<compile_context>
chip_gen: v6e
topology: v6e:2x2x1
jax: 0.10.0
libtpu: 0.0.40
codegen_flags: <defaults>
</compile_context>

<pallas_src>
import numpy as np
import jax
import jax.numpy as jnp
from jax import lax
from jax.experimental import pallas as pl
from jax.experimental.pallas import tpu as pltpu


def net_kernel(x_ref, w1m_ref, b1t_ref, w2b_ref, b2t_ref,
               fw1_ref, fb1_ref, fw2_ref, fb2_ref, out_ref):
    B = x_ref.shape[1]
    # x2[r, b, p*28 + m] = image[b, 2*r + p, m]  (row pairs folded onto lanes)
    x2 = x_ref[...].astype(jnp.bfloat16)                  # (14, B, 56) bf16

    # ---- conv1 as banded (Toeplitz) matmuls; even / odd output rows --------
    # xk_*[i', b, kh*28 + m] = image[b, row + kh, m], row = 2i' (+1 for odd)
    ek = [x2[0:12, :, 0:28], x2[0:12, :, 28:56], x2[1:13, :, 0:28],
          x2[1:13, :, 28:56], x2[2:14, :, 0:28]]
    ok = [x2[0:12, :, 28:56], x2[1:13, :, 0:28], x2[1:13, :, 28:56],
          x2[2:14, :, 0:28], x2[2:14, :, 28:56]]
    xk_e = jnp.concatenate(ek, axis=-1).reshape(12 * B, 140)
    xk_o = jnp.concatenate(ok, axis=-1).reshape(12 * B, 140)
    w1m = w1m_ref[...]                                    # (140, 512) bf16
    b1t = b1t_ref[...]                                    # (1, 512)   f32
    # lanes: even cols j=2jj -> jj*20+c in [0,240); odd cols -> 256+jj*20+c
    y_e = jnp.dot(xk_e, w1m, preferred_element_type=jnp.float32)   # (12B, 512)
    y_o = jnp.dot(xk_o, w1m, preferred_element_type=jnp.float32)
    a_e = jnp.maximum(y_e + b1t, 0.0)
    a_o = jnp.maximum(y_o + b1t, 0.0)
    # row half of the 2x2 maxpool == max over the output-row pair
    a1h = jnp.maximum(a_e, a_o).astype(jnp.bfloat16)      # (12B, 512)
    # column half of the pool: one aligned max of the even/odd lane halves
    p1 = jnp.maximum(a1h[:, 0:256], a1h[:, 256:512])      # (12B, 256) bf16
    p1 = p1.reshape(12, B, 256)                           # [i1, b, j1*20+cin]

    # ---- conv2 as banded matmuls: one (8B,256)@(256,512) per kh ------------
    w2b = w2b_ref[...]                                    # (5, 256, 512) bf16
    acc = jnp.dot(p1[0:8].reshape(8 * B, 256), w2b[0],
                  preferred_element_type=jnp.float32)     # (8B, 512) f32
    for kh in range(1, 5):
        acc = acc + jnp.dot(p1[kh:kh + 8].reshape(8 * B, 256), w2b[kh],
                            preferred_element_type=jnp.float32)
    # lanes: even j2 -> jj2*64+cout in [0,256); odd j2 -> 256+jj2*64+cout
    a2 = jnp.maximum(acc + b2t_ref[...], 0.0).astype(jnp.bfloat16)  # (8B, 512)

    # ---- maxpool 2x2: j2 half = aligned lane-half max, i2 half = leading dim
    a2 = jnp.maximum(a2[:, 0:256], a2[:, 256:512]).reshape(4, 2, B, 256)
    p2 = jnp.maximum(a2[:, 0], a2[:, 1])                  # (4, B, 256) [h,b,w*64+c]

    # ---- flatten (lane = h*256 + w*64 + c; fw1 rows pre-permuted) + fc1/fc2 -
    flat = jnp.concatenate([p2[0], p2[1], p2[2], p2[3]], axis=-1)   # (B, 1024)
    h1 = jnp.dot(flat, fw1_ref[...], preferred_element_type=jnp.float32)
    h1 = jnp.maximum(h1 + fb1_ref[...], 0.0).astype(jnp.bfloat16)   # (B, 512)
    out = jnp.dot(h1, fw2_ref[...], preferred_element_type=jnp.float32) \
        + fb2_ref[...]
    out_ref[...] = out                                    # (B, 128) lane-dense


def net_forward_pallas(x_nchw, packed, *, block_b=128):
    """x_nchw: (N, 1, 28, 28) f32.  Returns (N, 10) logits."""
    w1m, b1t, w2b, b2t, fw1, fb1p, fw2p, fb2p = packed
    assert block_b % 16 == 0            # bf16 sublane packing
    N = x_nchw.shape[0]
    assert x_nchw.shape[1:] == (1, 28, 28)

    # Shrink the block for small batches: avoids mostly-padding steps and
    # keeps >= 2 "parallel" grid steps (both v7x TensorCores) when possible.
    bb = min(block_b, max(32, (((N + 1) // 2) + 15) // 16 * 16))
    n_pad = int(pl.cdiv(N, bb)) * bb
    x = x_nchw[:, 0, :, :].astype(jnp.float32)            # (N, 28, 28), Cin == 1
    if n_pad != N:
        x = jnp.pad(x, ((0, n_pad - N), (0, 0), (0, 0)))
    # (n_pad, 28, 28) -> (14, n_pad, 56): row pairs onto lanes, batch to sublanes.
    x = jnp.transpose(x.reshape(n_pad, 14, 56), (1, 0, 2))
    steps = n_pad // bb

    per_img_flops = (2 * 2 * 12 * 140 * 512        # conv1 (even + odd rows)
                     + 2 * 5 * 8 * 256 * 512       # conv2 (banded, 5 kh)
                     + 2 * 1024 * 512              # fc1
                     + 2 * 512 * 128)              # fc2
    weight_bytes = (2 * (140 * 512 + 5 * 256 * 512 + 1024 * 512 + 512 * 128)
                    + 4 * (512 + 512 + 512 + 128))
    cost = pl.CostEstimate(
        flops=per_img_flops * n_pad,
        transcendentals=0,
        # weights are resident / revisited, count them once (not per step)
        bytes_accessed=n_pad * (14 * 56 * 4 + 128 * 4) + weight_bytes)

    def wspec(shape):
        return pl.BlockSpec(shape, lambda n: (0,) * len(shape))

    out = pl.pallas_call(
        net_kernel,
        out_shape=jax.ShapeDtypeStruct((n_pad, 128), jnp.float32),
        grid_spec=pltpu.PrefetchScalarGridSpec(
            num_scalar_prefetch=0,
            grid=(steps,),
            in_specs=[
                pl.BlockSpec((14, bb, 56), lambda n: (0, n, 0)),
                wspec((140, 512)),       # conv1 banded weight (bf16)
                wspec((1, 512)),         # conv1 bias (f32)
                wspec((5, 256, 512)),    # conv2 banded weights (bf16)
                wspec((1, 512)),         # conv2 bias (f32)
                wspec((1024, 512)),      # fc1 weight (bf16, rows permuted/padded)
                wspec((1, 512)),         # fc1 bias (f32)
                wspec((512, 128)),       # fc2 weight (bf16, padded)
                wspec((1, 128)),         # fc2 bias (f32)
            ],
            out_specs=pl.BlockSpec((bb, 128), lambda n: (n, 0)),
        ),
        compiler_params=pltpu.CompilerParams(
            dimension_semantics=("parallel",),
            vmem_limit_bytes=48 * 1024 * 1024),
        cost_estimate=cost,
    )(x, w1m, b1t, w2b, b2t, fw1, fb1p, fw2p, fb2p)
    return out[:N, :10]


def pack_params(params):
    """Plain-JAX/numpy glue: repack PyTorch-layout params for the kernel."""
    w1, b1, w2, b2, W1t, fb1, W2t, fb2 = [np.asarray(p, np.float32) for p in params]

    # conv1 banded weight; output lanes split into 128-aligned column-parity
    # halves: even cols j=2jj -> lane jj*20+c; odd cols j=2jj+1 -> 256+jj*20+c.
    w1m = np.zeros((5, 28, 512), np.float32)
    b1t = np.zeros((1, 512), np.float32)
    for kh in range(5):
        for kw in range(5):
            for jj in range(12):
                w1m[kh, 2 * jj + kw, jj * 20:jj * 20 + 20] = w1[:, 0, kh, kw]
                w1m[kh, 2 * jj + 1 + kw,
                    256 + jj * 20:256 + jj * 20 + 20] = w1[:, 0, kh, kw]
    w1m = w1m.reshape(140, 512)
    for jj in range(12):
        b1t[0, jj * 20:jj * 20 + 20] = b1
        b1t[0, 256 + jj * 20:256 + jj * 20 + 20] = b1

    # conv2 banded weights: one (256, 512) band per kh.  Input lanes are
    # j1*20+cin (lanes 240..255 are the zero pad of pool1's output); output
    # lanes split into even/odd-j2 halves with cout padded 50 -> 64.
    w2b = np.zeros((5, 256, 512), np.float32)
    b2t = np.zeros((1, 512), np.float32)
    for kh in range(5):
        for kw in range(5):
            wt = w2[:, :, kh, kw].T                        # (cin, cout)
            for jj in range(4):
                j1e = 2 * jj + kw
                j1o = 2 * jj + 1 + kw
                w2b[kh, j1e * 20:j1e * 20 + 20, jj * 64:jj * 64 + 50] = wt
                w2b[kh, j1o * 20:j1o * 20 + 20,
                    256 + jj * 64:256 + jj * 64 + 50] = wt
    for jj in range(4):
        b2t[0, jj * 64:jj * 64 + 50] = b2
        b2t[0, 256 + jj * 64:256 + jj * 64 + 50] = b2

    # fc1: kernel flattens as lane = h*256 + w*64 + c(pad 64); PyTorch's NCHW
    # flatten is c*16 + h*4 + w.  Out dim padded 500 -> 512.
    fw1 = np.zeros((4, 4, 64, 512), np.float32)
    fw1[:, :, :50, :500] = np.transpose(W1t.reshape(50, 4, 4, 500), (1, 2, 0, 3))
    fw1 = fw1.reshape(1024, 512)
    fb1p = np.zeros((1, 512), np.float32)
    fb1p[0, :500] = fb1

    # fc2: pad K 500 -> 512 and output lanes 10 -> 128 (lane-dense final store).
    fw2p = np.zeros((512, 128), np.float32)
    fw2p[:500, :10] = W2t
    fb2p = np.zeros((1, 128), np.float32)
    fb2p[0, :10] = fb2

    bf16 = lambda a: jnp.asarray(a, jnp.bfloat16)          # MXU operands
    f32 = lambda a: jnp.asarray(a, jnp.float32)            # biases stay f32 (VPU)
    return (bf16(w1m), f32(b1t), bf16(w2b), f32(b2t),
            bf16(fw1), f32(fb1p), bf16(fw2p), f32(fb2p))


def init_params(key):
    """Deterministic PyTorch-like init (uniform +-1/sqrt(fan_in))."""
    ks = jax.random.split(key, 8)

    def u(k, shape, fan_in):
        b = 1.0 / np.sqrt(fan_in)
        return jax.random.uniform(k, shape, jnp.float32, -b, b)

    w1 = u(ks[0], (20, 1, 5, 5), 25)      # OIHW
    b1 = u(ks[1], (20,), 25)
    w2 = u(ks[2], (50, 20, 5, 5), 500)    # OIHW
    b2 = u(ks[3], (50,), 500)
    W1t = u(ks[4], (800, 500), 800)       # fc1.weight.T  (in, out)
    fb1 = u(ks[5], (500,), 800)
    W2t = u(ks[6], (500, 10), 500)        # fc2.weight.T  (in, out)
    fb2 = u(ks[7], (10,), 500)
    return w1, b1, w2, b2, W1t, fb1, W2t, fb2


def reference_forward(x_nchw, params):
    """Plain-JAX reference mirroring the PyTorch module (NCHW, f32)."""
    w1, b1, w2, b2, W1t, fb1, W2t, fb2 = params
    dn = ('NCHW', 'OIHW', 'NCHW')
    y = lax.conv_general_dilated(x_nchw, w1, (1, 1), 'VALID', dimension_numbers=dn)
    y = jax.nn.relu(y + b1[None, :, None, None])
    y = lax.reduce_window(y, -jnp.inf, lax.max, (1, 1, 2, 2), (1, 1, 2, 2), 'VALID')
    y = lax.conv_general_dilated(y, w2, (1, 1), 'VALID', dimension_numbers=dn)
    y = jax.nn.relu(y + b2[None, :, None, None])
    y = lax.reduce_window(y, -jnp.inf, lax.max, (1, 1, 2, 2), (1, 1, 2, 2), 'VALID')
    flat = y.reshape(y.shape[0], 4 * 4 * 50)              # NCHW flatten, like .view
    h = jax.nn.relu(flat @ W1t + fb1)
    return h @ W2t + fb2


if __name__ == "__main__":
    key = jax.random.PRNGKey(0)
    kx, kp = jax.random.split(key)

    # NOTE: spatial size must be 28 (MNIST) so that 4*4*50 matches fc1.
    N = 2
    x_nchw = jax.random.normal(kx, (N, 1, 28, 28), jnp.float32)
    params = init_params(kp)
    packed = pack_params(params)

    out_kernel = net_forward_pallas(x_nchw, packed, block_b=128)
    out_kernel = jax.block_until_ready(out_kernel)

    out_ref = jax.block_until_ready(reference_forward(x_nchw, params))
    # bf16 MXU operands with f32 accumulation -> bf16-level tolerance.
    np.testing.assert_allclose(np.asarray(out_kernel), np.asarray(out_ref),
                               rtol=5e-2, atol=5e-2)

    print("KERNEL_OK")
</pallas_src>

<mosaic_0001>
module attributes {stable_mosaic.version = 11 : i64} {
  func.func @net_kernel(%arg0: i32, %arg1: memref<14x32x56xf32, #tpu.memory_space<vmem>>, %arg2: memref<140x512xbf16, #tpu.memory_space<vmem>>, %arg3: memref<1x512xf32, #tpu.memory_space<vmem>>, %arg4: memref<5x256x512xbf16, #tpu.memory_space<vmem>>, %arg5: memref<1x512xf32, #tpu.memory_space<vmem>>, %arg6: memref<1024x512xbf16, #tpu.memory_space<vmem>>, %arg7: memref<1x512xf32, #tpu.memory_space<vmem>>, %arg8: memref<512x128xbf16, #tpu.memory_space<vmem>>, %arg9: memref<1x128xf32, #tpu.memory_space<vmem>>, %arg10: memref<32x128xf32, #tpu.memory_space<vmem>>) attributes {dimension_semantics = [#tpu.dimension_semantics<parallel>], iteration_bounds = array<i64: 1>, scalar_prefetch = 0 : i64, scratch_operands = 0 : i64, tpu.core_type = #tpu.core_type<tc>, window_params = [{transform_indices = @transform_0, window_bounds = array<i64: 14, 32, 56>}, {pipeline_mode = #tpu.pipeline_mode<synchronous>, transform_indices = @transform_1, window_bounds = array<i64: 140, 512>}, {pipeline_mode = #tpu.pipeline_mode<synchronous>, transform_indices = @transform_2, window_bounds = array<i64: 1, 512>}, {pipeline_mode = #tpu.pipeline_mode<synchronous>, transform_indices = @transform_3, window_bounds = array<i64: 5, 256, 512>}, {pipeline_mode = #tpu.pipeline_mode<synchronous>, transform_indices = @transform_4, window_bounds = array<i64: 1, 512>}, {pipeline_mode = #tpu.pipeline_mode<synchronous>, transform_indices = @transform_5, window_bounds = array<i64: 1024, 512>}, {pipeline_mode = #tpu.pipeline_mode<synchronous>, transform_indices = @transform_6, window_bounds = array<i64: 1, 512>}, {pipeline_mode = #tpu.pipeline_mode<synchronous>, transform_indices = @transform_7, window_bounds = array<i64: 512, 128>}, {pipeline_mode = #tpu.pipeline_mode<synchronous>, transform_indices = @transform_8, window_bounds = array<i64: 1, 128>}, {transform_indices = @transform_9, window_bounds = array<i64: 32, 128>}]} {
    %c0 = arith.constant 0 : index
    %c0_0 = arith.constant 0 : index
    %c0_1 = arith.constant 0 : index
    %0 = vector.load %arg1[%c0, %c0_0, %c0_1] : memref<14x32x56xf32, #tpu.memory_space<vmem>>, vector<14x32x56xf32>
    %1 = arith.truncf %0 : vector<14x32x56xf32> to vector<14x32x56xbf16>
    %2 = vector.extract_strided_slice %1 {offsets = [0, 0, 0], sizes = [12, 32, 28], strides = [1, 1, 1]} : vector<14x32x56xbf16> to vector<12x32x28xbf16>
    %3 = vector.extract_strided_slice %1 {offsets = [0, 0, 28], sizes = [12, 32, 28], strides = [1, 1, 1]} : vector<14x32x56xbf16> to vector<12x32x28xbf16>
    %4 = vector.extract_strided_slice %1 {offsets = [1, 0, 0], sizes = [12, 32, 28], strides = [1, 1, 1]} : vector<14x32x56xbf16> to vector<12x32x28xbf16>
    %5 = vector.extract_strided_slice %1 {offsets = [1, 0, 28], sizes = [12, 32, 28], strides = [1, 1, 1]} : vector<14x32x56xbf16> to vector<12x32x28xbf16>
    %6 = vector.extract_strided_slice %1 {offsets = [2, 0, 0], sizes = [12, 32, 28], strides = [1, 1, 1]} : vector<14x32x56xbf16> to vector<12x32x28xbf16>
    %7 = vector.extract_strided_slice %1 {offsets = [0, 0, 28], sizes = [12, 32, 28], strides = [1, 1, 1]} : vector<14x32x56xbf16> to vector<12x32x28xbf16>
    %8 = vector.extract_strided_slice %1 {offsets = [1, 0, 0], sizes = [12, 32, 28], strides = [1, 1, 1]} : vector<14x32x56xbf16> to vector<12x32x28xbf16>
    %9 = vector.extract_strided_slice %1 {offsets = [1, 0, 28], sizes = [12, 32, 28], strides = [1, 1, 1]} : vector<14x32x56xbf16> to vector<12x32x28xbf16>
    %10 = vector.extract_strided_slice %1 {offsets = [2, 0, 0], sizes = [12, 32, 28], strides = [1, 1, 1]} : vector<14x32x56xbf16> to vector<12x32x28xbf16>
    %11 = vector.extract_strided_slice %1 {offsets = [2, 0, 28], sizes = [12, 32, 28], strides = [1, 1, 1]} : vector<14x32x56xbf16> to vector<12x32x28xbf16>
    %12 = tpu.concatenate %2, %3, %4, %5, %6 in 2 : vector<12x32x28xbf16>, vector<12x32x28xbf16>, vector<12x32x28xbf16>, vector<12x32x28xbf16>, vector<12x32x28xbf16> -> vector<12x32x140xbf16>
    %13 = vector.shape_cast %12 : vector<12x32x140xbf16> to vector<384x140xbf16>
    %14 = tpu.concatenate %7, %8, %9, %10, %11 in 2 : vector<12x32x28xbf16>, vector<12x32x28xbf16>, vector<12x32x28xbf16>, vector<12x32x28xbf16>, vector<12x32x28xbf16> -> vector<12x32x140xbf16>
    %15 = vector.shape_cast %14 : vector<12x32x140xbf16> to vector<384x140xbf16>
    %c0_2 = arith.constant 0 : index
    %c0_3 = arith.constant 0 : index
    %16 = vector.load %arg2[%c0_2, %c0_3] : memref<140x512xbf16, #tpu.memory_space<vmem>>, vector<140x512xbf16>
    %c0_4 = arith.constant 0 : index
    %c0_5 = arith.constant 0 : index
    %17 = vector.load %arg3[%c0_4, %c0_5] : memref<1x512xf32, #tpu.memory_space<vmem>>, vector<1x512xf32>
    %cst = arith.constant dense<0.000000e+00> : vector<384x512xf32>
    %18 = tpu.matmul %13, %16, %cst {dimension_numbers = #tpu.dot_dimension_numbers<[1], [0], [0], [1], [0, 0, 1, 1], [], []>} : vector<384x140xbf16>, vector<140x512xbf16>, vector<384x512xf32> -> vector<384x512xf32>
    %cst_6 = arith.constant dense<0.000000e+00> : vector<384x512xf32>
    %19 = tpu.matmul %15, %16, %cst_6 {dimension_numbers = #tpu.dot_dimension_numbers<[1], [0], [0], [1], [0, 0, 1, 1], [], []>} : vector<384x140xbf16>, vector<140x512xbf16>, vector<384x512xf32> -> vector<384x512xf32>
    %20 = vector.broadcast %17 : vector<1x512xf32> to vector<384x512xf32>
    %21 = arith.addf %18, %20 : vector<384x512xf32>
    %cst_7 = arith.constant 0.000000e+00 : f32
    %22 = vector.broadcast %cst_7 : f32 to vector<384x512xf32>
    %23 = arith.maximumf %21, %22 : vector<384x512xf32>
    %24 = vector.broadcast %17 : vector<1x512xf32> to vector<384x512xf32>
    %25 = arith.addf %19, %24 : vector<384x512xf32>
    %cst_8 = arith.constant 0.000000e+00 : f32
    %26 = vector.broadcast %cst_8 : f32 to vector<384x512xf32>
    %27 = arith.maximumf %25, %26 : vector<384x512xf32>
    %28 = arith.maximumf %23, %27 : vector<384x512xf32>
    %29 = arith.truncf %28 : vector<384x512xf32> to vector<384x512xbf16>
    %30 = vector.extract_strided_slice %29 {offsets = [0, 0], sizes = [384, 256], strides = [1, 1]} : vector<384x512xbf16> to vector<384x256xbf16>
    %31 = vector.extract_strided_slice %29 {offsets = [0, 256], sizes = [384, 256], strides = [1, 1]} : vector<384x512xbf16> to vector<384x256xbf16>
    %32 = arith.maximumf %30, %31 : vector<384x256xbf16>
    %33 = vector.shape_cast %32 : vector<384x256xbf16> to vector<12x32x256xbf16>
    %c0_9 = arith.constant 0 : index
    %c0_10 = arith.constant 0 : index
    %c0_11 = arith.constant 0 : index
    %34 = vector.load %arg4[%c0_9, %c0_10, %c0_11] : memref<5x256x512xbf16, #tpu.memory_space<vmem>>, vector<5x256x512xbf16>
    %35 = vector.extract_strided_slice %33 {offsets = [0, 0, 0], sizes = [8, 32, 256], strides = [1, 1, 1]} : vector<12x32x256xbf16> to vector<8x32x256xbf16>
    %36 = vector.shape_cast %35 : vector<8x32x256xbf16> to vector<256x256xbf16>
    %37 = vector.extract_strided_slice %34 {offsets = [0, 0, 0], sizes = [1, 256, 512], strides = [1, 1, 1]} : vector<5x256x512xbf16> to vector<1x256x512xbf16>
    %38 = vector.shape_cast %37 : vector<1x256x512xbf16> to vector<256x512xbf16>
    %cst_12 = arith.constant dense<0.000000e+00> : vector<256x512xf32>
    %39 = tpu.matmul %36, %38, %cst_12 {dimension_numbers = #tpu.dot_dimension_numbers<[1], [0], [0], [1], [0, 0, 1, 1], [], []>} : vector<256x256xbf16>, vector<256x512xbf16>, vector<256x512xf32> -> vector<256x512xf32>
    %40 = vector.extract_strided_slice %33 {offsets = [1, 0, 0], sizes = [8, 32, 256], strides = [1, 1, 1]} : vector<12x32x256xbf16> to vector<8x32x256xbf16>
    %41 = vector.shape_cast %40 : vector<8x32x256xbf16> to vector<256x256xbf16>
    %42 = vector.extract_strided_slice %34 {offsets = [1, 0, 0], sizes = [1, 256, 512], strides = [1, 1, 1]} : vector<5x256x512xbf16> to vector<1x256x512xbf16>
    %43 = vector.shape_cast %42 : vector<1x256x512xbf16> to vector<256x512xbf16>
    %cst_13 = arith.constant dense<0.000000e+00> : vector<256x512xf32>
    %44 = tpu.matmul %41, %43, %cst_13 {dimension_numbers = #tpu.dot_dimension_numbers<[1], [0], [0], [1], [0, 0, 1, 1], [], []>} : vector<256x256xbf16>, vector<256x512xbf16>, vector<256x512xf32> -> vector<256x512xf32>
    %45 = arith.addf %39, %44 : vector<256x512xf32>
    %46 = vector.extract_strided_slice %33 {offsets = [2, 0, 0], sizes = [8, 32, 256], strides = [1, 1, 1]} : vector<12x32x256xbf16> to vector<8x32x256xbf16>
    %47 = vector.shape_cast %46 : vector<8x32x256xbf16> to vector<256x256xbf16>
    %48 = vector.extract_strided_slice %34 {offsets = [2, 0, 0], sizes = [1, 256, 512], strides = [1, 1, 1]} : vector<5x256x512xbf16> to vector<1x256x512xbf16>
    %49 = vector.shape_cast %48 : vector<1x256x512xbf16> to vector<256x512xbf16>
    %cst_14 = arith.constant dense<0.000000e+00> : vector<256x512xf32>
    %50 = tpu.matmul %47, %49, %cst_14 {dimension_numbers = #tpu.dot_dimension_numbers<[1], [0], [0], [1], [0, 0, 1, 1], [], []>} : vector<256x256xbf16>, vector<256x512xbf16>, vector<256x512xf32> -> vector<256x512xf32>
    %51 = arith.addf %45, %50 : vector<256x512xf32>
    %52 = vector.extract_strided_slice %33 {offsets = [3, 0, 0], sizes = [8, 32, 256], strides = [1, 1, 1]} : vector<12x32x256xbf16> to vector<8x32x256xbf16>
    %53 = vector.shape_cast %52 : vector<8x32x256xbf16> to vector<256x256xbf16>
    %54 = vector.extract_strided_slice %34 {offsets = [3, 0, 0], sizes = [1, 256, 512], strides = [1, 1, 1]} : vector<5x256x512xbf16> to vector<1x256x512xbf16>
    %55 = vector.shape_cast %54 : vector<1x256x512xbf16> to vector<256x512xbf16>
    %cst_15 = arith.constant dense<0.000000e+00> : vector<256x512xf32>
    %56 = tpu.matmul %53, %55, %cst_15 {dimension_numbers = #tpu.dot_dimension_numbers<[1], [0], [0], [1], [0, 0, 1, 1], [], []>} : vector<256x256xbf16>, vector<256x512xbf16>, vector<256x512xf32> -> vector<256x512xf32>
    %57 = arith.addf %51, %56 : vector<256x512xf32>
    %58 = vector.extract_strided_slice %33 {offsets = [4, 0, 0], sizes = [8, 32, 256], strides = [1, 1, 1]} : vector<12x32x256xbf16> to vector<8x32x256xbf16>
    %59 = vector.shape_cast %58 : vector<8x32x256xbf16> to vector<256x256xbf16>
    %60 = vector.extract_strided_slice %34 {offsets = [4, 0, 0], sizes = [1, 256, 512], strides = [1, 1, 1]} : vector<5x256x512xbf16> to vector<1x256x512xbf16>
    %61 = vector.shape_cast %60 : vector<1x256x512xbf16> to vector<256x512xbf16>
    %cst_16 = arith.constant dense<0.000000e+00> : vector<256x512xf32>
    %62 = tpu.matmul %59, %61, %cst_16 {dimension_numbers = #tpu.dot_dimension_numbers<[1], [0], [0], [1], [0, 0, 1, 1], [], []>} : vector<256x256xbf16>, vector<256x512xbf16>, vector<256x512xf32> -> vector<256x512xf32>
    %63 = arith.addf %57, %62 : vector<256x512xf32>
    %c0_17 = arith.constant 0 : index
    %c0_18 = arith.constant 0 : index
    %64 = vector.load %arg5[%c0_17, %c0_18] : memref<1x512xf32, #tpu.memory_space<vmem>>, vector<1x512xf32>
    %65 = vector.broadcast %64 : vector<1x512xf32> to vector<256x512xf32>
    %66 = arith.addf %63, %65 : vector<256x512xf32>
    %cst_19 = arith.constant 0.000000e+00 : f32
    %67 = vector.broadcast %cst_19 : f32 to vector<256x512xf32>
    %68 = arith.maximumf %66, %67 : vector<256x512xf32>
    %69 = arith.truncf %68 : vector<256x512xf32> to vector<256x512xbf16>
    %70 = vector.extract_strided_slice %69 {offsets = [0, 0], sizes = [256, 256], strides = [1, 1]} : vector<256x512xbf16> to vector<256x256xbf16>
    %71 = vector.extract_strided_slice %69 {offsets = [0, 256], sizes = [256, 256], strides = [1, 1]} : vector<256x512xbf16> to vector<256x256xbf16>
    %72 = arith.maximumf %70, %71 : vector<256x256xbf16>
    %73 = vector.shape_cast %72 : vector<256x256xbf16> to vector<4x2x32x256xbf16>
    %74 = vector.extract_strided_slice %73 {offsets = [0, 0, 0, 0], sizes = [4, 1, 32, 256], strides = [1, 1, 1, 1]} : vector<4x2x32x256xbf16> to vector<4x1x32x256xbf16>
    %75 = vector.shape_cast %74 : vector<4x1x32x256xbf16> to vector<4x32x256xbf16>
    %76 = vector.extract_strided_slice %73 {offsets = [0, 1, 0, 0], sizes = [4, 1, 32, 256], strides = [1, 1, 1, 1]} : vector<4x2x32x256xbf16> to vector<4x1x32x256xbf16>
    %77 = vector.shape_cast %76 : vector<4x1x32x256xbf16> to vector<4x32x256xbf16>
    %78 = arith.maximumf %75, %77 : vector<4x32x256xbf16>
    %79 = vector.extract_strided_slice %78 {offsets = [0, 0, 0], sizes = [1, 32, 256], strides = [1, 1, 1]} : vector<4x32x256xbf16> to vector<1x32x256xbf16>
    %80 = vector.shape_cast %79 : vector<1x32x256xbf16> to vector<32x256xbf16>
    %81 = vector.extract_strided_slice %78 {offsets = [1, 0, 0], sizes = [1, 32, 256], strides = [1, 1, 1]} : vector<4x32x256xbf16> to vector<1x32x256xbf16>
    %82 = vector.shape_cast %81 : vector<1x32x256xbf16> to vector<32x256xbf16>
    %83 = vector.extract_strided_slice %78 {offsets = [2, 0, 0], sizes = [1, 32, 256], strides = [1, 1, 1]} : vector<4x32x256xbf16> to vector<1x32x256xbf16>
    %84 = vector.shape_cast %83 : vector<1x32x256xbf16> to vector<32x256xbf16>
    %85 = vector.extract_strided_slice %78 {offsets = [3, 0, 0], sizes = [1, 32, 256], strides = [1, 1, 1]} : vector<4x32x256xbf16> to vector<1x32x256xbf16>
    %86 = vector.shape_cast %85 : vector<1x32x256xbf16> to vector<32x256xbf16>
    %87 = tpu.concatenate %80, %82, %84, %86 in 1 : vector<32x256xbf16>, vector<32x256xbf16>, vector<32x256xbf16>, vector<32x256xbf16> -> vector<32x1024xbf16>
    %c0_20 = arith.constant 0 : index
    %c0_21 = arith.constant 0 : index
    %88 = vector.load %arg6[%c0_20, %c0_21] : memref<1024x512xbf16, #tpu.memory_space<vmem>>, vector<1024x512xbf16>
    %cst_22 = arith.constant dense<0.000000e+00> : vector<32x512xf32>
    %89 = tpu.matmul %87, %88, %cst_22 {dimension_numbers = #tpu.dot_dimension_numbers<[1], [0], [0], [1], [0, 0, 1, 1], [], []>} : vector<32x1024xbf16>, vector<1024x512xbf16>, vector<32x512xf32> -> vector<32x512xf32>
    %c0_23 = arith.constant 0 : index
    %c0_24 = arith.constant 0 : index
    %90 = vector.load %arg7[%c0_23, %c0_24] : memref<1x512xf32, #tpu.memory_space<vmem>>, vector<1x512xf32>
    %91 = vector.broadcast %90 : vector<1x512xf32> to vector<32x512xf32>
    %92 = arith.addf %89, %91 : vector<32x512xf32>
    %cst_25 = arith.constant 0.000000e+00 : f32
    %93 = vector.broadcast %cst_25 : f32 to vector<32x512xf32>
    %94 = arith.maximumf %92, %93 : vector<32x512xf32>
    %95 = arith.truncf %94 : vector<32x512xf32> to vector<32x512xbf16>
    %c0_26 = arith.constant 0 : index
    %c0_27 = arith.constant 0 : index
    %96 = vector.load %arg8[%c0_26, %c0_27] : memref<512x128xbf16, #tpu.memory_space<vmem>>, vector<512x128xbf16>
    %cst_28 = arith.constant dense<0.000000e+00> : vector<32x128xf32>
    %97 = tpu.matmul %95, %96, %cst_28 {dimension_numbers = #tpu.dot_dimension_numbers<[1], [0], [0], [1], [0, 0, 1, 1], [], []>} : vector<32x512xbf16>, vector<512x128xbf16>, vector<32x128xf32> -> vector<32x128xf32>
    %c0_29 = arith.constant 0 : index
    %c0_30 = arith.constant 0 : index
    %98 = vector.load %arg9[%c0_29, %c0_30] : memref<1x128xf32, #tpu.memory_space<vmem>>, vector<1x128xf32>
    %99 = vector.broadcast %98 : vector<1x128xf32> to vector<32x128xf32>
    %100 = arith.addf %97, %99 : vector<32x128xf32>
    %c0_31 = arith.constant 0 : index
    %c0_32 = arith.constant 0 : index
    %101 = vector.load %arg10[%c0_31, %c0_32] : memref<32x128xf32, #tpu.memory_space<vmem>>, vector<32x128xf32>
    tpu.vector_store %arg10[%c0_31, %c0_32], %100 {strides = array<i32>} : memref<32x128xf32, #tpu.memory_space<vmem>>, vector<32x128xf32>,
    return
  }
  func.func @transform_0(%arg0: i32) -> (i32, i32, i32) {
    %c0_i32 = arith.constant 0 : i32
    %c0_i32_0 = arith.constant 0 : i32
    %c0_i32_1 = arith.constant 0 : i32
    return %c0_i32, %arg0, %c0_i32_0 : i32, i32, i32
  }
  func.func @transform_1(%arg0: i32) -> (i32, i32) {
    %c0_i32 = arith.constant 0 : i32
    %c0_i32_0 = arith.constant 0 : i32
    %c0_i32_1 = arith.constant 0 : i32
    return %c0_i32, %c0_i32_0 : i32, i32
  }
  func.func @transform_2(%arg0: i32) -> (i32, i32) {
    %c0_i32 = arith.constant 0 : i32
    %c0_i32_0 = arith.constant 0 : i32
    %c0_i32_1 = arith.constant 0 : i32
    return %c0_i32, %c0_i32_0 : i32, i32
  }
  func.func @transform_3(%arg0: i32) -> (i32, i32, i32) {
    %c0_i32 = arith.constant 0 : i32
    %c0_i32_0 = arith.constant 0 : i32
    %c0_i32_1 = arith.constant 0 : i32
    %c0_i32_2 = arith.constant 0 : i32
    return %c0_i32, %c0_i32_0, %c0_i32_1 : i32, i32, i32
  }
  func.func @transform_4(%arg0: i32) -> (i32, i32) {
    %c0_i32 = arith.constant 0 : i32
    %c0_i32_0 = arith.constant 0 : i32
    %c0_i32_1 = arith.constant 0 : i32
    return %c0_i32, %c0_i32_0 : i32, i32
  }
  func.func @transform_5(%arg0: i32) -> (i32, i32) {
    %c0_i32 = arith.constant 0 : i32
    %c0_i32_0 = arith.constant 0 : i32
    %c0_i32_1 = arith.constant 0 : i32
    return %c0_i32, %c0_i32_0 : i32, i32
  }
  func.func @transform_6(%arg0: i32) -> (i32, i32) {
    %c0_i32 = arith.constant 0 : i32
    %c0_i32_0 = arith.constant 0 : i32
    %c0_i32_1 = arith.constant 0 : i32
    return %c0_i32, %c0_i32_0 : i32, i32
  }
  func.func @transform_7(%arg0: i32) -> (i32, i32) {
    %c0_i32 = arith.constant 0 : i32
    %c0_i32_0 = arith.constant 0 : i32
    %c0_i32_1 = arith.constant 0 : i32
    return %c0_i32, %c0_i32_0 : i32, i32
  }
  func.func @transform_8(%arg0: i32) -> (i32, i32) {
    %c0_i32 = arith.constant 0 : i32
    %c0_i32_0 = arith.constant 0 : i32
    %c0_i32_1 = arith.constant 0 : i32
    return %c0_i32, %c0_i32_0 : i32, i32
  }
  func.func @transform_9(%arg0: i32) -> (i32, i32) {
    %c0_i32 = arith.constant 0 : i32
    %c0_i32_0 = arith.constant 0 : i32
    return %arg0, %c0_i32 : i32, i32
  }
}

</mosaic_0001>

<llo_original>
// kernel: tpu_custom_call.1
$region0: #{tpu_custom_call.1}
  #allocation0 [shape = 'u32[]', space=smem, size = 0x4, offset = 0x4, fixed_abs, tag = 'smem constant byte address 0x4 - core index']
  #allocation1 [shape = 'u32[144,128]{1,0:T(1,128)}', space=vmem, size = 0x12000, scoped, tag = 'internal scratch']
  %s0 = inlined_call_operand.hbm [shape: f32[14,32,56], index: 0, kind: input, shape index: {}]
  %s1 = inlined_call_operand.hbm [shape: bf16[140,512], index: 1, kind: input, shape index: {}]
  %s2 = inlined_call_operand.hbm [shape: f32[1,512], index: 2, kind: input, shape index: {}]
  %s3 = inlined_call_operand.hbm [shape: bf16[5,256,512], index: 3, kind: input, shape index: {}]
  %s4 = inlined_call_operand.hbm [shape: f32[1,512], index: 4, kind: input, shape index: {}]
  %s5 = inlined_call_operand.hbm [shape: bf16[1024,512], index: 5, kind: input, shape index: {}]
  %s6 = inlined_call_operand.hbm [shape: f32[1,512], index: 6, kind: input, shape index: {}]
  %s7 = inlined_call_operand.hbm [shape: bf16[512,128], index: 7, kind: input, shape index: {}]
  %s8 = inlined_call_operand.hbm [shape: f32[1,128], index: 8, kind: input, shape index: {}]
  %s9 = inlined_call_operand.hbm [shape: f32[32,128], index: 9, kind: output, shape index: {}]
  %s10 = sld [smem:[#allocation0]]
  $region82: #{tpu_custom_call.1} parent=0
    _
  %s12 = ssub.s32 1, %s10
  %s13 = scalar_select 0, %s12, %s10
  $region1: #{tpu_custom_call.1} parent=0
    #allocation2 [shape = 'u8[229376]{0}', space=vmem, size = 0x38000, scoped, tag = 'input window, operand 0, single buffered']
    #allocation3 [shape = 's32[1]{0}', space=sflag, size = 0x4, scoped, tag = 'scoped memory for tpu_custom_call.1']
    #allocation4 [shape = 's32[1]{0}', space=sflag, size = 0x4, scoped, tag = 'scoped memory for tpu_custom_call.1']
    #allocation5 [shape = 'u8[147456]{0}', space=vmem, size = 0x24000, scoped, tag = 'input window, operand 1, single buffered']
    #allocation6 [shape = 's32[1]{0}', space=sflag, size = 0x4, scoped, tag = 'scoped memory for tpu_custom_call.1']
    #allocation7 [shape = 'u8[2048]{0}', space=vmem, size = 0x800, scoped, tag = 'input window, operand 2, single buffered']
    #allocation8 [shape = 'u8[1310720]{0}', space=vmem, size = 0x140000, scoped, tag = 'input window, operand 3, single buffered']
    #allocation9 [shape = 's32[1]{0}', space=sflag, size = 0x4, scoped, tag = 'scoped memory for tpu_custom_call.1']
    #allocation10 [shape = 'u8[2048]{0}', space=vmem, size = 0x800, scoped, tag = 'input window, operand 4, single buffered']
    #allocation11 [shape = 'u8[1048576]{0}', space=vmem, size = 0x100000, scoped, tag = 'input window, operand 5, single buffered']
    #allocation12 [shape = 's32[1]{0}', space=sflag, size = 0x4, scoped, tag = 'scoped memory for tpu_custom_call.1']
    #allocation13 [shape = 'u8[2048]{0}', space=vmem, size = 0x800, scoped, tag = 'input window, operand 6, single buffered']
    #allocation14 [shape = 'u8[131072]{0}', space=vmem, size = 0x20000, scoped, tag = 'input window, operand 7, single buffered']
    #allocation15 [shape = 's32[1]{0}', space=sflag, size = 0x4, scoped, tag = 'scoped memory for tpu_custom_call.1']
    #allocation16 [shape = 'u8[512]{0}', space=vmem, size = 0x400, scoped, tag = 'input window, operand 8, single buffered']
    #allocation17 [shape = 'u8[16384]{0}', space=vmem, size = 0x4000, scoped, tag = 'output window, operand 0, single buffered']
    %14 = vsyncpa [#allocation3], 0
    %15 = vsyncpa [#allocation6], 0
    %16 = vsyncpa [#allocation9], 0
    %17 = vsyncpa [#allocation12], 0
    %18 = vsyncpa [#allocation15], 0
    %19 = vsyncpa [#allocation4], 0
    // Predicated region
    $region2: #{tpu_custom_call.1} parent=1 // pred_check
      _
    $region3: #{tpu_custom_call.1} parent=1 // pred_check_branch
      %21 = sbr.rel (0) target = $region5
    $region4: #{tpu_custom_call.1} parent=1 // pred_region
      %s23 = ssub.s32 7168, 7168
      %24 = vsyncadd [#allocation3], %s23
      %s25 = sshll.u32 [#allocation2], 4
      %s26 = int_to_ptr.vmem [resolvable:$true] %s25
      %31 = dma.hbm_to_vmem [thread:$0]  %s0, 7168, %s26, [#allocation3], 128, 128, 8
    $region5: #{tpu_custom_call.1} parent=1 // pred_fallthru
      _
    // Predicated region
    $region6: #{tpu_custom_call.1} parent=1 // pred_check
      _
    $region7: #{tpu_custom_call.1} parent=1 // pred_check_branch
      %33 = sbr.rel (0) target = $region9
    $region8: #{tpu_custom_call.1} parent=1 // pred_region
      %s35 = ssub.s32 4608, 4608
      %36 = vsyncadd [#allocation6], %s35
      %s37 = sshll.u32 [#allocation5], 4
      %s38 = int_to_ptr.vmem [resolvable:$true] %s37
      %43 = dma.hbm_to_vmem [thread:$0]  %s1, 4608, %s38, [#allocation6], 256, 256, 16
    $region9: #{tpu_custom_call.1} parent=1 // pred_fallthru
      _
    // Predicated region
    $region10: #{tpu_custom_call.1} parent=1 // pred_check
      _
    $region11: #{tpu_custom_call.1} parent=1 // pred_check_branch
      %45 = sbr.rel (0) target = $region13
    $region12: #{tpu_custom_call.1} parent=1 // pred_region
      %s47 = ssub.s32 64, 64
      %48 = vsyncadd [#allocation6], %s47
      %s50 = sshll.u32 [#allocation7], 4
      %s51 = int_to_ptr.vmem [resolvable:$true] %s50
      %53 = dma.hbm_to_vmem [thread:$0]  %s2, 64, %s51, [#allocation6]
    $region13: #{tpu_custom_call.1} parent=1 // pred_fallthru
      _
    // Predicated region
    $region14: #{tpu_custom_call.1} parent=1 // pred_check
      _
    $region15: #{tpu_custom_call.1} parent=1 // pred_check_branch
      %55 = sbr.rel (0) target = $region17
    $region16: #{tpu_custom_call.1} parent=1 // pred_region
      %s57 = ssub.s32 40960, 40960
      %58 = vsyncadd [#allocation9], %s57
      %s59 = sshll.u32 [#allocation8], 4
      %s60 = int_to_ptr.vmem [resolvable:$true] %s59
      %65 = dma.hbm_to_vmem [thread:$0]  %s3, 40960, %s60, [#allocation9], 256, 256, 16
    $region17: #{tpu_custom_call.1} parent=1 // pred_fallthru
      _
    // Predicated region
    $region18: #{tpu_custom_call.1} parent=1 // pred_check
      _
    $region19: #{tpu_custom_call.1} parent=1 // pred_check_branch
      %67 = sbr.rel (0) target = $region21
    $region20: #{tpu_custom_call.1} parent=1 // pred_region
      %s69 = ssub.s32 64, 64
      %70 = vsyncadd [#allocation9], %s69
      %s72 = sshll.u32 [#allocation10], 4
      %s73 = int_to_ptr.vmem [resolvable:$true] %s72
      %75 = dma.hbm_to_vmem [thread:$0]  %s4, 64, %s73, [#allocation9]
    $region21: #{tpu_custom_call.1} parent=1 // pred_fallthru
      _
    // Predicated region
    $region22: #{tpu_custom_call.1} parent=1 // pred_check
      _
    $region23: #{tpu_custom_call.1} parent=1 // pred_check_branch
      %77 = sbr.rel (0) target = $region25
    $region24: #{tpu_custom_call.1} parent=1 // pred_region
      %s79 = ssub.s32 32768, 32768
      %80 = vsyncadd [#allocation12], %s79
      %s81 = sshll.u32 [#allocation11], 4
      %s82 = int_to_ptr.vmem [resolvable:$true] %s81
      %87 = dma.hbm_to_vmem [thread:$0]  %s5, 32768, %s82, [#allocation12], 256, 256, 16
    $region25: #{tpu_custom_call.1} parent=1 // pred_fallthru
      _
    // Predicated region
    $region26: #{tpu_custom_call.1} parent=1 // pred_check
      _
    $region27: #{tpu_custom_call.1} parent=1 // pred_check_branch
      %89 = sbr.rel (0) target = $region29
    $region28: #{tpu_custom_call.1} parent=1 // pred_region
      %s91 = ssub.s32 64, 64
      %92 = vsyncadd [#allocation12], %s91
      %s94 = sshll.u32 [#allocation13], 4
      %s95 = int_to_ptr.vmem [resolvable:$true] %s94
      %97 = dma.hbm_to_vmem [thread:$0]  %s6, 64, %s95, [#allocation12]
    $region29: #{tpu_custom_call.1} parent=1 // pred_fallthru
      _
    // Predicated region
    $region30: #{tpu_custom_call.1} parent=1 // pred_check
      _
    $region31: #{tpu_custom_call.1} parent=1 // pred_check_branch
      %99 = sbr.rel (0) target = $region33
    $region32: #{tpu_custom_call.1} parent=1 // pred_region
      %s101 = ssub.s32 4096, 4096
      %102 = vsyncadd [#allocation15], %s101
      %s103 = sshll.u32 [#allocation14], 4
      %s104 = int_to_ptr.vmem [resolvable:$true] %s103
      %109 = dma.hbm_to_vmem [thread:$0]  %s7, 4096, %s104, [#allocation15], 64, 64, 4
    $region33: #{tpu_custom_call.1} parent=1 // pred_fallthru
      _
    // Predicated region
    $region34: #{tpu_custom_call.1} parent=1 // pred_check
      _
    $region35: #{tpu_custom_call.1} parent=1 // pred_check_branch
      %111 = sbr.rel (0) target = $region37
    $region36: #{tpu_custom_call.1} parent=1 // pred_region
      %s113 = ssub.s32 16, 16
      %114 = vsyncadd [#allocation15], %s113
      %s116 = sshll.u32 [#allocation16], 4
      %s117 = int_to_ptr.vmem [resolvable:$true] %s116
      %119 = dma.hbm_to_vmem [thread:$0]  %s8, 16, %s117, [#allocation15]
    $region37: #{tpu_custom_call.1} parent=1 // pred_fallthru
      _
    // Predicated region
    $region38: #{tpu_custom_call.1} parent=1 // pred_check
      _
    $region39: #{tpu_custom_call.1} parent=1 // pred_check_branch
      %121 = sbr.rel (0) target = $region41
    $region40: #{tpu_custom_call.1} parent=1 // pred_region
      %122 = dma.done [#allocation3], 7168
    $region41: #{tpu_custom_call.1} parent=1 // pred_fallthru
      _
    // Predicated region
    $region42: #{tpu_custom_call.1} parent=1 // pred_check
      _
    $region43: #{tpu_custom_call.1} parent=1 // pred_check_branch
      %124 = sbr.rel (0) target = $region45
    $region44: #{tpu_custom_call.1} parent=1 // pred_region
      %125 = dma.done [#allocation6], 4608
    $region45: #{tpu_custom_call.1} parent=1 // pred_fallthru
      _
    // Predicated region
    $region46: #{tpu_custom_call.1} parent=1 // pred_check
      _
    $region47: #{tpu_custom_call.1} parent=1 // pred_check_branch
      %127 = sbr.rel (0) target = $region49
    $region48: #{tpu_custom_call.1} parent=1 // pred_region
      %128 = dma.done [#allocation6], 64
    $region49: #{tpu_custom_call.1} parent=1 // pred_fallthru
      _
    // Predicated region
    $region50: #{tpu_custom_call.1} parent=1 // pred_check
      _
    $region51: #{tpu_custom_call.1} parent=1 // pred_check_branch
      %130 = sbr.rel (0) target = $region53
    $region52: #{tpu_custom_call.1} parent=1 // pred_region
      %131 = dma.done [#allocation9], 40960
    $region53: #{tpu_custom_call.1} parent=1 // pred_fallthru
      _
    // Predicated region
    $region54: #{tpu_custom_call.1} parent=1 // pred_check
      _
    $region55: #{tpu_custom_call.1} parent=1 // pred_check_branch
      %133 = sbr.rel (0) target = $region57
    $region56: #{tpu_custom_call.1} parent=1 // pred_region
      %134 = dma.done [#allocation9], 64
    $region57: #{tpu_custom_call.1} parent=1 // pred_fallthru
      _
    // Predicated region
    $region58: #{tpu_custom_call.1} parent=1 // pred_check
      _
    $region59: #{tpu_custom_call.1} parent=1 // pred_check_branch
      %136 = sbr.rel (0) target = $region61
    $region60: #{tpu_custom_call.1} parent=1 // pred_region
      %137 = dma.done [#allocation12], 32768
    $region61: #{tpu_custom_call.1} parent=1 // pred_fallthru
      _
    // Predicated region
    $region62: #{tpu_custom_call.1} parent=1 // pred_check
      _
    $region63: #{tpu_custom_call.1} parent=1 // pred_check_branch
      %139 = sbr.rel (0) target = $region65
    $region64: #{tpu_custom_call.1} parent=1 // pred_region
      %140 = dma.done [#allocation12], 64
    $region65: #{tpu_custom_call.1} parent=1 // pred_fallthru
      _
    // Predicated region
    $region66: #{tpu_custom_call.1} parent=1 // pred_check
      _
    $region67: #{tpu_custom_call.1} parent=1 // pred_check_branch
      %142 = sbr.rel (0) target = $region69
    $region68: #{tpu_custom_call.1} parent=1 // pred_region
      %143 = dma.done [#allocation15], 4096
    $region69: #{tpu_custom_call.1} parent=1 // pred_fallthru
      _
    // Predicated region
    $region70: #{tpu_custom_call.1} parent=1 // pred_check
      _
    $region71: #{tpu_custom_call.1} parent=1 // pred_check_branch
      %145 = sbr.rel (0) target = $region73
    $region72: #{tpu_custom_call.1} parent=1 // pred_region
      %146 = dma.done [#allocation15], 16
    $region73: #{tpu_custom_call.1} parent=1 // pred_fallthru
      _
    %v148 = vld [vmem:[#allocation2] sm:$0xff]
    %v149 = vld [vmem:[#allocation2 + $0x8] sm:$0xff]
    %v150 = vld [vmem:[#allocation2 + $0x10] sm:$0xff]
    %v151 = vld [vmem:[#allocation2 + $0x18] sm:$0xff]
    %v152 = vld [vmem:[#allocation2 + $0x20] sm:$0xff]
    %v153 = vld [vmem:[#allocation2 + $0x28] sm:$0xff]
    %v154 = vld [vmem:[#allocation2 + $0x30] sm:$0xff]
    %v155 = vld [vmem:[#allocation2 + $0x38] sm:$0xff]
    %v156 = vld [vmem:[#allocation2 + $0x40] sm:$0xff]
    %v157 = vld [vmem:[#allocation2 + $0x48] sm:$0xff]
    %v158 = vld [vmem:[#allocation2 + $0x50] sm:$0xff]
    %v159 = vld [vmem:[#allocation2 + $0x58] sm:$0xff]
    %v160 = vld [vmem:[#allocation2 + $0x60] sm:$0xff]
    %v161 = vld [vmem:[#allocation2 + $0x68] sm:$0xff]
    %v162 = vld [vmem:[#allocation2 + $0x70] sm:$0xff]
    %v163 = vld [vmem:[#allocation2 + $0x78] sm:$0xff]
    %v164 = vld [vmem:[#allocation2 + $0x80] sm:$0xff]
    %v165 = vld [vmem:[#allocation2 + $0x88] sm:$0xff]
    %v166 = vld [vmem:[#allocation2 + $0x90] sm:$0xff]
    %v167 = vld [vmem:[#allocation2 + $0x98] sm:$0xff]
    %v168 = vld [vmem:[#allocation2 + $0xa0] sm:$0xff]
    %v169 = vld [vmem:[#allocation2 + $0xa8] sm:$0xff]
    %v170 = vld [vmem:[#allocation2 + $0xb0] sm:$0xff]
    %v171 = vld [vmem:[#allocation2 + $0xb8] sm:$0xff]
    %v172 = vld [vmem:[#allocation2 + $0xc0] sm:$0xff]
    %v173 = vld [vmem:[#allocation2 + $0xc8] sm:$0xff]
    %v174 = vld [vmem:[#allocation2 + $0xd0] sm:$0xff]
    %v175 = vld [vmem:[#allocation2 + $0xd8] sm:$0xff]
    %v176 = vld [vmem:[#allocation2 + $0xe0] sm:$0xff]
    %v177 = vld [vmem:[#allocation2 + $0xe8] sm:$0xff]
    %v178 = vld [vmem:[#allocation2 + $0xf0] sm:$0xff]
    %v179 = vld [vmem:[#allocation2 + $0xf8] sm:$0xff]
    %v180 = vld [vmem:[#allocation2 + $0x100] sm:$0xff]
    %v181 = vld [vmem:[#allocation2 + $0x108] sm:$0xff]
    %v182 = vld [vmem:[#allocation2 + $0x110] sm:$0xff]
    %v183 = vld [vmem:[#allocation2 + $0x118] sm:$0xff]
    %v184 = vld [vmem:[#allocation2 + $0x120] sm:$0xff]
    %v185 = vld [vmem:[#allocation2 + $0x128] sm:$0xff]
    %v186 = vld [vmem:[#allocation2 + $0x130] sm:$0xff]
    %v187 = vld [vmem:[#allocation2 + $0x138] sm:$0xff]
    %v188 = vld [vmem:[#allocation2 + $0x140] sm:$0xff]
    %v189 = vld [vmem:[#allocation2 + $0x148] sm:$0xff]
    %v190 = vld [vmem:[#allocation2 + $0x150] sm:$0xff]
    %v191 = vld [vmem:[#allocation2 + $0x158] sm:$0xff]
    %v192 = vld [vmem:[#allocation2 + $0x160] sm:$0xff]
    %v193 = vld [vmem:[#allocation2 + $0x168] sm:$0xff]
    %v194 = vld [vmem:[#allocation2 + $0x170] sm:$0xff]
    %v195 = vld [vmem:[#allocation2 + $0x178] sm:$0xff]
    %v196 = vld [vmem:[#allocation2 + $0x180] sm:$0xff]
    %v197 = vld [vmem:[#allocation2 + $0x188] sm:$0xff]
    %v198 = vld [vmem:[#allocation2 + $0x190] sm:$0xff]
    %v199 = vld [vmem:[#allocation2 + $0x198] sm:$0xff]
    %v200 = vld [vmem:[#allocation2 + $0x1a0] sm:$0xff]
    %v201 = vld [vmem:[#allocation2 + $0x1a8] sm:$0xff]
    %v202 = vld [vmem:[#allocation2 + $0x1b0] sm:$0xff]
    %v203 = vld [vmem:[#allocation2 + $0x1b8] sm:$0xff]
    %v204 = vpack.c.bf16 %v149, %v148
    %v205 = vpack.c.bf16 %v151, %v150
    %v206 = vpack.c.bf16 %v153, %v152
    %v207 = vpack.c.bf16 %v155, %v154
    %v208 = vpack.c.bf16 %v157, %v156
    %v209 = vpack.c.bf16 %v159, %v158
    %v210 = vpack.c.bf16 %v161, %v160
    %v211 = vpack.c.bf16 %v163, %v162
    %v212 = vpack.c.bf16 %v165, %v164
    %v213 = vpack.c.bf16 %v167, %v166
    %v214 = vpack.c.bf16 %v169, %v168
    %v215 = vpack.c.bf16 %v171, %v170
    %v216 = vpack.c.bf16 %v173, %v172
    %v217 = vpack.c.bf16 %v175, %v174
    %v218 = vpack.c.bf16 %v177, %v176
    %v219 = vpack.c.bf16 %v179, %v178
    %v220 = vpack.c.bf16 %v181, %v180
    %v221 = vpack.c.bf16 %v183, %v182
    %v222 = vpack.c.bf16 %v185, %v184
    %v223 = vpack.c.bf16 %v187, %v186
    %v224 = vpack.c.bf16 %v189, %v188
    %v225 = vpack.c.bf16 %v191, %v190
    %v226 = vpack.c.bf16 %v193, %v192
    %v227 = vpack.c.bf16 %v195, %v194
    %v228 = vpack.c.bf16 %v197, %v196
    %v229 = vpack.c.bf16 %v199, %v198
    %v230 = vpack.c.bf16 %v201, %v200
    %v231 = vpack.c.bf16 %v203, %v202
    %256 = vrot.lane.b32.xlu0 %v206, 56
    %v257 = vpop.permute.xlu0 %256
    %258 = vrot.lane.b32.xlu0 %v207, 56
    %v259 = vpop.permute.xlu0 %258
    %260 = vrot.lane.b32.xlu0 %v208, 56
    %v261 = vpop.permute.xlu0 %260
    %262 = vrot.lane.b32.xlu0 %v209, 56
    %v263 = vpop.permute.xlu0 %262
    %264 = vrot.lane.b32.xlu0 %v210, 56
    %v265 = vpop.permute.xlu0 %264
    %266 = vrot.lane.b32.xlu0 %v211, 56
    %v267 = vpop.permute.xlu0 %266
    %268 = vrot.lane.b32.xlu0 %v212, 56
    %v269 = vpop.permute.xlu0 %268
    %270 = vrot.lane.b32.xlu0 %v213, 56
    %v271 = vpop.permute.xlu0 %270
    %272 = vrot.lane.b32.xlu0 %v214, 56
    %v273 = vpop.permute.xlu0 %272
    %274 = vrot.lane.b32.xlu0 %v215, 56
    %v275 = vpop.permute.xlu0 %274
    %276 = vrot.lane.b32.xlu0 %v216, 56
    %v277 = vpop.permute.xlu0 %276
    %278 = vrot.lane.b32.xlu0 %v217, 56
    %v279 = vpop.permute.xlu0 %278
    %280 = vrot.lane.b32.xlu0 %v218, 56
    %v281 = vpop.permute.xlu0 %280
    %282 = vrot.lane.b32.xlu0 %v219, 56
    %v283 = vpop.permute.xlu0 %282
    %284 = vrot.lane.b32.xlu0 %v220, 56
    %v285 = vpop.permute.xlu0 %284
    %286 = vrot.lane.b32.xlu0 %v221, 56
    %v287 = vpop.permute.xlu0 %286
    %288 = vrot.lane.b32.xlu0 %v222, 56
    %v289 = vpop.permute.xlu0 %288
    %290 = vrot.lane.b32.xlu0 %v223, 56
    %v291 = vpop.permute.xlu0 %290
    %292 = vrot.lane.b32.xlu0 %v224, 56
    %v293 = vpop.permute.xlu0 %292
    %294 = vrot.lane.b32.xlu0 %v225, 56
    %v295 = vpop.permute.xlu0 %294
    %296 = vrot.lane.b32.xlu0 %v226, 56
    %v297 = vpop.permute.xlu0 %296
    %298 = vrot.lane.b32.xlu0 %v227, 56
    %v299 = vpop.permute.xlu0 %298
    %300 = vrot.lane.b32.xlu0 %v228, 56
    %v301 = vpop.permute.xlu0 %300
    %302 = vrot.lane.b32.xlu0 %v229, 56
    %v303 = vpop.permute.xlu0 %302
    %306 = vrot.lane.b32.xlu0 %v208, 112
    %v307 = vpop.permute.xlu0 %306
    %308 = vrot.lane.b32.xlu0 %v209, 112
    %v309 = vpop.permute.xlu0 %308
    %310 = vrot.lane.b32.xlu0 %v210, 112
    %v311 = vpop.permute.xlu0 %310
    %312 = vrot.lane.b32.xlu0 %v211, 112
    %v313 = vpop.permute.xlu0 %312
    %314 = vrot.lane.b32.xlu0 %v212, 112
    %v315 = vpop.permute.xlu0 %314
    %316 = vrot.lane.b32.xlu0 %v213, 112
    %v317 = vpop.permute.xlu0 %316
    %318 = vrot.lane.b32.xlu0 %v214, 112
    %v319 = vpop.permute.xlu0 %318
    %320 = vrot.lane.b32.xlu0 %v215, 112
    %v321 = vpop.permute.xlu0 %320
    %322 = vrot.lane.b32.xlu0 %v216, 112
    %v323 = vpop.permute.xlu0 %322
    %324 = vrot.lane.b32.xlu0 %v217, 112
    %v325 = vpop.permute.xlu0 %324
    %326 = vrot.lane.b32.xlu0 %v218, 112
    %v327 = vpop.permute.xlu0 %326
    %328 = vrot.lane.b32.xlu0 %v219, 112
    %v329 = vpop.permute.xlu0 %328
    %330 = vrot.lane.b32.xlu0 %v220, 112
    %v331 = vpop.permute.xlu0 %330
    %332 = vrot.lane.b32.xlu0 %v221, 112
    %v333 = vpop.permute.xlu0 %332
    %334 = vrot.lane.b32.xlu0 %v222, 112
    %v335 = vpop.permute.xlu0 %334
    %336 = vrot.lane.b32.xlu0 %v223, 112
    %v337 = vpop.permute.xlu0 %336
    %338 = vrot.lane.b32.xlu0 %v224, 112
    %v339 = vpop.permute.xlu0 %338
    %340 = vrot.lane.b32.xlu0 %v225, 112
    %v341 = vpop.permute.xlu0 %340
    %342 = vrot.lane.b32.xlu0 %v226, 112
    %v343 = vpop.permute.xlu0 %342
    %344 = vrot.lane.b32.xlu0 %v227, 112
    %v345 = vpop.permute.xlu0 %344
    %346 = vrot.lane.b32.xlu0 %v228, 112
    %v347 = vpop.permute.xlu0 %346
    %348 = vrot.lane.b32.xlu0 %v229, 112
    %v349 = vpop.permute.xlu0 %348
    %350 = vrot.lane.b32.xlu0 %v230, 112
    %v351 = vpop.permute.xlu0 %350
    %352 = vrot.lane.b32.xlu0 %v231, 112
    %v353 = vpop.permute.xlu0 %352
    %vm354 = vcmask 228352
    %vm379 = vcmask 457728
    %v381 = vsel %vm379, %v204, %v257
    %v383 = vsel %vm379, %v205, %v259
    %v385 = vsel %vm379, %v206, %v261
    %v387 = vsel %vm379, %v207, %v263
    %v389 = vsel %vm379, %v208, %v265
    %v391 = vsel %vm379, %v209, %v267
    %v393 = vsel %vm379, %v210, %v269
    %v395 = vsel %vm379, %v211, %v271
    %v397 = vsel %vm379, %v212, %v273
    %v399 = vsel %vm379, %v213, %v275
    %v401 = vsel %vm379, %v214, %v277
    %v403 = vsel %vm379, %v215, %v279
    %v405 = vsel %vm379, %v216, %v281
    %v407 = vsel %vm379, %v217, %v283
    %v409 = vsel %vm379, %v218, %v285
    %v411 = vsel %vm379, %v219, %v287
    %v413 = vsel %vm379, %v220, %v289
    %v415 = vsel %vm379, %v221, %v291
    %v417 = vsel %vm379, %v222, %v293
    %v419 = vsel %vm379, %v223, %v295
    %v421 = vsel %vm379, %v224, %v297
    %v423 = vsel %vm379, %v225, %v299
    %v425 = vsel %vm379, %v226, %v301
    %v427 = vsel %vm379, %v227, %v303
    %vm428 = vcmask 687104
    %v429 = vsel %vm428, %v381, %v257
    %v430 = vsel %vm428, %v383, %v259
    %v431 = vsel %vm428, %v385, %v261
    %v432 = vsel %vm428, %v387, %v263
    %v433 = vsel %vm428, %v389, %v265
    %v434 = vsel %vm428, %v391, %v267
    %v435 = vsel %vm428, %v393, %v269
    %v436 = vsel %vm428, %v395, %v271
    %v437 = vsel %vm428, %v397, %v273
    %v438 = vsel %vm428, %v399, %v275
    %v439 = vsel %vm428, %v401, %v277
    %v440 = vsel %vm428, %v403, %v279
    %v441 = vsel %vm428, %v405, %v281
    %v442 = vsel %vm428, %v407, %v283
    %v443 = vsel %vm428, %v409, %v285
    %v444 = vsel %vm428, %v411, %v287
    %v445 = vsel %vm428, %v413, %v289
    %v446 = vsel %vm428, %v415, %v291
    %v447 = vsel %vm428, %v417, %v293
    %v448 = vsel %vm428, %v419, %v295
    %v449 = vsel %vm428, %v421, %v297
    %v450 = vsel %vm428, %v423, %v299
    %v451 = vsel %vm428, %v425, %v301
    %v452 = vsel %vm428, %v427, %v303
    %vm453 = vcmask 916480
    %v455 = vsel %vm453, %v429, %v307
    %v458 = vsel %vm453, %v430, %v309
    %v461 = vsel %vm453, %v431, %v311
    %v464 = vsel %vm453, %v432, %v313
    %v467 = vsel %vm453, %v433, %v315
    %v470 = vsel %vm453, %v434, %v317
    %v473 = vsel %vm453, %v435, %v319
    %v476 = vsel %vm453, %v436, %v321
    %v479 = vsel %vm453, %v437, %v323
    %v482 = vsel %vm453, %v438, %v325
    %v485 = vsel %vm453, %v439, %v327
    %v488 = vsel %vm453, %v440, %v329
    %v491 = vsel %vm453, %v441, %v331
    %v494 = vsel %vm453, %v442, %v333
    %v497 = vsel %vm453, %v443, %v335
    %v500 = vsel %vm453, %v444, %v337
    %v503 = vsel %vm453, %v445, %v339
    %v506 = vsel %vm453, %v446, %v341
    %v509 = vsel %vm453, %v447, %v343
    %v512 = vsel %vm453, %v448, %v345
    %v515 = vsel %vm453, %v449, %v347
    %v518 = vsel %vm453, %v450, %v349
    %v521 = vsel %vm453, %v451, %v351
    %v524 = vsel %vm453, %v452, %v353
    %528 = vrot.lane.b32.xlu0 %v204, 100
    %v529 = vpop.permute.xlu0 %528
    %530 = vrot.lane.b32.xlu0 %v205, 100
    %v531 = vpop.permute.xlu0 %530
    %532 = vrot.lane.b32.xlu0 %v206, 100
    %v533 = vpop.permute.xlu0 %532
    %534 = vrot.lane.b32.xlu0 %v207, 100
    %v535 = vpop.permute.xlu0 %534
    %536 = vrot.lane.b32.xlu0 %v208, 100
    %v537 = vpop.permute.xlu0 %536
    %538 = vrot.lane.b32.xlu0 %v209, 100
    %v539 = vpop.permute.xlu0 %538
    %540 = vrot.lane.b32.xlu0 %v210, 100
    %v541 = vpop.permute.xlu0 %540
    %542 = vrot.lane.b32.xlu0 %v211, 100
    %v543 = vpop.permute.xlu0 %542
    %544 = vrot.lane.b32.xlu0 %v212, 100
    %v545 = vpop.permute.xlu0 %544
    %546 = vrot.lane.b32.xlu0 %v213, 100
    %v547 = vpop.permute.xlu0 %546
    %548 = vrot.lane.b32.xlu0 %v214, 100
    %v549 = vpop.permute.xlu0 %548
    %550 = vrot.lane.b32.xlu0 %v215, 100
    %v551 = vpop.permute.xlu0 %550
    %552 = vrot.lane.b32.xlu0 %v216, 100
    %v553 = vpop.permute.xlu0 %552
    %554 = vrot.lane.b32.xlu0 %v217, 100
    %v555 = vpop.permute.xlu0 %554
    %556 = vrot.lane.b32.xlu0 %v218, 100
    %v557 = vpop.permute.xlu0 %556
    %558 = vrot.lane.b32.xlu0 %v219, 100
    %v559 = vpop.permute.xlu0 %558
    %560 = vrot.lane.b32.xlu0 %v220, 100
    %v561 = vpop.permute.xlu0 %560
    %562 = vrot.lane.b32.xlu0 %v221, 100
    %v563 = vpop.permute.xlu0 %562
    %564 = vrot.lane.b32.xlu0 %v222, 100
    %v565 = vpop.permute.xlu0 %564
    %566 = vrot.lane.b32.xlu0 %v223, 100
    %v567 = vpop.permute.xlu0 %566
    %568 = vrot.lane.b32.xlu0 %v224, 100
    %v569 = vpop.permute.xlu0 %568
    %570 = vrot.lane.b32.xlu0 %v225, 100
    %v571 = vpop.permute.xlu0 %570
    %572 = vrot.lane.b32.xlu0 %v226, 100
    %v573 = vpop.permute.xlu0 %572
    %574 = vrot.lane.b32.xlu0 %v227, 100
    %v575 = vpop.permute.xlu0 %574
    %576 = vrot.lane.b32.xlu0 %v206, 28
    %v577 = vpop.permute.xlu0 %576
    %578 = vrot.lane.b32.xlu0 %v207, 28
    %v579 = vpop.permute.xlu0 %578
    %580 = vrot.lane.b32.xlu0 %v208, 28
    %v581 = vpop.permute.xlu0 %580
    %582 = vrot.lane.b32.xlu0 %v209, 28
    %v583 = vpop.permute.xlu0 %582
    %584 = vrot.lane.b32.xlu0 %v210, 28
    %v585 = vpop.permute.xlu0 %584
    %586 = vrot.lane.b32.xlu0 %v211, 28
    %v587 = vpop.permute.xlu0 %586
    %588 = vrot.lane.b32.xlu0 %v212, 28
    %v589 = vpop.permute.xlu0 %588
    %590 = vrot.lane.b32.xlu0 %v213, 28
    %v591 = vpop.permute.xlu0 %590
    %592 = vrot.lane.b32.xlu0 %v214, 28
    %v593 = vpop.permute.xlu0 %592
    %594 = vrot.lane.b32.xlu0 %v215, 28
    %v595 = vpop.permute.xlu0 %594
    %596 = vrot.lane.b32.xlu0 %v216, 28
    %v597 = vpop.permute.xlu0 %596
    %598 = vrot.lane.b32.xlu0 %v217, 28
    %v599 = vpop.permute.xlu0 %598
    %600 = vrot.lane.b32.xlu0 %v218, 28
    %v601 = vpop.permute.xlu0 %600
    %602 = vrot.lane.b32.xlu0 %v219, 28
    %v603 = vpop.permute.xlu0 %602
    %604 = vrot.lane.b32.xlu0 %v220, 28
    %v605 = vpop.permute.xlu0 %604
    %606 = vrot.lane.b32.xlu0 %v221, 28
    %v607 = vpop.permute.xlu0 %606
    %608 = vrot.lane.b32.xlu0 %v222, 28
    %v609 = vpop.permute.xlu0 %608
    %610 = vrot.lane.b32.xlu0 %v223, 28
    %v611 = vpop.permute.xlu0 %610
    %612 = vrot.lane.b32.xlu0 %v224, 28
    %v613 = vpop.permute.xlu0 %612
    %614 = vrot.lane.b32.xlu0 %v225, 28
    %v615 = vpop.permute.xlu0 %614
    %616 = vrot.lane.b32.xlu0 %v226, 28
    %v617 = vpop.permute.xlu0 %616
    %618 = vrot.lane.b32.xlu0 %v227, 28
    %v619 = vpop.permute.xlu0 %618
    %620 = vrot.lane.b32.xlu0 %v228, 28
    %v621 = vpop.permute.xlu0 %620
    %622 = vrot.lane.b32.xlu0 %v229, 28
    %v623 = vpop.permute.xlu0 %622
    %624 = vrot.lane.b32.xlu0 %v208, 84
    %v625 = vpop.permute.xlu0 %624
    %626 = vrot.lane.b32.xlu0 %v209, 84
    %v627 = vpop.permute.xlu0 %626
    %628 = vrot.lane.b32.xlu0 %v210, 84
    %v629 = vpop.permute.xlu0 %628
    %630 = vrot.lane.b32.xlu0 %v211, 84
    %v631 = vpop.permute.xlu0 %630
    %632 = vrot.lane.b32.xlu0 %v212, 84
    %v633 = vpop.permute.xlu0 %632
    %634 = vrot.lane.b32.xlu0 %v213, 84
    %v635 = vpop.permute.xlu0 %634
    %636 = vrot.lane.b32.xlu0 %v214, 84
    %v637 = vpop.permute.xlu0 %636
    %638 = vrot.lane.b32.xlu0 %v215, 84
    %v639 = vpop.permute.xlu0 %638
    %640 = vrot.lane.b32.xlu0 %v216, 84
    %v641 = vpop.permute.xlu0 %640
    %642 = vrot.lane.b32.xlu0 %v217, 84
    %v643 = vpop.permute.xlu0 %642
    %644 = vrot.lane.b32.xlu0 %v218, 84
    %v645 = vpop.permute.xlu0 %644
    %646 = vrot.lane.b32.xlu0 %v219, 84
    %v647 = vpop.permute.xlu0 %646
    %648 = vrot.lane.b32.xlu0 %v220, 84
    %v649 = vpop.permute.xlu0 %648
    %650 = vrot.lane.b32.xlu0 %v221, 84
    %v651 = vpop.permute.xlu0 %650
    %652 = vrot.lane.b32.xlu0 %v222, 84
    %v653 = vpop.permute.xlu0 %652
    %654 = vrot.lane.b32.xlu0 %v223, 84
    %v655 = vpop.permute.xlu0 %654
    %656 = vrot.lane.b32.xlu0 %v224, 84
    %v657 = vpop.permute.xlu0 %656
    %658 = vrot.lane.b32.xlu0 %v225, 84
    %v659 = vpop.permute.xlu0 %658
    %660 = vrot.lane.b32.xlu0 %v226, 84
    %v661 = vpop.permute.xlu0 %660
    %662 = vrot.lane.b32.xlu0 %v227, 84
    %v663 = vpop.permute.xlu0 %662
    %664 = vrot.lane.b32.xlu0 %v228, 84
    %v665 = vpop.permute.xlu0 %664
    %666 = vrot.lane.b32.xlu0 %v229, 84
    %v667 = vpop.permute.xlu0 %666
    %668 = vrot.lane.b32.xlu0 %v230, 84
    %v669 = vpop.permute.xlu0 %668
    %670 = vrot.lane.b32.xlu0 %v231, 84
    %v671 = vpop.permute.xlu0 %670
    %v674 = vsel %vm354, %v529, %v577
    %v677 = vsel %vm354, %v531, %v579
    %v680 = vsel %vm354, %v533, %v581
    %v683 = vsel %vm354, %v535, %v583
    %v686 = vsel %vm354, %v537, %v585
    %v689 = vsel %vm354, %v539, %v587
    %v692 = vsel %vm354, %v541, %v589
    %v695 = vsel %vm354, %v543, %v591
    %v698 = vsel %vm354, %v545, %v593
    %v701 = vsel %vm354, %v547, %v595
    %v704 = vsel %vm354, %v549, %v597
    %v707 = vsel %vm354, %v551, %v599
    %v710 = vsel %vm354, %v553, %v601
    %v713 = vsel %vm354, %v555, %v603
    %v716 = vsel %vm354, %v557, %v605
    %v719 = vsel %vm354, %v559, %v607
    %v722 = vsel %vm354, %v561, %v609
    %v725 = vsel %vm354, %v563, %v611
    %v728 = vsel %vm354, %v565, %v613
    %v731 = vsel %vm354, %v567, %v615
    %v734 = vsel %vm354, %v569, %v617
    %v737 = vsel %vm354, %v571, %v619
    %v740 = vsel %vm354, %v573, %v621
    %v743 = vsel %vm354, %v575, %v623
    %v744 = vsel %vm379, %v674, %v577
    %v745 = vsel %vm379, %v677, %v579
    %v746 = vsel %vm379, %v680, %v581
    %v747 = vsel %vm379, %v683, %v583
    %v748 = vsel %vm379, %v686, %v585
    %v749 = vsel %vm379, %v689, %v587
    %v750 = vsel %vm379, %v692, %v589
    %v751 = vsel %vm379, %v695, %v591
    %v752 = vsel %vm379, %v698, %v593
    %v753 = vsel %vm379, %v701, %v595
    %v754 = vsel %vm379, %v704, %v597
    %v755 = vsel %vm379, %v707, %v599
    %v756 = vsel %vm379, %v710, %v601
    %v757 = vsel %vm379, %v713, %v603
    %v758 = vsel %vm379, %v716, %v605
    %v759 = vsel %vm379, %v719, %v607
    %v760 = vsel %vm379, %v722, %v609
    %v761 = vsel %vm379, %v725, %v611
    %v762 = vsel %vm379, %v728, %v613
    %v763 = vsel %vm379, %v731, %v615
    %v764 = vsel %vm379, %v734, %v617
    %v765 = vsel %vm379, %v737, %v619
    %v766 = vsel %vm379, %v740, %v621
    %v767 = vsel %vm379, %v743, %v623
    %v769 = vsel %vm428, %v744, %v625
    %v771 = vsel %vm428, %v745, %v627
    %v773 = vsel %vm428, %v746, %v629
    %v775 = vsel %vm428, %v747, %v631
    %v777 = vsel %vm428, %v748, %v633
    %v779 = vsel %vm428, %v749, %v635
    %v781 = vsel %vm428, %v750, %v637
    %v783 = vsel %vm428, %v751, %v639
    %v785 = vsel %vm428, %v752, %v641
    %v787 = vsel %vm428, %v753, %v643
    %v789 = vsel %vm428, %v754, %v645
    %v791 = vsel %vm428, %v755, %v647
    %v793 = vsel %vm428, %v756, %v649
    %v795 = vsel %vm428, %v757, %v651
    %v797 = vsel %vm428, %v758, %v653
    %v799 = vsel %vm428, %v759, %v655
    %v801 = vsel %vm428, %v760, %v657
    %v803 = vsel %vm428, %v761, %v659
    %v805 = vsel %vm428, %v762, %v661
    %v807 = vsel %vm428, %v763, %v663
    %v809 = vsel %vm428, %v764, %v665
    %v811 = vsel %vm428, %v765, %v667
    %v813 = vsel %vm428, %v766, %v669
    %v815 = vsel %vm428, %v767, %v671
    %v816 = vsel %vm453, %v769, %v625
    %v818 = vsel %vm453, %v771, %v627
    %v820 = vsel %vm453, %v773, %v629
    %v822 = vsel %vm453, %v775, %v631
    %v824 = vsel %vm453, %v777, %v633
    %v826 = vsel %vm453, %v779, %v635
    %v828 = vsel %vm453, %v781, %v637
    %v830 = vsel %vm453, %v783, %v639
    %v832 = vsel %vm453, %v785, %v641
    %v834 = vsel %vm453, %v787, %v643
    %v836 = vsel %vm453, %v789, %v645
    %v838 = vsel %vm453, %v791, %v647
    %v840 = vsel %vm453, %v793, %v649
    %v842 = vsel %vm453, %v795, %v651
    %v844 = vsel %vm453, %v797, %v653
    %v846 = vsel %vm453, %v799, %v655
    %v848 = vsel %vm453, %v801, %v657
    %v850 = vsel %vm453, %v803, %v659
    %v852 = vsel %vm453, %v805, %v661
    %v854 = vsel %vm453, %v807, %v663
    %v856 = vsel %vm453, %v809, %v665
    %v858 = vsel %vm453, %v811, %v667
    %v860 = vsel %vm453, %v813, %v669
    %v862 = vsel %vm453, %v815, %v671
    %v864 = vld [vmem:[#allocation5] sm:$0xff]
    %v865 = vld [vmem:[#allocation5 + $0x8] sm:$0xff]
    %v866 = vld [vmem:[#allocation5 + $0x10] sm:$0xff]
    %v867 = vld [vmem:[#allocation5 + $0x18] sm:$0xff]
    %v868 = vld [vmem:[#allocation5 + $0x20] sm:$0xff]
    %v869 = vld [vmem:[#allocation5 + $0x28] sm:$0xff]
    %v870 = vld [vmem:[#allocation5 + $0x30] sm:$0xff]
    %v871 = vld [vmem:[#allocation5 + $0x38] sm:$0xff]
    %v872 = vld [vmem:[#allocation5 + $0x40] sm:$0xff]
    %v873 = vld [vmem:[#allocation5 + $0x48] sm:$0xff]
    %v874 = vld [vmem:[#allocation5 + $0x50] sm:$0xff]
    %v875 = vld [vmem:[#allocation5 + $0x58] sm:$0xff]
    %v876 = vld [vmem:[#allocation5 + $0x60] sm:$0xff]
    %v877 = vld [vmem:[#allocation5 + $0x68] sm:$0xff]
    %v878 = vld [vmem:[#allocation5 + $0x70] sm:$0xff]
    %v879 = vld [vmem:[#allocation5 + $0x78] sm:$0xff]
    %v880 = vld [vmem:[#allocation5 + $0x80] sm:$0xff]
    %v881 = vld [vmem:[#allocation5 + $0x88] sm:$0xff]
    %v882 = vld [vmem:[#allocation5 + $0x90] sm:$0xff]
    %v883 = vld [vmem:[#allocation5 + $0x98] sm:$0xff]
    %v884 = vld [vmem:[#allocation5 + $0xa0] sm:$0xff]
    %v885 = vld [vmem:[#allocation5 + $0xa8] sm:$0xff]
    %v886 = vld [vmem:[#allocation5 + $0xb0] sm:$0xff]
    %v887 = vld [vmem:[#allocation5 + $0xb8] sm:$0xff]
    %v888 = vld [vmem:[#allocation5 + $0xc0] sm:$0xff]
    %v889 = vld [vmem:[#allocation5 + $0xc8] sm:$0xff]
    %v890 = vld [vmem:[#allocation5 + $0xd0] sm:$0xff]
    %v891 = vld [vmem:[#allocation5 + $0xd8] sm:$0xff]
    %v892 = vld [vmem:[#allocation5 + $0xe0] sm:$0xff]
    %v893 = vld [vmem:[#allocation5 + $0xe8] sm:$0xff]
    %v894 = vld [vmem:[#allocation5 + $0xf0] sm:$0xff]
    %v895 = vld [vmem:[#allocation5 + $0xf8] sm:$0xff]
    %v896 = vld [vmem:[#allocation5 + $0x100] sm:$0xff]
    %v897 = vld [vmem:[#allocation5 + $0x108] sm:$0xff]
    %v898 = vld [vmem:[#allocation5 + $0x110] sm:$0x33]
    %v899 = vld [vmem:[#allocation5 + $0x118] sm:$0x33]
    %v900 = vld [vmem:[#allocation7] sm:$0xf]
    %v902 = vlaneseq
    %v903 = vshrl.u32 %v902, 7
    %v904 = vsub.s32 0, %v903
    %v905 = vrot.slane %v900, %v904
    %v906 = vlaneseq
    %v907 = vshrl.u32 %v906, 7
    %v908 = vsub.s32 1, %v907
    %v909 = vrot.slane %v900, %v908
    %v910 = vlaneseq
    %v911 = vshrl.u32 %v910, 7
    %v912 = vsub.s32 2, %v911
    %v913 = vrot.slane %v900, %v912
    %v914 = vlaneseq
    %v915 = vshrl.u32 %v914, 7
    %v916 = vsub.s32 3, %v915
    %v917 = vrot.slane %v900, %v916
    %v958 = vunpack.c.l.b16 %v864
    %v959 = vunpack.c.h.b16 %v864
    %v960 = vunpack.c.l.b16 %v865
    %v961 = vunpack.c.h.b16 %v865
    %v962 = vunpack.c.l.b16 %v866
    %v963 = vunpack.c.h.b16 %v866
    %v964 = vunpack.c.l.b16 %v867
    %v965 = vunpack.c.h.b16 %v867
    %v966 = vunpack.c.l.b16 %v868
    %v967 = vunpack.c.h.b16 %v868
    %v968 = vunpack.c.l.b16 %v869
    %v969 = vunpack.c.h.b16 %v869
    %v970 = vunpack.c.l.b16 %v870
    %v971 = vunpack.c.h.b16 %v870
    %v972 = vunpack.c.l.b16 %v871
    %v973 = vunpack.c.h.b16 %v871
    %v974 = vunpack.c.l.b16 %v872
    %v975 = vunpack.c.h.b16 %v872
    %v976 = vunpack.c.l.b16 %v873
    %v977 = vunpack.c.h.b16 %v873
    %v978 = vunpack.c.l.b16 %v874
    %v979 = vunpack.c.h.b16 %v874
    %v980 = vunpack.c.l.b16 %v875
    %v981 = vunpack.c.h.b16 %v875
    %v982 = vunpack.c.l.b16 %v876
    %v983 = vunpack.c.h.b16 %v876
    %v984 = vunpack.c.l.b16 %v877
    %v985 = vunpack.c.h.b16 %v877
    %v986 = vunpack.c.l.b16 %v878
    %v987 = vunpack.c.h.b16 %v878
    %v988 = vunpack.c.l.b16 %v879
    %v989 = vunpack.c.h.b16 %v879
    %v990 = vunpack.c.l.b16 %v880
    %v991 = vunpack.c.h.b16 %v880
    %v992 = vunpack.c.l.b16 %v881
    %v993 = vunpack.c.h.b16 %v881
    %v994 = vunpack.c.l.b16 %v882
    %v995 = vunpack.c.h.b16 %v882
    %v996 = vunpack.c.l.b16 %v883
    %v997 = vunpack.c.h.b16 %v883
    %v998 = vunpack.c.l.b16 %v884
    %v999 = vunpack.c.h.b16 %v884
    %v1000 = vunpack.c.l.b16 %v885
    %v1001 = vunpack.c.h.b16 %v885
    %v1002 = vunpack.c.l.b16 %v886
    %v1003 = vunpack.c.h.b16 %v886
    %v1004 = vunpack.c.l.b16 %v887
    %v1005 = vunpack.c.h.b16 %v887
    %v1006 = vunpack.c.l.b16 %v888
    %v1007 = vunpack.c.h.b16 %v888
    %v1008 = vunpack.c.l.b16 %v889
    %v1009 = vunpack.c.h.b16 %v889
    %v1010 = vunpack.c.l.b16 %v890
    %v1011 = vunpack.c.h.b16 %v890
    %v1012 = vunpack.c.l.b16 %v891
    %v1013 = vunpack.c.h.b16 %v891
    %v1014 = vunpack.c.l.b16 %v892
    %v1015 = vunpack.c.h.b16 %v892
    %v1016 = vunpack.c.l.b16 %v893
    %v1017 = vunpack.c.h.b16 %v893
    %v1018 = vunpack.c.l.b16 %v894
    %v1019 = vunpack.c.h.b16 %v894
    %v1020 = vunpack.c.l.b16 %v895
    %v1021 = vunpack.c.h.b16 %v895
    %v1022 = vunpack.c.l.b16 %v896
    %v1023 = vunpack.c.h.b16 %v896
    %v1024 = vunpack.c.l.b16 %v897
    %v1025 = vunpack.c.h.b16 %v897
    %v1026 = vunpack.c.l.b16 %v898
    %v1027 = vunpack.c.h.b16 %v898
    %v1028 = vunpack.c.l.b16 %v899
    %v1029 = vunpack.c.h.b16 %v899
    %v1030 = vpack.c.b16 %v962, %v958
    %v1031 = vpack.c.b16 %v963, %v959
    %v1032 = vpack.c.b16 %v964, %v960
    %v1033 = vpack.c.b16 %v965, %v961
    %v1034 = vpack.c.b16 %v970, %v966
    %v1035 = vpack.c.b16 %v971, %v967
    %v1036 = vpack.c.b16 %v972, %v968
    %v1037 = vpack.c.b16 %v973, %v969
    %v1038 = vpack.c.b16 %v978, %v974
    %v1039 = vpack.c.b16 %v979, %v975
    %v1040 = vpack.c.b16 %v980, %v976
    %v1041 = vpack.c.b16 %v981, %v977
    %v1042 = vpack.c.b16 %v986, %v982
    %v1043 = vpack.c.b16 %v987, %v983
    %v1044 = vpack.c.b16 %v988, %v984
    %v1045 = vpack.c.b16 %v989, %v985
    %v1046 = vpack.c.b16 %v994, %v990
    %v1047 = vpack.c.b16 %v995, %v991
    %v1048 = vpack.c.b16 %v996, %v992
    %v1049 = vpack.c.b16 %v997, %v993
    %v1050 = vpack.c.b16 %v1002, %v998
    %v1051 = vpack.c.b16 %v1003, %v999
    %v1052 = vpack.c.b16 %v1004, %v1000
    %v1053 = vpack.c.b16 %v1005, %v1001
    %v1054 = vpack.c.b16 %v1010, %v1006
    %v1055 = vpack.c.b16 %v1011, %v1007
    %v1056 = vpack.c.b16 %v1012, %v1008
    %v1057 = vpack.c.b16 %v1013, %v1009
    %v1058 = vpack.c.b16 %v1018, %v1014
    %v1059 = vpack.c.b16 %v1019, %v1015
    %v1060 = vpack.c.b16 %v1020, %v1016
    %v1061 = vpack.c.b16 %v1021, %v1017
    %v1062 = vpack.c.b16 %v1026, %v1022
    %v1063 = vpack.c.b16 %v1027, %v1023
    %v1064 = vpack.c.b16 %v1028, %v1024
    %v1065 = vpack.c.b16 %v1029, %v1025
    %vm1098 = vcmask 97280
    %v1099 = vsel %vm1098, %v307, 0
    %v1101 = vsel %vm1098, %v309, 0
    %v1103 = vsel %vm1098, %v311, 0
    %v1105 = vsel %vm1098, %v313, 0
    %v1107 = vsel %vm1098, %v315, 0
    %v1109 = vsel %vm1098, %v317, 0
    %v1111 = vsel %vm1098, %v319, 0
    %v1113 = vsel %vm1098, %v321, 0
    %v1115 = vsel %vm1098, %v323, 0
    %v1117 = vsel %vm1098, %v325, 0
    %v1119 = vsel %vm1098, %v327, 0
    %v1121 = vsel %vm1098, %v329, 0
    %v1123 = vsel %vm1098, %v331, 0
    %v1125 = vsel %vm1098, %v333, 0
    %v1127 = vsel %vm1098, %v335, 0
    %v1129 = vsel %vm1098, %v337, 0
    %v1131 = vsel %vm1098, %v339, 0
    %v1133 = vsel %vm1098, %v341, 0
    %v1135 = vsel %vm1098, %v343, 0
    %v1137 = vsel %vm1098, %v345, 0
    %v1139 = vsel %vm1098, %v347, 0
    %v1141 = vsel %vm1098, %v349, 0
    %v1143 = vsel %vm1098, %v351, 0
    %v1145 = vsel %vm1098, %v353, 0
    %vm1147 = vcmask 1045504
    %v1149 = vsel %vm1147, %v1062, 0
    %v1152 = vsel %vm1147, %v1063, 0
    %v1155 = vsel %vm1147, %v1064, 0
    %v1158 = vsel %vm1147, %v1065, 0
    %1160 = vmatprep.subr.bf16.mxu0 %v1059
    %1161 = vmatpush1.bf16.msra.mxu0 %v1058
    %1162 = vmatprep.subr.bf16.mxu0 %v1055
    %1163 = vmatpush1.bf16.msra.mxu0 %v1054
    %1164 = vmatprep.subr.bf16.mxu0 %v1051
    %1165 = vmatpush1.bf16.msra.mxu0 %v1050
    %1166 = vmatprep.subr.bf16.mxu0 %v1047
    %1167 = vmatpush1.bf16.msra.mxu0 %v1046
    %1168 = vmatprep.subr.bf16.mxu0 %v1043
    %1169 = vmatpush1.bf16.msra.mxu0 %v1042
    %1170 = vmatprep.subr.bf16.mxu0 %v1039
    %1171 = vmatpush1.bf16.msra.mxu0 %v1038
    %1172 = vmatprep.subr.bf16.mxu0 %v1035
    %1173 = vmatpush1.bf16.msra.mxu0 %v1034
    %1174 = vmatprep.subr.bf16.mxu0 %v1031
    %1175 = vmatpush1.bf16.msra.mxu0 %v1030
    %1176 = vmatprep.subr.bf16.mxu0 0
    %1177 = vmatpush2.bf16.msra.mxu0 0
    %1178 = vmatprep.subr.bf16.mxu0 0
    %1179 = vmatpush2.bf16.msra.mxu0 0
    %1180 = vmatprep.subr.bf16.mxu0 0
    %1181 = vmatpush2.bf16.msra.mxu0 0
    %1182 = vmatprep.subr.bf16.mxu0 0
    %1183 = vmatpush2.bf16.msra.mxu0 0
    %1184 = vmatprep.subr.bf16.mxu0 0
    %1185 = vmatpush2.bf16.msra.mxu0 0
    %1186 = vmatprep.subr.bf16.mxu0 0
    %1187 = vmatpush2.bf16.msra.mxu0 0
    %1188 = vmatprep.subr.bf16.mxu0 0
    %1189 = vmatpush2.bf16.msra.mxu0 0
    %1190 = vmatprep.subr.bf16.mxu0 %v1152
    %1191 = vmatpush2.bf16.msra.mxu0 %v1149
    %1192 = vmatprep.mubr.bf16.mxu0 %v1099
    %1193 = vmatmul.mubr.bf16.gmra.mxu0 %v455
    %v1194 = vpop.f32.mrf.mxu0
    %v1195 = vadd.f32 %v905, %v1194
    %v1196 = vpop.f32.mrf.mxu0
    %v1197 = vadd.f32 %v909, %v1196
    %v1198 = vpop.f32.mrf.mxu0
    %v1199 = vadd.f32 %v905, %v1198
    %v1200 = vpop.f32.mrf.mxu0
    %v1201 = vadd.f32 %v909, %v1200
    %1202 = vmatprep.mubr.bf16.mxu0 %v1101
    %1203 = vmatmul.mubr.bf16.gmra.mxu0 %v458
    %v1204 = vpop.f32.mrf.mxu0
    %v1205 = vadd.f32 %v905, %v1204
    %v1206 = vpop.f32.mrf.mxu0
    %v1207 = vadd.f32 %v909, %v1206
    %v1208 = vpop.f32.mrf.mxu0
    %v1209 = vadd.f32 %v905, %v1208
    %v1210 = vpop.f32.mrf.mxu0
    %v1211 = vadd.f32 %v909, %v1210
    %1212 = vmatprep.mubr.bf16.mxu0 %v1103
    %1213 = vmatmul.mubr.bf16.gmra.mxu0 %v461
    %v1214 = vpop.f32.mrf.mxu0
    %v1215 = vadd.f32 %v905, %v1214
    %v1216 = vpop.f32.mrf.mxu0
    %v1217 = vadd.f32 %v909, %v1216
    %v1218 = vpop.f32.mrf.mxu0
    %v1219 = vadd.f32 %v905, %v1218
    %v1220 = vpop.f32.mrf.mxu0
    %v1221 = vadd.f32 %v909, %v1220
    %1222 = vmatprep.mubr.bf16.mxu0 %v1105
    %1223 = vmatmul.mubr.bf16.gmra.mxu0 %v464
    %v1224 = vpop.f32.mrf.mxu0
    %v1225 = vadd.f32 %v905, %v1224
    %v1226 = vpop.f32.mrf.mxu0
    %v1227 = vadd.f32 %v909, %v1226
    %v1228 = vpop.f32.mrf.mxu0
    %v1229 = vadd.f32 %v905, %v1228
    %v1230 = vpop.f32.mrf.mxu0
    %v1231 = vadd.f32 %v909, %v1230
    %1232 = vmatprep.mubr.bf16.mxu0 %v1107
    %1233 = vmatmul.mubr.bf16.gmra.mxu0 %v467
    %v1234 = vpop.f32.mrf.mxu0
    %v1235 = vadd.f32 %v905, %v1234
    %v1236 = vpop.f32.mrf.mxu0
    %v1237 = vadd.f32 %v909, %v1236
    %v1238 = vpop.f32.mrf.mxu0
    %v1239 = vadd.f32 %v905, %v1238
    %v1240 = vpop.f32.mrf.mxu0
    %v1241 = vadd.f32 %v909, %v1240
    %1242 = vmatprep.mubr.bf16.mxu0 %v1109
    %1243 = vmatmul.mubr.bf16.gmra.mxu0 %v470
    %v1244 = vpop.f32.mrf.mxu0
    %v1245 = vadd.f32 %v905, %v1244
    %v1246 = vpop.f32.mrf.mxu0
    %v1247 = vadd.f32 %v909, %v1246
    %v1248 = vpop.f32.mrf.mxu0
    %v1249 = vadd.f32 %v905, %v1248
    %v1250 = vpop.f32.mrf.mxu0
    %v1251 = vadd.f32 %v909, %v1250
    %1252 = vmatprep.mubr.bf16.mxu0 %v1111
    %1253 = vmatmul.mubr.bf16.gmra.mxu0 %v473
    %v1254 = vpop.f32.mrf.mxu0
    %v1255 = vadd.f32 %v905, %v1254
    %v1256 = vpop.f32.mrf.mxu0
    %v1257 = vadd.f32 %v909, %v1256
    %v1258 = vpop.f32.mrf.mxu0
    %v1259 = vadd.f32 %v905, %v1258
    %v1260 = vpop.f32.mrf.mxu0
    %v1261 = vadd.f32 %v909, %v1260
    %1262 = vmatprep.mubr.bf16.mxu0 %v1113
    %1263 = vmatmul.mubr.bf16.gmra.mxu0 %v476
    %v1264 = vpop.f32.mrf.mxu0
    %v1265 = vadd.f32 %v905, %v1264
    %v1266 = vpop.f32.mrf.mxu0
    %v1267 = vadd.f32 %v909, %v1266
    %v1268 = vpop.f32.mrf.mxu0
    %v1269 = vadd.f32 %v905, %v1268
    %v1270 = vpop.f32.mrf.mxu0
    %v1271 = vadd.f32 %v909, %v1270
    %1272 = vmatprep.mubr.bf16.mxu0 %v1115
    %1273 = vmatmul.mubr.bf16.gmra.mxu0 %v479
    %v1274 = vpop.f32.mrf.mxu0
    %v1275 = vadd.f32 %v905, %v1274
    %v1276 = vpop.f32.mrf.mxu0
    %v1277 = vadd.f32 %v909, %v1276
    %v1278 = vpop.f32.mrf.mxu0
    %v1279 = vadd.f32 %v905, %v1278
    %v1280 = vpop.f32.mrf.mxu0
    %v1281 = vadd.f32 %v909, %v1280
    %1282 = vmatprep.mubr.bf16.mxu0 %v1117
    %1283 = vmatmul.mubr.bf16.gmra.mxu0 %v482
    %v1284 = vpop.f32.mrf.mxu0
    %v1285 = vadd.f32 %v905, %v1284
    %v1286 = vpop.f32.mrf.mxu0
    %v1287 = vadd.f32 %v909, %v1286
    %v1288 = vpop.f32.mrf.mxu0
    %v1289 = vadd.f32 %v905, %v1288
    %v1290 = vpop.f32.mrf.mxu0
    %v1291 = vadd.f32 %v909, %v1290
    %1292 = vmatprep.mubr.bf16.mxu0 %v1119
    %1293 = vmatmul.mubr.bf16.gmra.mxu0 %v485
    %v1294 = vpop.f32.mrf.mxu0
    %v1295 = vadd.f32 %v905, %v1294
    %v1296 = vpop.f32.mrf.mxu0
    %v1297 = vadd.f32 %v909, %v1296
    %v1298 = vpop.f32.mrf.mxu0
    %v1299 = vadd.f32 %v905, %v1298
    %v1300 = vpop.f32.mrf.mxu0
    %v1301 = vadd.f32 %v909, %v1300
    %1302 = vmatprep.mubr.bf16.mxu0 %v1121
    %1303 = vmatmul.mubr.bf16.gmra.mxu0 %v488
    %v1304 = vpop.f32.mrf.mxu0
    %v1305 = vadd.f32 %v905, %v1304
    %v1306 = vpop.f32.mrf.mxu0
    %v1307 = vadd.f32 %v909, %v1306
    %v1308 = vpop.f32.mrf.mxu0
    %v1309 = vadd.f32 %v905, %v1308
    %v1310 = vpop.f32.mrf.mxu0
    %v1311 = vadd.f32 %v909, %v1310
    %1312 = vmatprep.mubr.bf16.mxu0 %v1123
    %1313 = vmatmul.mubr.bf16.gmra.mxu0 %v491
    %v1314 = vpop.f32.mrf.mxu0
    %v1315 = vadd.f32 %v905, %v1314
    %v1316 = vpop.f32.mrf.mxu0
    %v1317 = vadd.f32 %v909, %v1316
    %v1318 = vpop.f32.mrf.mxu0
    %v1319 = vadd.f32 %v905, %v1318
    %v1320 = vpop.f32.mrf.mxu0
    %v1321 = vadd.f32 %v909, %v1320
    %1322 = vmatprep.mubr.bf16.mxu0 %v1125
    %1323 = vmatmul.mubr.bf16.gmra.mxu0 %v494
    %v1324 = vpop.f32.mrf.mxu0
    %v1325 = vadd.f32 %v905, %v1324
    %v1326 = vpop.f32.mrf.mxu0
    %v1327 = vadd.f32 %v909, %v1326
    %v1328 = vpop.f32.mrf.mxu0
    %v1329 = vadd.f32 %v905, %v1328
    %v1330 = vpop.f32.mrf.mxu0
    %v1331 = vadd.f32 %v909, %v1330
    %1332 = vmatprep.mubr.bf16.mxu0 %v1127
    %1333 = vmatmul.mubr.bf16.gmra.mxu0 %v497
    %v1334 = vpop.f32.mrf.mxu0
    %v1335 = vadd.f32 %v905, %v1334
    %v1336 = vpop.f32.mrf.mxu0
    %v1337 = vadd.f32 %v909, %v1336
    %v1338 = vpop.f32.mrf.mxu0
    %v1339 = vadd.f32 %v905, %v1338
    %v1340 = vpop.f32.mrf.mxu0
    %v1341 = vadd.f32 %v909, %v1340
    %1342 = vmatprep.mubr.bf16.mxu0 %v1129
    %1343 = vmatmul.mubr.bf16.gmra.mxu0 %v500
    %v1344 = vpop.f32.mrf.mxu0
    %v1345 = vadd.f32 %v905, %v1344
    %v1346 = vpop.f32.mrf.mxu0
    %v1347 = vadd.f32 %v909, %v1346
    %v1348 = vpop.f32.mrf.mxu0
    %v1349 = vadd.f32 %v905, %v1348
    %v1350 = vpop.f32.mrf.mxu0
    %v1351 = vadd.f32 %v909, %v1350
    %1352 = vmatprep.mubr.bf16.mxu0 %v1131
    %1353 = vmatmul.mubr.bf16.gmra.mxu0 %v503
    %v1354 = vpop.f32.mrf.mxu0
    %v1355 = vadd.f32 %v905, %v1354
    %v1356 = vpop.f32.mrf.mxu0
    %v1357 = vadd.f32 %v909, %v1356
    %v1358 = vpop.f32.mrf.mxu0
    %v1359 = vadd.f32 %v905, %v1358
    %v1360 = vpop.f32.mrf.mxu0
    %v1361 = vadd.f32 %v909, %v1360
    %1362 = vmatprep.mubr.bf16.mxu0 %v1133
    %1363 = vmatmul.mubr.bf16.gmra.mxu0 %v506
    %v1364 = vpop.f32.mrf.mxu0
    %v1365 = vadd.f32 %v905, %v1364
    %v1366 = vpop.f32.mrf.mxu0
    %v1367 = vadd.f32 %v909, %v1366
    %v1368 = vpop.f32.mrf.mxu0
    %v1369 = vadd.f32 %v905, %v1368
    %v1370 = vpop.f32.mrf.mxu0
    %v1371 = vadd.f32 %v909, %v1370
    %1372 = vmatprep.mubr.bf16.mxu0 %v1135
    %1373 = vmatmul.mubr.bf16.gmra.mxu0 %v509
    %v1374 = vpop.f32.mrf.mxu0
    %v1375 = vadd.f32 %v905, %v1374
    %v1376 = vpop.f32.mrf.mxu0
    %v1377 = vadd.f32 %v909, %v1376
    %v1378 = vpop.f32.mrf.mxu0
    %v1379 = vadd.f32 %v905, %v1378
    %v1380 = vpop.f32.mrf.mxu0
    %v1381 = vadd.f32 %v909, %v1380
    %1382 = vmatprep.mubr.bf16.mxu0 %v1137
    %1383 = vmatmul.mubr.bf16.gmra.mxu0 %v512
    %v1384 = vpop.f32.mrf.mxu0
    %v1385 = vadd.f32 %v905, %v1384
    %v1386 = vpop.f32.mrf.mxu0
    %v1387 = vadd.f32 %v909, %v1386
    %v1388 = vpop.f32.mrf.mxu0
    %v1389 = vadd.f32 %v905, %v1388
    %v1390 = vpop.f32.mrf.mxu0
    %v1391 = vadd.f32 %v909, %v1390
    %1392 = vmatprep.mubr.bf16.mxu0 %v1139
    %1393 = vmatmul.mubr.bf16.gmra.mxu0 %v515
    %v1394 = vpop.f32.mrf.mxu0
    %v1395 = vadd.f32 %v905, %v1394
    %v1396 = vpop.f32.mrf.mxu0
    %v1397 = vadd.f32 %v909, %v1396
    %v1398 = vpop.f32.mrf.mxu0
    %v1399 = vadd.f32 %v905, %v1398
    %v1400 = vpop.f32.mrf.mxu0
    %v1401 = vadd.f32 %v909, %v1400
    %1402 = vmatprep.mubr.bf16.mxu0 %v1141
    %1403 = vmatmul.mubr.bf16.gmra.mxu0 %v518
    %v1404 = vpop.f32.mrf.mxu0
    %v1405 = vadd.f32 %v905, %v1404
    %v1406 = vpop.f32.mrf.mxu0
    %v1407 = vadd.f32 %v909, %v1406
    %v1408 = vpop.f32.mrf.mxu0
    %v1409 = vadd.f32 %v905, %v1408
    %v1410 = vpop.f32.mrf.mxu0
    %v1411 = vadd.f32 %v909, %v1410
    %1412 = vmatprep.mubr.bf16.mxu0 %v1143
    %1413 = vmatmul.mubr.bf16.gmra.mxu0 %v521
    %v1414 = vpop.f32.mrf.mxu0
    %v1415 = vadd.f32 %v905, %v1414
    %v1416 = vpop.f32.mrf.mxu0
    %v1417 = vadd.f32 %v909, %v1416
    %v1418 = vpop.f32.mrf.mxu0
    %v1419 = vadd.f32 %v905, %v1418
    %v1420 = vpop.f32.mrf.mxu0
    %v1421 = vadd.f32 %v909, %v1420
    %1422 = vmatprep.mubr.bf16.mxu0 %v1145
    %1423 = vmatmul.mubr.bf16.gmra.mxu0 %v524
    %v1424 = vpop.f32.mrf.mxu0
    %v1425 = vadd.f32 %v905, %v1424
    %v1426 = vpop.f32.mrf.mxu0
    %v1427 = vadd.f32 %v909, %v1426
    %v1428 = vpop.f32.mrf.mxu0
    %v1429 = vadd.f32 %v905, %v1428
    %v1430 = vpop.f32.mrf.mxu0
    %v1431 = vadd.f32 %v909, %v1430
    %1432 = vdwg.mxu0
    %1433 = vmatprep.subr.bf16.mxu0 %v1061
    %1434 = vmatpush1.bf16.msra.mxu0 %v1060
    %1435 = vmatprep.subr.bf16.mxu0 %v1057
    %1436 = vmatpush1.bf16.msra.mxu0 %v1056
    %1437 = vmatprep.subr.bf16.mxu0 %v1053
    %1438 = vmatpush1.bf16.msra.mxu0 %v1052
    %1439 = vmatprep.subr.bf16.mxu0 %v1049
    %1440 = vmatpush1.bf16.msra.mxu0 %v1048
    %1441 = vmatprep.subr.bf16.mxu0 %v1045
    %1442 = vmatpush1.bf16.msra.mxu0 %v1044
    %1443 = vmatprep.subr.bf16.mxu0 %v1041
    %1444 = vmatpush1.bf16.msra.mxu0 %v1040
    %1445 = vmatprep.subr.bf16.mxu0 %v1037
    %1446 = vmatpush1.bf16.msra.mxu0 %v1036
    %1447 = vmatprep.subr.bf16.mxu0 %v1033
    %1448 = vmatpush1.bf16.msra.mxu0 %v1032
    %1449 = vmatprep.subr.bf16.mxu0 0
    %1450 = vmatpush2.bf16.msra.mxu0 0
    %1451 = vmatprep.subr.bf16.mxu0 0
    %1452 = vmatpush2.bf16.msra.mxu0 0
    %1453 = vmatprep.subr.bf16.mxu0 0
    %1454 = vmatpush2.bf16.msra.mxu0 0
    %1455 = vmatprep.subr.bf16.mxu0 0
    %1456 = vmatpush2.bf16.msra.mxu0 0
    %1457 = vmatprep.subr.bf16.mxu0 0
    %1458 = vmatpush2.bf16.msra.mxu0 0
    %1459 = vmatprep.subr.bf16.mxu0 0
    %1460 = vmatpush2.bf16.msra.mxu0 0
    %1461 = vmatprep.subr.bf16.mxu0 0
    %1462 = vmatpush2.bf16.msra.mxu0 0
    %1463 = vmatprep.subr.bf16.mxu0 %v1158
    %1464 = vmatpush2.bf16.msra.mxu0 %v1155
    %1465 = vmatprep.mubr.bf16.mxu0 %v1099
    %1466 = vmatmul.mubr.bf16.gmra.mxu0 %v455
    %v1467 = vpop.f32.mrf.mxu0
    %v1468 = vadd.f32 %v913, %v1467
    %v1469 = vpop.f32.mrf.mxu0
    %v1470 = vadd.f32 %v917, %v1469
    %v1471 = vpop.f32.mrf.mxu0
    %v1472 = vadd.f32 %v913, %v1471
    %v1473 = vpop.f32.mrf.mxu0
    %v1474 = vadd.f32 %v917, %v1473
    %1475 = vmatprep.mubr.bf16.mxu0 %v1101
    %1476 = vmatmul.mubr.bf16.gmra.mxu0 %v458
    %v1477 = vpop.f32.mrf.mxu0
    %v1478 = vadd.f32 %v913, %v1477
    %v1479 = vpop.f32.mrf.mxu0
    %v1480 = vadd.f32 %v917, %v1479
    %v1481 = vpop.f32.mrf.mxu0
    %v1482 = vadd.f32 %v913, %v1481
    %v1483 = vpop.f32.mrf.mxu0
    %v1484 = vadd.f32 %v917, %v1483
    %1485 = vmatprep.mubr.bf16.mxu0 %v1103
    %1486 = vmatmul.mubr.bf16.gmra.mxu0 %v461
    %v1487 = vpop.f32.mrf.mxu0
    %v1488 = vadd.f32 %v913, %v1487
    %v1489 = vpop.f32.mrf.mxu0
    %v1490 = vadd.f32 %v917, %v1489
    %v1491 = vpop.f32.mrf.mxu0
    %v1492 = vadd.f32 %v913, %v1491
    %v1493 = vpop.f32.mrf.mxu0
    %v1494 = vadd.f32 %v917, %v1493
    %1495 = vmatprep.mubr.bf16.mxu0 %v1105
    %1496 = vmatmul.mubr.bf16.gmra.mxu0 %v464
    %v1497 = vpop.f32.mrf.mxu0
    %v1498 = vadd.f32 %v913, %v1497
    %v1499 = vpop.f32.mrf.mxu0
    %v1500 = vadd.f32 %v917, %v1499
    %v1501 = vpop.f32.mrf.mxu0
    %v1502 = vadd.f32 %v913, %v1501
    %v1503 = vpop.f32.mrf.mxu0
    %v1504 = vadd.f32 %v917, %v1503
    %1505 = vmatprep.mubr.bf16.mxu0 %v1107
    %1506 = vmatmul.mubr.bf16.gmra.mxu0 %v467
    %v1507 = vpop.f32.mrf.mxu0
    %v1508 = vadd.f32 %v913, %v1507
    %v1509 = vpop.f32.mrf.mxu0
    %v1510 = vadd.f32 %v917, %v1509
    %v1511 = vpop.f32.mrf.mxu0
    %v1512 = vadd.f32 %v913, %v1511
    %v1513 = vpop.f32.mrf.mxu0
    %v1514 = vadd.f32 %v917, %v1513
    %1515 = vmatprep.mubr.bf16.mxu0 %v1109
    %1516 = vmatmul.mubr.bf16.gmra.mxu0 %v470
    %v1517 = vpop.f32.mrf.mxu0
    %v1518 = vadd.f32 %v913, %v1517
    %v1519 = vpop.f32.mrf.mxu0
    %v1520 = vadd.f32 %v917, %v1519
    %v1521 = vpop.f32.mrf.mxu0
    %v1522 = vadd.f32 %v913, %v1521
    %v1523 = vpop.f32.mrf.mxu0
    %v1524 = vadd.f32 %v917, %v1523
    %1525 = vmatprep.mubr.bf16.mxu0 %v1111
    %1526 = vmatmul.mubr.bf16.gmra.mxu0 %v473
    %v1527 = vpop.f32.mrf.mxu0
    %v1528 = vadd.f32 %v913, %v1527
    %v1529 = vpop.f32.mrf.mxu0
    %v1530 = vadd.f32 %v917, %v1529
    %v1531 = vpop.f32.mrf.mxu0
    %v1532 = vadd.f32 %v913, %v1531
    %v1533 = vpop.f32.mrf.mxu0
    %v1534 = vadd.f32 %v917, %v1533
    %1535 = vmatprep.mubr.bf16.mxu0 %v1113
    %1536 = vmatmul.mubr.bf16.gmra.mxu0 %v476
    %v1537 = vpop.f32.mrf.mxu0
    %v1538 = vadd.f32 %v913, %v1537
    %v1539 = vpop.f32.mrf.mxu0
    %v1540 = vadd.f32 %v917, %v1539
    %v1541 = vpop.f32.mrf.mxu0
    %v1542 = vadd.f32 %v913, %v1541
    %v1543 = vpop.f32.mrf.mxu0
    %v1544 = vadd.f32 %v917, %v1543
    %1545 = vmatprep.mubr.bf16.mxu0 %v1115
    %1546 = vmatmul.mubr.bf16.gmra.mxu0 %v479
    %v1547 = vpop.f32.mrf.mxu0
    %v1548 = vadd.f32 %v913, %v1547
    %v1549 = vpop.f32.mrf.mxu0
    %v1550 = vadd.f32 %v917, %v1549
    %v1551 = vpop.f32.mrf.mxu0
    %v1552 = vadd.f32 %v913, %v1551
    %v1553 = vpop.f32.mrf.mxu0
    %v1554 = vadd.f32 %v917, %v1553
    %1555 = vmatprep.mubr.bf16.mxu0 %v1117
    %1556 = vmatmul.mubr.bf16.gmra.mxu0 %v482
    %v1557 = vpop.f32.mrf.mxu0
    %v1558 = vadd.f32 %v913, %v1557
    %v1559 = vpop.f32.mrf.mxu0
    %v1560 = vadd.f32 %v917, %v1559
    %v1561 = vpop.f32.mrf.mxu0
    %v1562 = vadd.f32 %v913, %v1561
    %v1563 = vpop.f32.mrf.mxu0
    %v1564 = vadd.f32 %v917, %v1563
    %1565 = vmatprep.mubr.bf16.mxu0 %v1119
    %1566 = vmatmul.mubr.bf16.gmra.mxu0 %v485
    %v1567 = vpop.f32.mrf.mxu0
    %v1568 = vadd.f32 %v913, %v1567
    %v1569 = vpop.f32.mrf.mxu0
    %v1570 = vadd.f32 %v917, %v1569
    %v1571 = vpop.f32.mrf.mxu0
    %v1572 = vadd.f32 %v913, %v1571
    %v1573 = vpop.f32.mrf.mxu0
    %v1574 = vadd.f32 %v917, %v1573
    %1575 = vmatprep.mubr.bf16.mxu0 %v1121
    %1576 = vmatmul.mubr.bf16.gmra.mxu0 %v488
    %v1577 = vpop.f32.mrf.mxu0
    %v1578 = vadd.f32 %v913, %v1577
    %v1579 = vpop.f32.mrf.mxu0
    %v1580 = vadd.f32 %v917, %v1579
    %v1581 = vpop.f32.mrf.mxu0
    %v1582 = vadd.f32 %v913, %v1581
    %v1583 = vpop.f32.mrf.mxu0
    %v1584 = vadd.f32 %v917, %v1583
    %1585 = vmatprep.mubr.bf16.mxu0 %v1123
    %1586 = vmatmul.mubr.bf16.gmra.mxu0 %v491
    %v1587 = vpop.f32.mrf.mxu0
    %v1588 = vadd.f32 %v913, %v1587
    %v1589 = vpop.f32.mrf.mxu0
    %v1590 = vadd.f32 %v917, %v1589
    %v1591 = vpop.f32.mrf.mxu0
    %v1592 = vadd.f32 %v913, %v1591
    %v1593 = vpop.f32.mrf.mxu0
    %v1594 = vadd.f32 %v917, %v1593
    %1595 = vmatprep.mubr.bf16.mxu0 %v1125
    %1596 = vmatmul.mubr.bf16.gmra.mxu0 %v494
    %v1597 = vpop.f32.mrf.mxu0
    %v1598 = vadd.f32 %v913, %v1597
    %v1599 = vpop.f32.mrf.mxu0
    %v1600 = vadd.f32 %v917, %v1599
    %v1601 = vpop.f32.mrf.mxu0
    %v1602 = vadd.f32 %v913, %v1601
    %v1603 = vpop.f32.mrf.mxu0
    %v1604 = vadd.f32 %v917, %v1603
    %1605 = vmatprep.mubr.bf16.mxu0 %v1127
    %1606 = vmatmul.mubr.bf16.gmra.mxu0 %v497
    %v1607 = vpop.f32.mrf.mxu0
    %v1608 = vadd.f32 %v913, %v1607
    %v1609 = vpop.f32.mrf.mxu0
    %v1610 = vadd.f32 %v917, %v1609
    %v1611 = vpop.f32.mrf.mxu0
    %v1612 = vadd.f32 %v913, %v1611
    %v1613 = vpop.f32.mrf.mxu0
    %v1614 = vadd.f32 %v917, %v1613
    %1615 = vmatprep.mubr.bf16.mxu0 %v1129
    %1616 = vmatmul.mubr.bf16.gmra.mxu0 %v500
    %v1617 = vpop.f32.mrf.mxu0
    %v1618 = vadd.f32 %v913, %v1617
    %v1619 = vpop.f32.mrf.mxu0
    %v1620 = vadd.f32 %v917, %v1619
    %v1621 = vpop.f32.mrf.mxu0
    %v1622 = vadd.f32 %v913, %v1621
    %v1623 = vpop.f32.mrf.mxu0
    %v1624 = vadd.f32 %v917, %v1623
    %1625 = vmatprep.mubr.bf16.mxu0 %v1131
    %1626 = vmatmul.mubr.bf16.gmra.mxu0 %v503
    %v1627 = vpop.f32.mrf.mxu0
    %v1628 = vadd.f32 %v913, %v1627
    %v1629 = vpop.f32.mrf.mxu0
    %v1630 = vadd.f32 %v917, %v1629
    %v1631 = vpop.f32.mrf.mxu0
    %v1632 = vadd.f32 %v913, %v1631
    %v1633 = vpop.f32.mrf.mxu0
    %v1634 = vadd.f32 %v917, %v1633
    %1635 = vmatprep.mubr.bf16.mxu0 %v1133
    %1636 = vmatmul.mubr.bf16.gmra.mxu0 %v506
    %v1637 = vpop.f32.mrf.mxu0
    %v1638 = vadd.f32 %v913, %v1637
    %v1639 = vpop.f32.mrf.mxu0
    %v1640 = vadd.f32 %v917, %v1639
    %v1641 = vpop.f32.mrf.mxu0
    %v1642 = vadd.f32 %v913, %v1641
    %v1643 = vpop.f32.mrf.mxu0
    %v1644 = vadd.f32 %v917, %v1643
    %1645 = vmatprep.mubr.bf16.mxu0 %v1135
    %1646 = vmatmul.mubr.bf16.gmra.mxu0 %v509
    %v1647 = vpop.f32.mrf.mxu0
    %v1648 = vadd.f32 %v913, %v1647
    %v1649 = vpop.f32.mrf.mxu0
    %v1650 = vadd.f32 %v917, %v1649
    %v1651 = vpop.f32.mrf.mxu0
    %v1652 = vadd.f32 %v913, %v1651
    %v1653 = vpop.f32.mrf.mxu0
    %v1654 = vadd.f32 %v917, %v1653
    %1655 = vmatprep.mubr.bf16.mxu0 %v1137
    %1656 = vmatmul.mubr.bf16.gmra.mxu0 %v512
    %v1657 = vpop.f32.mrf.mxu0
    %v1658 = vadd.f32 %v913, %v1657
    %v1659 = vpop.f32.mrf.mxu0
    %v1660 = vadd.f32 %v917, %v1659
    %v1661 = vpop.f32.mrf.mxu0
    %v1662 = vadd.f32 %v913, %v1661
    %v1663 = vpop.f32.mrf.mxu0
    %v1664 = vadd.f32 %v917, %v1663
    %1665 = vmatprep.mubr.bf16.mxu0 %v1139
    %1666 = vmatmul.mubr.bf16.gmra.mxu0 %v515
    %v1667 = vpop.f32.mrf.mxu0
    %v1668 = vadd.f32 %v913, %v1667
    %v1669 = vpop.f32.mrf.mxu0
    %v1670 = vadd.f32 %v917, %v1669
    %v1671 = vpop.f32.mrf.mxu0
    %v1672 = vadd.f32 %v913, %v1671
    %v1673 = vpop.f32.mrf.mxu0
    %v1674 = vadd.f32 %v917, %v1673
    %1675 = vmatprep.mubr.bf16.mxu0 %v1141
    %1676 = vmatmul.mubr.bf16.gmra.mxu0 %v518
    %v1677 = vpop.f32.mrf.mxu0
    %v1678 = vadd.f32 %v913, %v1677
    %v1679 = vpop.f32.mrf.mxu0
    %v1680 = vadd.f32 %v917, %v1679
    %v1681 = vpop.f32.mrf.mxu0
    %v1682 = vadd.f32 %v913, %v1681
    %v1683 = vpop.f32.mrf.mxu0
    %v1684 = vadd.f32 %v917, %v1683
    %1685 = vmatprep.mubr.bf16.mxu0 %v1143
    %1686 = vmatmul.mubr.bf16.gmra.mxu0 %v521
    %v1687 = vpop.f32.mrf.mxu0
    %v1688 = vadd.f32 %v913, %v1687
    %v1689 = vpop.f32.mrf.mxu0
    %v1690 = vadd.f32 %v917, %v1689
    %v1691 = vpop.f32.mrf.mxu0
    %v1692 = vadd.f32 %v913, %v1691
    %v1693 = vpop.f32.mrf.mxu0
    %v1694 = vadd.f32 %v917, %v1693
    %1695 = vmatprep.mubr.bf16.mxu0 %v1145
    %1696 = vmatmul.mubr.bf16.gmra.mxu0 %v524
    %v1697 = vpop.f32.mrf.mxu0
    %v1698 = vadd.f32 %v913, %v1697
    %v1699 = vpop.f32.mrf.mxu0
    %v1700 = vadd.f32 %v917, %v1699
    %v1701 = vpop.f32.mrf.mxu0
    %v1702 = vadd.f32 %v913, %v1701
    %v1703 = vpop.f32.mrf.mxu0
    %v1704 = vadd.f32 %v917, %v1703
    %1705 = vdwg.mxu0
    %v1706 = vmax.f32 %v1195, 0.0
    %v1707 = vmax.f32 %v1197, 0.0
    %v1708 = vmax.f32 %v1468, 0.0
    %v1709 = vmax.f32 %v1470, 0.0
    %v1710 = vmax.f32 %v1199, 0.0
    %v1711 = vmax.f32 %v1201, 0.0
    %v1712 = vmax.f32 %v1472, 0.0
    %v1713 = vmax.f32 %v1474, 0.0
    %v1714 = vmax.f32 %v1205, 0.0
    %v1715 = vmax.f32 %v1207, 0.0
    %v1716 = vmax.f32 %v1478, 0.0
    %v1717 = vmax.f32 %v1480, 0.0
    %v1718 = vmax.f32 %v1209, 0.0
    %v1719 = vmax.f32 %v1211, 0.0
    %v1720 = vmax.f32 %v1482, 0.0
    %v1721 = vmax.f32 %v1484, 0.0
    %v1722 = vmax.f32 %v1215, 0.0
    %v1723 = vmax.f32 %v1217, 0.0
    %v1724 = vmax.f32 %v1488, 0.0
    %v1725 = vmax.f32 %v1490, 0.0
    %v1726 = vmax.f32 %v1219, 0.0
    %v1727 = vmax.f32 %v1221, 0.0
    %v1728 = vmax.f32 %v1492, 0.0
    %v1729 = vmax.f32 %v1494, 0.0
    %v1730 = vmax.f32 %v1225, 0.0
    %v1731 = vmax.f32 %v1227, 0.0
    %v1732 = vmax.f32 %v1498, 0.0
    %v1733 = vmax.f32 %v1500, 0.0
    %v1734 = vmax.f32 %v1229, 0.0
    %v1735 = vmax.f32 %v1231, 0.0
    %v1736 = vmax.f32 %v1502, 0.0
    %v1737 = vmax.f32 %v1504, 0.0
    %v1738 = vmax.f32 %v1235, 0.0
    %v1739 = vmax.f32 %v1237, 0.0
    %v1740 = vmax.f32 %v1508, 0.0
    %v1741 = vmax.f32 %v1510, 0.0
    %v1742 = vmax.f32 %v1239, 0.0
    %v1743 = vmax.f32 %v1241, 0.0
    %v1744 = vmax.f32 %v1512, 0.0
    %v1745 = vmax.f32 %v1514, 0.0
    %v1746 = vmax.f32 %v1245, 0.0
    %v1747 = vmax.f32 %v1247, 0.0
    %v1748 = vmax.f32 %v1518, 0.0
    %v1749 = vmax.f32 %v1520, 0.0
    %v1750 = vmax.f32 %v1249, 0.0
    %v1751 = vmax.f32 %v1251, 0.0
    %v1752 = vmax.f32 %v1522, 0.0
    %v1753 = vmax.f32 %v1524, 0.0
    %v1754 = vmax.f32 %v1255, 0.0
    %v1755 = vmax.f32 %v1257, 0.0
    %v1756 = vmax.f32 %v1528, 0.0
    %v1757 = vmax.f32 %v1530, 0.0
    %v1758 = vmax.f32 %v1259, 0.0
    %v1759 = vmax.f32 %v1261, 0.0
    %v1760 = vmax.f32 %v1532, 0.0
    %v1761 = vmax.f32 %v1534, 0.0
    %v1762 = vmax.f32 %v1265, 0.0
    %v1763 = vmax.f32 %v1267, 0.0
    %v1764 = vmax.f32 %v1538, 0.0
    %v1765 = vmax.f32 %v1540, 0.0
    %v1766 = vmax.f32 %v1269, 0.0
    %v1767 = vmax.f32 %v1271, 0.0
    %v1768 = vmax.f32 %v1542, 0.0
    %v1769 = vmax.f32 %v1544, 0.0
    %v1770 = vmax.f32 %v1275, 0.0
    %v1771 = vmax.f32 %v1277, 0.0
    %v1772 = vmax.f32 %v1548, 0.0
    %v1773 = vmax.f32 %v1550, 0.0
    %v1774 = vmax.f32 %v1279, 0.0
    %v1775 = vmax.f32 %v1281, 0.0
    %v1776 = vmax.f32 %v1552, 0.0
    %v1777 = vmax.f32 %v1554, 0.0
    %v1778 = vmax.f32 %v1285, 0.0
    %v1779 = vmax.f32 %v1287, 0.0
    %v1780 = vmax.f32 %v1558, 0.0
    %v1781 = vmax.f32 %v1560, 0.0
    %v1782 = vmax.f32 %v1289, 0.0
    %v1783 = vmax.f32 %v1291, 0.0
    %v1784 = vmax.f32 %v1562, 0.0
    %v1785 = vmax.f32 %v1564, 0.0
    %v1786 = vmax.f32 %v1295, 0.0
    %v1787 = vmax.f32 %v1297, 0.0
    %v1788 = vmax.f32 %v1568, 0.0
    %v1789 = vmax.f32 %v1570, 0.0
    %v1790 = vmax.f32 %v1299, 0.0
    %v1791 = vmax.f32 %v1301, 0.0
    %v1792 = vmax.f32 %v1572, 0.0
    %v1793 = vmax.f32 %v1574, 0.0
    %v1794 = vmax.f32 %v1305, 0.0
    %v1795 = vmax.f32 %v1307, 0.0
    %v1796 = vmax.f32 %v1578, 0.0
    %v1797 = vmax.f32 %v1580, 0.0
    %v1798 = vmax.f32 %v1309, 0.0
    %v1799 = vmax.f32 %v1311, 0.0
    %v1800 = vmax.f32 %v1582, 0.0
    %v1801 = vmax.f32 %v1584, 0.0
    %v1802 = vmax.f32 %v1315, 0.0
    %v1803 = vmax.f32 %v1317, 0.0
    %v1804 = vmax.f32 %v1588, 0.0
    %v1805 = vmax.f32 %v1590, 0.0
    %v1806 = vmax.f32 %v1319, 0.0
    %v1807 = vmax.f32 %v1321, 0.0
    %v1808 = vmax.f32 %v1592, 0.0
    %v1809 = vmax.f32 %v1594, 0.0
    %v1810 = vmax.f32 %v1325, 0.0
    %v1811 = vmax.f32 %v1327, 0.0
    %v1812 = vmax.f32 %v1598, 0.0
    %v1813 = vmax.f32 %v1600, 0.0
    %v1814 = vmax.f32 %v1329, 0.0
    %v1815 = vmax.f32 %v1331, 0.0
    %v1816 = vmax.f32 %v1602, 0.0
    %v1817 = vmax.f32 %v1604, 0.0
    %v1818 = vmax.f32 %v1335, 0.0
    %v1819 = vmax.f32 %v1337, 0.0
    %v1820 = vmax.f32 %v1608, 0.0
    %v1821 = vmax.f32 %v1610, 0.0
    %v1822 = vmax.f32 %v1339, 0.0
    %v1823 = vmax.f32 %v1341, 0.0
    %v1824 = vmax.f32 %v1612, 0.0
    %v1825 = vmax.f32 %v1614, 0.0
    %v1826 = vmax.f32 %v1345, 0.0
    %v1827 = vmax.f32 %v1347, 0.0
    %v1828 = vmax.f32 %v1618, 0.0
    %v1829 = vmax.f32 %v1620, 0.0
    %v1830 = vmax.f32 %v1349, 0.0
    %v1831 = vmax.f32 %v1351, 0.0
    %v1832 = vmax.f32 %v1622, 0.0
    %v1833 = vmax.f32 %v1624, 0.0
    %v1834 = vmax.f32 %v1355, 0.0
    %v1835 = vmax.f32 %v1357, 0.0
    %v1836 = vmax.f32 %v1628, 0.0
    %v1837 = vmax.f32 %v1630, 0.0
    %v1838 = vmax.f32 %v1359, 0.0
    %v1839 = vmax.f32 %v1361, 0.0
    %v1840 = vmax.f32 %v1632, 0.0
    %v1841 = vmax.f32 %v1634, 0.0
    %v1842 = vmax.f32 %v1365, 0.0
    %v1843 = vmax.f32 %v1367, 0.0
    %v1844 = vmax.f32 %v1638, 0.0
    %v1845 = vmax.f32 %v1640, 0.0
    %v1846 = vmax.f32 %v1369, 0.0
    %v1847 = vmax.f32 %v1371, 0.0
    %v1848 = vmax.f32 %v1642, 0.0
    %v1849 = vmax.f32 %v1644, 0.0
    %v1850 = vmax.f32 %v1375, 0.0
    %v1851 = vmax.f32 %v1377, 0.0
    %v1852 = vmax.f32 %v1648, 0.0
    %v1853 = vmax.f32 %v1650, 0.0
    %v1854 = vmax.f32 %v1379, 0.0
    %v1855 = vmax.f32 %v1381, 0.0
    %v1856 = vmax.f32 %v1652, 0.0
    %v1857 = vmax.f32 %v1654, 0.0
    %v1858 = vmax.f32 %v1385, 0.0
    %v1859 = vmax.f32 %v1387, 0.0
    %v1860 = vmax.f32 %v1658, 0.0
    %v1861 = vmax.f32 %v1660, 0.0
    %v1862 = vmax.f32 %v1389, 0.0
    %v1863 = vmax.f32 %v1391, 0.0
    %v1864 = vmax.f32 %v1662, 0.0
    %v1865 = vmax.f32 %v1664, 0.0
    %v1866 = vmax.f32 %v1395, 0.0
    %v1867 = vmax.f32 %v1397, 0.0
    %v1868 = vmax.f32 %v1668, 0.0
    %v1869 = vmax.f32 %v1670, 0.0
    %v1870 = vmax.f32 %v1399, 0.0
    %v1871 = vmax.f32 %v1401, 0.0
    %v1872 = vmax.f32 %v1672, 0.0
    %v1873 = vmax.f32 %v1674, 0.0
    %v1874 = vmax.f32 %v1405, 0.0
    %v1875 = vmax.f32 %v1407, 0.0
    %v1876 = vmax.f32 %v1678, 0.0
    %v1877 = vmax.f32 %v1680, 0.0
    %v1878 = vmax.f32 %v1409, 0.0
    %v1879 = vmax.f32 %v1411, 0.0
    %v1880 = vmax.f32 %v1682, 0.0
    %v1881 = vmax.f32 %v1684, 0.0
    %v1882 = vmax.f32 %v1415, 0.0
    %v1883 = vmax.f32 %v1417, 0.0
    %v1884 = vmax.f32 %v1688, 0.0
    %v1885 = vmax.f32 %v1690, 0.0
    %v1886 = vmax.f32 %v1419, 0.0
    %v1887 = vmax.f32 %v1421, 0.0
    %v1888 = vmax.f32 %v1692, 0.0
    %v1889 = vmax.f32 %v1694, 0.0
    %v1890 = vmax.f32 %v1425, 0.0
    %v1891 = vmax.f32 %v1427, 0.0
    %v1892 = vmax.f32 %v1698, 0.0
    %v1893 = vmax.f32 %v1700, 0.0
    %v1894 = vmax.f32 %v1429, 0.0
    %v1895 = vmax.f32 %v1431, 0.0
    %v1896 = vmax.f32 %v1702, 0.0
    %v1897 = vmax.f32 %v1704, 0.0
    %v1898 = vsel %vm1098, %v625, 0
    %v1900 = vsel %vm1098, %v627, 0
    %v1902 = vsel %vm1098, %v629, 0
    %v1904 = vsel %vm1098, %v631, 0
    %v1906 = vsel %vm1098, %v633, 0
    %v1908 = vsel %vm1098, %v635, 0
    %v1910 = vsel %vm1098, %v637, 0
    %v1912 = vsel %vm1098, %v639, 0
    %v1914 = vsel %vm1098, %v641, 0
    %v1916 = vsel %vm1098, %v643, 0
    %v1918 = vsel %vm1098, %v645, 0
    %v1920 = vsel %vm1098, %v647, 0
    %v1922 = vsel %vm1098, %v649, 0
    %v1924 = vsel %vm1098, %v651, 0
    %v1926 = vsel %vm1098, %v653, 0
    %v1928 = vsel %vm1098, %v655, 0
    %v1930 = vsel %vm1098, %v657, 0
    %v1932 = vsel %vm1098, %v659, 0
    %v1934 = vsel %vm1098, %v661, 0
    %v1936 = vsel %vm1098, %v663, 0
    %v1938 = vsel %vm1098, %v665, 0
    %v1940 = vsel %vm1098, %v667, 0
    %v1942 = vsel %vm1098, %v669, 0
    %v1944 = vsel %vm1098, %v671, 0
    %1946 = vmatprep.subr.bf16.mxu0 %v1059
    %1947 = vmatpush1.bf16.msra.mxu0 %v1058
    %1948 = vmatprep.subr.bf16.mxu0 %v1055
    %1949 = vmatpush1.bf16.msra.mxu0 %v1054
    %1950 = vmatprep.subr.bf16.mxu0 %v1051
    %1951 = vmatpush1.bf16.msra.mxu0 %v1050
    %1952 = vmatprep.subr.bf16.mxu0 %v1047
    %1953 = vmatpush1.bf16.msra.mxu0 %v1046
    %1954 = vmatprep.subr.bf16.mxu0 %v1043
    %1955 = vmatpush1.bf16.msra.mxu0 %v1042
    %1956 = vmatprep.subr.bf16.mxu0 %v1039
    %1957 = vmatpush1.bf16.msra.mxu0 %v1038
    %1958 = vmatprep.subr.bf16.mxu0 %v1035
    %1959 = vmatpush1.bf16.msra.mxu0 %v1034
    %1960 = vmatprep.subr.bf16.mxu0 %v1031
    %1961 = vmatpush1.bf16.msra.mxu0 %v1030
    %1962 = vmatprep.subr.bf16.mxu0 0
    %1963 = vmatpush2.bf16.msra.mxu0 0
    %1964 = vmatprep.subr.bf16.mxu0 0
    %1965 = vmatpush2.bf16.msra.mxu0 0
    %1966 = vmatprep.subr.bf16.mxu0 0
    %1967 = vmatpush2.bf16.msra.mxu0 0
    %1968 = vmatprep.subr.bf16.mxu0 0
    %1969 = vmatpush2.bf16.msra.mxu0 0
    %1970 = vmatprep.subr.bf16.mxu0 0
    %1971 = vmatpush2.bf16.msra.mxu0 0
    %1972 = vmatprep.subr.bf16.mxu0 0
    %1973 = vmatpush2.bf16.msra.mxu0 0
    %1974 = vmatprep.subr.bf16.mxu0 0
    %1975 = vmatpush2.bf16.msra.mxu0 0
    %1976 = vmatprep.subr.bf16.mxu0 %v1152
    %1977 = vmatpush2.bf16.msra.mxu0 %v1149
    %1978 = vmatprep.mubr.bf16.mxu0 %v1898
    %1979 = vmatmul.mubr.bf16.gmra.mxu0 %v816
    %v1980 = vpop.f32.mrf.mxu0
    %v1981 = vadd.f32 %v905, %v1980
    %v1982 = vpop.f32.mrf.mxu0
    %v1983 = vadd.f32 %v909, %v1982
    %v1984 = vpop.f32.mrf.mxu0
    %v1985 = vadd.f32 %v905, %v1984
    %v1986 = vpop.f32.mrf.mxu0
    %v1987 = vadd.f32 %v909, %v1986
    %1988 = vmatprep.mubr.bf16.mxu0 %v1900
    %1989 = vmatmul.mubr.bf16.gmra.mxu0 %v818
    %v1990 = vpop.f32.mrf.mxu0
    %v1991 = vadd.f32 %v905, %v1990
    %v1992 = vpop.f32.mrf.mxu0
    %v1993 = vadd.f32 %v909, %v1992
    %v1994 = vpop.f32.mrf.mxu0
    %v1995 = vadd.f32 %v905, %v1994
    %v1996 = vpop.f32.mrf.mxu0
    %v1997 = vadd.f32 %v909, %v1996
    %1998 = vmatprep.mubr.bf16.mxu0 %v1902
    %1999 = vmatmul.mubr.bf16.gmra.mxu0 %v820
    %v2000 = vpop.f32.mrf.mxu0
    %v2001 = vadd.f32 %v905, %v2000
    %v2002 = vpop.f32.mrf.mxu0
    %v2003 = vadd.f32 %v909, %v2002
    %v2004 = vpop.f32.mrf.mxu0
    %v2005 = vadd.f32 %v905, %v2004
    %v2006 = vpop.f32.mrf.mxu0
    %v2007 = vadd.f32 %v909, %v2006
    %2008 = vmatprep.mubr.bf16.mxu0 %v1904
    %2009 = vmatmul.mubr.bf16.gmra.mxu0 %v822
    %v2010 = vpop.f32.mrf.mxu0
    %v2011 = vadd.f32 %v905, %v2010
    %v2012 = vpop.f32.mrf.mxu0
    %v2013 = vadd.f32 %v909, %v2012
    %v2014 = vpop.f32.mrf.mxu0
    %v2015 = vadd.f32 %v905, %v2014
    %v2016 = vpop.f32.mrf.mxu0
    %v2017 = vadd.f32 %v909, %v2016
    %2018 = vmatprep.mubr.bf16.mxu0 %v1906
    %2019 = vmatmul.mubr.bf16.gmra.mxu0 %v824
    %v2020 = vpop.f32.mrf.mxu0
    %v2021 = vadd.f32 %v905, %v2020
    %v2022 = vpop.f32.mrf.mxu0
    %v2023 = vadd.f32 %v909, %v2022
    %v2024 = vpop.f32.mrf.mxu0
    %v2025 = vadd.f32 %v905, %v2024
    %v2026 = vpop.f32.mrf.mxu0
    %v2027 = vadd.f32 %v909, %v2026
    %2028 = vmatprep.mubr.bf16.mxu0 %v1908
    %2029 = vmatmul.mubr.bf16.gmra.mxu0 %v826
    %v2030 = vpop.f32.mrf.mxu0
    %v2031 = vadd.f32 %v905, %v2030
    %v2032 = vpop.f32.mrf.mxu0
    %v2033 = vadd.f32 %v909, %v2032
    %v2034 = vpop.f32.mrf.mxu0
    %v2035 = vadd.f32 %v905, %v2034
    %v2036 = vpop.f32.mrf.mxu0
    %v2037 = vadd.f32 %v909, %v2036
    %2038 = vmatprep.mubr.bf16.mxu0 %v1910
    %2039 = vmatmul.mubr.bf16.gmra.mxu0 %v828
    %v2040 = vpop.f32.mrf.mxu0
    %v2041 = vadd.f32 %v905, %v2040
    %v2042 = vpop.f32.mrf.mxu0
    %v2043 = vadd.f32 %v909, %v2042
    %v2044 = vpop.f32.mrf.mxu0
    %v2045 = vadd.f32 %v905, %v2044
    %v2046 = vpop.f32.mrf.mxu0
    %v2047 = vadd.f32 %v909, %v2046
    %2048 = vmatprep.mubr.bf16.mxu0 %v1912
    %2049 = vmatmul.mubr.bf16.gmra.mxu0 %v830
    %v2050 = vpop.f32.mrf.mxu0
    %v2051 = vadd.f32 %v905, %v2050
    %v2052 = vpop.f32.mrf.mxu0
    %v2053 = vadd.f32 %v909, %v2052
    %v2054 = vpop.f32.mrf.mxu0
    %v2055 = vadd.f32 %v905, %v2054
    %v2056 = vpop.f32.mrf.mxu0
    %v2057 = vadd.f32 %v909, %v2056
    %2058 = vmatprep.mubr.bf16.mxu0 %v1914
    %2059 = vmatmul.mubr.bf16.gmra.mxu0 %v832
    %v2060 = vpop.f32.mrf.mxu0
    %v2061 = vadd.f32 %v905, %v2060
    %v2062 = vpop.f32.mrf.mxu0
    %v2063 = vadd.f32 %v909, %v2062
    %v2064 = vpop.f32.mrf.mxu0
    %v2065 = vadd.f32 %v905, %v2064
    %v2066 = vpop.f32.mrf.mxu0
    %v2067 = vadd.f32 %v909, %v2066
    %2068 = vmatprep.mubr.bf16.mxu0 %v1916
    %2069 = vmatmul.mubr.bf16.gmra.mxu0 %v834
    %v2070 = vpop.f32.mrf.mxu0
    %v2071 = vadd.f32 %v905, %v2070
    %v2072 = vpop.f32.mrf.mxu0
    %v2073 = vadd.f32 %v909, %v2072
    %v2074 = vpop.f32.mrf.mxu0
    %v2075 = vadd.f32 %v905, %v2074
    %v2076 = vpop.f32.mrf.mxu0
    %v2077 = vadd.f32 %v909, %v2076
    %2078 = vmatprep.mubr.bf16.mxu0 %v1918
    %2079 = vmatmul.mubr.bf16.gmra.mxu0 %v836
    %v2080 = vpop.f32.mrf.mxu0
    %v2081 = vadd.f32 %v905, %v2080
    %v2082 = vpop.f32.mrf.mxu0
    %v2083 = vadd.f32 %v909, %v2082
    %v2084 = vpop.f32.mrf.mxu0
    %v2085 = vadd.f32 %v905, %v2084
    %v2086 = vpop.f32.mrf.mxu0
    %v2087 = vadd.f32 %v909, %v2086
    %2088 = vmatprep.mubr.bf16.mxu0 %v1920
    %2089 = vmatmul.mubr.bf16.gmra.mxu0 %v838
    %v2090 = vpop.f32.mrf.mxu0
    %v2091 = vadd.f32 %v905, %v2090
    %v2092 = vpop.f32.mrf.mxu0
    %v2093 = vadd.f32 %v909, %v2092
    %v2094 = vpop.f32.mrf.mxu0
    %v2095 = vadd.f32 %v905, %v2094
    %v2096 = vpop.f32.mrf.mxu0
    %v2097 = vadd.f32 %v909, %v2096
    %2098 = vmatprep.mubr.bf16.mxu0 %v1922
    %2099 = vmatmul.mubr.bf16.gmra.mxu0 %v840
    %v2100 = vpop.f32.mrf.mxu0
    %v2101 = vadd.f32 %v905, %v2100
    %v2102 = vpop.f32.mrf.mxu0
    %v2103 = vadd.f32 %v909, %v2102
    %v2104 = vpop.f32.mrf.mxu0
    %v2105 = vadd.f32 %v905, %v2104
    %v2106 = vpop.f32.mrf.mxu0
    %v2107 = vadd.f32 %v909, %v2106
    %2108 = vmatprep.mubr.bf16.mxu0 %v1924
    %2109 = vmatmul.mubr.bf16.gmra.mxu0 %v842
    %v2110 = vpop.f32.mrf.mxu0
    %v2111 = vadd.f32 %v905, %v2110
    %v2112 = vpop.f32.mrf.mxu0
    %v2113 = vadd.f32 %v909, %v2112
    %v2114 = vpop.f32.mrf.mxu0
    %v2115 = vadd.f32 %v905, %v2114
    %v2116 = vpop.f32.mrf.mxu0
    %v2117 = vadd.f32 %v909, %v2116
    %2118 = vmatprep.mubr.bf16.mxu0 %v1926
    %2119 = vmatmul.mubr.bf16.gmra.mxu0 %v844
    %v2120 = vpop.f32.mrf.mxu0
    %v2121 = vadd.f32 %v905, %v2120
    %v2122 = vpop.f32.mrf.mxu0
    %v2123 = vadd.f32 %v909, %v2122
    %v2124 = vpop.f32.mrf.mxu0
    %v2125 = vadd.f32 %v905, %v2124
    %v2126 = vpop.f32.mrf.mxu0
    %v2127 = vadd.f32 %v909, %v2126
    %2128 = vmatprep.mubr.bf16.mxu0 %v1928
    %2129 = vmatmul.mubr.bf16.gmra.mxu0 %v846
    %v2130 = vpop.f32.mrf.mxu0
    %v2131 = vadd.f32 %v905, %v2130
    %v2132 = vpop.f32.mrf.mxu0
    %v2133 = vadd.f32 %v909, %v2132
    %v2134 = vpop.f32.mrf.mxu0
    %v2135 = vadd.f32 %v905, %v2134
    %v2136 = vpop.f32.mrf.mxu0
    %v2137 = vadd.f32 %v909, %v2136
    %2138 = vmatprep.mubr.bf16.mxu0 %v1930
    %2139 = vmatmul.mubr.bf16.gmra.mxu0 %v848
    %v2140 = vpop.f32.mrf.mxu0
    %v2141 = vadd.f32 %v905, %v2140
    %v2142 = vpop.f32.mrf.mxu0
    %v2143 = vadd.f32 %v909, %v2142
    %v2144 = vpop.f32.mrf.mxu0
    %v2145 = vadd.f32 %v905, %v2144
    %v2146 = vpop.f32.mrf.mxu0
    %v2147 = vadd.f32 %v909, %v2146
    %2148 = vmatprep.mubr.bf16.mxu0 %v1932
    %2149 = vmatmul.mubr.bf16.gmra.mxu0 %v850
    %v2150 = vpop.f32.mrf.mxu0
    %v2151 = vadd.f32 %v905, %v2150
    %v2152 = vpop.f32.mrf.mxu0
    %v2153 = vadd.f32 %v909, %v2152
    %v2154 = vpop.f32.mrf.mxu0
    %v2155 = vadd.f32 %v905, %v2154
    %v2156 = vpop.f32.mrf.mxu0
    %v2157 = vadd.f32 %v909, %v2156
    %2158 = vmatprep.mubr.bf16.mxu0 %v1934
    %2159 = vmatmul.mubr.bf16.gmra.mxu0 %v852
    %v2160 = vpop.f32.mrf.mxu0
    %v2161 = vadd.f32 %v905, %v2160
    %v2162 = vpop.f32.mrf.mxu0
    %v2163 = vadd.f32 %v909, %v2162
    %v2164 = vpop.f32.mrf.mxu0
    %v2165 = vadd.f32 %v905, %v2164
    %v2166 = vpop.f32.mrf.mxu0
    %v2167 = vadd.f32 %v909, %v2166
    %2168 = vmatprep.mubr.bf16.mxu0 %v1936
    %2169 = vmatmul.mubr.bf16.gmra.mxu0 %v854
    %v2170 = vpop.f32.mrf.mxu0
    %v2171 = vadd.f32 %v905, %v2170
    %v2172 = vpop.f32.mrf.mxu0
    %v2173 = vadd.f32 %v909, %v2172
    %v2174 = vpop.f32.mrf.mxu0
    %v2175 = vadd.f32 %v905, %v2174
    %v2176 = vpop.f32.mrf.mxu0
    %v2177 = vadd.f32 %v909, %v2176
    %2178 = vmatprep.mubr.bf16.mxu0 %v1938
    %2179 = vmatmul.mubr.bf16.gmra.mxu0 %v856
    %v2180 = vpop.f32.mrf.mxu0
    %v2181 = vadd.f32 %v905, %v2180
    %v2182 = vpop.f32.mrf.mxu0
    %v2183 = vadd.f32 %v909, %v2182
    %v2184 = vpop.f32.mrf.mxu0
    %v2185 = vadd.f32 %v905, %v2184
    %v2186 = vpop.f32.mrf.mxu0
    %v2187 = vadd.f32 %v909, %v2186
    %2188 = vmatprep.mubr.bf16.mxu0 %v1940
    %2189 = vmatmul.mubr.bf16.gmra.mxu0 %v858
    %v2190 = vpop.f32.mrf.mxu0
    %v2191 = vadd.f32 %v905, %v2190
    %v2192 = vpop.f32.mrf.mxu0
    %v2193 = vadd.f32 %v909, %v2192
    %v2194 = vpop.f32.mrf.mxu0
    %v2195 = vadd.f32 %v905, %v2194
    %v2196 = vpop.f32.mrf.mxu0
    %v2197 = vadd.f32 %v909, %v2196
    %2198 = vmatprep.mubr.bf16.mxu0 %v1942
    %2199 = vmatmul.mubr.bf16.gmra.mxu0 %v860
    %v2200 = vpop.f32.mrf.mxu0
    %v2201 = vadd.f32 %v905, %v2200
    %v2202 = vpop.f32.mrf.mxu0
    %v2203 = vadd.f32 %v909, %v2202
    %v2204 = vpop.f32.mrf.mxu0
    %v2205 = vadd.f32 %v905, %v2204
    %v2206 = vpop.f32.mrf.mxu0
    %v2207 = vadd.f32 %v909, %v2206
    %2208 = vmatprep.mubr.bf16.mxu0 %v1944
    %2209 = vmatmul.mubr.bf16.gmra.mxu0 %v862
    %v2210 = vpop.f32.mrf.mxu0
    %v2211 = vadd.f32 %v905, %v2210
    %v2212 = vpop.f32.mrf.mxu0
    %v2213 = vadd.f32 %v909, %v2212
    %v2214 = vpop.f32.mrf.mxu0
    %v2215 = vadd.f32 %v905, %v2214
    %v2216 = vpop.f32.mrf.mxu0
    %v2217 = vadd.f32 %v909, %v2216
    %2218 = vdwg.mxu0
    %2219 = vmatprep.subr.bf16.mxu0 %v1061
    %2220 = vmatpush1.bf16.msra.mxu0 %v1060
    %2221 = vmatprep.subr.bf16.mxu0 %v1057
    %2222 = vmatpush1.bf16.msra.mxu0 %v1056
    %2223 = vmatprep.subr.bf16.mxu0 %v1053
    %2224 = vmatpush1.bf16.msra.mxu0 %v1052
    %2225 = vmatprep.subr.bf16.mxu0 %v1049
    %2226 = vmatpush1.bf16.msra.mxu0 %v1048
    %2227 = vmatprep.subr.bf16.mxu0 %v1045
    %2228 = vmatpush1.bf16.msra.mxu0 %v1044
    %2229 = vmatprep.subr.bf16.mxu0 %v1041
    %2230 = vmatpush1.bf16.msra.mxu0 %v1040
    %2231 = vmatprep.subr.bf16.mxu0 %v1037
    %2232 = vmatpush1.bf16.msra.mxu0 %v1036
    %2233 = vmatprep.subr.bf16.mxu0 %v1033
    %2234 = vmatpush1.bf16.msra.mxu0 %v1032
    %2235 = vmatprep.subr.bf16.mxu0 0
    %2236 = vmatpush2.bf16.msra.mxu0 0
    %2237 = vmatprep.subr.bf16.mxu0 0
    %2238 = vmatpush2.bf16.msra.mxu0 0
    %2239 = vmatprep.subr.bf16.mxu0 0
    %2240 = vmatpush2.bf16.msra.mxu0 0
    %2241 = vmatprep.subr.bf16.mxu0 0
    %2242 = vmatpush2.bf16.msra.mxu0 0
    %2243 = vmatprep.subr.bf16.mxu0 0
    %2244 = vmatpush2.bf16.msra.mxu0 0
    %2245 = vmatprep.subr.bf16.mxu0 0
    %2246 = vmatpush2.bf16.msra.mxu0 0
    %2247 = vmatprep.subr.bf16.mxu0 0
    %2248 = vmatpush2.bf16.msra.mxu0 0
    %2249 = vmatprep.subr.bf16.mxu0 %v1158
    %2250 = vmatpush2.bf16.msra.mxu0 %v1155
    %2251 = vmatprep.mubr.bf16.mxu0 %v1898
    %2252 = vmatmul.mubr.bf16.gmra.mxu0 %v816
    %v2253 = vpop.f32.mrf.mxu0
    %v2254 = vadd.f32 %v913, %v2253
    %v2255 = vpop.f32.mrf.mxu0
    %v2256 = vadd.f32 %v917, %v2255
    %v2257 = vpop.f32.mrf.mxu0
    %v2258 = vadd.f32 %v913, %v2257
    %v2259 = vpop.f32.mrf.mxu0
    %v2260 = vadd.f32 %v917, %v2259
    %2261 = vmatprep.mubr.bf16.mxu0 %v1900
    %2262 = vmatmul.mubr.bf16.gmra.mxu0 %v818
    %v2263 = vpop.f32.mrf.mxu0
    %v2264 = vadd.f32 %v913, %v2263
    %v2265 = vpop.f32.mrf.mxu0
    %v2266 = vadd.f32 %v917, %v2265
    %v2267 = vpop.f32.mrf.mxu0
    %v2268 = vadd.f32 %v913, %v2267
    %v2269 = vpop.f32.mrf.mxu0
    %v2270 = vadd.f32 %v917, %v2269
    %2271 = vmatprep.mubr.bf16.mxu0 %v1902
    %2272 = vmatmul.mubr.bf16.gmra.mxu0 %v820
    %v2273 = vpop.f32.mrf.mxu0
    %v2274 = vadd.f32 %v913, %v2273
    %v2275 = vpop.f32.mrf.mxu0
    %v2276 = vadd.f32 %v917, %v2275
    %v2277 = vpop.f32.mrf.mxu0
    %v2278 = vadd.f32 %v913, %v2277
    %v2279 = vpop.f32.mrf.mxu0
    %v2280 = vadd.f32 %v917, %v2279
    %2281 = vmatprep.mubr.bf16.mxu0 %v1904
    %2282 = vmatmul.mubr.bf16.gmra.mxu0 %v822
    %v2283 = vpop.f32.mrf.mxu0
    %v2284 = vadd.f32 %v913, %v2283
    %v2285 = vpop.f32.mrf.mxu0
    %v2286 = vadd.f32 %v917, %v2285
    %v2287 = vpop.f32.mrf.mxu0
    %v2288 = vadd.f32 %v913, %v2287
    %v2289 = vpop.f32.mrf.mxu0
    %v2290 = vadd.f32 %v917, %v2289
    %2291 = vmatprep.mubr.bf16.mxu0 %v1906
    %2292 = vmatmul.mubr.bf16.gmra.mxu0 %v824
    %v2293 = vpop.f32.mrf.mxu0
    %v2294 = vadd.f32 %v913, %v2293
    %v2295 = vpop.f32.mrf.mxu0
    %v2296 = vadd.f32 %v917, %v2295
    %v2297 = vpop.f32.mrf.mxu0
    %v2298 = vadd.f32 %v913, %v2297
    %v2299 = vpop.f32.mrf.mxu0
    %v2300 = vadd.f32 %v917, %v2299
    %2301 = vmatprep.mubr.bf16.mxu0 %v1908
    %2302 = vmatmul.mubr.bf16.gmra.mxu0 %v826
    %v2303 = vpop.f32.mrf.mxu0
    %v2304 = vadd.f32 %v913, %v2303
    %v2305 = vpop.f32.mrf.mxu0
    %v2306 = vadd.f32 %v917, %v2305
    %v2307 = vpop.f32.mrf.mxu0
    %v2308 = vadd.f32 %v913, %v2307
    %v2309 = vpop.f32.mrf.mxu0
    %v2310 = vadd.f32 %v917, %v2309
    %2311 = vmatprep.mubr.bf16.mxu0 %v1910
    %2312 = vmatmul.mubr.bf16.gmra.mxu0 %v828
    %v2313 = vpop.f32.mrf.mxu0
    %v2314 = vadd.f32 %v913, %v2313
    %v2315 = vpop.f32.mrf.mxu0
    %v2316 = vadd.f32 %v917, %v2315
    %v2317 = vpop.f32.mrf.mxu0
    %v2318 = vadd.f32 %v913, %v2317
    %v2319 = vpop.f32.mrf.mxu0
    %v2320 = vadd.f32 %v917, %v2319
    %2321 = vmatprep.mubr.bf16.mxu0 %v1912
    %2322 = vmatmul.mubr.bf16.gmra.mxu0 %v830
    %v2323 = vpop.f32.mrf.mxu0
    %v2324 = vadd.f32 %v913, %v2323
    %v2325 = vpop.f32.mrf.mxu0
    %v2326 = vadd.f32 %v917, %v2325
    %v2327 = vpop.f32.mrf.mxu0
    %v2328 = vadd.f32 %v913, %v2327
    %v2329 = vpop.f32.mrf.mxu0
    %v2330 = vadd.f32 %v917, %v2329
    %2331 = vmatprep.mubr.bf16.mxu0 %v1914
    %2332 = vmatmul.mubr.bf16.gmra.mxu0 %v832
    %v2333 = vpop.f32.mrf.mxu0
    %v2334 = vadd.f32 %v913, %v2333
    %v2335 = vpop.f32.mrf.mxu0
    %v2336 = vadd.f32 %v917, %v2335
    %v2337 = vpop.f32.mrf.mxu0
    %v2338 = vadd.f32 %v913, %v2337
    %v2339 = vpop.f32.mrf.mxu0
    %v2340 = vadd.f32 %v917, %v2339
    %2341 = vmatprep.mubr.bf16.mxu0 %v1916
    %2342 = vmatmul.mubr.bf16.gmra.mxu0 %v834
    %v2343 = vpop.f32.mrf.mxu0
    %v2344 = vadd.f32 %v913, %v2343
    %v2345 = vpop.f32.mrf.mxu0
    %v2346 = vadd.f32 %v917, %v2345
    %v2347 = vpop.f32.mrf.mxu0
    %v2348 = vadd.f32 %v913, %v2347
    %v2349 = vpop.f32.mrf.mxu0
    %v2350 = vadd.f32 %v917, %v2349
    %2351 = vmatprep.mubr.bf16.mxu0 %v1918
    %2352 = vmatmul.mubr.bf16.gmra.mxu0 %v836
    %v2353 = vpop.f32.mrf.mxu0
    %v2354 = vadd.f32 %v913, %v2353
    %v2355 = vpop.f32.mrf.mxu0
    %v2356 = vadd.f32 %v917, %v2355
    %v2357 = vpop.f32.mrf.mxu0
    %v2358 = vadd.f32 %v913, %v2357
    %v2359 = vpop.f32.mrf.mxu0
    %v2360 = vadd.f32 %v917, %v2359
    %2361 = vmatprep.mubr.bf16.mxu0 %v1920
    %2362 = vmatmul.mubr.bf16.gmra.mxu0 %v838
    %v2363 = vpop.f32.mrf.mxu0
    %v2364 = vadd.f32 %v913, %v2363
    %v2365 = vpop.f32.mrf.mxu0
    %v2366 = vadd.f32 %v917, %v2365
    %v2367 = vpop.f32.mrf.mxu0
    %v2368 = vadd.f32 %v913, %v2367
    %v2369 = vpop.f32.mrf.mxu0
    %v2370 = vadd.f32 %v917, %v2369
    %2371 = vmatprep.mubr.bf16.mxu0 %v1922
    %2372 = vmatmul.mubr.bf16.gmra.mxu0 %v840
    %v2373 = vpop.f32.mrf.mxu0
    %v2374 = vadd.f32 %v913, %v2373
    %v2375 = vpop.f32.mrf.mxu0
    %v2376 = vadd.f32 %v917, %v2375
    %v2377 = vpop.f32.mrf.mxu0
    %v2378 = vadd.f32 %v913, %v2377
    %v2379 = vpop.f32.mrf.mxu0
    %v2380 = vadd.f32 %v917, %v2379
    %2381 = vmatprep.mubr.bf16.mxu0 %v1924
    %2382 = vmatmul.mubr.bf16.gmra.mxu0 %v842
    %v2383 = vpop.f32.mrf.mxu0
    %v2384 = vadd.f32 %v913, %v2383
    %v2385 = vpop.f32.mrf.mxu0
    %v2386 = vadd.f32 %v917, %v2385
    %v2387 = vpop.f32.mrf.mxu0
    %v2388 = vadd.f32 %v913, %v2387
    %v2389 = vpop.f32.mrf.mxu0
    %v2390 = vadd.f32 %v917, %v2389
    %2391 = vmatprep.mubr.bf16.mxu0 %v1926
    %2392 = vmatmul.mubr.bf16.gmra.mxu0 %v844
    %v2393 = vpop.f32.mrf.mxu0
    %v2394 = vadd.f32 %v913, %v2393
    %v2395 = vpop.f32.mrf.mxu0
    %v2396 = vadd.f32 %v917, %v2395
    %v2397 = vpop.f32.mrf.mxu0
    %v2398 = vadd.f32 %v913, %v2397
    %v2399 = vpop.f32.mrf.mxu0
    %v2400 = vadd.f32 %v917, %v2399
    %2401 = vmatprep.mubr.bf16.mxu0 %v1928
    %2402 = vmatmul.mubr.bf16.gmra.mxu0 %v846
    %v2403 = vpop.f32.mrf.mxu0
    %v2404 = vadd.f32 %v913, %v2403
    %v2405 = vpop.f32.mrf.mxu0
    %v2406 = vadd.f32 %v917, %v2405
    %v2407 = vpop.f32.mrf.mxu0
    %v2408 = vadd.f32 %v913, %v2407
    %v2409 = vpop.f32.mrf.mxu0
    %v2410 = vadd.f32 %v917, %v2409
    %2411 = vmatprep.mubr.bf16.mxu0 %v1930
    %2412 = vmatmul.mubr.bf16.gmra.mxu0 %v848
    %v2413 = vpop.f32.mrf.mxu0
    %v2414 = vadd.f32 %v913, %v2413
    %v2415 = vpop.f32.mrf.mxu0
    %v2416 = vadd.f32 %v917, %v2415
    %v2417 = vpop.f32.mrf.mxu0
    %v2418 = vadd.f32 %v913, %v2417
    %v2419 = vpop.f32.mrf.mxu0
    %v2420 = vadd.f32 %v917, %v2419
    %2421 = vmatprep.mubr.bf16.mxu0 %v1932
    %2422 = vmatmul.mubr.bf16.gmra.mxu0 %v850
    %v2423 = vpop.f32.mrf.mxu0
    %v2424 = vadd.f32 %v913, %v2423
    %v2425 = vpop.f32.mrf.mxu0
    %v2426 = vadd.f32 %v917, %v2425
    %v2427 = vpop.f32.mrf.mxu0
    %v2428 = vadd.f32 %v913, %v2427
    %v2429 = vpop.f32.mrf.mxu0
    %v2430 = vadd.f32 %v917, %v2429
    %2431 = vmatprep.mubr.bf16.mxu0 %v1934
    %2432 = vmatmul.mubr.bf16.gmra.mxu0 %v852
    %v2433 = vpop.f32.mrf.mxu0
    %v2434 = vadd.f32 %v913, %v2433
    %v2435 = vpop.f32.mrf.mxu0
    %v2436 = vadd.f32 %v917, %v2435
    %v2437 = vpop.f32.mrf.mxu0
    %v2438 = vadd.f32 %v913, %v2437
    %v2439 = vpop.f32.mrf.mxu0
    %v2440 = vadd.f32 %v917, %v2439
    %2441 = vmatprep.mubr.bf16.mxu0 %v1936
    %2442 = vmatmul.mubr.bf16.gmra.mxu0 %v854
    %v2443 = vpop.f32.mrf.mxu0
    %v2444 = vadd.f32 %v913, %v2443
    %v2445 = vpop.f32.mrf.mxu0
    %v2446 = vadd.f32 %v917, %v2445
    %v2447 = vpop.f32.mrf.mxu0
    %v2448 = vadd.f32 %v913, %v2447
    %v2449 = vpop.f32.mrf.mxu0
    %v2450 = vadd.f32 %v917, %v2449
    %2451 = vmatprep.mubr.bf16.mxu0 %v1938
    %2452 = vmatmul.mubr.bf16.gmra.mxu0 %v856
    %v2453 = vpop.f32.mrf.mxu0
    %v2454 = vadd.f32 %v913, %v2453
    %v2455 = vpop.f32.mrf.mxu0
    %v2456 = vadd.f32 %v917, %v2455
    %v2457 = vpop.f32.mrf.mxu0
    %v2458 = vadd.f32 %v913, %v2457
    %v2459 = vpop.f32.mrf.mxu0
    %v2460 = vadd.f32 %v917, %v2459
    %2461 = vmatprep.mubr.bf16.mxu0 %v1940
    %2462 = vmatmul.mubr.bf16.gmra.mxu0 %v858
    %v2463 = vpop.f32.mrf.mxu0
    %v2464 = vadd.f32 %v913, %v2463
    %v2465 = vpop.f32.mrf.mxu0
    %v2466 = vadd.f32 %v917, %v2465
    %v2467 = vpop.f32.mrf.mxu0
    %v2468 = vadd.f32 %v913, %v2467
    %v2469 = vpop.f32.mrf.mxu0
    %v2470 = vadd.f32 %v917, %v2469
    %2471 = vmatprep.mubr.bf16.mxu0 %v1942
    %2472 = vmatmul.mubr.bf16.gmra.mxu0 %v860
    %v2473 = vpop.f32.mrf.mxu0
    %v2474 = vadd.f32 %v913, %v2473
    %v2475 = vpop.f32.mrf.mxu0
    %v2476 = vadd.f32 %v917, %v2475
    %v2477 = vpop.f32.mrf.mxu0
    %v2478 = vadd.f32 %v913, %v2477
    %v2479 = vpop.f32.mrf.mxu0
    %v2480 = vadd.f32 %v917, %v2479
    %2481 = vmatprep.mubr.bf16.mxu0 %v1944
    %2482 = vmatmul.mubr.bf16.gmra.mxu0 %v862
    %v2483 = vpop.f32.mrf.mxu0
    %v2484 = vadd.f32 %v913, %v2483
    %v2485 = vpop.f32.mrf.mxu0
    %v2486 = vadd.f32 %v917, %v2485
    %v2487 = vpop.f32.mrf.mxu0
    %v2488 = vadd.f32 %v913, %v2487
    %v2489 = vpop.f32.mrf.mxu0
    %v2490 = vadd.f32 %v917, %v2489
    %2491 = vdwg.mxu0
    %v2492 = vmax.f32 %v1981, 0.0
    %v2493 = vmax.f32 %v1983, 0.0
    %v2494 = vmax.f32 %v2254, 0.0
    %v2495 = vmax.f32 %v2256, 0.0
    %v2496 = vmax.f32 %v1985, 0.0
    %v2497 = vmax.f32 %v1987, 0.0
    %v2498 = vmax.f32 %v2258, 0.0
    %v2499 = vmax.f32 %v2260, 0.0
    %v2500 = vmax.f32 %v1991, 0.0
    %v2501 = vmax.f32 %v1993, 0.0
    %v2502 = vmax.f32 %v2264, 0.0
    %v2503 = vmax.f32 %v2266, 0.0
    %v2504 = vmax.f32 %v1995, 0.0
    %v2505 = vmax.f32 %v1997, 0.0
    %v2506 = vmax.f32 %v2268, 0.0
    %v2507 = vmax.f32 %v2270, 0.0
    %v2508 = vmax.f32 %v2001, 0.0
    %v2509 = vmax.f32 %v2003, 0.0
    %v2510 = vmax.f32 %v2274, 0.0
    %v2511 = vmax.f32 %v2276, 0.0
    %v2512 = vmax.f32 %v2005, 0.0
    %v2513 = vmax.f32 %v2007, 0.0
    %v2514 = vmax.f32 %v2278, 0.0
    %v2515 = vmax.f32 %v2280, 0.0
    %v2516 = vmax.f32 %v2011, 0.0
    %v2517 = vmax.f32 %v2013, 0.0
    %v2518 = vmax.f32 %v2284, 0.0
    %v2519 = vmax.f32 %v2286, 0.0
    %v2520 = vmax.f32 %v2015, 0.0
    %v2521 = vmax.f32 %v2017, 0.0
    %v2522 = vmax.f32 %v2288, 0.0
    %v2523 = vmax.f32 %v2290, 0.0
    %v2524 = vmax.f32 %v2021, 0.0
    %v2525 = vmax.f32 %v2023, 0.0
    %v2526 = vmax.f32 %v2294, 0.0
    %v2527 = vmax.f32 %v2296, 0.0
    %v2528 = vmax.f32 %v2025, 0.0
    %v2529 = vmax.f32 %v2027, 0.0
    %v2530 = vmax.f32 %v2298, 0.0
    %v2531 = vmax.f32 %v2300, 0.0
    %v2532 = vmax.f32 %v2031, 0.0
    %v2533 = vmax.f32 %v2033, 0.0
    %v2534 = vmax.f32 %v2304, 0.0
    %v2535 = vmax.f32 %v2306, 0.0
    %v2536 = vmax.f32 %v2035, 0.0
    %v2537 = vmax.f32 %v2037, 0.0
    %v2538 = vmax.f32 %v2308, 0.0
    %v2539 = vmax.f32 %v2310, 0.0
    %v2540 = vmax.f32 %v2041, 0.0
    %v2541 = vmax.f32 %v2043, 0.0
    %v2542 = vmax.f32 %v2314, 0.0
    %v2543 = vmax.f32 %v2316, 0.0
    %v2544 = vmax.f32 %v2045, 0.0
    %v2545 = vmax.f32 %v2047, 0.0
    %v2546 = vmax.f32 %v2318, 0.0
    %v2547 = vmax.f32 %v2320, 0.0
    %v2548 = vmax.f32 %v2051, 0.0
    %v2549 = vmax.f32 %v2053, 0.0
    %v2550 = vmax.f32 %v2324, 0.0
    %v2551 = vmax.f32 %v2326, 0.0
    %v2552 = vmax.f32 %v2055, 0.0
    %v2553 = vmax.f32 %v2057, 0.0
    %v2554 = vmax.f32 %v2328, 0.0
    %v2555 = vmax.f32 %v2330, 0.0
    %v2556 = vmax.f32 %v2061, 0.0
    %v2557 = vmax.f32 %v2063, 0.0
    %v2558 = vmax.f32 %v2334, 0.0
    %v2559 = vmax.f32 %v2336, 0.0
    %v2560 = vmax.f32 %v2065, 0.0
    %v2561 = vmax.f32 %v2067, 0.0
    %v2562 = vmax.f32 %v2338, 0.0
    %v2563 = vmax.f32 %v2340, 0.0
    %v2564 = vmax.f32 %v2071, 0.0
    %v2565 = vmax.f32 %v2073, 0.0
    %v2566 = vmax.f32 %v2344, 0.0
    %v2567 = vmax.f32 %v2346, 0.0
    %v2568 = vmax.f32 %v2075, 0.0
    %v2569 = vmax.f32 %v2077, 0.0
    %v2570 = vmax.f32 %v2348, 0.0
    %v2571 = vmax.f32 %v2350, 0.0
    %v2572 = vmax.f32 %v2081, 0.0
    %v2573 = vmax.f32 %v2083, 0.0
    %v2574 = vmax.f32 %v2354, 0.0
    %v2575 = vmax.f32 %v2356, 0.0
    %v2576 = vmax.f32 %v2085, 0.0
    %v2577 = vmax.f32 %v2087, 0.0
    %v2578 = vmax.f32 %v2358, 0.0
    %v2579 = vmax.f32 %v2360, 0.0
    %v2580 = vmax.f32 %v2091, 0.0
    %v2581 = vmax.f32 %v2093, 0.0
    %v2582 = vmax.f32 %v2364, 0.0
    %v2583 = vmax.f32 %v2366, 0.0
    %v2584 = vmax.f32 %v2095, 0.0
    %v2585 = vmax.f32 %v2097, 0.0
    %v2586 = vmax.f32 %v2368, 0.0
    %v2587 = vmax.f32 %v2370, 0.0
    %v2588 = vmax.f32 %v2101, 0.0
    %v2589 = vmax.f32 %v2103, 0.0
    %v2590 = vmax.f32 %v2374, 0.0
    %v2591 = vmax.f32 %v2376, 0.0
    %v2592 = vmax.f32 %v2105, 0.0
    %v2593 = vmax.f32 %v2107, 0.0
    %v2594 = vmax.f32 %v2378, 0.0
    %v2595 = vmax.f32 %v2380, 0.0
    %v2596 = vmax.f32 %v2111, 0.0
    %v2597 = vmax.f32 %v2113, 0.0
    %v2598 = vmax.f32 %v2384, 0.0
    %v2599 = vmax.f32 %v2386, 0.0
    %v2600 = vmax.f32 %v2115, 0.0
    %v2601 = vmax.f32 %v2117, 0.0
    %v2602 = vmax.f32 %v2388, 0.0
    %v2603 = vmax.f32 %v2390, 0.0
    %v2604 = vmax.f32 %v2121, 0.0
    %v2605 = vmax.f32 %v2123, 0.0
    %v2606 = vmax.f32 %v2394, 0.0
    %v2607 = vmax.f32 %v2396, 0.0
    %v2608 = vmax.f32 %v2125, 0.0
    %v2609 = vmax.f32 %v2127, 0.0
    %v2610 = vmax.f32 %v2398, 0.0
    %v2611 = vmax.f32 %v2400, 0.0
    %v2612 = vmax.f32 %v2131, 0.0
    %v2613 = vmax.f32 %v2133, 0.0
    %v2614 = vmax.f32 %v2404, 0.0
    %v2615 = vmax.f32 %v2406, 0.0
    %v2616 = vmax.f32 %v2135, 0.0
    %v2617 = vmax.f32 %v2137, 0.0
    %v2618 = vmax.f32 %v2408, 0.0
    %v2619 = vmax.f32 %v2410, 0.0
    %v2620 = vmax.f32 %v2141, 0.0
    %v2621 = vmax.f32 %v2143, 0.0
    %v2622 = vmax.f32 %v2414, 0.0
    %v2623 = vmax.f32 %v2416, 0.0
    %v2624 = vmax.f32 %v2145, 0.0
    %v2625 = vmax.f32 %v2147, 0.0
    %v2626 = vmax.f32 %v2418, 0.0
    %v2627 = vmax.f32 %v2420, 0.0
    %v2628 = vmax.f32 %v2151, 0.0
    %v2629 = vmax.f32 %v2153, 0.0
    %v2630 = vmax.f32 %v2424, 0.0
    %v2631 = vmax.f32 %v2426, 0.0
    %v2632 = vmax.f32 %v2155, 0.0
    %v2633 = vmax.f32 %v2157, 0.0
    %v2634 = vmax.f32 %v2428, 0.0
    %v2635 = vmax.f32 %v2430, 0.0
    %v2636 = vmax.f32 %v2161, 0.0
    %v2637 = vmax.f32 %v2163, 0.0
    %v2638 = vmax.f32 %v2434, 0.0
    %v2639 = vmax.f32 %v2436, 0.0
    %v2640 = vmax.f32 %v2165, 0.0
    %v2641 = vmax.f32 %v2167, 0.0
    %v2642 = vmax.f32 %v2438, 0.0
    %v2643 = vmax.f32 %v2440, 0.0
    %v2644 = vmax.f32 %v2171, 0.0
    %v2645 = vmax.f32 %v2173, 0.0
    %v2646 = vmax.f32 %v2444, 0.0
    %v2647 = vmax.f32 %v2446, 0.0
    %v2648 = vmax.f32 %v2175, 0.0
    %v2649 = vmax.f32 %v2177, 0.0
    %v2650 = vmax.f32 %v2448, 0.0
    %v2651 = vmax.f32 %v2450, 0.0
    %v2652 = vmax.f32 %v2181, 0.0
    %v2653 = vmax.f32 %v2183, 0.0
    %v2654 = vmax.f32 %v2454, 0.0
    %v2655 = vmax.f32 %v2456, 0.0
    %v2656 = vmax.f32 %v2185, 0.0
    %v2657 = vmax.f32 %v2187, 0.0
    %v2658 = vmax.f32 %v2458, 0.0
    %v2659 = vmax.f32 %v2460, 0.0
    %v2660 = vmax.f32 %v2191, 0.0
    %v2661 = vmax.f32 %v2193, 0.0
    %v2662 = vmax.f32 %v2464, 0.0
    %v2663 = vmax.f32 %v2466, 0.0
    %v2664 = vmax.f32 %v2195, 0.0
    %v2665 = vmax.f32 %v2197, 0.0
    %v2666 = vmax.f32 %v2468, 0.0
    %v2667 = vmax.f32 %v2470, 0.0
    %v2668 = vmax.f32 %v2201, 0.0
    %v2669 = vmax.f32 %v2203, 0.0
    %v2670 = vmax.f32 %v2474, 0.0
    %v2671 = vmax.f32 %v2476, 0.0
    %v2672 = vmax.f32 %v2205, 0.0
    %v2673 = vmax.f32 %v2207, 0.0
    %v2674 = vmax.f32 %v2478, 0.0
    %v2675 = vmax.f32 %v2480, 0.0
    %v2676 = vmax.f32 %v2211, 0.0
    %v2677 = vmax.f32 %v2213, 0.0
    %v2678 = vmax.f32 %v2484, 0.0
    %v2679 = vmax.f32 %v2486, 0.0
    %v2680 = vmax.f32 %v2215, 0.0
    %v2681 = vmax.f32 %v2217, 0.0
    %v2682 = vmax.f32 %v2488, 0.0
    %v2683 = vmax.f32 %v2490, 0.0
    %v2684 = vmax.f32 %v1706, %v2492
    %v2685 = vmax.f32 %v1707, %v2493
    %v2686 = vmax.f32 %v1708, %v2494
    %v2687 = vmax.f32 %v1709, %v2495
    %v2688 = vmax.f32 %v1710, %v2496
    %v2689 = vmax.f32 %v1711, %v2497
    %v2690 = vmax.f32 %v1712, %v2498
    %v2691 = vmax.f32 %v1713, %v2499
    %v2692 = vmax.f32 %v1714, %v2500
    %v2693 = vmax.f32 %v1715, %v2501
    %v2694 = vmax.f32 %v1716, %v2502
    %v2695 = vmax.f32 %v1717, %v2503
    %v2696 = vmax.f32 %v1718, %v2504
    %v2697 = vmax.f32 %v1719, %v2505
    %v2698 = vmax.f32 %v1720, %v2506
    %v2699 = vmax.f32 %v1721, %v2507
    %v2700 = vmax.f32 %v1722, %v2508
    %v2701 = vmax.f32 %v1723, %v2509
    %v2702 = vmax.f32 %v1724, %v2510
    %v2703 = vmax.f32 %v1725, %v2511
    %v2704 = vmax.f32 %v1726, %v2512
    %v2705 = vmax.f32 %v1727, %v2513
    %v2706 = vmax.f32 %v1728, %v2514
    %v2707 = vmax.f32 %v1729, %v2515
    %v2708 = vmax.f32 %v1730, %v2516
    %v2709 = vmax.f32 %v1731, %v2517
    %v2710 = vmax.f32 %v1732, %v2518
    %v2711 = vmax.f32 %v1733, %v2519
    %v2712 = vmax.f32 %v1734, %v2520
    %v2713 = vmax.f32 %v1735, %v2521
    %v2714 = vmax.f32 %v1736, %v2522
    %v2715 = vmax.f32 %v1737, %v2523
    %v2716 = vmax.f32 %v1738, %v2524
    %v2717 = vmax.f32 %v1739, %v2525
    %v2718 = vmax.f32 %v1740, %v2526
    %v2719 = vmax.f32 %v1741, %v2527
    %v2720 = vmax.f32 %v1742, %v2528
    %v2721 = vmax.f32 %v1743, %v2529
    %v2722 = vmax.f32 %v1744, %v2530
    %v2723 = vmax.f32 %v1745, %v2531
    %v2724 = vmax.f32 %v1746, %v2532
    %v2725 = vmax.f32 %v1747, %v2533
    %v2726 = vmax.f32 %v1748, %v2534
    %v2727 = vmax.f32 %v1749, %v2535
    %v2728 = vmax.f32 %v1750, %v2536
    %v2729 = vmax.f32 %v1751, %v2537
    %v2730 = vmax.f32 %v1752, %v2538
    %v2731 = vmax.f32 %v1753, %v2539
    %v2732 = vmax.f32 %v1754, %v2540
    %v2733 = vmax.f32 %v1755, %v2541
    %v2734 = vmax.f32 %v1756, %v2542
    %v2735 = vmax.f32 %v1757, %v2543
    %v2736 = vmax.f32 %v1758, %v2544
    %v2737 = vmax.f32 %v1759, %v2545
    %v2738 = vmax.f32 %v1760, %v2546
    %v2739 = vmax.f32 %v1761, %v2547
    %v2740 = vmax.f32 %v1762, %v2548
    %v2741 = vmax.f32 %v1763, %v2549
    %v2742 = vmax.f32 %v1764, %v2550
    %v2743 = vmax.f32 %v1765, %v2551
    %v2744 = vmax.f32 %v1766, %v2552
    %v2745 = vmax.f32 %v1767, %v2553
    %v2746 = vmax.f32 %v1768, %v2554
    %v2747 = vmax.f32 %v1769, %v2555
    %v2748 = vmax.f32 %v1770, %v2556
    %v2749 = vmax.f32 %v1771, %v2557
    %v2750 = vmax.f32 %v1772, %v2558
    %v2751 = vmax.f32 %v1773, %v2559
    %v2752 = vmax.f32 %v1774, %v2560
    %v2753 = vmax.f32 %v1775, %v2561
    %v2754 = vmax.f32 %v1776, %v2562
    %v2755 = vmax.f32 %v1777, %v2563
    %v2756 = vmax.f32 %v1778, %v2564
    %v2757 = vmax.f32 %v1779, %v2565
    %v2758 = vmax.f32 %v1780, %v2566
    %v2759 = vmax.f32 %v1781, %v2567
    %v2760 = vmax.f32 %v1782, %v2568
    %v2761 = vmax.f32 %v1783, %v2569
    %v2762 = vmax.f32 %v1784, %v2570
    %v2763 = vmax.f32 %v1785, %v2571
    %v2764 = vmax.f32 %v1786, %v2572
    %v2765 = vmax.f32 %v1787, %v2573
    %v2766 = vmax.f32 %v1788, %v2574
    %v2767 = vmax.f32 %v1789, %v2575
    %v2768 = vmax.f32 %v1790, %v2576
    %v2769 = vmax.f32 %v1791, %v2577
    %v2770 = vmax.f32 %v1792, %v2578
    %v2771 = vmax.f32 %v1793, %v2579
    %v2772 = vmax.f32 %v1794, %v2580
    %v2773 = vmax.f32 %v1795, %v2581
    %v2774 = vmax.f32 %v1796, %v2582
    %v2775 = vmax.f32 %v1797, %v2583
    %v2776 = vmax.f32 %v1798, %v2584
    %v2777 = vmax.f32 %v1799, %v2585
    %v2778 = vmax.f32 %v1800, %v2586
    %v2779 = vmax.f32 %v1801, %v2587
    %v2780 = vmax.f32 %v1802, %v2588
    %v2781 = vmax.f32 %v1803, %v2589
    %v2782 = vmax.f32 %v1804, %v2590
    %v2783 = vmax.f32 %v1805, %v2591
    %v2784 = vmax.f32 %v1806, %v2592
    %v2785 = vmax.f32 %v1807, %v2593
    %v2786 = vmax.f32 %v1808, %v2594
    %v2787 = vmax.f32 %v1809, %v2595
    %v2788 = vmax.f32 %v1810, %v2596
    %v2789 = vmax.f32 %v1811, %v2597
    %v2790 = vmax.f32 %v1812, %v2598
    %v2791 = vmax.f32 %v1813, %v2599
    %v2792 = vmax.f32 %v1814, %v2600
    %v2793 = vmax.f32 %v1815, %v2601
    %v2794 = vmax.f32 %v1816, %v2602
    %v2795 = vmax.f32 %v1817, %v2603
    %v2796 = vmax.f32 %v1818, %v2604
    %v2797 = vmax.f32 %v1819, %v2605
    %v2798 = vmax.f32 %v1820, %v2606
    %v2799 = vmax.f32 %v1821, %v2607
    %v2800 = vmax.f32 %v1822, %v2608
    %v2801 = vmax.f32 %v1823, %v2609
    %v2802 = vmax.f32 %v1824, %v2610
    %v2803 = vmax.f32 %v1825, %v2611
    %v2804 = vmax.f32 %v1826, %v2612
    %v2805 = vmax.f32 %v1827, %v2613
    %v2806 = vmax.f32 %v1828, %v2614
    %v2807 = vmax.f32 %v1829, %v2615
    %v2808 = vmax.f32 %v1830, %v2616
    %v2809 = vmax.f32 %v1831, %v2617
    %v2810 = vmax.f32 %v1832, %v2618
    %v2811 = vmax.f32 %v1833, %v2619
    %v2812 = vmax.f32 %v1834, %v2620
    %v2813 = vmax.f32 %v1835, %v2621
    %v2814 = vmax.f32 %v1836, %v2622
    %v2815 = vmax.f32 %v1837, %v2623
    %v2816 = vmax.f32 %v1838, %v2624
    %v2817 = vmax.f32 %v1839, %v2625
    %v2818 = vmax.f32 %v1840, %v2626
    %v2819 = vmax.f32 %v1841, %v2627
    %v2820 = vmax.f32 %v1842, %v2628
    %v2821 = vmax.f32 %v1843, %v2629
    %v2822 = vmax.f32 %v1844, %v2630
    %v2823 = vmax.f32 %v1845, %v2631
    %v2824 = vmax.f32 %v1846, %v2632
    %v2825 = vmax.f32 %v1847, %v2633
    %v2826 = vmax.f32 %v1848, %v2634
    %v2827 = vmax.f32 %v1849, %v2635
    %v2828 = vmax.f32 %v1850, %v2636
    %v2829 = vmax.f32 %v1851, %v2637
    %v2830 = vmax.f32 %v1852, %v2638
    %v2831 = vmax.f32 %v1853, %v2639
    %v2832 = vmax.f32 %v1854, %v2640
    %v2833 = vmax.f32 %v1855, %v2641
    %v2834 = vmax.f32 %v1856, %v2642
    %v2835 = vmax.f32 %v1857, %v2643
    %v2836 = vmax.f32 %v1858, %v2644
    %v2837 = vmax.f32 %v1859, %v2645
    %v2838 = vmax.f32 %v1860, %v2646
    %v2839 = vmax.f32 %v1861, %v2647
    %v2840 = vmax.f32 %v1862, %v2648
    %v2841 = vmax.f32 %v1863, %v2649
    %v2842 = vmax.f32 %v1864, %v2650
    %v2843 = vmax.f32 %v1865, %v2651
    %v2844 = vmax.f32 %v1866, %v2652
    %v2845 = vmax.f32 %v1867, %v2653
    %v2846 = vmax.f32 %v1868, %v2654
    %v2847 = vmax.f32 %v1869, %v2655
    %v2848 = vmax.f32 %v1870, %v2656
    %v2849 = vmax.f32 %v1871, %v2657
    %v2850 = vmax.f32 %v1872, %v2658
    %v2851 = vmax.f32 %v1873, %v2659
    %v2852 = vmax.f32 %v1874, %v2660
    %v2853 = vmax.f32 %v1875, %v2661
    %v2854 = vmax.f32 %v1876, %v2662
    %v2855 = vmax.f32 %v1877, %v2663
    %v2856 = vmax.f32 %v1878, %v2664
    %v2857 = vmax.f32 %v1879, %v2665
    %v2858 = vmax.f32 %v1880, %v2666
    %v2859 = vmax.f32 %v1881, %v2667
    %v2860 = vmax.f32 %v1882, %v2668
    %v2861 = vmax.f32 %v1883, %v2669
    %v2862 = vmax.f32 %v1884, %v2670
    %v2863 = vmax.f32 %v1885, %v2671
    %v2864 = vmax.f32 %v1886, %v2672
    %v2865 = vmax.f32 %v1887, %v2673
    %v2866 = vmax.f32 %v1888, %v2674
    %v2867 = vmax.f32 %v1889, %v2675
    %v2868 = vmax.f32 %v1890, %v2676
    %v2869 = vmax.f32 %v1891, %v2677
    %v2870 = vmax.f32 %v1892, %v2678
    %v2871 = vmax.f32 %v1893, %v2679
    %v2872 = vmax.f32 %v1894, %v2680
    %v2873 = vmax.f32 %v1895, %v2681
    %v2874 = vmax.f32 %v1896, %v2682
    %v2875 = vmax.f32 %v1897, %v2683
    %v2876 = vpack.c.bf16 %v2688, %v2684
    %v2877 = vpack.c.bf16 %v2689, %v2685
    %v2878 = vpack.c.bf16 %v2690, %v2686
    %v2879 = vpack.c.bf16 %v2691, %v2687
    %v2880 = vpack.c.bf16 %v2696, %v2692
    %v2881 = vpack.c.bf16 %v2697, %v2693
    %v2882 = vpack.c.bf16 %v2698, %v2694
    %v2883 = vpack.c.bf16 %v2699, %v2695
    %v2884 = vpack.c.bf16 %v2704, %v2700
    %v2885 = vpack.c.bf16 %v2705, %v2701
    %v2886 = vpack.c.bf16 %v2706, %v2702
    %v2887 = vpack.c.bf16 %v2707, %v2703
    %v2888 = vpack.c.bf16 %v2712, %v2708
    %v2889 = vpack.c.bf16 %v2713, %v2709
    %v2890 = vpack.c.bf16 %v2714, %v2710
    %v2891 = vpack.c.bf16 %v2715, %v2711
    %v2892 = vpack.c.bf16 %v2720, %v2716
    %v2893 = vpack.c.bf16 %v2721, %v2717
    %v2894 = vpack.c.bf16 %v2722, %v2718
    %v2895 = vpack.c.bf16 %v2723, %v2719
    %v2896 = vpack.c.bf16 %v2728, %v2724
    %v2897 = vpack.c.bf16 %v2729, %v2725
    %v2898 = vpack.c.bf16 %v2730, %v2726
    %v2899 = vpack.c.bf16 %v2731, %v2727
    %v2900 = vpack.c.bf16 %v2736, %v2732
    %v2901 = vpack.c.bf16 %v2737, %v2733
    %v2902 = vpack.c.bf16 %v2738, %v2734
    %v2903 = vpack.c.bf16 %v2739, %v2735
    %v2904 = vpack.c.bf16 %v2744, %v2740
    %v2905 = vpack.c.bf16 %v2745, %v2741
    %v2906 = vpack.c.bf16 %v2746, %v2742
    %v2907 = vpack.c.bf16 %v2747, %v2743
    %v2908 = vpack.c.bf16 %v2752, %v2748
    %v2909 = vpack.c.bf16 %v2753, %v2749
    %v2910 = vpack.c.bf16 %v2754, %v2750
    %v2911 = vpack.c.bf16 %v2755, %v2751
    %v2912 = vpack.c.bf16 %v2760, %v2756
    %v2913 = vpack.c.bf16 %v2761, %v2757
    %v2914 = vpack.c.bf16 %v2762, %v2758
    %v2915 = vpack.c.bf16 %v2763, %v2759
    %v2916 = vpack.c.bf16 %v2768, %v2764
    %v2917 = vpack.c.bf16 %v2769, %v2765
    %v2918 = vpack.c.bf16 %v2770, %v2766
    %v2919 = vpack.c.bf16 %v2771, %v2767
    %v2920 = vpack.c.bf16 %v2776, %v2772
    %v2921 = vpack.c.bf16 %v2777, %v2773
    %v2922 = vpack.c.bf16 %v2778, %v2774
    %v2923 = vpack.c.bf16 %v2779, %v2775
    %v2924 = vpack.c.bf16 %v2784, %v2780
    %v2925 = vpack.c.bf16 %v2785, %v2781
    %v2926 = vpack.c.bf16 %v2786, %v2782
    %v2927 = vpack.c.bf16 %v2787, %v2783
    %v2928 = vpack.c.bf16 %v2792, %v2788
    %v2929 = vpack.c.bf16 %v2793, %v2789
    %v2930 = vpack.c.bf16 %v2794, %v2790
    %v2931 = vpack.c.bf16 %v2795, %v2791
    %v2932 = vpack.c.bf16 %v2800, %v2796
    %v2933 = vpack.c.bf16 %v2801, %v2797
    %v2934 = vpack.c.bf16 %v2802, %v2798
    %v2935 = vpack.c.bf16 %v2803, %v2799
    %v2936 = vpack.c.bf16 %v2808, %v2804
    %v2937 = vpack.c.bf16 %v2809, %v2805
    %v2938 = vpack.c.bf16 %v2810, %v2806
    %v2939 = vpack.c.bf16 %v2811, %v2807
    %v2940 = vpack.c.bf16 %v2816, %v2812
    %v2941 = vpack.c.bf16 %v2817, %v2813
    %v2942 = vpack.c.bf16 %v2818, %v2814
    %v2943 = vpack.c.bf16 %v2819, %v2815
    %v2944 = vpack.c.bf16 %v2824, %v2820
    %v2945 = vpack.c.bf16 %v2825, %v2821
    %v2946 = vpack.c.bf16 %v2826, %v2822
    %v2947 = vpack.c.bf16 %v2827, %v2823
    %v2948 = vpack.c.bf16 %v2832, %v2828
    %v2949 = vpack.c.bf16 %v2833, %v2829
    %v2950 = vpack.c.bf16 %v2834, %v2830
    %v2951 = vpack.c.bf16 %v2835, %v2831
    %v2952 = vpack.c.bf16 %v2840, %v2836
    %v2953 = vpack.c.bf16 %v2841, %v2837
    %v2954 = vpack.c.bf16 %v2842, %v2838
    %v2955 = vpack.c.bf16 %v2843, %v2839
    %v2956 = vpack.c.bf16 %v2848, %v2844
    %v2957 = vpack.c.bf16 %v2849, %v2845
    %v2958 = vpack.c.bf16 %v2850, %v2846
    %v2959 = vpack.c.bf16 %v2851, %v2847
    %v2960 = vpack.c.bf16 %v2856, %v2852
    %v2961 = vpack.c.bf16 %v2857, %v2853
    %v2962 = vpack.c.bf16 %v2858, %v2854
    %v2963 = vpack.c.bf16 %v2859, %v2855
    %v2964 = vpack.c.bf16 %v2864, %v2860
    %v2965 = vpack.c.bf16 %v2865, %v2861
    %v2966 = vpack.c.bf16 %v2866, %v2862
    %v2967 = vpack.c.bf16 %v2867, %v2863
    %v2968 = vpack.c.bf16 %v2872, %v2868
    %v2969 = vpack.c.bf16 %v2873, %v2869
    %v2970 = vpack.c.bf16 %v2874, %v2870
    %v2971 = vpack.c.bf16 %v2875, %v2871
    %v2972 = vmax.bf16 %v2876, %v2878
    %v2973 = vmax.bf16 %v2877, %v2879
    %v2974 = vmax.bf16 %v2880, %v2882
    %v2975 = vmax.bf16 %v2881, %v2883
    %v2976 = vmax.bf16 %v2884, %v2886
    %v2977 = vmax.bf16 %v2885, %v2887
    %v2978 = vmax.bf16 %v2888, %v2890
    %v2979 = vmax.bf16 %v2889, %v2891
    %v2980 = vmax.bf16 %v2892, %v2894
    %v2981 = vmax.bf16 %v2893, %v2895
    %v2982 = vmax.bf16 %v2896, %v2898
    %v2983 = vmax.bf16 %v2897, %v2899
    %v2984 = vmax.bf16 %v2900, %v2902
    %v2985 = vmax.bf16 %v2901, %v2903
    %v2986 = vmax.bf16 %v2904, %v2906
    %v2987 = vmax.bf16 %v2905, %v2907
    %v2988 = vmax.bf16 %v2908, %v2910
    %v2989 = vmax.bf16 %v2909, %v2911
    %v2990 = vmax.bf16 %v2912, %v2914
    %v2991 = vmax.bf16 %v2913, %v2915
    %v2992 = vmax.bf16 %v2916, %v2918
    %v2993 = vmax.bf16 %v2917, %v2919
    %v2994 = vmax.bf16 %v2920, %v2922
    %v2995 = vmax.bf16 %v2921, %v2923
    %v2996 = vmax.bf16 %v2924, %v2926
    %v2997 = vmax.bf16 %v2925, %v2927
    %v2998 = vmax.bf16 %v2928, %v2930
    %v2999 = vmax.bf16 %v2929, %v2931
    %v3000 = vmax.bf16 %v2932, %v2934
    %v3001 = vmax.bf16 %v2933, %v2935
    %v3002 = vmax.bf16 %v2936, %v2938
    %v3003 = vmax.bf16 %v2937, %v2939
    %v3004 = vmax.bf16 %v2940, %v2942
    %v3005 = vmax.bf16 %v2941, %v2943
    %v3006 = vmax.bf16 %v2944, %v2946
    %v3007 = vmax.bf16 %v2945, %v2947
    %v3008 = vmax.bf16 %v2948, %v2950
    %v3009 = vmax.bf16 %v2949, %v2951
    %v3010 = vmax.bf16 %v2952, %v2954
    %v3011 = vmax.bf16 %v2953, %v2955
    %v3012 = vmax.bf16 %v2956, %v2958
    %v3013 = vmax.bf16 %v2957, %v2959
    %v3014 = vmax.bf16 %v2960, %v2962
    %v3015 = vmax.bf16 %v2961, %v2963
    %v3016 = vmax.bf16 %v2964, %v2966
    %v3017 = vmax.bf16 %v2965, %v2967
    %v3018 = vmax.bf16 %v2968, %v2970
    %v3019 = vmax.bf16 %v2969, %v2971
    %v3020 = vld [vmem:[#allocation8] sm:$0xff]
    %v3021 = vld [vmem:[#allocation8 + $0x8] sm:$0xff]
    %v3022 = vld [vmem:[#allocation8 + $0x10] sm:$0xff]
    %v3023 = vld [vmem:[#allocation8 + $0x18] sm:$0xff]
    %v3024 = vld [vmem:[#allocation8 + $0x20] sm:$0xff]
    %v3025 = vld [vmem:[#allocation8 + $0x28] sm:$0xff]
    %v3026 = vld [vmem:[#allocation8 + $0x30] sm:$0xff]
    %v3027 = vld [vmem:[#allocation8 + $0x38] sm:$0xff]
    %v3028 = vld [vmem:[#allocation8 + $0x40] sm:$0xff]
    %v3029 = vld [vmem:[#allocation8 + $0x48] sm:$0xff]
    %v3030 = vld [vmem:[#allocation8 + $0x50] sm:$0xff]
    %v3031 = vld [vmem:[#allocation8 + $0x58] sm:$0xff]
    %v3032 = vld [vmem:[#allocation8 + $0x60] sm:$0xff]
    %v3033 = vld [vmem:[#allocation8 + $0x68] sm:$0xff]
    %v3034 = vld [vmem:[#allocation8 + $0x70] sm:$0xff]
    %v3035 = vld [vmem:[#allocation8 + $0x78] sm:$0xff]
    %v3036 = vld [vmem:[#allocation8 + $0x80] sm:$0xff]
    %v3037 = vld [vmem:[#allocation8 + $0x88] sm:$0xff]
    %v3038 = vld [vmem:[#allocation8 + $0x90] sm:$0xff]
    %v3039 = vld [vmem:[#allocation8 + $0x98] sm:$0xff]
    %v3040 = vld [vmem:[#allocation8 + $0xa0] sm:$0xff]
    %v3041 = vld [vmem:[#allocation8 + $0xa8] sm:$0xff]
    %v3042 = vld [vmem:[#allocation8 + $0xb0] sm:$0xff]
    %v3043 = vld [vmem:[#allocation8 + $0xb8] sm:$0xff]
    %v3044 = vld [vmem:[#allocation8 + $0xc0] sm:$0xff]
    %v3045 = vld [vmem:[#allocation8 + $0xc8] sm:$0xff]
    %v3046 = vld [vmem:[#allocation8 + $0xd0] sm:$0xff]
    %v3047 = vld [vmem:[#allocation8 + $0xd8] sm:$0xff]
    %v3048 = vld [vmem:[#allocation8 + $0xe0] sm:$0xff]
    %v3049 = vld [vmem:[#allocation8 + $0xe8] sm:$0xff]
    %v3050 = vld [vmem:[#allocation8 + $0xf0] sm:$0xff]
    %v3051 = vld [vmem:[#allocation8 + $0xf8] sm:$0xff]
    %v3052 = vld [vmem:[#allocation8 + $0x100] sm:$0xff]
    %v3053 = vld [vmem:[#allocation8 + $0x108] sm:$0xff]
    %v3054 = vld [vmem:[#allocation8 + $0x110] sm:$0xff]
    %v3055 = vld [vmem:[#allocation8 + $0x118] sm:$0xff]
    %v3056 = vld [vmem:[#allocation8 + $0x120] sm:$0xff]
    %v3057 = vld [vmem:[#allocation8 + $0x128] sm:$0xff]
    %v3058 = vld [vmem:[#allocation8 + $0x130] sm:$0xff]
    %v3059 = vld [vmem:[#allocation8 + $0x138] sm:$0xff]
    %v3060 = vld [vmem:[#allocation8 + $0x140] sm:$0xff]
    %v3061 = vld [vmem:[#allocation8 + $0x148] sm:$0xff]
    %v3062 = vld [vmem:[#allocation8 + $0x150] sm:$0xff]
    %v3063 = vld [vmem:[#allocation8 + $0x158] sm:$0xff]
    %v3064 = vld [vmem:[#allocation8 + $0x160] sm:$0xff]
    %v3065 = vld [vmem:[#allocation8 + $0x168] sm:$0xff]
    %v3066 = vld [vmem:[#allocation8 + $0x170] sm:$0xff]
    %v3067 = vld [vmem:[#allocation8 + $0x178] sm:$0xff]
    %v3068 = vld [vmem:[#allocation8 + $0x180] sm:$0xff]
    %v3069 = vld [vmem:[#allocation8 + $0x188] sm:$0xff]
    %v3070 = vld [vmem:[#allocation8 + $0x190] sm:$0xff]
    %v3071 = vld [vmem:[#allocation8 + $0x198] sm:$0xff]
    %v3072 = vld [vmem:[#allocation8 + $0x1a0] sm:$0xff]
    %v3073 = vld [vmem:[#allocation8 + $0x1a8] sm:$0xff]
    %v3074 = vld [vmem:[#allocation8 + $0x1b0] sm:$0xff]
    %v3075 = vld [vmem:[#allocation8 + $0x1b8] sm:$0xff]
    %v3076 = vld [vmem:[#allocation8 + $0x1c0] sm:$0xff]
    %v3077 = vld [vmem:[#allocation8 + $0x1c8] sm:$0xff]
    %v3078 = vld [vmem:[#allocation8 + $0x1d0] sm:$0xff]
    %v3079 = vld [vmem:[#allocation8 + $0x1d8] sm:$0xff]
    %v3080 = vld [vmem:[#allocation8 + $0x1e0] sm:$0xff]
    %v3081 = vld [vmem:[#allocation8 + $0x1e8] sm:$0xff]
    %v3082 = vld [vmem:[#allocation8 + $0x1f0] sm:$0xff]
    %v3083 = vld [vmem:[#allocation8 + $0x1f8] sm:$0xff]
    %v3084 = vld [vmem:[#allocation8 + $0x200] sm:$0xff]
    %v3085 = vld [vmem:[#allocation8 + $0x208] sm:$0xff]
    %v3086 = vld [vmem:[#allocation8 + $0x210] sm:$0xff]
    %v3087 = vld [vmem:[#allocation8 + $0x218] sm:$0xff]
    %v3088 = vld [vmem:[#allocation8 + $0x220] sm:$0xff]
    %v3089 = vld [vmem:[#allocation8 + $0x228] sm:$0xff]
    %v3090 = vld [vmem:[#allocation8 + $0x230] sm:$0xff]
    %v3091 = vld [vmem:[#allocation8 + $0x238] sm:$0xff]
    %v3092 = vld [vmem:[#allocation8 + $0x240] sm:$0xff]
    %v3093 = vld [vmem:[#allocation8 + $0x248] sm:$0xff]
    %v3094 = vld [vmem:[#allocation8 + $0x250] sm:$0xff]
    %v3095 = vld [vmem:[#allocation8 + $0x258] sm:$0xff]
    %v3096 = vld [vmem:[#allocation8 + $0x260] sm:$0xff]
    %v3097 = vld [vmem:[#allocation8 + $0x268] sm:$0xff]
    %v3098 = vld [vmem:[#allocation8 + $0x270] sm:$0xff]
    %v3099 = vld [vmem:[#allocation8 + $0x278] sm:$0xff]
    %v3100 = vld [vmem:[#allocation8 + $0x280] sm:$0xff]
    %v3101 = vld [vmem:[#allocation8 + $0x288] sm:$0xff]
    %v3102 = vld [vmem:[#allocation8 + $0x290] sm:$0xff]
    %v3103 = vld [vmem:[#allocation8 + $0x298] sm:$0xff]
    %v3104 = vld [vmem:[#allocation8 + $0x2a0] sm:$0xff]
    %v3105 = vld [vmem:[#allocation8 + $0x2a8] sm:$0xff]
    %v3106 = vld [vmem:[#allocation8 + $0x2b0] sm:$0xff]
    %v3107 = vld [vmem:[#allocation8 + $0x2b8] sm:$0xff]
    %v3108 = vld [vmem:[#allocation8 + $0x2c0] sm:$0xff]
    %v3109 = vld [vmem:[#allocation8 + $0x2c8] sm:$0xff]
    %v3110 = vld [vmem:[#allocation8 + $0x2d0] sm:$0xff]
    %v3111 = vld [vmem:[#allocation8 + $0x2d8] sm:$0xff]
    %v3112 = vld [vmem:[#allocation8 + $0x2e0] sm:$0xff]
    %v3113 = vld [vmem:[#allocation8 + $0x2e8] sm:$0xff]
    %v3114 = vld [vmem:[#allocation8 + $0x2f0] sm:$0xff]
    %v3115 = vld [vmem:[#allocation8 + $0x2f8] sm:$0xff]
    %v3116 = vld [vmem:[#allocation8 + $0x300] sm:$0xff]
    %v3117 = vld [vmem:[#allocation8 + $0x308] sm:$0xff]
    %v3118 = vld [vmem:[#allocation8 + $0x310] sm:$0xff]
    %v3119 = vld [vmem:[#allocation8 + $0x318] sm:$0xff]
    %v3120 = vld [vmem:[#allocation8 + $0x320] sm:$0xff]
    %v3121 = vld [vmem:[#allocation8 + $0x328] sm:$0xff]
    %v3122 = vld [vmem:[#allocation8 + $0x330] sm:$0xff]
    %v3123 = vld [vmem:[#allocation8 + $0x338] sm:$0xff]
    %v3124 = vld [vmem:[#allocation8 + $0x340] sm:$0xff]
    %v3125 = vld [vmem:[#allocation8 + $0x348] sm:$0xff]
    %v3126 = vld [vmem:[#allocation8 + $0x350] sm:$0xff]
    %v3127 = vld [vmem:[#allocation8 + $0x358] sm:$0xff]
    %v3128 = vld [vmem:[#allocation8 + $0x360] sm:$0xff]
    %v3129 = vld [vmem:[#allocation8 + $0x368] sm:$0xff]
    %v3130 = vld [vmem:[#allocation8 + $0x370] sm:$0xff]
    %v3131 = vld [vmem:[#allocation8 + $0x378] sm:$0xff]
    %v3132 = vld [vmem:[#allocation8 + $0x380] sm:$0xff]
    %v3133 = vld [vmem:[#allocation8 + $0x388] sm:$0xff]
    %v3134 = vld [vmem:[#allocation8 + $0x390] sm:$0xff]
    %v3135 = vld [vmem:[#allocation8 + $0x398] sm:$0xff]
    %v3136 = vld [vmem:[#allocation8 + $0x3a0] sm:$0xff]
    %v3137 = vld [vmem:[#allocation8 + $0x3a8] sm:$0xff]
    %v3138 = vld [vmem:[#allocation8 + $0x3b0] sm:$0xff]
    %v3139 = vld [vmem:[#allocation8 + $0x3b8] sm:$0xff]
    %v3140 = vld [vmem:[#allocation8 + $0x3c0] sm:$0xff]
    %v3141 = vld [vmem:[#allocation8 + $0x3c8] sm:$0xff]
    %v3142 = vld [vmem:[#allocation8 + $0x3d0] sm:$0xff]
    %v3143 = vld [vmem:[#allocation8 + $0x3d8] sm:$0xff]
    %v3144 = vld [vmem:[#allocation8 + $0x3e0] sm:$0xff]
    %v3145 = vld [vmem:[#allocation8 + $0x3e8] sm:$0xff]
    %v3146 = vld [vmem:[#allocation8 + $0x3f0] sm:$0xff]
    %v3147 = vld [vmem:[#allocation8 + $0x3f8] sm:$0xff]
    %v3148 = vld [vmem:[#allocation8 + $0x400] sm:$0xff]
    %v3149 = vld [vmem:[#allocation8 + $0x408] sm:$0xff]
    %v3150 = vld [vmem:[#allocation8 + $0x410] sm:$0xff]
    %v3151 = vld [vmem:[#allocation8 + $0x418] sm:$0xff]
    %v3152 = vld [vmem:[#allocation8 + $0x420] sm:$0xff]
    %v3153 = vld [vmem:[#allocation8 + $0x428] sm:$0xff]
    %v3154 = vld [vmem:[#allocation8 + $0x430] sm:$0xff]
    %v3155 = vld [vmem:[#allocation8 + $0x438] sm:$0xff]
    %v3156 = vld [vmem:[#allocation8 + $0x440] sm:$0xff]
    %v3157 = vld [vmem:[#allocation8 + $0x448] sm:$0xff]
    %v3158 = vld [vmem:[#allocation8 + $0x450] sm:$0xff]
    %v3159 = vld [vmem:[#allocation8 + $0x458] sm:$0xff]
    %v3160 = vld [vmem:[#allocation8 + $0x460] sm:$0xff]
    %v3161 = vld [vmem:[#allocation8 + $0x468] sm:$0xff]
    %v3162 = vld [vmem:[#allocation8 + $0x470] sm:$0xff]
    %v3163 = vld [vmem:[#allocation8 + $0x478] sm:$0xff]
    %v3164 = vld [vmem:[#allocation8 + $0x480] sm:$0xff]
    %v3165 = vld [vmem:[#allocation8 + $0x488] sm:$0xff]
    %v3166 = vld [vmem:[#allocation8 + $0x490] sm:$0xff]
    %v3167 = vld [vmem:[#allocation8 + $0x498] sm:$0xff]
    %v3168 = vld [vmem:[#allocation8 + $0x4a0] sm:$0xff]
    %v3169 = vld [vmem:[#allocation8 + $0x4a8] sm:$0xff]
    %v3170 = vld [vmem:[#allocation8 + $0x4b0] sm:$0xff]
    %v3171 = vld [vmem:[#allocation8 + $0x4b8] sm:$0xff]
    %v3172 = vld [vmem:[#allocation8 + $0x4c0] sm:$0xff]
    %v3173 = vld [vmem:[#allocation8 + $0x4c8] sm:$0xff]
    %v3174 = vld [vmem:[#allocation8 + $0x4d0] sm:$0xff]
    %v3175 = vld [vmem:[#allocation8 + $0x4d8] sm:$0xff]
    %v3176 = vld [vmem:[#allocation8 + $0x4e0] sm:$0xff]
    %v3177 = vld [vmem:[#allocation8 + $0x4e8] sm:$0xff]
    %v3178 = vld [vmem:[#allocation8 + $0x4f0] sm:$0xff]
    %v3179 = vld [vmem:[#allocation8 + $0x4f8] sm:$0xff]
    %v3180 = vld [vmem:[#allocation8 + $0x500] sm:$0xff]
    %v3181 = vld [vmem:[#allocation8 + $0x508] sm:$0xff]
    %v3182 = vld [vmem:[#allocation8 + $0x510] sm:$0xff]
    %v3183 = vld [vmem:[#allocation8 + $0x518] sm:$0xff]
    %v3184 = vld [vmem:[#allocation8 + $0x520] sm:$0xff]
    %v3185 = vld [vmem:[#allocation8 + $0x528] sm:$0xff]
    %v3186 = vld [vmem:[#allocation8 + $0x530] sm:$0xff]
    %v3187 = vld [vmem:[#allocation8 + $0x538] sm:$0xff]
    %v3188 = vld [vmem:[#allocation8 + $0x540] sm:$0xff]
    %v3189 = vld [vmem:[#allocation8 + $0x548] sm:$0xff]
    %v3190 = vld [vmem:[#allocation8 + $0x550] sm:$0xff]
    %v3191 = vld [vmem:[#allocation8 + $0x558] sm:$0xff]
    %v3192 = vld [vmem:[#allocation8 + $0x560] sm:$0xff]
    %v3193 = vld [vmem:[#allocation8 + $0x568] sm:$0xff]
    %v3194 = vld [vmem:[#allocation8 + $0x570] sm:$0xff]
    %v3195 = vld [vmem:[#allocation8 + $0x578] sm:$0xff]
    %v3196 = vld [vmem:[#allocation8 + $0x580] sm:$0xff]
    %v3197 = vld [vmem:[#allocation8 + $0x588] sm:$0xff]
    %v3198 = vld [vmem:[#allocation8 + $0x590] sm:$0xff]
    %v3199 = vld [vmem:[#allocation8 + $0x598] sm:$0xff]
    %v3200 = vld [vmem:[#allocation8 + $0x5a0] sm:$0xff]
    %v3201 = vld [vmem:[#allocation8 + $0x5a8] sm:$0xff]
    %v3202 = vld [vmem:[#allocation8 + $0x5b0] sm:$0xff]
    %v3203 = vld [vmem:[#allocation8 + $0x5b8] sm:$0xff]
    %v3204 = vld [vmem:[#allocation8 + $0x5c0] sm:$0xff]
    %v3205 = vld [vmem:[#allocation8 + $0x5c8] sm:$0xff]
    %v3206 = vld [vmem:[#allocation8 + $0x5d0] sm:$0xff]
    %v3207 = vld [vmem:[#allocation8 + $0x5d8] sm:$0xff]
    %v3208 = vld [vmem:[#allocation8 + $0x5e0] sm:$0xff]
    %v3209 = vld [vmem:[#allocation8 + $0x5e8] sm:$0xff]
    %v3210 = vld [vmem:[#allocation8 + $0x5f0] sm:$0xff]
    %v3211 = vld [vmem:[#allocation8 + $0x5f8] sm:$0xff]
    %v3212 = vld [vmem:[#allocation8 + $0x600] sm:$0xff]
    %v3213 = vld [vmem:[#allocation8 + $0x608] sm:$0xff]
    %v3214 = vld [vmem:[#allocation8 + $0x610] sm:$0xff]
    %v3215 = vld [vmem:[#allocation8 + $0x618] sm:$0xff]
    %v3216 = vld [vmem:[#allocation8 + $0x620] sm:$0xff]
    %v3217 = vld [vmem:[#allocation8 + $0x628] sm:$0xff]
    %v3218 = vld [vmem:[#allocation8 + $0x630] sm:$0xff]
    %v3219 = vld [vmem:[#allocation8 + $0x638] sm:$0xff]
    %v3220 = vld [vmem:[#allocation8 + $0x640] sm:$0xff]
    %v3221 = vld [vmem:[#allocation8 + $0x648] sm:$0xff]
    %v3222 = vld [vmem:[#allocation8 + $0x650] sm:$0xff]
    %v3223 = vld [vmem:[#allocation8 + $0x658] sm:$0xff]
    %v3224 = vld [vmem:[#allocation8 + $0x660] sm:$0xff]
    %v3225 = vld [vmem:[#allocation8 + $0x668] sm:$0xff]
    %v3226 = vld [vmem:[#allocation8 + $0x670] sm:$0xff]
    %v3227 = vld [vmem:[#allocation8 + $0x678] sm:$0xff]
    %v3228 = vld [vmem:[#allocation8 + $0x680] sm:$0xff]
    %v3229 = vld [vmem:[#allocation8 + $0x688] sm:$0xff]
    %v3230 = vld [vmem:[#allocation8 + $0x690] sm:$0xff]
    %v3231 = vld [vmem:[#allocation8 + $0x698] sm:$0xff]
    %v3232 = vld [vmem:[#allocation8 + $0x6a0] sm:$0xff]
    %v3233 = vld [vmem:[#allocation8 + $0x6a8] sm:$0xff]
    %v3234 = vld [vmem:[#allocation8 + $0x6b0] sm:$0xff]
    %v3235 = vld [vmem:[#allocation8 + $0x6b8] sm:$0xff]
    %v3236 = vld [vmem:[#allocation8 + $0x6c0] sm:$0xff]
    %v3237 = vld [vmem:[#allocation8 + $0x6c8] sm:$0xff]
    %v3238 = vld [vmem:[#allocation8 + $0x6d0] sm:$0xff]
    %v3239 = vld [vmem:[#allocation8 + $0x6d8] sm:$0xff]
    %v3240 = vld [vmem:[#allocation8 + $0x6e0] sm:$0xff]
    %v3241 = vld [vmem:[#allocation8 + $0x6e8] sm:$0xff]
    %v3242 = vld [vmem:[#allocation8 + $0x6f0] sm:$0xff]
    %v3243 = vld [vmem:[#allocation8 + $0x6f8] sm:$0xff]
    %v3244 = vld [vmem:[#allocation8 + $0x700] sm:$0xff]
    %v3245 = vld [vmem:[#allocation8 + $0x708] sm:$0xff]
    %v3246 = vld [vmem:[#allocation8 + $0x710] sm:$0xff]
    %v3247 = vld [vmem:[#allocation8 + $0x718] sm:$0xff]
    %v3248 = vld [vmem:[#allocation8 + $0x720] sm:$0xff]
    %v3249 = vld [vmem:[#allocation8 + $0x728] sm:$0xff]
    %v3250 = vld [vmem:[#allocation8 + $0x730] sm:$0xff]
    %v3251 = vld [vmem:[#allocation8 + $0x738] sm:$0xff]
    %v3252 = vld [vmem:[#allocation8 + $0x740] sm:$0xff]
    %v3253 = vld [vmem:[#allocation8 + $0x748] sm:$0xff]
    %v3254 = vld [vmem:[#allocation8 + $0x750] sm:$0xff]
    %v3255 = vld [vmem:[#allocation8 + $0x758] sm:$0xff]
    %v3256 = vld [vmem:[#allocation8 + $0x760] sm:$0xff]
    %v3257 = vld [vmem:[#allocation8 + $0x768] sm:$0xff]
    %v3258 = vld [vmem:[#allocation8 + $0x770] sm:$0xff]
    %v3259 = vld [vmem:[#allocation8 + $0x778] sm:$0xff]
    %v3260 = vld [vmem:[#allocation8 + $0x780] sm:$0xff]
    %v3261 = vld [vmem:[#allocation8 + $0x788] sm:$0xff]
    %v3262 = vld [vmem:[#allocation8 + $0x790] sm:$0xff]
    %v3263 = vld [vmem:[#allocation8 + $0x798] sm:$0xff]
    %v3264 = vld [vmem:[#allocation8 + $0x7a0] sm:$0xff]
    %v3265 = vld [vmem:[#allocation8 + $0x7a8] sm:$0xff]
    %v3266 = vld [vmem:[#allocation8 + $0x7b0] sm:$0xff]
    %v3267 = vld [vmem:[#allocation8 + $0x7b8] sm:$0xff]
    %v3268 = vld [vmem:[#allocation8 + $0x7c0] sm:$0xff]
    %v3269 = vld [vmem:[#allocation8 + $0x7c8] sm:$0xff]
    %v3270 = vld [vmem:[#allocation8 + $0x7d0] sm:$0xff]
    %v3271 = vld [vmem:[#allocation8 + $0x7d8] sm:$0xff]
    %v3272 = vld [vmem:[#allocation8 + $0x7e0] sm:$0xff]
    %v3273 = vld [vmem:[#allocation8 + $0x7e8] sm:$0xff]
    %v3274 = vld [vmem:[#allocation8 + $0x7f0] sm:$0xff]
    %v3275 = vld [vmem:[#allocation8 + $0x7f8] sm:$0xff]
    %v3276 = vld [vmem:[#allocation8 + $0x800] sm:$0xff]
    %v3277 = vld [vmem:[#allocation8 + $0x808] sm:$0xff]
    %v3278 = vld [vmem:[#allocation8 + $0x810] sm:$0xff]
    %v3279 = vld [vmem:[#allocation8 + $0x818] sm:$0xff]
    %v3280 = vld [vmem:[#allocation8 + $0x820] sm:$0xff]
    %v3281 = vld [vmem:[#allocation8 + $0x828] sm:$0xff]
    %v3282 = vld [vmem:[#allocation8 + $0x830] sm:$0xff]
    %v3283 = vld [vmem:[#allocation8 + $0x838] sm:$0xff]
    %v3284 = vld [vmem:[#allocation8 + $0x840] sm:$0xff]
    %v3285 = vld [vmem:[#allocation8 + $0x848] sm:$0xff]
    %v3286 = vld [vmem:[#allocation8 + $0x850] sm:$0xff]
    %v3287 = vld [vmem:[#allocation8 + $0x858] sm:$0xff]
    %v3288 = vld [vmem:[#allocation8 + $0x860] sm:$0xff]
    %v3289 = vld [vmem:[#allocation8 + $0x868] sm:$0xff]
    %v3290 = vld [vmem:[#allocation8 + $0x870] sm:$0xff]
    %v3291 = vld [vmem:[#allocation8 + $0x878] sm:$0xff]
    %v3292 = vld [vmem:[#allocation8 + $0x880] sm:$0xff]
    %v3293 = vld [vmem:[#allocation8 + $0x888] sm:$0xff]
    %v3294 = vld [vmem:[#allocation8 + $0x890] sm:$0xff]
    %v3295 = vld [vmem:[#allocation8 + $0x898] sm:$0xff]
    %v3296 = vld [vmem:[#allocation8 + $0x8a0] sm:$0xff]
    %v3297 = vld [vmem:[#allocation8 + $0x8a8] sm:$0xff]
    %v3298 = vld [vmem:[#allocation8 + $0x8b0] sm:$0xff]
    %v3299 = vld [vmem:[#allocation8 + $0x8b8] sm:$0xff]
    %v3300 = vld [vmem:[#allocation8 + $0x8c0] sm:$0xff]
    %v3301 = vld [vmem:[#allocation8 + $0x8c8] sm:$0xff]
    %v3302 = vld [vmem:[#allocation8 + $0x8d0] sm:$0xff]
    %v3303 = vld [vmem:[#allocation8 + $0x8d8] sm:$0xff]
    %v3304 = vld [vmem:[#allocation8 + $0x8e0] sm:$0xff]
    %v3305 = vld [vmem:[#allocation8 + $0x8e8] sm:$0xff]
    %v3306 = vld [vmem:[#allocation8 + $0x8f0] sm:$0xff]
    %v3307 = vld [vmem:[#allocation8 + $0x8f8] sm:$0xff]
    %v3308 = vld [vmem:[#allocation8 + $0x900] sm:$0xff]
    %v3309 = vld [vmem:[#allocation8 + $0x908] sm:$0xff]
    %v3310 = vld [vmem:[#allocation8 + $0x910] sm:$0xff]
    %v3311 = vld [vmem:[#allocation8 + $0x918] sm:$0xff]
    %v3312 = vld [vmem:[#allocation8 + $0x920] sm:$0xff]
    %v3313 = vld [vmem:[#allocation8 + $0x928] sm:$0xff]
    %v3314 = vld [vmem:[#allocation8 + $0x930] sm:$0xff]
    %v3315 = vld [vmem:[#allocation8 + $0x938] sm:$0xff]
    %v3316 = vld [vmem:[#allocation8 + $0x940] sm:$0xff]
    %v3317 = vld [vmem:[#allocation8 + $0x948] sm:$0xff]
    %v3318 = vld [vmem:[#allocation8 + $0x950] sm:$0xff]
    %v3319 = vld [vmem:[#allocation8 + $0x958] sm:$0xff]
    %v3320 = vld [vmem:[#allocation8 + $0x960] sm:$0xff]
    %v3321 = vld [vmem:[#allocation8 + $0x968] sm:$0xff]
    %v3322 = vld [vmem:[#allocation8 + $0x970] sm:$0xff]
    %v3323 = vld [vmem:[#allocation8 + $0x978] sm:$0xff]
    %v3324 = vld [vmem:[#allocation8 + $0x980] sm:$0xff]
    %v3325 = vld [vmem:[#allocation8 + $0x988] sm:$0xff]
    %v3326 = vld [vmem:[#allocation8 + $0x990] sm:$0xff]
    %v3327 = vld [vmem:[#allocation8 + $0x998] sm:$0xff]
    %v3328 = vld [vmem:[#allocation8 + $0x9a0] sm:$0xff]
    %v3329 = vld [vmem:[#allocation8 + $0x9a8] sm:$0xff]
    %v3330 = vld [vmem:[#allocation8 + $0x9b0] sm:$0xff]
    %v3331 = vld [vmem:[#allocation8 + $0x9b8] sm:$0xff]
    %v3332 = vld [vmem:[#allocation8 + $0x9c0] sm:$0xff]
    %v3333 = vld [vmem:[#allocation8 + $0x9c8] sm:$0xff]
    %v3334 = vld [vmem:[#allocation8 + $0x9d0] sm:$0xff]
    %v3335 = vld [vmem:[#allocation8 + $0x9d8] sm:$0xff]
    %v3336 = vld [vmem:[#allocation8 + $0x9e0] sm:$0xff]
    %v3337 = vld [vmem:[#allocation8 + $0x9e8] sm:$0xff]
    %v3338 = vld [vmem:[#allocation8 + $0x9f0] sm:$0xff]
    %v3339 = vld [vmem:[#allocation8 + $0x9f8] sm:$0xff]
    %v3404 = vunpack.c.l.b16 %v3084
    %v3405 = vunpack.c.h.b16 %v3084
    %v3406 = vunpack.c.l.b16 %v3085
    %v3407 = vunpack.c.h.b16 %v3085
    %v3408 = vunpack.c.l.b16 %v3086
    %v3409 = vunpack.c.h.b16 %v3086
    %v3410 = vunpack.c.l.b16 %v3087
    %v3411 = vunpack.c.h.b16 %v3087
    %v3412 = vunpack.c.l.b16 %v3088
    %v3413 = vunpack.c.h.b16 %v3088
    %v3414 = vunpack.c.l.b16 %v3089
    %v3415 = vunpack.c.h.b16 %v3089
    %v3416 = vunpack.c.l.b16 %v3090
    %v3417 = vunpack.c.h.b16 %v3090
    %v3418 = vunpack.c.l.b16 %v3091
    %v3419 = vunpack.c.h.b16 %v3091
    %v3420 = vunpack.c.l.b16 %v3092
    %v3421 = vunpack.c.h.b16 %v3092
    %v3422 = vunpack.c.l.b16 %v3093
    %v3423 = vunpack.c.h.b16 %v3093
    %v3424 = vunpack.c.l.b16 %v3094
    %v3425 = vunpack.c.h.b16 %v3094
    %v3426 = vunpack.c.l.b16 %v3095
    %v3427 = vunpack.c.h.b16 %v3095
    %v3428 = vunpack.c.l.b16 %v3096
    %v3429 = vunpack.c.h.b16 %v3096
    %v3430 = vunpack.c.l.b16 %v3097
    %v3431 = vunpack.c.h.b16 %v3097
    %v3432 = vunpack.c.l.b16 %v3098
    %v3433 = vunpack.c.h.b16 %v3098
    %v3434 = vunpack.c.l.b16 %v3099
    %v3435 = vunpack.c.h.b16 %v3099
    %v3436 = vunpack.c.l.b16 %v3100
    %v3437 = vunpack.c.h.b16 %v3100
    %v3438 = vunpack.c.l.b16 %v3101
    %v3439 = vunpack.c.h.b16 %v3101
    %v3440 = vunpack.c.l.b16 %v3102
    %v3441 = vunpack.c.h.b16 %v3102
    %v3442 = vunpack.c.l.b16 %v3103
    %v3443 = vunpack.c.h.b16 %v3103
    %v3444 = vunpack.c.l.b16 %v3104
    %v3445 = vunpack.c.h.b16 %v3104
    %v3446 = vunpack.c.l.b16 %v3105
    %v3447 = vunpack.c.h.b16 %v3105
    %v3448 = vunpack.c.l.b16 %v3106
    %v3449 = vunpack.c.h.b16 %v3106
    %v3450 = vunpack.c.l.b16 %v3107
    %v3451 = vunpack.c.h.b16 %v3107
    %v3452 = vunpack.c.l.b16 %v3108
    %v3453 = vunpack.c.h.b16 %v3108
    %v3454 = vunpack.c.l.b16 %v3109
    %v3455 = vunpack.c.h.b16 %v3109
    %v3456 = vunpack.c.l.b16 %v3110
    %v3457 = vunpack.c.h.b16 %v3110
    %v3458 = vunpack.c.l.b16 %v3111
    %v3459 = vunpack.c.h.b16 %v3111
    %v3460 = vunpack.c.l.b16 %v3112
    %v3461 = vunpack.c.h.b16 %v3112
    %v3462 = vunpack.c.l.b16 %v3113
    %v3463 = vunpack.c.h.b16 %v3113
    %v3464 = vunpack.c.l.b16 %v3114
    %v3465 = vunpack.c.h.b16 %v3114
    %v3466 = vunpack.c.l.b16 %v3115
    %v3467 = vunpack.c.h.b16 %v3115
    %v3468 = vunpack.c.l.b16 %v3116
    %v3469 = vunpack.c.h.b16 %v3116
    %v3470 = vunpack.c.l.b16 %v3117
    %v3471 = vunpack.c.h.b16 %v3117
    %v3472 = vunpack.c.l.b16 %v3118
    %v3473 = vunpack.c.h.b16 %v3118
    %v3474 = vunpack.c.l.b16 %v3119
    %v3475 = vunpack.c.h.b16 %v3119
    %v3476 = vunpack.c.l.b16 %v3120
    %v3477 = vunpack.c.h.b16 %v3120
    %v3478 = vunpack.c.l.b16 %v3121
    %v3479 = vunpack.c.h.b16 %v3121
    %v3480 = vunpack.c.l.b16 %v3122
    %v3481 = vunpack.c.h.b16 %v3122
    %v3482 = vunpack.c.l.b16 %v3123
    %v3483 = vunpack.c.h.b16 %v3123
    %v3484 = vunpack.c.l.b16 %v3124
    %v3485 = vunpack.c.h.b16 %v3124
    %v3486 = vunpack.c.l.b16 %v3125
    %v3487 = vunpack.c.h.b16 %v3125
    %v3488 = vunpack.c.l.b16 %v3126
    %v3489 = vunpack.c.h.b16 %v3126
    %v3490 = vunpack.c.l.b16 %v3127
    %v3491 = vunpack.c.h.b16 %v3127
    %v3492 = vunpack.c.l.b16 %v3128
    %v3493 = vunpack.c.h.b16 %v3128
    %v3494 = vunpack.c.l.b16 %v3129
    %v3495 = vunpack.c.h.b16 %v3129
    %v3496 = vunpack.c.l.b16 %v3130
    %v3497 = vunpack.c.h.b16 %v3130
    %v3498 = vunpack.c.l.b16 %v3131
    %v3499 = vunpack.c.h.b16 %v3131
    %v3500 = vunpack.c.l.b16 %v3132
    %v3501 = vunpack.c.h.b16 %v3132
    %v3502 = vunpack.c.l.b16 %v3133
    %v3503 = vunpack.c.h.b16 %v3133
    %v3504 = vunpack.c.l.b16 %v3134
    %v3505 = vunpack.c.h.b16 %v3134
    %v3506 = vunpack.c.l.b16 %v3135
    %v3507 = vunpack.c.h.b16 %v3135
    %v3508 = vunpack.c.l.b16 %v3136
    %v3509 = vunpack.c.h.b16 %v3136
    %v3510 = vunpack.c.l.b16 %v3137
    %v3511 = vunpack.c.h.b16 %v3137
    %v3512 = vunpack.c.l.b16 %v3138
    %v3513 = vunpack.c.h.b16 %v3138
    %v3514 = vunpack.c.l.b16 %v3139
    %v3515 = vunpack.c.h.b16 %v3139
    %v3516 = vunpack.c.l.b16 %v3140
    %v3517 = vunpack.c.h.b16 %v3140
    %v3518 = vunpack.c.l.b16 %v3141
    %v3519 = vunpack.c.h.b16 %v3141
    %v3520 = vunpack.c.l.b16 %v3142
    %v3521 = vunpack.c.h.b16 %v3142
    %v3522 = vunpack.c.l.b16 %v3143
    %v3523 = vunpack.c.h.b16 %v3143
    %v3524 = vunpack.c.l.b16 %v3144
    %v3525 = vunpack.c.h.b16 %v3144
    %v3526 = vunpack.c.l.b16 %v3145
    %v3527 = vunpack.c.h.b16 %v3145
    %v3528 = vunpack.c.l.b16 %v3146
    %v3529 = vunpack.c.h.b16 %v3146
    %v3530 = vunpack.c.l.b16 %v3147
    %v3531 = vunpack.c.h.b16 %v3147
    %v3532 = vpack.c.b16 %v3408, %v3404
    %v3533 = vpack.c.b16 %v3409, %v3405
    %v3534 = vpack.c.b16 %v3410, %v3406
    %v3535 = vpack.c.b16 %v3411, %v3407
    %v3536 = vpack.c.b16 %v3416, %v3412
    %v3537 = vpack.c.b16 %v3417, %v3413
    %v3538 = vpack.c.b16 %v3418, %v3414
    %v3539 = vpack.c.b16 %v3419, %v3415
    %v3540 = vpack.c.b16 %v3424, %v3420
    %v3541 = vpack.c.b16 %v3425, %v3421
    %v3542 = vpack.c.b16 %v3426, %v3422
    %v3543 = vpack.c.b16 %v3427, %v3423
    %v3544 = vpack.c.b16 %v3432, %v3428
    %v3545 = vpack.c.b16 %v3433, %v3429
    %v3546 = vpack.c.b16 %v3434, %v3430
    %v3547 = vpack.c.b16 %v3435, %v3431
    %v3548 = vpack.c.b16 %v3440, %v3436
    %v3549 = vpack.c.b16 %v3441, %v3437
    %v3550 = vpack.c.b16 %v3442, %v3438
    %v3551 = vpack.c.b16 %v3443, %v3439
    %v3552 = vpack.c.b16 %v3448, %v3444
    %v3553 = vpack.c.b16 %v3449, %v3445
    %v3554 = vpack.c.b16 %v3450, %v3446
    %v3555 = vpack.c.b16 %v3451, %v3447
    %v3556 = vpack.c.b16 %v3456, %v3452
    %v3557 = vpack.c.b16 %v3457, %v3453
    %v3558 = vpack.c.b16 %v3458, %v3454
    %v3559 = vpack.c.b16 %v3459, %v3455
    %v3560 = vpack.c.b16 %v3464, %v3460
    %v3561 = vpack.c.b16 %v3465, %v3461
    %v3562 = vpack.c.b16 %v3466, %v3462
    %v3563 = vpack.c.b16 %v3467, %v3463
    %v3564 = vpack.c.b16 %v3472, %v3468
    %v3565 = vpack.c.b16 %v3473, %v3469
    %v3566 = vpack.c.b16 %v3474, %v3470
    %v3567 = vpack.c.b16 %v3475, %v3471
    %v3568 = vpack.c.b16 %v3480, %v3476
    %v3569 = vpack.c.b16 %v3481, %v3477
    %v3570 = vpack.c.b16 %v3482, %v3478
    %v3571 = vpack.c.b16 %v3483, %v3479
    %v3572 = vpack.c.b16 %v3488, %v3484
    %v3573 = vpack.c.b16 %v3489, %v3485
    %v3574 = vpack.c.b16 %v3490, %v3486
    %v3575 = vpack.c.b16 %v3491, %v3487
    %v3576 = vpack.c.b16 %v3496, %v3492
    %v3577 = vpack.c.b16 %v3497, %v3493
    %v3578 = vpack.c.b16 %v3498, %v3494
    %v3579 = vpack.c.b16 %v3499, %v3495
    %v3580 = vpack.c.b16 %v3504, %v3500
    %v3581 = vpack.c.b16 %v3505, %v3501
    %v3582 = vpack.c.b16 %v3506, %v3502
    %v3583 = vpack.c.b16 %v3507, %v3503
    %v3584 = vpack.c.b16 %v3512, %v3508
    %v3585 = vpack.c.b16 %v3513, %v3509
    %v3586 = vpack.c.b16 %v3514, %v3510
    %v3587 = vpack.c.b16 %v3515, %v3511
    %v3588 = vpack.c.b16 %v3520, %v3516
    %v3589 = vpack.c.b16 %v3521, %v3517
    %v3590 = vpack.c.b16 %v3522, %v3518
    %v3591 = vpack.c.b16 %v3523, %v3519
    %v3592 = vpack.c.b16 %v3528, %v3524
    %v3593 = vpack.c.b16 %v3529, %v3525
    %v3594 = vpack.c.b16 %v3530, %v3526
    %v3595 = vpack.c.b16 %v3531, %v3527
    %3660 = vmatprep.subr.bf16.mxu0 %v3561
    %3661 = vmatpush1.bf16.msra.mxu0 %v3560
    %3662 = vmatprep.subr.bf16.mxu0 %v3557
    %3663 = vmatpush1.bf16.msra.mxu0 %v3556
    %3664 = vmatprep.subr.bf16.mxu0 %v3553
    %3665 = vmatpush1.bf16.msra.mxu0 %v3552
    %3666 = vmatprep.subr.bf16.mxu0 %v3549
    %3667 = vmatpush1.bf16.msra.mxu0 %v3548
    %3668 = vmatprep.subr.bf16.mxu0 %v3545
    %3669 = vmatpush1.bf16.msra.mxu0 %v3544
    %3670 = vmatprep.subr.bf16.mxu0 %v3541
    %3671 = vmatpush1.bf16.msra.mxu0 %v3540
    %3672 = vmatprep.subr.bf16.mxu0 %v3537
    %3673 = vmatpush1.bf16.msra.mxu0 %v3536
    %3674 = vmatprep.subr.bf16.mxu0 %v3533
    %3675 = vmatpush1.bf16.msra.mxu0 %v3532
    %3676 = vmatprep.subr.bf16.mxu0 %v3593
    %3677 = vmatpush2.bf16.msra.mxu0 %v3592
    %3678 = vmatprep.subr.bf16.mxu0 %v3589
    %3679 = vmatpush2.bf16.msra.mxu0 %v3588
    %3680 = vmatprep.subr.bf16.mxu0 %v3585
    %3681 = vmatpush2.bf16.msra.mxu0 %v3584
    %3682 = vmatprep.subr.bf16.mxu0 %v3581
    %3683 = vmatpush2.bf16.msra.mxu0 %v3580
    %3684 = vmatprep.subr.bf16.mxu0 %v3577
    %3685 = vmatpush2.bf16.msra.mxu0 %v3576
    %3686 = vmatprep.subr.bf16.mxu0 %v3573
    %3687 = vmatpush2.bf16.msra.mxu0 %v3572
    %3688 = vmatprep.subr.bf16.mxu0 %v3569
    %3689 = vmatpush2.bf16.msra.mxu0 %v3568
    %3690 = vmatprep.subr.bf16.mxu0 %v3565
    %3691 = vmatpush2.bf16.msra.mxu0 %v3564
    %3692 = vmatprep.mubr.bf16.mxu0 %v2977
    %3693 = vmatmul.mubr.bf16.gmra.mxu0 %v2976
    %v3694 = vpop.f32.mrf.mxu0
    %v3695 = vadd.f32 0.0, %v3694
    %v3696 = vpop.f32.mrf.mxu0
    %v3697 = vadd.f32 0.0, %v3696
    %v3698 = vpop.f32.mrf.mxu0
    %v3699 = vadd.f32 0.0, %v3698
    %v3700 = vpop.f32.mrf.mxu0
    %v3701 = vadd.f32 0.0, %v3700
    %3702 = vmatprep.mubr.bf16.mxu0 %v2979
    %3703 = vmatmul.mubr.bf16.gmra.mxu0 %v2978
    %v3704 = vpop.f32.mrf.mxu0
    %v3705 = vadd.f32 0.0, %v3704
    %v3706 = vpop.f32.mrf.mxu0
    %v3707 = vadd.f32 0.0, %v3706
    %v3708 = vpop.f32.mrf.mxu0
    %v3709 = vadd.f32 0.0, %v3708
    %v3710 = vpop.f32.mrf.mxu0
    %v3711 = vadd.f32 0.0, %v3710
    %3712 = vmatprep.mubr.bf16.mxu0 %v2981
    %3713 = vmatmul.mubr.bf16.gmra.mxu0 %v2980
    %v3714 = vpop.f32.mrf.mxu0
    %v3715 = vadd.f32 0.0, %v3714
    %v3716 = vpop.f32.mrf.mxu0
    %v3717 = vadd.f32 0.0, %v3716
    %v3718 = vpop.f32.mrf.mxu0
    %v3719 = vadd.f32 0.0, %v3718
    %v3720 = vpop.f32.mrf.mxu0
    %v3721 = vadd.f32 0.0, %v3720
    %3722 = vmatprep.mubr.bf16.mxu0 %v2983
    %3723 = vmatmul.mubr.bf16.gmra.mxu0 %v2982
    %v3724 = vpop.f32.mrf.mxu0
    %v3725 = vadd.f32 0.0, %v3724
    %v3726 = vpop.f32.mrf.mxu0
    %v3727 = vadd.f32 0.0, %v3726
    %v3728 = vpop.f32.mrf.mxu0
    %v3729 = vadd.f32 0.0, %v3728
    %v3730 = vpop.f32.mrf.mxu0
    %v3731 = vadd.f32 0.0, %v3730
    %3732 = vmatprep.mubr.bf16.mxu0 %v2985
    %3733 = vmatmul.mubr.bf16.gmra.mxu0 %v2984
    %v3734 = vpop.f32.mrf.mxu0
    %v3735 = vadd.f32 0.0, %v3734
    %v3736 = vpop.f32.mrf.mxu0
    %v3737 = vadd.f32 0.0, %v3736
    %v3738 = vpop.f32.mrf.mxu0
    %v3739 = vadd.f32 0.0, %v3738
    %v3740 = vpop.f32.mrf.mxu0
    %v3741 = vadd.f32 0.0, %v3740
    %3742 = vmatprep.mubr.bf16.mxu0 %v2987
    %3743 = vmatmul.mubr.bf16.gmra.mxu0 %v2986
    %v3744 = vpop.f32.mrf.mxu0
    %v3745 = vadd.f32 0.0, %v3744
    %v3746 = vpop.f32.mrf.mxu0
    %v3747 = vadd.f32 0.0, %v3746
    %v3748 = vpop.f32.mrf.mxu0
    %v3749 = vadd.f32 0.0, %v3748
    %v3750 = vpop.f32.mrf.mxu0
    %v3751 = vadd.f32 0.0, %v3750
    %3752 = vmatprep.mubr.bf16.mxu0 %v2989
    %3753 = vmatmul.mubr.bf16.gmra.mxu0 %v2988
    %v3754 = vpop.f32.mrf.mxu0
    %v3755 = vadd.f32 0.0, %v3754
    %v3756 = vpop.f32.mrf.mxu0
    %v3757 = vadd.f32 0.0, %v3756
    %v3758 = vpop.f32.mrf.mxu0
    %v3759 = vadd.f32 0.0, %v3758
    %v3760 = vpop.f32.mrf.mxu0
    %v3761 = vadd.f32 0.0, %v3760
    %3762 = vmatprep.mubr.bf16.mxu0 %v2991
    %3763 = vmatmul.mubr.bf16.gmra.mxu0 %v2990
    %v3764 = vpop.f32.mrf.mxu0
    %v3765 = vadd.f32 0.0, %v3764
    %v3766 = vpop.f32.mrf.mxu0
    %v3767 = vadd.f32 0.0, %v3766
    %v3768 = vpop.f32.mrf.mxu0
    %v3769 = vadd.f32 0.0, %v3768
    %v3770 = vpop.f32.mrf.mxu0
    %v3771 = vadd.f32 0.0, %v3770
    %3772 = vmatprep.mubr.bf16.mxu0 %v2993
    %3773 = vmatmul.mubr.bf16.gmra.mxu0 %v2992
    %v3774 = vpop.f32.mrf.mxu0
    %v3775 = vadd.f32 0.0, %v3774
    %v3776 = vpop.f32.mrf.mxu0
    %v3777 = vadd.f32 0.0, %v3776
    %v3778 = vpop.f32.mrf.mxu0
    %v3779 = vadd.f32 0.0, %v3778
    %v3780 = vpop.f32.mrf.mxu0
    %v3781 = vadd.f32 0.0, %v3780
    %3782 = vmatprep.mubr.bf16.mxu0 %v2995
    %3783 = vmatmul.mubr.bf16.gmra.mxu0 %v2994
    %v3784 = vpop.f32.mrf.mxu0
    %v3785 = vadd.f32 0.0, %v3784
    %v3786 = vpop.f32.mrf.mxu0
    %v3787 = vadd.f32 0.0, %v3786
    %v3788 = vpop.f32.mrf.mxu0
    %v3789 = vadd.f32 0.0, %v3788
    %v3790 = vpop.f32.mrf.mxu0
    %v3791 = vadd.f32 0.0, %v3790
    %3792 = vmatprep.mubr.bf16.mxu0 %v2997
    %3793 = vmatmul.mubr.bf16.gmra.mxu0 %v2996
    %v3794 = vpop.f32.mrf.mxu0
    %v3795 = vadd.f32 0.0, %v3794
    %v3796 = vpop.f32.mrf.mxu0
    %v3797 = vadd.f32 0.0, %v3796
    %v3798 = vpop.f32.mrf.mxu0
    %v3799 = vadd.f32 0.0, %v3798
    %v3800 = vpop.f32.mrf.mxu0
    %v3801 = vadd.f32 0.0, %v3800
    %3802 = vmatprep.mubr.bf16.mxu0 %v2999
    %3803 = vmatmul.mubr.bf16.gmra.mxu0 %v2998
    %v3804 = vpop.f32.mrf.mxu0
    %v3805 = vadd.f32 0.0, %v3804
    %v3806 = vpop.f32.mrf.mxu0
    %v3807 = vadd.f32 0.0, %v3806
    %v3808 = vpop.f32.mrf.mxu0
    %v3809 = vadd.f32 0.0, %v3808
    %v3810 = vpop.f32.mrf.mxu0
    %v3811 = vadd.f32 0.0, %v3810
    %3812 = vmatprep.mubr.bf16.mxu0 %v3001
    %3813 = vmatmul.mubr.bf16.gmra.mxu0 %v3000
    %v3814 = vpop.f32.mrf.mxu0
    %v3815 = vadd.f32 0.0, %v3814
    %v3816 = vpop.f32.mrf.mxu0
    %v3817 = vadd.f32 0.0, %v3816
    %v3818 = vpop.f32.mrf.mxu0
    %v3819 = vadd.f32 0.0, %v3818
    %v3820 = vpop.f32.mrf.mxu0
    %v3821 = vadd.f32 0.0, %v3820
    %3822 = vmatprep.mubr.bf16.mxu0 %v3003
    %3823 = vmatmul.mubr.bf16.gmra.mxu0 %v3002
    %v3824 = vpop.f32.mrf.mxu0
    %v3825 = vadd.f32 0.0, %v3824
    %v3826 = vpop.f32.mrf.mxu0
    %v3827 = vadd.f32 0.0, %v3826
    %v3828 = vpop.f32.mrf.mxu0
    %v3829 = vadd.f32 0.0, %v3828
    %v3830 = vpop.f32.mrf.mxu0
    %v3831 = vadd.f32 0.0, %v3830
    %3832 = vmatprep.mubr.bf16.mxu0 %v3005
    %3833 = vmatmul.mubr.bf16.gmra.mxu0 %v3004
    %v3834 = vpop.f32.mrf.mxu0
    %v3835 = vadd.f32 0.0, %v3834
    %v3836 = vpop.f32.mrf.mxu0
    %v3837 = vadd.f32 0.0, %v3836
    %v3838 = vpop.f32.mrf.mxu0
    %v3839 = vadd.f32 0.0, %v3838
    %v3840 = vpop.f32.mrf.mxu0
    %v3841 = vadd.f32 0.0, %v3840
    %3842 = vmatprep.mubr.bf16.mxu0 %v3007
    %3843 = vmatmul.mubr.bf16.gmra.mxu0 %v3006
    %v3844 = vpop.f32.mrf.mxu0
    %v3845 = vadd.f32 0.0, %v3844
    %v3846 = vpop.f32.mrf.mxu0
    %v3847 = vadd.f32 0.0, %v3846
    %v3848 = vpop.f32.mrf.mxu0
    %v3849 = vadd.f32 0.0, %v3848
    %v3850 = vpop.f32.mrf.mxu0
    %v3851 = vadd.f32 0.0, %v3850
    %3852 = vdwg.mxu0
    %3853 = vmatprep.subr.bf16.mxu0 %v3563
    %3854 = vmatpush1.bf16.msra.mxu0 %v3562
    %3855 = vmatprep.subr.bf16.mxu0 %v3559
    %3856 = vmatpush1.bf16.msra.mxu0 %v3558
    %3857 = vmatprep.subr.bf16.mxu0 %v3555
    %3858 = vmatpush1.bf16.msra.mxu0 %v3554
    %3859 = vmatprep.subr.bf16.mxu0 %v3551
    %3860 = vmatpush1.bf16.msra.mxu0 %v3550
    %3861 = vmatprep.subr.bf16.mxu0 %v3547
    %3862 = vmatpush1.bf16.msra.mxu0 %v3546
    %3863 = vmatprep.subr.bf16.mxu0 %v3543
    %3864 = vmatpush1.bf16.msra.mxu0 %v3542
    %3865 = vmatprep.subr.bf16.mxu0 %v3539
    %3866 = vmatpush1.bf16.msra.mxu0 %v3538
    %3867 = vmatprep.subr.bf16.mxu0 %v3535
    %3868 = vmatpush1.bf16.msra.mxu0 %v3534
    %3869 = vmatprep.subr.bf16.mxu0 %v3595
    %3870 = vmatpush2.bf16.msra.mxu0 %v3594
    %3871 = vmatprep.subr.bf16.mxu0 %v3591
    %3872 = vmatpush2.bf16.msra.mxu0 %v3590
    %3873 = vmatprep.subr.bf16.mxu0 %v3587
    %3874 = vmatpush2.bf16.msra.mxu0 %v3586
    %3875 = vmatprep.subr.bf16.mxu0 %v3583
    %3876 = vmatpush2.bf16.msra.mxu0 %v3582
    %3877 = vmatprep.subr.bf16.mxu0 %v3579
    %3878 = vmatpush2.bf16.msra.mxu0 %v3578
    %3879 = vmatprep.subr.bf16.mxu0 %v3575
    %3880 = vmatpush2.bf16.msra.mxu0 %v3574
    %3881 = vmatprep.subr.bf16.mxu0 %v3571
    %3882 = vmatpush2.bf16.msra.mxu0 %v3570
    %3883 = vmatprep.subr.bf16.mxu0 %v3567
    %3884 = vmatpush2.bf16.msra.mxu0 %v3566
    %3885 = vmatprep.mubr.bf16.mxu0 %v2977
    %3886 = vmatmul.mubr.bf16.gmra.mxu0 %v2976
    %v3887 = vpop.f32.mrf.mxu0
    %v3888 = vadd.f32 0.0, %v3887
    %v3889 = vpop.f32.mrf.mxu0
    %v3890 = vadd.f32 0.0, %v3889
    %v3891 = vpop.f32.mrf.mxu0
    %v3892 = vadd.f32 0.0, %v3891
    %v3893 = vpop.f32.mrf.mxu0
    %v3894 = vadd.f32 0.0, %v3893
    %3895 = vmatprep.mubr.bf16.mxu0 %v2979
    %3896 = vmatmul.mubr.bf16.gmra.mxu0 %v2978
    %v3897 = vpop.f32.mrf.mxu0
    %v3898 = vadd.f32 0.0, %v3897
    %v3899 = vpop.f32.mrf.mxu0
    %v3900 = vadd.f32 0.0, %v3899
    %v3901 = vpop.f32.mrf.mxu0
    %v3902 = vadd.f32 0.0, %v3901
    %v3903 = vpop.f32.mrf.mxu0
    %v3904 = vadd.f32 0.0, %v3903
    %3905 = vmatprep.mubr.bf16.mxu0 %v2981
    %3906 = vmatmul.mubr.bf16.gmra.mxu0 %v2980
    %v3907 = vpop.f32.mrf.mxu0
    %v3908 = vadd.f32 0.0, %v3907
    %v3909 = vpop.f32.mrf.mxu0
    %v3910 = vadd.f32 0.0, %v3909
    %v3911 = vpop.f32.mrf.mxu0
    %v3912 = vadd.f32 0.0, %v3911
    %v3913 = vpop.f32.mrf.mxu0
    %v3914 = vadd.f32 0.0, %v3913
    %3915 = vmatprep.mubr.bf16.mxu0 %v2983
    %3916 = vmatmul.mubr.bf16.gmra.mxu0 %v2982
    %v3917 = vpop.f32.mrf.mxu0
    %v3918 = vadd.f32 0.0, %v3917
    %v3919 = vpop.f32.mrf.mxu0
    %v3920 = vadd.f32 0.0, %v3919
    %v3921 = vpop.f32.mrf.mxu0
    %v3922 = vadd.f32 0.0, %v3921
    %v3923 = vpop.f32.mrf.mxu0
    %v3924 = vadd.f32 0.0, %v3923
    %3925 = vmatprep.mubr.bf16.mxu0 %v2985
    %3926 = vmatmul.mubr.bf16.gmra.mxu0 %v2984
    %v3927 = vpop.f32.mrf.mxu0
    %v3928 = vadd.f32 0.0, %v3927
    %v3929 = vpop.f32.mrf.mxu0
    %v3930 = vadd.f32 0.0, %v3929
    %v3931 = vpop.f32.mrf.mxu0
    %v3932 = vadd.f32 0.0, %v3931
    %v3933 = vpop.f32.mrf.mxu0
    %v3934 = vadd.f32 0.0, %v3933
    %3935 = vmatprep.mubr.bf16.mxu0 %v2987
    %3936 = vmatmul.mubr.bf16.gmra.mxu0 %v2986
    %v3937 = vpop.f32.mrf.mxu0
    %v3938 = vadd.f32 0.0, %v3937
    %v3939 = vpop.f32.mrf.mxu0
    %v3940 = vadd.f32 0.0, %v3939
    %v3941 = vpop.f32.mrf.mxu0
    %v3942 = vadd.f32 0.0, %v3941
    %v3943 = vpop.f32.mrf.mxu0
    %v3944 = vadd.f32 0.0, %v3943
    %3945 = vmatprep.mubr.bf16.mxu0 %v2989
    %3946 = vmatmul.mubr.bf16.gmra.mxu0 %v2988
    %v3947 = vpop.f32.mrf.mxu0
    %v3948 = vadd.f32 0.0, %v3947
    %v3949 = vpop.f32.mrf.mxu0
    %v3950 = vadd.f32 0.0, %v3949
    %v3951 = vpop.f32.mrf.mxu0
    %v3952 = vadd.f32 0.0, %v3951
    %v3953 = vpop.f32.mrf.mxu0
    %v3954 = vadd.f32 0.0, %v3953
    %3955 = vmatprep.mubr.bf16.mxu0 %v2991
    %3956 = vmatmul.mubr.bf16.gmra.mxu0 %v2990
    %v3957 = vpop.f32.mrf.mxu0
    %v3958 = vadd.f32 0.0, %v3957
    %v3959 = vpop.f32.mrf.mxu0
    %v3960 = vadd.f32 0.0, %v3959
    %v3961 = vpop.f32.mrf.mxu0
    %v3962 = vadd.f32 0.0, %v3961
    %v3963 = vpop.f32.mrf.mxu0
    %v3964 = vadd.f32 0.0, %v3963
    %3965 = vmatprep.mubr.bf16.mxu0 %v2993
    %3966 = vmatmul.mubr.bf16.gmra.mxu0 %v2992
    %v3967 = vpop.f32.mrf.mxu0
    %v3968 = vadd.f32 0.0, %v3967
    %v3969 = vpop.f32.mrf.mxu0
    %v3970 = vadd.f32 0.0, %v3969
    %v3971 = vpop.f32.mrf.mxu0
    %v3972 = vadd.f32 0.0, %v3971
    %v3973 = vpop.f32.mrf.mxu0
    %v3974 = vadd.f32 0.0, %v3973
    %3975 = vmatprep.mubr.bf16.mxu0 %v2995
    %3976 = vmatmul.mubr.bf16.gmra.mxu0 %v2994
    %v3977 = vpop.f32.mrf.mxu0
    %v3978 = vadd.f32 0.0, %v3977
    %v3979 = vpop.f32.mrf.mxu0
    %v3980 = vadd.f32 0.0, %v3979
    %v3981 = vpop.f32.mrf.mxu0
    %v3982 = vadd.f32 0.0, %v3981
    %v3983 = vpop.f32.mrf.mxu0
    %v3984 = vadd.f32 0.0, %v3983
    %3985 = vmatprep.mubr.bf16.mxu0 %v2997
    %3986 = vmatmul.mubr.bf16.gmra.mxu0 %v2996
    %v3987 = vpop.f32.mrf.mxu0
    %v3988 = vadd.f32 0.0, %v3987
    %v3989 = vpop.f32.mrf.mxu0
    %v3990 = vadd.f32 0.0, %v3989
    %v3991 = vpop.f32.mrf.mxu0
    %v3992 = vadd.f32 0.0, %v3991
    %v3993 = vpop.f32.mrf.mxu0
    %v3994 = vadd.f32 0.0, %v3993
    %3995 = vmatprep.mubr.bf16.mxu0 %v2999
    %3996 = vmatmul.mubr.bf16.gmra.mxu0 %v2998
    %v3997 = vpop.f32.mrf.mxu0
    %v3998 = vadd.f32 0.0, %v3997
    %v3999 = vpop.f32.mrf.mxu0
    %v4000 = vadd.f32 0.0, %v3999
    %v4001 = vpop.f32.mrf.mxu0
    %v4002 = vadd.f32 0.0, %v4001
    %v4003 = vpop.f32.mrf.mxu0
    %v4004 = vadd.f32 0.0, %v4003
    %4005 = vmatprep.mubr.bf16.mxu0 %v3001
    %4006 = vmatmul.mubr.bf16.gmra.mxu0 %v3000
    %v4007 = vpop.f32.mrf.mxu0
    %v4008 = vadd.f32 0.0, %v4007
    %v4009 = vpop.f32.mrf.mxu0
    %v4010 = vadd.f32 0.0, %v4009
    %v4011 = vpop.f32.mrf.mxu0
    %v4012 = vadd.f32 0.0, %v4011
    %v4013 = vpop.f32.mrf.mxu0
    %v4014 = vadd.f32 0.0, %v4013
    %4015 = vmatprep.mubr.bf16.mxu0 %v3003
    %4016 = vmatmul.mubr.bf16.gmra.mxu0 %v3002
    %v4017 = vpop.f32.mrf.mxu0
    %v4018 = vadd.f32 0.0, %v4017
    %v4019 = vpop.f32.mrf.mxu0
    %v4020 = vadd.f32 0.0, %v4019
    %v4021 = vpop.f32.mrf.mxu0
    %v4022 = vadd.f32 0.0, %v4021
    %v4023 = vpop.f32.mrf.mxu0
    %v4024 = vadd.f32 0.0, %v4023
    %4025 = vmatprep.mubr.bf16.mxu0 %v3005
    %4026 = vmatmul.mubr.bf16.gmra.mxu0 %v3004
    %v4027 = vpop.f32.mrf.mxu0
    %v4028 = vadd.f32 0.0, %v4027
    %v4029 = vpop.f32.mrf.mxu0
    %v4030 = vadd.f32 0.0, %v4029
    %v4031 = vpop.f32.mrf.mxu0
    %v4032 = vadd.f32 0.0, %v4031
    %v4033 = vpop.f32.mrf.mxu0
    %v4034 = vadd.f32 0.0, %v4033
    %4035 = vmatprep.mubr.bf16.mxu0 %v3007
    %4036 = vmatmul.mubr.bf16.gmra.mxu0 %v3006
    %v4037 = vpop.f32.mrf.mxu0
    %v4038 = vadd.f32 0.0, %v4037
    %v4039 = vpop.f32.mrf.mxu0
    %v4040 = vadd.f32 0.0, %v4039
    %v4041 = vpop.f32.mrf.mxu0
    %v4042 = vadd.f32 0.0, %v4041
    %v4043 = vpop.f32.mrf.mxu0
    %v4044 = vadd.f32 0.0, %v4043
    %4045 = vdwg.mxu0
    %v4110 = vunpack.c.l.b16 %v3020
    %v4111 = vunpack.c.h.b16 %v3020
    %v4112 = vunpack.c.l.b16 %v3021
    %v4113 = vunpack.c.h.b16 %v3021
    %v4114 = vunpack.c.l.b16 %v3022
    %v4115 = vunpack.c.h.b16 %v3022
    %v4116 = vunpack.c.l.b16 %v3023
    %v4117 = vunpack.c.h.b16 %v3023
    %v4118 = vunpack.c.l.b16 %v3024
    %v4119 = vunpack.c.h.b16 %v3024
    %v4120 = vunpack.c.l.b16 %v3025
    %v4121 = vunpack.c.h.b16 %v3025
    %v4122 = vunpack.c.l.b16 %v3026
    %v4123 = vunpack.c.h.b16 %v3026
    %v4124 = vunpack.c.l.b16 %v3027
    %v4125 = vunpack.c.h.b16 %v3027
    %v4126 = vunpack.c.l.b16 %v3028
    %v4127 = vunpack.c.h.b16 %v3028
    %v4128 = vunpack.c.l.b16 %v3029
    %v4129 = vunpack.c.h.b16 %v3029
    %v4130 = vunpack.c.l.b16 %v3030
    %v4131 = vunpack.c.h.b16 %v3030
    %v4132 = vunpack.c.l.b16 %v3031
    %v4133 = vunpack.c.h.b16 %v3031
    %v4134 = vunpack.c.l.b16 %v3032
    %v4135 = vunpack.c.h.b16 %v3032
    %v4136 = vunpack.c.l.b16 %v3033
    %v4137 = vunpack.c.h.b16 %v3033
    %v4138 = vunpack.c.l.b16 %v3034
    %v4139 = vunpack.c.h.b16 %v3034
    %v4140 = vunpack.c.l.b16 %v3035
    %v4141 = vunpack.c.h.b16 %v3035
    %v4142 = vunpack.c.l.b16 %v3036
    %v4143 = vunpack.c.h.b16 %v3036
    %v4144 = vunpack.c.l.b16 %v3037
    %v4145 = vunpack.c.h.b16 %v3037
    %v4146 = vunpack.c.l.b16 %v3038
    %v4147 = vunpack.c.h.b16 %v3038
    %v4148 = vunpack.c.l.b16 %v3039
    %v4149 = vunpack.c.h.b16 %v3039
    %v4150 = vunpack.c.l.b16 %v3040
    %v4151 = vunpack.c.h.b16 %v3040
    %v4152 = vunpack.c.l.b16 %v3041
    %v4153 = vunpack.c.h.b16 %v3041
    %v4154 = vunpack.c.l.b16 %v3042
    %v4155 = vunpack.c.h.b16 %v3042
    %v4156 = vunpack.c.l.b16 %v3043
    %v4157 = vunpack.c.h.b16 %v3043
    %v4158 = vunpack.c.l.b16 %v3044
    %v4159 = vunpack.c.h.b16 %v3044
    %v4160 = vunpack.c.l.b16 %v3045
    %v4161 = vunpack.c.h.b16 %v3045
    %v4162 = vunpack.c.l.b16 %v3046
    %v4163 = vunpack.c.h.b16 %v3046
    %v4164 = vunpack.c.l.b16 %v3047
    %v4165 = vunpack.c.h.b16 %v3047
    %v4166 = vunpack.c.l.b16 %v3048
    %v4167 = vunpack.c.h.b16 %v3048
    %v4168 = vunpack.c.l.b16 %v3049
    %v4169 = vunpack.c.h.b16 %v3049
    %v4170 = vunpack.c.l.b16 %v3050
    %v4171 = vunpack.c.h.b16 %v3050
    %v4172 = vunpack.c.l.b16 %v3051
    %v4173 = vunpack.c.h.b16 %v3051
    %v4174 = vunpack.c.l.b16 %v3052
    %v4175 = vunpack.c.h.b16 %v3052
    %v4176 = vunpack.c.l.b16 %v3053
    %v4177 = vunpack.c.h.b16 %v3053
    %v4178 = vunpack.c.l.b16 %v3054
    %v4179 = vunpack.c.h.b16 %v3054
    %v4180 = vunpack.c.l.b16 %v3055
    %v4181 = vunpack.c.h.b16 %v3055
    %v4182 = vunpack.c.l.b16 %v3056
    %v4183 = vunpack.c.h.b16 %v3056
    %v4184 = vunpack.c.l.b16 %v3057
    %v4185 = vunpack.c.h.b16 %v3057
    %v4186 = vunpack.c.l.b16 %v3058
    %v4187 = vunpack.c.h.b16 %v3058
    %v4188 = vunpack.c.l.b16 %v3059
    %v4189 = vunpack.c.h.b16 %v3059
    %v4190 = vunpack.c.l.b16 %v3060
    %v4191 = vunpack.c.h.b16 %v3060
    %v4192 = vunpack.c.l.b16 %v3061
    %v4193 = vunpack.c.h.b16 %v3061
    %v4194 = vunpack.c.l.b16 %v3062
    %v4195 = vunpack.c.h.b16 %v3062
    %v4196 = vunpack.c.l.b16 %v3063
    %v4197 = vunpack.c.h.b16 %v3063
    %v4198 = vunpack.c.l.b16 %v3064
    %v4199 = vunpack.c.h.b16 %v3064
    %v4200 = vunpack.c.l.b16 %v3065
    %v4201 = vunpack.c.h.b16 %v3065
    %v4202 = vunpack.c.l.b16 %v3066
    %v4203 = vunpack.c.h.b16 %v3066
    %v4204 = vunpack.c.l.b16 %v3067
    %v4205 = vunpack.c.h.b16 %v3067
    %v4206 = vunpack.c.l.b16 %v3068
    %v4207 = vunpack.c.h.b16 %v3068
    %v4208 = vunpack.c.l.b16 %v3069
    %v4209 = vunpack.c.h.b16 %v3069
    %v4210 = vunpack.c.l.b16 %v3070
    %v4211 = vunpack.c.h.b16 %v3070
    %v4212 = vunpack.c.l.b16 %v3071
    %v4213 = vunpack.c.h.b16 %v3071
    %v4214 = vunpack.c.l.b16 %v3072
    %v4215 = vunpack.c.h.b16 %v3072
    %v4216 = vunpack.c.l.b16 %v3073
    %v4217 = vunpack.c.h.b16 %v3073
    %v4218 = vunpack.c.l.b16 %v3074
    %v4219 = vunpack.c.h.b16 %v3074
    %v4220 = vunpack.c.l.b16 %v3075
    %v4221 = vunpack.c.h.b16 %v3075
    %v4222 = vunpack.c.l.b16 %v3076
    %v4223 = vunpack.c.h.b16 %v3076
    %v4224 = vunpack.c.l.b16 %v3077
    %v4225 = vunpack.c.h.b16 %v3077
    %v4226 = vunpack.c.l.b16 %v3078
    %v4227 = vunpack.c.h.b16 %v3078
    %v4228 = vunpack.c.l.b16 %v3079
    %v4229 = vunpack.c.h.b16 %v3079
    %v4230 = vunpack.c.l.b16 %v3080
    %v4231 = vunpack.c.h.b16 %v3080
    %v4232 = vunpack.c.l.b16 %v3081
    %v4233 = vunpack.c.h.b16 %v3081
    %v4234 = vunpack.c.l.b16 %v3082
    %v4235 = vunpack.c.h.b16 %v3082
    %v4236 = vunpack.c.l.b16 %v3083
    %v4237 = vunpack.c.h.b16 %v3083
    %v4238 = vpack.c.b16 %v4114, %v4110
    %v4239 = vpack.c.b16 %v4115, %v4111
    %v4240 = vpack.c.b16 %v4116, %v4112
    %v4241 = vpack.c.b16 %v4117, %v4113
    %v4242 = vpack.c.b16 %v4122, %v4118
    %v4243 = vpack.c.b16 %v4123, %v4119
    %v4244 = vpack.c.b16 %v4124, %v4120
    %v4245 = vpack.c.b16 %v4125, %v4121
    %v4246 = vpack.c.b16 %v4130, %v4126
    %v4247 = vpack.c.b16 %v4131, %v4127
    %v4248 = vpack.c.b16 %v4132, %v4128
    %v4249 = vpack.c.b16 %v4133, %v4129
    %v4250 = vpack.c.b16 %v4138, %v4134
    %v4251 = vpack.c.b16 %v4139, %v4135
    %v4252 = vpack.c.b16 %v4140, %v4136
    %v4253 = vpack.c.b16 %v4141, %v4137
    %v4254 = vpack.c.b16 %v4146, %v4142
    %v4255 = vpack.c.b16 %v4147, %v4143
    %v4256 = vpack.c.b16 %v4148, %v4144
    %v4257 = vpack.c.b16 %v4149, %v4145
    %v4258 = vpack.c.b16 %v4154, %v4150
    %v4259 = vpack.c.b16 %v4155, %v4151
    %v4260 = vpack.c.b16 %v4156, %v4152
    %v4261 = vpack.c.b16 %v4157, %v4153
    %v4262 = vpack.c.b16 %v4162, %v4158
    %v4263 = vpack.c.b16 %v4163, %v4159
    %v4264 = vpack.c.b16 %v4164, %v4160
    %v4265 = vpack.c.b16 %v4165, %v4161
    %v4266 = vpack.c.b16 %v4170, %v4166
    %v4267 = vpack.c.b16 %v4171, %v4167
    %v4268 = vpack.c.b16 %v4172, %v4168
    %v4269 = vpack.c.b16 %v4173, %v4169
    %v4270 = vpack.c.b16 %v4178, %v4174
    %v4271 = vpack.c.b16 %v4179, %v4175
    %v4272 = vpack.c.b16 %v4180, %v4176
    %v4273 = vpack.c.b16 %v4181, %v4177
    %v4274 = vpack.c.b16 %v4186, %v4182
    %v4275 = vpack.c.b16 %v4187, %v4183
    %v4276 = vpack.c.b16 %v4188, %v4184
    %v4277 = vpack.c.b16 %v4189, %v4185
    %v4278 = vpack.c.b16 %v4194, %v4190
    %v4279 = vpack.c.b16 %v4195, %v4191
    %v4280 = vpack.c.b16 %v4196, %v4192
    %v4281 = vpack.c.b16 %v4197, %v4193
    %v4282 = vpack.c.b16 %v4202, %v4198
    %v4283 = vpack.c.b16 %v4203, %v4199
    %v4284 = vpack.c.b16 %v4204, %v4200
    %v4285 = vpack.c.b16 %v4205, %v4201
    %v4286 = vpack.c.b16 %v4210, %v4206
    %v4287 = vpack.c.b16 %v4211, %v4207
    %v4288 = vpack.c.b16 %v4212, %v4208
    %v4289 = vpack.c.b16 %v4213, %v4209
    %v4290 = vpack.c.b16 %v4218, %v4214
    %v4291 = vpack.c.b16 %v4219, %v4215
    %v4292 = vpack.c.b16 %v4220, %v4216
    %v4293 = vpack.c.b16 %v4221, %v4217
    %v4294 = vpack.c.b16 %v4226, %v4222
    %v4295 = vpack.c.b16 %v4227, %v4223
    %v4296 = vpack.c.b16 %v4228, %v4224
    %v4297 = vpack.c.b16 %v4229, %v4225
    %v4298 = vpack.c.b16 %v4234, %v4230
    %v4299 = vpack.c.b16 %v4235, %v4231
    %v4300 = vpack.c.b16 %v4236, %v4232
    %v4301 = vpack.c.b16 %v4237, %v4233
    %4366 = vmatprep.subr.bf16.mxu0 %v4267
    %4367 = vmatpush1.bf16.msra.mxu0 %v4266
    %4368 = vmatprep.subr.bf16.mxu0 %v4263
    %4369 = vmatpush1.bf16.msra.mxu0 %v4262
    %4370 = vmatprep.subr.bf16.mxu0 %v4259
    %4371 = vmatpush1.bf16.msra.mxu0 %v4258
    %4372 = vmatprep.subr.bf16.mxu0 %v4255
    %4373 = vmatpush1.bf16.msra.mxu0 %v4254
    %4374 = vmatprep.subr.bf16.mxu0 %v4251
    %4375 = vmatpush1.bf16.msra.mxu0 %v4250
    %4376 = vmatprep.subr.bf16.mxu0 %v4247
    %4377 = vmatpush1.bf16.msra.mxu0 %v4246
    %4378 = vmatprep.subr.bf16.mxu0 %v4243
    %4379 = vmatpush1.bf16.msra.mxu0 %v4242
    %4380 = vmatprep.subr.bf16.mxu0 %v4239
    %4381 = vmatpush1.bf16.msra.mxu0 %v4238
    %4382 = vmatprep.subr.bf16.mxu0 %v4299
    %4383 = vmatpush2.bf16.msra.mxu0 %v4298
    %4384 = vmatprep.subr.bf16.mxu0 %v4295
    %4385 = vmatpush2.bf16.msra.mxu0 %v4294
    %4386 = vmatprep.subr.bf16.mxu0 %v4291
    %4387 = vmatpush2.bf16.msra.mxu0 %v4290
    %4388 = vmatprep.subr.bf16.mxu0 %v4287
    %4389 = vmatpush2.bf16.msra.mxu0 %v4286
    %4390 = vmatprep.subr.bf16.mxu0 %v4283
    %4391 = vmatpush2.bf16.msra.mxu0 %v4282
    %4392 = vmatprep.subr.bf16.mxu0 %v4279
    %4393 = vmatpush2.bf16.msra.mxu0 %v4278
    %4394 = vmatprep.subr.bf16.mxu0 %v4275
    %4395 = vmatpush2.bf16.msra.mxu0 %v4274
    %4396 = vmatprep.subr.bf16.mxu0 %v4271
    %4397 = vmatpush2.bf16.msra.mxu0 %v4270
    %4398 = vmatprep.mubr.bf16.mxu0 %v2973
    %4399 = vmatmul.mubr.bf16.gmra.mxu0 %v2972
    %v4400 = vpop.f32.mrf.mxu0
    %v4401 = vadd.f32 %v3695, %v4400
    %v4402 = vpop.f32.mrf.mxu0
    %v4403 = vadd.f32 %v3697, %v4402
    %v4404 = vpop.f32.mrf.mxu0
    %v4405 = vadd.f32 %v3699, %v4404
    %v4406 = vpop.f32.mrf.mxu0
    %v4407 = vadd.f32 %v3701, %v4406
    %4408 = vmatprep.mubr.bf16.mxu0 %v2975
    %4409 = vmatmul.mubr.bf16.gmra.mxu0 %v2974
    %v4410 = vpop.f32.mrf.mxu0
    %v4411 = vadd.f32 %v3705, %v4410
    %v4412 = vpop.f32.mrf.mxu0
    %v4413 = vadd.f32 %v3707, %v4412
    %v4414 = vpop.f32.mrf.mxu0
    %v4415 = vadd.f32 %v3709, %v4414
    %v4416 = vpop.f32.mrf.mxu0
    %v4417 = vadd.f32 %v3711, %v4416
    %4418 = vmatprep.mubr.bf16.mxu0 %v2977
    %4419 = vmatmul.mubr.bf16.gmra.mxu0 %v2976
    %v4420 = vpop.f32.mrf.mxu0
    %v4421 = vadd.f32 %v3715, %v4420
    %v4422 = vpop.f32.mrf.mxu0
    %v4423 = vadd.f32 %v3717, %v4422
    %v4424 = vpop.f32.mrf.mxu0
    %v4425 = vadd.f32 %v3719, %v4424
    %v4426 = vpop.f32.mrf.mxu0
    %v4427 = vadd.f32 %v3721, %v4426
    %4428 = vmatprep.mubr.bf16.mxu0 %v2979
    %4429 = vmatmul.mubr.bf16.gmra.mxu0 %v2978
    %v4430 = vpop.f32.mrf.mxu0
    %v4431 = vadd.f32 %v3725, %v4430
    %v4432 = vpop.f32.mrf.mxu0
    %v4433 = vadd.f32 %v3727, %v4432
    %v4434 = vpop.f32.mrf.mxu0
    %v4435 = vadd.f32 %v3729, %v4434
    %v4436 = vpop.f32.mrf.mxu0
    %v4437 = vadd.f32 %v3731, %v4436
    %4438 = vmatprep.mubr.bf16.mxu0 %v2981
    %4439 = vmatmul.mubr.bf16.gmra.mxu0 %v2980
    %v4440 = vpop.f32.mrf.mxu0
    %v4441 = vadd.f32 %v3735, %v4440
    %v4442 = vpop.f32.mrf.mxu0
    %v4443 = vadd.f32 %v3737, %v4442
    %v4444 = vpop.f32.mrf.mxu0
    %v4445 = vadd.f32 %v3739, %v4444
    %v4446 = vpop.f32.mrf.mxu0
    %v4447 = vadd.f32 %v3741, %v4446
    %4448 = vmatprep.mubr.bf16.mxu0 %v2983
    %4449 = vmatmul.mubr.bf16.gmra.mxu0 %v2982
    %v4450 = vpop.f32.mrf.mxu0
    %v4451 = vadd.f32 %v3745, %v4450
    %v4452 = vpop.f32.mrf.mxu0
    %v4453 = vadd.f32 %v3747, %v4452
    %v4454 = vpop.f32.mrf.mxu0
    %v4455 = vadd.f32 %v3749, %v4454
    %v4456 = vpop.f32.mrf.mxu0
    %v4457 = vadd.f32 %v3751, %v4456
    %4458 = vmatprep.mubr.bf16.mxu0 %v2985
    %4459 = vmatmul.mubr.bf16.gmra.mxu0 %v2984
    %v4460 = vpop.f32.mrf.mxu0
    %v4461 = vadd.f32 %v3755, %v4460
    %v4462 = vpop.f32.mrf.mxu0
    %v4463 = vadd.f32 %v3757, %v4462
    %v4464 = vpop.f32.mrf.mxu0
    %v4465 = vadd.f32 %v3759, %v4464
    %v4466 = vpop.f32.mrf.mxu0
    %v4467 = vadd.f32 %v3761, %v4466
    %4468 = vmatprep.mubr.bf16.mxu0 %v2987
    %4469 = vmatmul.mubr.bf16.gmra.mxu0 %v2986
    %v4470 = vpop.f32.mrf.mxu0
    %v4471 = vadd.f32 %v3765, %v4470
    %v4472 = vpop.f32.mrf.mxu0
    %v4473 = vadd.f32 %v3767, %v4472
    %v4474 = vpop.f32.mrf.mxu0
    %v4475 = vadd.f32 %v3769, %v4474
    %v4476 = vpop.f32.mrf.mxu0
    %v4477 = vadd.f32 %v3771, %v4476
    %4478 = vmatprep.mubr.bf16.mxu0 %v2989
    %4479 = vmatmul.mubr.bf16.gmra.mxu0 %v2988
    %v4480 = vpop.f32.mrf.mxu0
    %v4481 = vadd.f32 %v3775, %v4480
    %v4482 = vpop.f32.mrf.mxu0
    %v4483 = vadd.f32 %v3777, %v4482
    %v4484 = vpop.f32.mrf.mxu0
    %v4485 = vadd.f32 %v3779, %v4484
    %v4486 = vpop.f32.mrf.mxu0
    %v4487 = vadd.f32 %v3781, %v4486
    %4488 = vmatprep.mubr.bf16.mxu0 %v2991
    %4489 = vmatmul.mubr.bf16.gmra.mxu0 %v2990
    %v4490 = vpop.f32.mrf.mxu0
    %v4491 = vadd.f32 %v3785, %v4490
    %v4492 = vpop.f32.mrf.mxu0
    %v4493 = vadd.f32 %v3787, %v4492
    %v4494 = vpop.f32.mrf.mxu0
    %v4495 = vadd.f32 %v3789, %v4494
    %v4496 = vpop.f32.mrf.mxu0
    %v4497 = vadd.f32 %v3791, %v4496
    %4498 = vmatprep.mubr.bf16.mxu0 %v2993
    %4499 = vmatmul.mubr.bf16.gmra.mxu0 %v2992
    %v4500 = vpop.f32.mrf.mxu0
    %v4501 = vadd.f32 %v3795, %v4500
    %v4502 = vpop.f32.mrf.mxu0
    %v4503 = vadd.f32 %v3797, %v4502
    %v4504 = vpop.f32.mrf.mxu0
    %v4505 = vadd.f32 %v3799, %v4504
    %v4506 = vpop.f32.mrf.mxu0
    %v4507 = vadd.f32 %v3801, %v4506
    %4508 = vmatprep.mubr.bf16.mxu0 %v2995
    %4509 = vmatmul.mubr.bf16.gmra.mxu0 %v2994
    %v4510 = vpop.f32.mrf.mxu0
    %v4511 = vadd.f32 %v3805, %v4510
    %v4512 = vpop.f32.mrf.mxu0
    %v4513 = vadd.f32 %v3807, %v4512
    %v4514 = vpop.f32.mrf.mxu0
    %v4515 = vadd.f32 %v3809, %v4514
    %v4516 = vpop.f32.mrf.mxu0
    %v4517 = vadd.f32 %v3811, %v4516
    %4518 = vmatprep.mubr.bf16.mxu0 %v2997
    %4519 = vmatmul.mubr.bf16.gmra.mxu0 %v2996
    %v4520 = vpop.f32.mrf.mxu0
    %v4521 = vadd.f32 %v3815, %v4520
    %v4522 = vpop.f32.mrf.mxu0
    %v4523 = vadd.f32 %v3817, %v4522
    %v4524 = vpop.f32.mrf.mxu0
    %v4525 = vadd.f32 %v3819, %v4524
    %v4526 = vpop.f32.mrf.mxu0
    %v4527 = vadd.f32 %v3821, %v4526
    %4528 = vmatprep.mubr.bf16.mxu0 %v2999
    %4529 = vmatmul.mubr.bf16.gmra.mxu0 %v2998
    %v4530 = vpop.f32.mrf.mxu0
    %v4531 = vadd.f32 %v3825, %v4530
    %v4532 = vpop.f32.mrf.mxu0
    %v4533 = vadd.f32 %v3827, %v4532
    %v4534 = vpop.f32.mrf.mxu0
    %v4535 = vadd.f32 %v3829, %v4534
    %v4536 = vpop.f32.mrf.mxu0
    %v4537 = vadd.f32 %v3831, %v4536
    %4538 = vmatprep.mubr.bf16.mxu0 %v3001
    %4539 = vmatmul.mubr.bf16.gmra.mxu0 %v3000
    %v4540 = vpop.f32.mrf.mxu0
    %v4541 = vadd.f32 %v3835, %v4540
    %v4542 = vpop.f32.mrf.mxu0
    %v4543 = vadd.f32 %v3837, %v4542
    %v4544 = vpop.f32.mrf.mxu0
    %v4545 = vadd.f32 %v3839, %v4544
    %v4546 = vpop.f32.mrf.mxu0
    %v4547 = vadd.f32 %v3841, %v4546
    %4548 = vmatprep.mubr.bf16.mxu0 %v3003
    %4549 = vmatmul.mubr.bf16.gmra.mxu0 %v3002
    %v4550 = vpop.f32.mrf.mxu0
    %v4551 = vadd.f32 %v3845, %v4550
    %v4552 = vpop.f32.mrf.mxu0
    %v4553 = vadd.f32 %v3847, %v4552
    %v4554 = vpop.f32.mrf.mxu0
    %v4555 = vadd.f32 %v3849, %v4554
    %v4556 = vpop.f32.mrf.mxu0
    %v4557 = vadd.f32 %v3851, %v4556
    %4558 = vdwg.mxu0
    %4559 = vmatprep.subr.bf16.mxu0 %v4269
    %4560 = vmatpush1.bf16.msra.mxu0 %v4268
    %4561 = vmatprep.subr.bf16.mxu0 %v4265
    %4562 = vmatpush1.bf16.msra.mxu0 %v4264
    %4563 = vmatprep.subr.bf16.mxu0 %v4261
    %4564 = vmatpush1.bf16.msra.mxu0 %v4260
    %4565 = vmatprep.subr.bf16.mxu0 %v4257
    %4566 = vmatpush1.bf16.msra.mxu0 %v4256
    %4567 = vmatprep.subr.bf16.mxu0 %v4253
    %4568 = vmatpush1.bf16.msra.mxu0 %v4252
    %4569 = vmatprep.subr.bf16.mxu0 %v4249
    %4570 = vmatpush1.bf16.msra.mxu0 %v4248
    %4571 = vmatprep.subr.bf16.mxu0 %v4245
    %4572 = vmatpush1.bf16.msra.mxu0 %v4244
    %4573 = vmatprep.subr.bf16.mxu0 %v4241
    %4574 = vmatpush1.bf16.msra.mxu0 %v4240
    %4575 = vmatprep.subr.bf16.mxu0 %v4301
    %4576 = vmatpush2.bf16.msra.mxu0 %v4300
    %4577 = vmatprep.subr.bf16.mxu0 %v4297
    %4578 = vmatpush2.bf16.msra.mxu0 %v4296
    %4579 = vmatprep.subr.bf16.mxu0 %v4293
    %4580 = vmatpush2.bf16.msra.mxu0 %v4292
    %4581 = vmatprep.subr.bf16.mxu0 %v4289
    %4582 = vmatpush2.bf16.msra.mxu0 %v4288
    %4583 = vmatprep.subr.bf16.mxu0 %v4285
    %4584 = vmatpush2.bf16.msra.mxu0 %v4284
    %4585 = vmatprep.subr.bf16.mxu0 %v4281
    %4586 = vmatpush2.bf16.msra.mxu0 %v4280
    %4587 = vmatprep.subr.bf16.mxu0 %v4277
    %4588 = vmatpush2.bf16.msra.mxu0 %v4276
    %4589 = vmatprep.subr.bf16.mxu0 %v4273
    %4590 = vmatpush2.bf16.msra.mxu0 %v4272
    %4591 = vmatprep.mubr.bf16.mxu0 %v2973
    %4592 = vmatmul.mubr.bf16.gmra.mxu0 %v2972
    %v4593 = vpop.f32.mrf.mxu0
    %v4594 = vadd.f32 %v3888, %v4593
    %v4595 = vpop.f32.mrf.mxu0
    %v4596 = vadd.f32 %v3890, %v4595
    %v4597 = vpop.f32.mrf.mxu0
    %v4598 = vadd.f32 %v3892, %v4597
    %v4599 = vpop.f32.mrf.mxu0
    %v4600 = vadd.f32 %v3894, %v4599
    %4601 = vmatprep.mubr.bf16.mxu0 %v2975
    %4602 = vmatmul.mubr.bf16.gmra.mxu0 %v2974
    %v4603 = vpop.f32.mrf.mxu0
    %v4604 = vadd.f32 %v3898, %v4603
    %v4605 = vpop.f32.mrf.mxu0
    %v4606 = vadd.f32 %v3900, %v4605
    %v4607 = vpop.f32.mrf.mxu0
    %v4608 = vadd.f32 %v3902, %v4607
    %v4609 = vpop.f32.mrf.mxu0
    %v4610 = vadd.f32 %v3904, %v4609
    %4611 = vmatprep.mubr.bf16.mxu0 %v2977
    %4612 = vmatmul.mubr.bf16.gmra.mxu0 %v2976
    %v4613 = vpop.f32.mrf.mxu0
    %v4614 = vadd.f32 %v3908, %v4613
    %v4615 = vpop.f32.mrf.mxu0
    %v4616 = vadd.f32 %v3910, %v4615
    %v4617 = vpop.f32.mrf.mxu0
    %v4618 = vadd.f32 %v3912, %v4617
    %v4619 = vpop.f32.mrf.mxu0
    %v4620 = vadd.f32 %v3914, %v4619
    %4621 = vmatprep.mubr.bf16.mxu0 %v2979
    %4622 = vmatmul.mubr.bf16.gmra.mxu0 %v2978
    %v4623 = vpop.f32.mrf.mxu0
    %v4624 = vadd.f32 %v3918, %v4623
    %v4625 = vpop.f32.mrf.mxu0
    %v4626 = vadd.f32 %v3920, %v4625
    %v4627 = vpop.f32.mrf.mxu0
    %v4628 = vadd.f32 %v3922, %v4627
    %v4629 = vpop.f32.mrf.mxu0
    %v4630 = vadd.f32 %v3924, %v4629
    %4631 = vmatprep.mubr.bf16.mxu0 %v2981
    %4632 = vmatmul.mubr.bf16.gmra.mxu0 %v2980
    %v4633 = vpop.f32.mrf.mxu0
    %v4634 = vadd.f32 %v3928, %v4633
    %v4635 = vpop.f32.mrf.mxu0
    %v4636 = vadd.f32 %v3930, %v4635
    %v4637 = vpop.f32.mrf.mxu0
    %v4638 = vadd.f32 %v3932, %v4637
    %v4639 = vpop.f32.mrf.mxu0
    %v4640 = vadd.f32 %v3934, %v4639
    %4641 = vmatprep.mubr.bf16.mxu0 %v2983
    %4642 = vmatmul.mubr.bf16.gmra.mxu0 %v2982
    %v4643 = vpop.f32.mrf.mxu0
    %v4644 = vadd.f32 %v3938, %v4643
    %v4645 = vpop.f32.mrf.mxu0
    %v4646 = vadd.f32 %v3940, %v4645
    %v4647 = vpop.f32.mrf.mxu0
    %v4648 = vadd.f32 %v3942, %v4647
    %v4649 = vpop.f32.mrf.mxu0
    %v4650 = vadd.f32 %v3944, %v4649
    %4651 = vmatprep.mubr.bf16.mxu0 %v2985
    %4652 = vmatmul.mubr.bf16.gmra.mxu0 %v2984
    %v4653 = vpop.f32.mrf.mxu0
    %v4654 = vadd.f32 %v3948, %v4653
    %v4655 = vpop.f32.mrf.mxu0
    %v4656 = vadd.f32 %v3950, %v4655
    %v4657 = vpop.f32.mrf.mxu0
    %v4658 = vadd.f32 %v3952, %v4657
    %v4659 = vpop.f32.mrf.mxu0
    %v4660 = vadd.f32 %v3954, %v4659
    %4661 = vmatprep.mubr.bf16.mxu0 %v2987
    %4662 = vmatmul.mubr.bf16.gmra.mxu0 %v2986
    %v4663 = vpop.f32.mrf.mxu0
    %v4664 = vadd.f32 %v3958, %v4663
    %v4665 = vpop.f32.mrf.mxu0
    %v4666 = vadd.f32 %v3960, %v4665
    %v4667 = vpop.f32.mrf.mxu0
    %v4668 = vadd.f32 %v3962, %v4667
    %v4669 = vpop.f32.mrf.mxu0
    %v4670 = vadd.f32 %v3964, %v4669
    %4671 = vmatprep.mubr.bf16.mxu0 %v2989
    %4672 = vmatmul.mubr.bf16.gmra.mxu0 %v2988
    %v4673 = vpop.f32.mrf.mxu0
    %v4674 = vadd.f32 %v3968, %v4673
    %v4675 = vpop.f32.mrf.mxu0
    %v4676 = vadd.f32 %v3970, %v4675
    %v4677 = vpop.f32.mrf.mxu0
    %v4678 = vadd.f32 %v3972, %v4677
    %v4679 = vpop.f32.mrf.mxu0
    %v4680 = vadd.f32 %v3974, %v4679
    %4681 = vmatprep.mubr.bf16.mxu0 %v2991
    %4682 = vmatmul.mubr.bf16.gmra.mxu0 %v2990
    %v4683 = vpop.f32.mrf.mxu0
    %v4684 = vadd.f32 %v3978, %v4683
    %v4685 = vpop.f32.mrf.mxu0
    %v4686 = vadd.f32 %v3980, %v4685
    %v4687 = vpop.f32.mrf.mxu0
    %v4688 = vadd.f32 %v3982, %v4687
    %v4689 = vpop.f32.mrf.mxu0
    %v4690 = vadd.f32 %v3984, %v4689
    %4691 = vmatprep.mubr.bf16.mxu0 %v2993
    %4692 = vmatmul.mubr.bf16.gmra.mxu0 %v2992
    %v4693 = vpop.f32.mrf.mxu0
    %v4694 = vadd.f32 %v3988, %v4693
    %v4695 = vpop.f32.mrf.mxu0
    %v4696 = vadd.f32 %v3990, %v4695
    %v4697 = vpop.f32.mrf.mxu0
    %v4698 = vadd.f32 %v3992, %v4697
    %v4699 = vpop.f32.mrf.mxu0
    %v4700 = vadd.f32 %v3994, %v4699
    %4701 = vmatprep.mubr.bf16.mxu0 %v2995
    %4702 = vmatmul.mubr.bf16.gmra.mxu0 %v2994
    %v4703 = vpop.f32.mrf.mxu0
    %v4704 = vadd.f32 %v3998, %v4703
    %v4705 = vpop.f32.mrf.mxu0
    %v4706 = vadd.f32 %v4000, %v4705
    %v4707 = vpop.f32.mrf.mxu0
    %v4708 = vadd.f32 %v4002, %v4707
    %v4709 = vpop.f32.mrf.mxu0
    %v4710 = vadd.f32 %v4004, %v4709
    %4711 = vmatprep.mubr.bf16.mxu0 %v2997
    %4712 = vmatmul.mubr.bf16.gmra.mxu0 %v2996
    %v4713 = vpop.f32.mrf.mxu0
    %v4714 = vadd.f32 %v4008, %v4713
    %v4715 = vpop.f32.mrf.mxu0
    %v4716 = vadd.f32 %v4010, %v4715
    %v4717 = vpop.f32.mrf.mxu0
    %v4718 = vadd.f32 %v4012, %v4717
    %v4719 = vpop.f32.mrf.mxu0
    %v4720 = vadd.f32 %v4014, %v4719
    %4721 = vmatprep.mubr.bf16.mxu0 %v2999
    %4722 = vmatmul.mubr.bf16.gmra.mxu0 %v2998
    %v4723 = vpop.f32.mrf.mxu0
    %v4724 = vadd.f32 %v4018, %v4723
    %v4725 = vpop.f32.mrf.mxu0
    %v4726 = vadd.f32 %v4020, %v4725
    %v4727 = vpop.f32.mrf.mxu0
    %v4728 = vadd.f32 %v4022, %v4727
    %v4729 = vpop.f32.mrf.mxu0
    %v4730 = vadd.f32 %v4024, %v4729
    %4731 = vmatprep.mubr.bf16.mxu0 %v3001
    %4732 = vmatmul.mubr.bf16.gmra.mxu0 %v3000
    %v4733 = vpop.f32.mrf.mxu0
    %v4734 = vadd.f32 %v4028, %v4733
    %v4735 = vpop.f32.mrf.mxu0
    %v4736 = vadd.f32 %v4030, %v4735
    %v4737 = vpop.f32.mrf.mxu0
    %v4738 = vadd.f32 %v4032, %v4737
    %v4739 = vpop.f32.mrf.mxu0
    %v4740 = vadd.f32 %v4034, %v4739
    %4741 = vmatprep.mubr.bf16.mxu0 %v3003
    %4742 = vmatmul.mubr.bf16.gmra.mxu0 %v3002
    %v4743 = vpop.f32.mrf.mxu0
    %v4744 = vadd.f32 %v4038, %v4743
    %v4745 = vpop.f32.mrf.mxu0
    %v4746 = vadd.f32 %v4040, %v4745
    %v4747 = vpop.f32.mrf.mxu0
    %v4748 = vadd.f32 %v4042, %v4747
    %v4749 = vpop.f32.mrf.mxu0
    %v4750 = vadd.f32 %v4044, %v4749
    %4751 = vdwg.mxu0
    %v4816 = vunpack.c.l.b16 %v3148
    %v4817 = vunpack.c.h.b16 %v3148
    %v4818 = vunpack.c.l.b16 %v3149
    %v4819 = vunpack.c.h.b16 %v3149
    %v4820 = vunpack.c.l.b16 %v3150
    %v4821 = vunpack.c.h.b16 %v3150
    %v4822 = vunpack.c.l.b16 %v3151
    %v4823 = vunpack.c.h.b16 %v3151
    %v4824 = vunpack.c.l.b16 %v3152
    %v4825 = vunpack.c.h.b16 %v3152
    %v4826 = vunpack.c.l.b16 %v3153
    %v4827 = vunpack.c.h.b16 %v3153
    %v4828 = vunpack.c.l.b16 %v3154
    %v4829 = vunpack.c.h.b16 %v3154
    %v4830 = vunpack.c.l.b16 %v3155
    %v4831 = vunpack.c.h.b16 %v3155
    %v4832 = vunpack.c.l.b16 %v3156
    %v4833 = vunpack.c.h.b16 %v3156
    %v4834 = vunpack.c.l.b16 %v3157
    %v4835 = vunpack.c.h.b16 %v3157
    %v4836 = vunpack.c.l.b16 %v3158
    %v4837 = vunpack.c.h.b16 %v3158
    %v4838 = vunpack.c.l.b16 %v3159
    %v4839 = vunpack.c.h.b16 %v3159
    %v4840 = vunpack.c.l.b16 %v3160
    %v4841 = vunpack.c.h.b16 %v3160
    %v4842 = vunpack.c.l.b16 %v3161
    %v4843 = vunpack.c.h.b16 %v3161
    %v4844 = vunpack.c.l.b16 %v3162
    %v4845 = vunpack.c.h.b16 %v3162
    %v4846 = vunpack.c.l.b16 %v3163
    %v4847 = vunpack.c.h.b16 %v3163
    %v4848 = vunpack.c.l.b16 %v3164
    %v4849 = vunpack.c.h.b16 %v3164
    %v4850 = vunpack.c.l.b16 %v3165
    %v4851 = vunpack.c.h.b16 %v3165
    %v4852 = vunpack.c.l.b16 %v3166
    %v4853 = vunpack.c.h.b16 %v3166
    %v4854 = vunpack.c.l.b16 %v3167
    %v4855 = vunpack.c.h.b16 %v3167
    %v4856 = vunpack.c.l.b16 %v3168
    %v4857 = vunpack.c.h.b16 %v3168
    %v4858 = vunpack.c.l.b16 %v3169
    %v4859 = vunpack.c.h.b16 %v3169
    %v4860 = vunpack.c.l.b16 %v3170
    %v4861 = vunpack.c.h.b16 %v3170
    %v4862 = vunpack.c.l.b16 %v3171
    %v4863 = vunpack.c.h.b16 %v3171
    %v4864 = vunpack.c.l.b16 %v3172
    %v4865 = vunpack.c.h.b16 %v3172
    %v4866 = vunpack.c.l.b16 %v3173
    %v4867 = vunpack.c.h.b16 %v3173
    %v4868 = vunpack.c.l.b16 %v3174
    %v4869 = vunpack.c.h.b16 %v3174
    %v4870 = vunpack.c.l.b16 %v3175
    %v4871 = vunpack.c.h.b16 %v3175
    %v4872 = vunpack.c.l.b16 %v3176
    %v4873 = vunpack.c.h.b16 %v3176
    %v4874 = vunpack.c.l.b16 %v3177
    %v4875 = vunpack.c.h.b16 %v3177
    %v4876 = vunpack.c.l.b16 %v3178
    %v4877 = vunpack.c.h.b16 %v3178
    %v4878 = vunpack.c.l.b16 %v3179
    %v4879 = vunpack.c.h.b16 %v3179
    %v4880 = vunpack.c.l.b16 %v3180
    %v4881 = vunpack.c.h.b16 %v3180
    %v4882 = vunpack.c.l.b16 %v3181
    %v4883 = vunpack.c.h.b16 %v3181
    %v4884 = vunpack.c.l.b16 %v3182
    %v4885 = vunpack.c.h.b16 %v3182
    %v4886 = vunpack.c.l.b16 %v3183
    %v4887 = vunpack.c.h.b16 %v3183
    %v4888 = vunpack.c.l.b16 %v3184
    %v4889 = vunpack.c.h.b16 %v3184
    %v4890 = vunpack.c.l.b16 %v3185
    %v4891 = vunpack.c.h.b16 %v3185
    %v4892 = vunpack.c.l.b16 %v3186
    %v4893 = vunpack.c.h.b16 %v3186
    %v4894 = vunpack.c.l.b16 %v3187
    %v4895 = vunpack.c.h.b16 %v3187
    %v4896 = vunpack.c.l.b16 %v3188
    %v4897 = vunpack.c.h.b16 %v3188
    %v4898 = vunpack.c.l.b16 %v3189
    %v4899 = vunpack.c.h.b16 %v3189
    %v4900 = vunpack.c.l.b16 %v3190
    %v4901 = vunpack.c.h.b16 %v3190
    %v4902 = vunpack.c.l.b16 %v3191
    %v4903 = vunpack.c.h.b16 %v3191
    %v4904 = vunpack.c.l.b16 %v3192
    %v4905 = vunpack.c.h.b16 %v3192
    %v4906 = vunpack.c.l.b16 %v3193
    %v4907 = vunpack.c.h.b16 %v3193
    %v4908 = vunpack.c.l.b16 %v3194
    %v4909 = vunpack.c.h.b16 %v3194
    %v4910 = vunpack.c.l.b16 %v3195
    %v4911 = vunpack.c.h.b16 %v3195
    %v4912 = vunpack.c.l.b16 %v3196
    %v4913 = vunpack.c.h.b16 %v3196
    %v4914 = vunpack.c.l.b16 %v3197
    %v4915 = vunpack.c.h.b16 %v3197
    %v4916 = vunpack.c.l.b16 %v3198
    %v4917 = vunpack.c.h.b16 %v3198
    %v4918 = vunpack.c.l.b16 %v3199
    %v4919 = vunpack.c.h.b16 %v3199
    %v4920 = vunpack.c.l.b16 %v3200
    %v4921 = vunpack.c.h.b16 %v3200
    %v4922 = vunpack.c.l.b16 %v3201
    %v4923 = vunpack.c.h.b16 %v3201
    %v4924 = vunpack.c.l.b16 %v3202
    %v4925 = vunpack.c.h.b16 %v3202
    %v4926 = vunpack.c.l.b16 %v3203
    %v4927 = vunpack.c.h.b16 %v3203
    %v4928 = vunpack.c.l.b16 %v3204
    %v4929 = vunpack.c.h.b16 %v3204
    %v4930 = vunpack.c.l.b16 %v3205
    %v4931 = vunpack.c.h.b16 %v3205
    %v4932 = vunpack.c.l.b16 %v3206
    %v4933 = vunpack.c.h.b16 %v3206
    %v4934 = vunpack.c.l.b16 %v3207
    %v4935 = vunpack.c.h.b16 %v3207
    %v4936 = vunpack.c.l.b16 %v3208
    %v4937 = vunpack.c.h.b16 %v3208
    %v4938 = vunpack.c.l.b16 %v3209
    %v4939 = vunpack.c.h.b16 %v3209
    %v4940 = vunpack.c.l.b16 %v3210
    %v4941 = vunpack.c.h.b16 %v3210
    %v4942 = vunpack.c.l.b16 %v3211
    %v4943 = vunpack.c.h.b16 %v3211
    %v4944 = vpack.c.b16 %v4820, %v4816
    %v4945 = vpack.c.b16 %v4821, %v4817
    %v4946 = vpack.c.b16 %v4822, %v4818
    %v4947 = vpack.c.b16 %v4823, %v4819
    %v4948 = vpack.c.b16 %v4828, %v4824
    %v4949 = vpack.c.b16 %v4829, %v4825
    %v4950 = vpack.c.b16 %v4830, %v4826
    %v4951 = vpack.c.b16 %v4831, %v4827
    %v4952 = vpack.c.b16 %v4836, %v4832
    %v4953 = vpack.c.b16 %v4837, %v4833
    %v4954 = vpack.c.b16 %v4838, %v4834
    %v4955 = vpack.c.b16 %v4839, %v4835
    %v4956 = vpack.c.b16 %v4844, %v4840
    %v4957 = vpack.c.b16 %v4845, %v4841
    %v4958 = vpack.c.b16 %v4846, %v4842
    %v4959 = vpack.c.b16 %v4847, %v4843
    %v4960 = vpack.c.b16 %v4852, %v4848
    %v4961 = vpack.c.b16 %v4853, %v4849
    %v4962 = vpack.c.b16 %v4854, %v4850
    %v4963 = vpack.c.b16 %v4855, %v4851
    %v4964 = vpack.c.b16 %v4860, %v4856
    %v4965 = vpack.c.b16 %v4861, %v4857
    %v4966 = vpack.c.b16 %v4862, %v4858
    %v4967 = vpack.c.b16 %v4863, %v4859
    %v4968 = vpack.c.b16 %v4868, %v4864
    %v4969 = vpack.c.b16 %v4869, %v4865
    %v4970 = vpack.c.b16 %v4870, %v4866
    %v4971 = vpack.c.b16 %v4871, %v4867
    %v4972 = vpack.c.b16 %v4876, %v4872
    %v4973 = vpack.c.b16 %v4877, %v4873
    %v4974 = vpack.c.b16 %v4878, %v4874
    %v4975 = vpack.c.b16 %v4879, %v4875
    %v4976 = vpack.c.b16 %v4884, %v4880
    %v4977 = vpack.c.b16 %v4885, %v4881
    %v4978 = vpack.c.b16 %v4886, %v4882
    %v4979 = vpack.c.b16 %v4887, %v4883
    %v4980 = vpack.c.b16 %v4892, %v4888
    %v4981 = vpack.c.b16 %v4893, %v4889
    %v4982 = vpack.c.b16 %v4894, %v4890
    %v4983 = vpack.c.b16 %v4895, %v4891
    %v4984 = vpack.c.b16 %v4900, %v4896
    %v4985 = vpack.c.b16 %v4901, %v4897
    %v4986 = vpack.c.b16 %v4902, %v4898
    %v4987 = vpack.c.b16 %v4903, %v4899
    %v4988 = vpack.c.b16 %v4908, %v4904
    %v4989 = vpack.c.b16 %v4909, %v4905
    %v4990 = vpack.c.b16 %v4910, %v4906
    %v4991 = vpack.c.b16 %v4911, %v4907
    %v4992 = vpack.c.b16 %v4916, %v4912
    %v4993 = vpack.c.b16 %v4917, %v4913
    %v4994 = vpack.c.b16 %v4918, %v4914
    %v4995 = vpack.c.b16 %v4919, %v4915
    %v4996 = vpack.c.b16 %v4924, %v4920
    %v4997 = vpack.c.b16 %v4925, %v4921
    %v4998 = vpack.c.b16 %v4926, %v4922
    %v4999 = vpack.c.b16 %v4927, %v4923
    %v5000 = vpack.c.b16 %v4932, %v4928
    %v5001 = vpack.c.b16 %v4933, %v4929
    %v5002 = vpack.c.b16 %v4934, %v4930
    %v5003 = vpack.c.b16 %v4935, %v4931
    %v5004 = vpack.c.b16 %v4940, %v4936
    %v5005 = vpack.c.b16 %v4941, %v4937
    %v5006 = vpack.c.b16 %v4942, %v4938
    %v5007 = vpack.c.b16 %v4943, %v4939
    %5072 = vmatprep.subr.bf16.mxu0 %v4973
    %5073 = vmatpush1.bf16.msra.mxu0 %v4972
    %5074 = vmatprep.subr.bf16.mxu0 %v4969
    %5075 = vmatpush1.bf16.msra.mxu0 %v4968
    %5076 = vmatprep.subr.bf16.mxu0 %v4965
    %5077 = vmatpush1.bf16.msra.mxu0 %v4964
    %5078 = vmatprep.subr.bf16.mxu0 %v4961
    %5079 = vmatpush1.bf16.msra.mxu0 %v4960
    %5080 = vmatprep.subr.bf16.mxu0 %v4957
    %5081 = vmatpush1.bf16.msra.mxu0 %v4956
    %5082 = vmatprep.subr.bf16.mxu0 %v4953
    %5083 = vmatpush1.bf16.msra.mxu0 %v4952
    %5084 = vmatprep.subr.bf16.mxu0 %v4949
    %5085 = vmatpush1.bf16.msra.mxu0 %v4948
    %5086 = vmatprep.subr.bf16.mxu0 %v4945
    %5087 = vmatpush1.bf16.msra.mxu0 %v4944
    %5088 = vmatprep.subr.bf16.mxu0 %v5005
    %5089 = vmatpush2.bf16.msra.mxu0 %v5004
    %5090 = vmatprep.subr.bf16.mxu0 %v5001
    %5091 = vmatpush2.bf16.msra.mxu0 %v5000
    %5092 = vmatprep.subr.bf16.mxu0 %v4997
    %5093 = vmatpush2.bf16.msra.mxu0 %v4996
    %5094 = vmatprep.subr.bf16.mxu0 %v4993
    %5095 = vmatpush2.bf16.msra.mxu0 %v4992
    %5096 = vmatprep.subr.bf16.mxu0 %v4989
    %5097 = vmatpush2.bf16.msra.mxu0 %v4988
    %5098 = vmatprep.subr.bf16.mxu0 %v4985
    %5099 = vmatpush2.bf16.msra.mxu0 %v4984
    %5100 = vmatprep.subr.bf16.mxu0 %v4981
    %5101 = vmatpush2.bf16.msra.mxu0 %v4980
    %5102 = vmatprep.subr.bf16.mxu0 %v4977
    %5103 = vmatpush2.bf16.msra.mxu0 %v4976
    %5104 = vmatprep.mubr.bf16.mxu0 %v2981
    %5105 = vmatmul.mubr.bf16.gmra.mxu0 %v2980
    %v5106 = vpop.f32.mrf.mxu0
    %v5107 = vadd.f32 0.0, %v5106
    %v5108 = vpop.f32.mrf.mxu0
    %v5109 = vadd.f32 0.0, %v5108
    %v5110 = vpop.f32.mrf.mxu0
    %v5111 = vadd.f32 0.0, %v5110
    %v5112 = vpop.f32.mrf.mxu0
    %v5113 = vadd.f32 0.0, %v5112
    %5114 = vmatprep.mubr.bf16.mxu0 %v2983
    %5115 = vmatmul.mubr.bf16.gmra.mxu0 %v2982
    %v5116 = vpop.f32.mrf.mxu0
    %v5117 = vadd.f32 0.0, %v5116
    %v5118 = vpop.f32.mrf.mxu0
    %v5119 = vadd.f32 0.0, %v5118
    %v5120 = vpop.f32.mrf.mxu0
    %v5121 = vadd.f32 0.0, %v5120
    %v5122 = vpop.f32.mrf.mxu0
    %v5123 = vadd.f32 0.0, %v5122
    %5124 = vmatprep.mubr.bf16.mxu0 %v2985
    %5125 = vmatmul.mubr.bf16.gmra.mxu0 %v2984
    %v5126 = vpop.f32.mrf.mxu0
    %v5127 = vadd.f32 0.0, %v5126
    %v5128 = vpop.f32.mrf.mxu0
    %v5129 = vadd.f32 0.0, %v5128
    %v5130 = vpop.f32.mrf.mxu0
    %v5131 = vadd.f32 0.0, %v5130
    %v5132 = vpop.f32.mrf.mxu0
    %v5133 = vadd.f32 0.0, %v5132
    %5134 = vmatprep.mubr.bf16.mxu0 %v2987
    %5135 = vmatmul.mubr.bf16.gmra.mxu0 %v2986
    %v5136 = vpop.f32.mrf.mxu0
    %v5137 = vadd.f32 0.0, %v5136
    %v5138 = vpop.f32.mrf.mxu0
    %v5139 = vadd.f32 0.0, %v5138
    %v5140 = vpop.f32.mrf.mxu0
    %v5141 = vadd.f32 0.0, %v5140
    %v5142 = vpop.f32.mrf.mxu0
    %v5143 = vadd.f32 0.0, %v5142
    %5144 = vmatprep.mubr.bf16.mxu0 %v2989
    %5145 = vmatmul.mubr.bf16.gmra.mxu0 %v2988
    %v5146 = vpop.f32.mrf.mxu0
    %v5147 = vadd.f32 0.0, %v5146
    %v5148 = vpop.f32.mrf.mxu0
    %v5149 = vadd.f32 0.0, %v5148
    %v5150 = vpop.f32.mrf.mxu0
    %v5151 = vadd.f32 0.0, %v5150
    %v5152 = vpop.f32.mrf.mxu0
    %v5153 = vadd.f32 0.0, %v5152
    %5154 = vmatprep.mubr.bf16.mxu0 %v2991
    %5155 = vmatmul.mubr.bf16.gmra.mxu0 %v2990
    %v5156 = vpop.f32.mrf.mxu0
    %v5157 = vadd.f32 0.0, %v5156
    %v5158 = vpop.f32.mrf.mxu0
    %v5159 = vadd.f32 0.0, %v5158
    %v5160 = vpop.f32.mrf.mxu0
    %v5161 = vadd.f32 0.0, %v5160
    %v5162 = vpop.f32.mrf.mxu0
    %v5163 = vadd.f32 0.0, %v5162
    %5164 = vmatprep.mubr.bf16.mxu0 %v2993
    %5165 = vmatmul.mubr.bf16.gmra.mxu0 %v2992
    %v5166 = vpop.f32.mrf.mxu0
    %v5167 = vadd.f32 0.0, %v5166
    %v5168 = vpop.f32.mrf.mxu0
    %v5169 = vadd.f32 0.0, %v5168
    %v5170 = vpop.f32.mrf.mxu0
    %v5171 = vadd.f32 0.0, %v5170
    %v5172 = vpop.f32.mrf.mxu0
    %v5173 = vadd.f32 0.0, %v5172
    %5174 = vmatprep.mubr.bf16.mxu0 %v2995
    %5175 = vmatmul.mubr.bf16.gmra.mxu0 %v2994
    %v5176 = vpop.f32.mrf.mxu0
    %v5177 = vadd.f32 0.0, %v5176
    %v5178 = vpop.f32.mrf.mxu0
    %v5179 = vadd.f32 0.0, %v5178
    %v5180 = vpop.f32.mrf.mxu0
    %v5181 = vadd.f32 0.0, %v5180
    %v5182 = vpop.f32.mrf.mxu0
    %v5183 = vadd.f32 0.0, %v5182
    %5184 = vmatprep.mubr.bf16.mxu0 %v2997
    %5185 = vmatmul.mubr.bf16.gmra.mxu0 %v2996
    %v5186 = vpop.f32.mrf.mxu0
    %v5187 = vadd.f32 0.0, %v5186
    %v5188 = vpop.f32.mrf.mxu0
    %v5189 = vadd.f32 0.0, %v5188
    %v5190 = vpop.f32.mrf.mxu0
    %v5191 = vadd.f32 0.0, %v5190
    %v5192 = vpop.f32.mrf.mxu0
    %v5193 = vadd.f32 0.0, %v5192
    %5194 = vmatprep.mubr.bf16.mxu0 %v2999
    %5195 = vmatmul.mubr.bf16.gmra.mxu0 %v2998
    %v5196 = vpop.f32.mrf.mxu0
    %v5197 = vadd.f32 0.0, %v5196
    %v5198 = vpop.f32.mrf.mxu0
    %v5199 = vadd.f32 0.0, %v5198
    %v5200 = vpop.f32.mrf.mxu0
    %v5201 = vadd.f32 0.0, %v5200
    %v5202 = vpop.f32.mrf.mxu0
    %v5203 = vadd.f32 0.0, %v5202
    %5204 = vmatprep.mubr.bf16.mxu0 %v3001
    %5205 = vmatmul.mubr.bf16.gmra.mxu0 %v3000
    %v5206 = vpop.f32.mrf.mxu0
    %v5207 = vadd.f32 0.0, %v5206
    %v5208 = vpop.f32.mrf.mxu0
    %v5209 = vadd.f32 0.0, %v5208
    %v5210 = vpop.f32.mrf.mxu0
    %v5211 = vadd.f32 0.0, %v5210
    %v5212 = vpop.f32.mrf.mxu0
    %v5213 = vadd.f32 0.0, %v5212
    %5214 = vmatprep.mubr.bf16.mxu0 %v3003
    %5215 = vmatmul.mubr.bf16.gmra.mxu0 %v3002
    %v5216 = vpop.f32.mrf.mxu0
    %v5217 = vadd.f32 0.0, %v5216
    %v5218 = vpop.f32.mrf.mxu0
    %v5219 = vadd.f32 0.0, %v5218
    %v5220 = vpop.f32.mrf.mxu0
    %v5221 = vadd.f32 0.0, %v5220
    %v5222 = vpop.f32.mrf.mxu0
    %v5223 = vadd.f32 0.0, %v5222
    %5224 = vmatprep.mubr.bf16.mxu0 %v3005
    %5225 = vmatmul.mubr.bf16.gmra.mxu0 %v3004
    %v5226 = vpop.f32.mrf.mxu0
    %v5227 = vadd.f32 0.0, %v5226
    %v5228 = vpop.f32.mrf.mxu0
    %v5229 = vadd.f32 0.0, %v5228
    %v5230 = vpop.f32.mrf.mxu0
    %v5231 = vadd.f32 0.0, %v5230
    %v5232 = vpop.f32.mrf.mxu0
    %v5233 = vadd.f32 0.0, %v5232
    %5234 = vmatprep.mubr.bf16.mxu0 %v3007
    %5235 = vmatmul.mubr.bf16.gmra.mxu0 %v3006
    %v5236 = vpop.f32.mrf.mxu0
    %v5237 = vadd.f32 0.0, %v5236
    %v5238 = vpop.f32.mrf.mxu0
    %v5239 = vadd.f32 0.0, %v5238
    %v5240 = vpop.f32.mrf.mxu0
    %v5241 = vadd.f32 0.0, %v5240
    %v5242 = vpop.f32.mrf.mxu0
    %v5243 = vadd.f32 0.0, %v5242
    %5244 = vmatprep.mubr.bf16.mxu0 %v3009
    %5245 = vmatmul.mubr.bf16.gmra.mxu0 %v3008
    %v5246 = vpop.f32.mrf.mxu0
    %v5247 = vadd.f32 0.0, %v5246
    %v5248 = vpop.f32.mrf.mxu0
    %v5249 = vadd.f32 0.0, %v5248
    %v5250 = vpop.f32.mrf.mxu0
    %v5251 = vadd.f32 0.0, %v5250
    %v5252 = vpop.f32.mrf.mxu0
    %v5253 = vadd.f32 0.0, %v5252
    %5254 = vmatprep.mubr.bf16.mxu0 %v3011
    %5255 = vmatmul.mubr.bf16.gmra.mxu0 %v3010
    %v5256 = vpop.f32.mrf.mxu0
    %v5257 = vadd.f32 0.0, %v5256
    %v5258 = vpop.f32.mrf.mxu0
    %v5259 = vadd.f32 0.0, %v5258
    %v5260 = vpop.f32.mrf.mxu0
    %v5261 = vadd.f32 0.0, %v5260
    %v5262 = vpop.f32.mrf.mxu0
    %v5263 = vadd.f32 0.0, %v5262
    %5264 = vdwg.mxu0
    %5265 = vmatprep.subr.bf16.mxu0 %v4975
    %5266 = vmatpush1.bf16.msra.mxu0 %v4974
    %5267 = vmatprep.subr.bf16.mxu0 %v4971
    %5268 = vmatpush1.bf16.msra.mxu0 %v4970
    %5269 = vmatprep.subr.bf16.mxu0 %v4967
    %5270 = vmatpush1.bf16.msra.mxu0 %v4966
    %5271 = vmatprep.subr.bf16.mxu0 %v4963
    %5272 = vmatpush1.bf16.msra.mxu0 %v4962
    %5273 = vmatprep.subr.bf16.mxu0 %v4959
    %5274 = vmatpush1.bf16.msra.mxu0 %v4958
    %5275 = vmatprep.subr.bf16.mxu0 %v4955
    %5276 = vmatpush1.bf16.msra.mxu0 %v4954
    %5277 = vmatprep.subr.bf16.mxu0 %v4951
    %5278 = vmatpush1.bf16.msra.mxu0 %v4950
    %5279 = vmatprep.subr.bf16.mxu0 %v4947
    %5280 = vmatpush1.bf16.msra.mxu0 %v4946
    %5281 = vmatprep.subr.bf16.mxu0 %v5007
    %5282 = vmatpush2.bf16.msra.mxu0 %v5006
    %5283 = vmatprep.subr.bf16.mxu0 %v5003
    %5284 = vmatpush2.bf16.msra.mxu0 %v5002
    %5285 = vmatprep.subr.bf16.mxu0 %v4999
    %5286 = vmatpush2.bf16.msra.mxu0 %v4998
    %5287 = vmatprep.subr.bf16.mxu0 %v4995
    %5288 = vmatpush2.bf16.msra.mxu0 %v4994
    %5289 = vmatprep.subr.bf16.mxu0 %v4991
    %5290 = vmatpush2.bf16.msra.mxu0 %v4990
    %5291 = vmatprep.subr.bf16.mxu0 %v4987
    %5292 = vmatpush2.bf16.msra.mxu0 %v4986
    %5293 = vmatprep.subr.bf16.mxu0 %v4983
    %5294 = vmatpush2.bf16.msra.mxu0 %v4982
    %5295 = vmatprep.subr.bf16.mxu0 %v4979
    %5296 = vmatpush2.bf16.msra.mxu0 %v4978
    %5297 = vmatprep.mubr.bf16.mxu0 %v2981
    %5298 = vmatmul.mubr.bf16.gmra.mxu0 %v2980
    %v5299 = vpop.f32.mrf.mxu0
    %v5300 = vadd.f32 0.0, %v5299
    %v5301 = vpop.f32.mrf.mxu0
    %v5302 = vadd.f32 0.0, %v5301
    %v5303 = vpop.f32.mrf.mxu0
    %v5304 = vadd.f32 0.0, %v5303
    %v5305 = vpop.f32.mrf.mxu0
    %v5306 = vadd.f32 0.0, %v5305
    %5307 = vmatprep.mubr.bf16.mxu0 %v2983
    %5308 = vmatmul.mubr.bf16.gmra.mxu0 %v2982
    %v5309 = vpop.f32.mrf.mxu0
    %v5310 = vadd.f32 0.0, %v5309
    %v5311 = vpop.f32.mrf.mxu0
    %v5312 = vadd.f32 0.0, %v5311
    %v5313 = vpop.f32.mrf.mxu0
    %v5314 = vadd.f32 0.0, %v5313
    %v5315 = vpop.f32.mrf.mxu0
    %v5316 = vadd.f32 0.0, %v5315
    %5317 = vmatprep.mubr.bf16.mxu0 %v2985
    %5318 = vmatmul.mubr.bf16.gmra.mxu0 %v2984
    %v5319 = vpop.f32.mrf.mxu0
    %v5320 = vadd.f32 0.0, %v5319
    %v5321 = vpop.f32.mrf.mxu0
    %v5322 = vadd.f32 0.0, %v5321
    %v5323 = vpop.f32.mrf.mxu0
    %v5324 = vadd.f32 0.0, %v5323
    %v5325 = vpop.f32.mrf.mxu0
    %v5326 = vadd.f32 0.0, %v5325
    %5327 = vmatprep.mubr.bf16.mxu0 %v2987
    %5328 = vmatmul.mubr.bf16.gmra.mxu0 %v2986
    %v5329 = vpop.f32.mrf.mxu0
    %v5330 = vadd.f32 0.0, %v5329
    %v5331 = vpop.f32.mrf.mxu0
    %v5332 = vadd.f32 0.0, %v5331
    %v5333 = vpop.f32.mrf.mxu0
    %v5334 = vadd.f32 0.0, %v5333
    %v5335 = vpop.f32.mrf.mxu0
    %v5336 = vadd.f32 0.0, %v5335
    %5337 = vmatprep.mubr.bf16.mxu0 %v2989
    %5338 = vmatmul.mubr.bf16.gmra.mxu0 %v2988
    %v5339 = vpop.f32.mrf.mxu0
    %v5340 = vadd.f32 0.0, %v5339
    %v5341 = vpop.f32.mrf.mxu0
    %v5342 = vadd.f32 0.0, %v5341
    %v5343 = vpop.f32.mrf.mxu0
    %v5344 = vadd.f32 0.0, %v5343
    %v5345 = vpop.f32.mrf.mxu0
    %v5346 = vadd.f32 0.0, %v5345
    %5347 = vmatprep.mubr.bf16.mxu0 %v2991
    %5348 = vmatmul.mubr.bf16.gmra.mxu0 %v2990
    %v5349 = vpop.f32.mrf.mxu0
    %v5350 = vadd.f32 0.0, %v5349
    %v5351 = vpop.f32.mrf.mxu0
    %v5352 = vadd.f32 0.0, %v5351
    %v5353 = vpop.f32.mrf.mxu0
    %v5354 = vadd.f32 0.0, %v5353
    %v5355 = vpop.f32.mrf.mxu0
    %v5356 = vadd.f32 0.0, %v5355
    %5357 = vmatprep.mubr.bf16.mxu0 %v2993
    %5358 = vmatmul.mubr.bf16.gmra.mxu0 %v2992
    %v5359 = vpop.f32.mrf.mxu0
    %v5360 = vadd.f32 0.0, %v5359
    %v5361 = vpop.f32.mrf.mxu0
    %v5362 = vadd.f32 0.0, %v5361
    %v5363 = vpop.f32.mrf.mxu0
    %v5364 = vadd.f32 0.0, %v5363
    %v5365 = vpop.f32.mrf.mxu0
    %v5366 = vadd.f32 0.0, %v5365
    %5367 = vmatprep.mubr.bf16.mxu0 %v2995
    %5368 = vmatmul.mubr.bf16.gmra.mxu0 %v2994
    %v5369 = vpop.f32.mrf.mxu0
    %v5370 = vadd.f32 0.0, %v5369
    %v5371 = vpop.f32.mrf.mxu0
    %v5372 = vadd.f32 0.0, %v5371
    %v5373 = vpop.f32.mrf.mxu0
    %v5374 = vadd.f32 0.0, %v5373
    %v5375 = vpop.f32.mrf.mxu0
    %v5376 = vadd.f32 0.0, %v5375
    %5377 = vmatprep.mubr.bf16.mxu0 %v2997
    %5378 = vmatmul.mubr.bf16.gmra.mxu0 %v2996
    %v5379 = vpop.f32.mrf.mxu0
    %v5380 = vadd.f32 0.0, %v5379
    %v5381 = vpop.f32.mrf.mxu0
    %v5382 = vadd.f32 0.0, %v5381
    %v5383 = vpop.f32.mrf.mxu0
    %v5384 = vadd.f32 0.0, %v5383
    %v5385 = vpop.f32.mrf.mxu0
    %v5386 = vadd.f32 0.0, %v5385
    %5387 = vmatprep.mubr.bf16.mxu0 %v2999
    %5388 = vmatmul.mubr.bf16.gmra.mxu0 %v2998
    %v5389 = vpop.f32.mrf.mxu0
    %v5390 = vadd.f32 0.0, %v5389
    %v5391 = vpop.f32.mrf.mxu0
    %v5392 = vadd.f32 0.0, %v5391
    %v5393 = vpop.f32.mrf.mxu0
    %v5394 = vadd.f32 0.0, %v5393
    %v5395 = vpop.f32.mrf.mxu0
    %v5396 = vadd.f32 0.0, %v5395
    %5397 = vmatprep.mubr.bf16.mxu0 %v3001
    %5398 = vmatmul.mubr.bf16.gmra.mxu0 %v3000
    %v5399 = vpop.f32.mrf.mxu0
    %v5400 = vadd.f32 0.0, %v5399
    %v5401 = vpop.f32.mrf.mxu0
    %v5402 = vadd.f32 0.0, %v5401
    %v5403 = vpop.f32.mrf.mxu0
    %v5404 = vadd.f32 0.0, %v5403
    %v5405 = vpop.f32.mrf.mxu0
    %v5406 = vadd.f32 0.0, %v5405
    %5407 = vmatprep.mubr.bf16.mxu0 %v3003
    %5408 = vmatmul.mubr.bf16.gmra.mxu0 %v3002
    %v5409 = vpop.f32.mrf.mxu0
    %v5410 = vadd.f32 0.0, %v5409
    %v5411 = vpop.f32.mrf.mxu0
    %v5412 = vadd.f32 0.0, %v5411
    %v5413 = vpop.f32.mrf.mxu0
    %v5414 = vadd.f32 0.0, %v5413
    %v5415 = vpop.f32.mrf.mxu0
    %v5416 = vadd.f32 0.0, %v5415
    %5417 = vmatprep.mubr.bf16.mxu0 %v3005
    %5418 = vmatmul.mubr.bf16.gmra.mxu0 %v3004
    %v5419 = vpop.f32.mrf.mxu0
    %v5420 = vadd.f32 0.0, %v5419
    %v5421 = vpop.f32.mrf.mxu0
    %v5422 = vadd.f32 0.0, %v5421
    %v5423 = vpop.f32.mrf.mxu0
    %v5424 = vadd.f32 0.0, %v5423
    %v5425 = vpop.f32.mrf.mxu0
    %v5426 = vadd.f32 0.0, %v5425
    %5427 = vmatprep.mubr.bf16.mxu0 %v3007
    %5428 = vmatmul.mubr.bf16.gmra.mxu0 %v3006
    %v5429 = vpop.f32.mrf.mxu0
    %v5430 = vadd.f32 0.0, %v5429
    %v5431 = vpop.f32.mrf.mxu0
    %v5432 = vadd.f32 0.0, %v5431
    %v5433 = vpop.f32.mrf.mxu0
    %v5434 = vadd.f32 0.0, %v5433
    %v5435 = vpop.f32.mrf.mxu0
    %v5436 = vadd.f32 0.0, %v5435
    %5437 = vmatprep.mubr.bf16.mxu0 %v3009
    %5438 = vmatmul.mubr.bf16.gmra.mxu0 %v3008
    %v5439 = vpop.f32.mrf.mxu0
    %v5440 = vadd.f32 0.0, %v5439
    %v5441 = vpop.f32.mrf.mxu0
    %v5442 = vadd.f32 0.0, %v5441
    %v5443 = vpop.f32.mrf.mxu0
    %v5444 = vadd.f32 0.0, %v5443
    %v5445 = vpop.f32.mrf.mxu0
    %v5446 = vadd.f32 0.0, %v5445
    %5447 = vmatprep.mubr.bf16.mxu0 %v3011
    %5448 = vmatmul.mubr.bf16.gmra.mxu0 %v3010
    %v5449 = vpop.f32.mrf.mxu0
    %v5450 = vadd.f32 0.0, %v5449
    %v5451 = vpop.f32.mrf.mxu0
    %v5452 = vadd.f32 0.0, %v5451
    %v5453 = vpop.f32.mrf.mxu0
    %v5454 = vadd.f32 0.0, %v5453
    %v5455 = vpop.f32.mrf.mxu0
    %v5456 = vadd.f32 0.0, %v5455
    %5457 = vdwg.mxu0
    %v5458 = vadd.f32 %v4401, %v5107
    %v5459 = vadd.f32 %v4403, %v5109
    %v5460 = vadd.f32 %v4594, %v5300
    %v5461 = vadd.f32 %v4596, %v5302
    %v5462 = vadd.f32 %v4405, %v5111
    %v5463 = vadd.f32 %v4407, %v5113
    %v5464 = vadd.f32 %v4598, %v5304
    %v5465 = vadd.f32 %v4600, %v5306
    %v5466 = vadd.f32 %v4411, %v5117
    %v5467 = vadd.f32 %v4413, %v5119
    %v5468 = vadd.f32 %v4604, %v5310
    %v5469 = vadd.f32 %v4606, %v5312
    %v5470 = vadd.f32 %v4415, %v5121
    %v5471 = vadd.f32 %v4417, %v5123
    %v5472 = vadd.f32 %v4608, %v5314
    %v5473 = vadd.f32 %v4610, %v5316
    %v5474 = vadd.f32 %v4421, %v5127
    %v5475 = vadd.f32 %v4423, %v5129
    %v5476 = vadd.f32 %v4614, %v5320
    %v5477 = vadd.f32 %v4616, %v5322
    %v5478 = vadd.f32 %v4425, %v5131
    %v5479 = vadd.f32 %v4427, %v5133
    %v5480 = vadd.f32 %v4618, %v5324
    %v5481 = vadd.f32 %v4620, %v5326
    %v5482 = vadd.f32 %v4431, %v5137
    %v5483 = vadd.f32 %v4433, %v5139
    %v5484 = vadd.f32 %v4624, %v5330
    %v5485 = vadd.f32 %v4626, %v5332
    %v5486 = vadd.f32 %v4435, %v5141
    %v5487 = vadd.f32 %v4437, %v5143
    %v5488 = vadd.f32 %v4628, %v5334
    %v5489 = vadd.f32 %v4630, %v5336
    %v5490 = vadd.f32 %v4441, %v5147
    %v5491 = vadd.f32 %v4443, %v5149
    %v5492 = vadd.f32 %v4634, %v5340
    %v5493 = vadd.f32 %v4636, %v5342
    %v5494 = vadd.f32 %v4445, %v5151
    %v5495 = vadd.f32 %v4447, %v5153
    %v5496 = vadd.f32 %v4638, %v5344
    %v5497 = vadd.f32 %v4640, %v5346
    %v5498 = vadd.f32 %v4451, %v5157
    %v5499 = vadd.f32 %v4453, %v5159
    %v5500 = vadd.f32 %v4644, %v5350
    %v5501 = vadd.f32 %v4646, %v5352
    %v5502 = vadd.f32 %v4455, %v5161
    %v5503 = vadd.f32 %v4457, %v5163
    %v5504 = vadd.f32 %v4648, %v5354
    %v5505 = vadd.f32 %v4650, %v5356
    %v5506 = vadd.f32 %v4461, %v5167
    %v5507 = vadd.f32 %v4463, %v5169
    %v5508 = vadd.f32 %v4654, %v5360
    %v5509 = vadd.f32 %v4656, %v5362
    %v5510 = vadd.f32 %v4465, %v5171
    %v5511 = vadd.f32 %v4467, %v5173
    %v5512 = vadd.f32 %v4658, %v5364
    %v5513 = vadd.f32 %v4660, %v5366
    %v5514 = vadd.f32 %v4471, %v5177
    %v5515 = vadd.f32 %v4473, %v5179
    %v5516 = vadd.f32 %v4664, %v5370
    %v5517 = vadd.f32 %v4666, %v5372
    %v5518 = vadd.f32 %v4475, %v5181
    %v5519 = vadd.f32 %v4477, %v5183
    %v5520 = vadd.f32 %v4668, %v5374
    %v5521 = vadd.f32 %v4670, %v5376
    %v5522 = vadd.f32 %v4481, %v5187
    %v5523 = vadd.f32 %v4483, %v5189
    %v5524 = vadd.f32 %v4674, %v5380
    %v5525 = vadd.f32 %v4676, %v5382
    %v5526 = vadd.f32 %v4485, %v5191
    %v5527 = vadd.f32 %v4487, %v5193
    %v5528 = vadd.f32 %v4678, %v5384
    %v5529 = vadd.f32 %v4680, %v5386
    %v5530 = vadd.f32 %v4491, %v5197
    %v5531 = vadd.f32 %v4493, %v5199
    %v5532 = vadd.f32 %v4684, %v5390
    %v5533 = vadd.f32 %v4686, %v5392
    %v5534 = vadd.f32 %v4495, %v5201
    %v5535 = vadd.f32 %v4497, %v5203
    %v5536 = vadd.f32 %v4688, %v5394
    %v5537 = vadd.f32 %v4690, %v5396
    %v5538 = vadd.f32 %v4501, %v5207
    %v5539 = vadd.f32 %v4503, %v5209
    %v5540 = vadd.f32 %v4694, %v5400
    %v5541 = vadd.f32 %v4696, %v5402
    %v5542 = vadd.f32 %v4505, %v5211
    %v5543 = vadd.f32 %v4507, %v5213
    %v5544 = vadd.f32 %v4698, %v5404
    %v5545 = vadd.f32 %v4700, %v5406
    %v5546 = vadd.f32 %v4511, %v5217
    %v5547 = vadd.f32 %v4513, %v5219
    %v5548 = vadd.f32 %v4704, %v5410
    %v5549 = vadd.f32 %v4706, %v5412
    %v5550 = vadd.f32 %v4515, %v5221
    %v5551 = vadd.f32 %v4517, %v5223
    %v5552 = vadd.f32 %v4708, %v5414
    %v5553 = vadd.f32 %v4710, %v5416
    %v5554 = vadd.f32 %v4521, %v5227
    %v5555 = vadd.f32 %v4523, %v5229
    %v5556 = vadd.f32 %v4714, %v5420
    %v5557 = vadd.f32 %v4716, %v5422
    %v5558 = vadd.f32 %v4525, %v5231
    %v5559 = vadd.f32 %v4527, %v5233
    %v5560 = vadd.f32 %v4718, %v5424
    %v5561 = vadd.f32 %v4720, %v5426
    %v5562 = vadd.f32 %v4531, %v5237
    %v5563 = vadd.f32 %v4533, %v5239
    %v5564 = vadd.f32 %v4724, %v5430
    %v5565 = vadd.f32 %v4726, %v5432
    %v5566 = vadd.f32 %v4535, %v5241
    %v5567 = vadd.f32 %v4537, %v5243
    %v5568 = vadd.f32 %v4728, %v5434
    %v5569 = vadd.f32 %v4730, %v5436
    %v5570 = vadd.f32 %v4541, %v5247
    %v5571 = vadd.f32 %v4543, %v5249
    %v5572 = vadd.f32 %v4734, %v5440
    %v5573 = vadd.f32 %v4736, %v5442
    %v5574 = vadd.f32 %v4545, %v5251
    %v5575 = vadd.f32 %v4547, %v5253
    %v5576 = vadd.f32 %v4738, %v5444
    %v5577 = vadd.f32 %v4740, %v5446
    %v5578 = vadd.f32 %v4551, %v5257
    %v5579 = vadd.f32 %v4553, %v5259
    %v5580 = vadd.f32 %v4744, %v5450
    %v5581 = vadd.f32 %v4746, %v5452
    %v5582 = vadd.f32 %v4555, %v5261
    %v5583 = vadd.f32 %v4557, %v5263
    %v5584 = vadd.f32 %v4748, %v5454
    %v5585 = vadd.f32 %v4750, %v5456
    %v5650 = vunpack.c.l.b16 %v3212
    %v5651 = vunpack.c.h.b16 %v3212
    %v5652 = vunpack.c.l.b16 %v3213
    %v5653 = vunpack.c.h.b16 %v3213
    %v5654 = vunpack.c.l.b16 %v3214
    %v5655 = vunpack.c.h.b16 %v3214
    %v5656 = vunpack.c.l.b16 %v3215
    %v5657 = vunpack.c.h.b16 %v3215
    %v5658 = vunpack.c.l.b16 %v3216
    %v5659 = vunpack.c.h.b16 %v3216
    %v5660 = vunpack.c.l.b16 %v3217
    %v5661 = vunpack.c.h.b16 %v3217
    %v5662 = vunpack.c.l.b16 %v3218
    %v5663 = vunpack.c.h.b16 %v3218
    %v5664 = vunpack.c.l.b16 %v3219
    %v5665 = vunpack.c.h.b16 %v3219
    %v5666 = vunpack.c.l.b16 %v3220
    %v5667 = vunpack.c.h.b16 %v3220
    %v5668 = vunpack.c.l.b16 %v3221
    %v5669 = vunpack.c.h.b16 %v3221
    %v5670 = vunpack.c.l.b16 %v3222
    %v5671 = vunpack.c.h.b16 %v3222
    %v5672 = vunpack.c.l.b16 %v3223
    %v5673 = vunpack.c.h.b16 %v3223
    %v5674 = vunpack.c.l.b16 %v3224
    %v5675 = vunpack.c.h.b16 %v3224
    %v5676 = vunpack.c.l.b16 %v3225
    %v5677 = vunpack.c.h.b16 %v3225
    %v5678 = vunpack.c.l.b16 %v3226
    %v5679 = vunpack.c.h.b16 %v3226
    %v5680 = vunpack.c.l.b16 %v3227
    %v5681 = vunpack.c.h.b16 %v3227
    %v5682 = vunpack.c.l.b16 %v3228
    %v5683 = vunpack.c.h.b16 %v3228
    %v5684 = vunpack.c.l.b16 %v3229
    %v5685 = vunpack.c.h.b16 %v3229
    %v5686 = vunpack.c.l.b16 %v3230
    %v5687 = vunpack.c.h.b16 %v3230
    %v5688 = vunpack.c.l.b16 %v3231
    %v5689 = vunpack.c.h.b16 %v3231
    %v5690 = vunpack.c.l.b16 %v3232
    %v5691 = vunpack.c.h.b16 %v3232
    %v5692 = vunpack.c.l.b16 %v3233
    %v5693 = vunpack.c.h.b16 %v3233
    %v5694 = vunpack.c.l.b16 %v3234
    %v5695 = vunpack.c.h.b16 %v3234
    %v5696 = vunpack.c.l.b16 %v3235
    %v5697 = vunpack.c.h.b16 %v3235
    %v5698 = vunpack.c.l.b16 %v3236
    %v5699 = vunpack.c.h.b16 %v3236
    %v5700 = vunpack.c.l.b16 %v3237
    %v5701 = vunpack.c.h.b16 %v3237
    %v5702 = vunpack.c.l.b16 %v3238
    %v5703 = vunpack.c.h.b16 %v3238
    %v5704 = vunpack.c.l.b16 %v3239
    %v5705 = vunpack.c.h.b16 %v3239
    %v5706 = vunpack.c.l.b16 %v3240
    %v5707 = vunpack.c.h.b16 %v3240
    %v5708 = vunpack.c.l.b16 %v3241
    %v5709 = vunpack.c.h.b16 %v3241
    %v5710 = vunpack.c.l.b16 %v3242
    %v5711 = vunpack.c.h.b16 %v3242
    %v5712 = vunpack.c.l.b16 %v3243
    %v5713 = vunpack.c.h.b16 %v3243
    %v5714 = vunpack.c.l.b16 %v3244
    %v5715 = vunpack.c.h.b16 %v3244
    %v5716 = vunpack.c.l.b16 %v3245
    %v5717 = vunpack.c.h.b16 %v3245
    %v5718 = vunpack.c.l.b16 %v3246
    %v5719 = vunpack.c.h.b16 %v3246
    %v5720 = vunpack.c.l.b16 %v3247
    %v5721 = vunpack.c.h.b16 %v3247
    %v5722 = vunpack.c.l.b16 %v3248
    %v5723 = vunpack.c.h.b16 %v3248
    %v5724 = vunpack.c.l.b16 %v3249
    %v5725 = vunpack.c.h.b16 %v3249
    %v5726 = vunpack.c.l.b16 %v3250
    %v5727 = vunpack.c.h.b16 %v3250
    %v5728 = vunpack.c.l.b16 %v3251
    %v5729 = vunpack.c.h.b16 %v3251
    %v5730 = vunpack.c.l.b16 %v3252
    %v5731 = vunpack.c.h.b16 %v3252
    %v5732 = vunpack.c.l.b16 %v3253
    %v5733 = vunpack.c.h.b16 %v3253
    %v5734 = vunpack.c.l.b16 %v3254
    %v5735 = vunpack.c.h.b16 %v3254
    %v5736 = vunpack.c.l.b16 %v3255
    %v5737 = vunpack.c.h.b16 %v3255
    %v5738 = vunpack.c.l.b16 %v3256
    %v5739 = vunpack.c.h.b16 %v3256
    %v5740 = vunpack.c.l.b16 %v3257
    %v5741 = vunpack.c.h.b16 %v3257
    %v5742 = vunpack.c.l.b16 %v3258
    %v5743 = vunpack.c.h.b16 %v3258
    %v5744 = vunpack.c.l.b16 %v3259
    %v5745 = vunpack.c.h.b16 %v3259
    %v5746 = vunpack.c.l.b16 %v3260
    %v5747 = vunpack.c.h.b16 %v3260
    %v5748 = vunpack.c.l.b16 %v3261
    %v5749 = vunpack.c.h.b16 %v3261
    %v5750 = vunpack.c.l.b16 %v3262
    %v5751 = vunpack.c.h.b16 %v3262
    %v5752 = vunpack.c.l.b16 %v3263
    %v5753 = vunpack.c.h.b16 %v3263
    %v5754 = vunpack.c.l.b16 %v3264
    %v5755 = vunpack.c.h.b16 %v3264
    %v5756 = vunpack.c.l.b16 %v3265
    %v5757 = vunpack.c.h.b16 %v3265
    %v5758 = vunpack.c.l.b16 %v3266
    %v5759 = vunpack.c.h.b16 %v3266
    %v5760 = vunpack.c.l.b16 %v3267
    %v5761 = vunpack.c.h.b16 %v3267
    %v5762 = vunpack.c.l.b16 %v3268
    %v5763 = vunpack.c.h.b16 %v3268
    %v5764 = vunpack.c.l.b16 %v3269
    %v5765 = vunpack.c.h.b16 %v3269
    %v5766 = vunpack.c.l.b16 %v3270
    %v5767 = vunpack.c.h.b16 %v3270
    %v5768 = vunpack.c.l.b16 %v3271
    %v5769 = vunpack.c.h.b16 %v3271
    %v5770 = vunpack.c.l.b16 %v3272
    %v5771 = vunpack.c.h.b16 %v3272
    %v5772 = vunpack.c.l.b16 %v3273
    %v5773 = vunpack.c.h.b16 %v3273
    %v5774 = vunpack.c.l.b16 %v3274
    %v5775 = vunpack.c.h.b16 %v3274
    %v5776 = vunpack.c.l.b16 %v3275
    %v5777 = vunpack.c.h.b16 %v3275
    %v5778 = vpack.c.b16 %v5654, %v5650
    %v5779 = vpack.c.b16 %v5655, %v5651
    %v5780 = vpack.c.b16 %v5656, %v5652
    %v5781 = vpack.c.b16 %v5657, %v5653
    %v5782 = vpack.c.b16 %v5662, %v5658
    %v5783 = vpack.c.b16 %v5663, %v5659
    %v5784 = vpack.c.b16 %v5664, %v5660
    %v5785 = vpack.c.b16 %v5665, %v5661
    %v5786 = vpack.c.b16 %v5670, %v5666
    %v5787 = vpack.c.b16 %v5671, %v5667
    %v5788 = vpack.c.b16 %v5672, %v5668
    %v5789 = vpack.c.b16 %v5673, %v5669
    %v5790 = vpack.c.b16 %v5678, %v5674
    %v5791 = vpack.c.b16 %v5679, %v5675
    %v5792 = vpack.c.b16 %v5680, %v5676
    %v5793 = vpack.c.b16 %v5681, %v5677
    %v5794 = vpack.c.b16 %v5686, %v5682
    %v5795 = vpack.c.b16 %v5687, %v5683
    %v5796 = vpack.c.b16 %v5688, %v5684
    %v5797 = vpack.c.b16 %v5689, %v5685
    %v5798 = vpack.c.b16 %v5694, %v5690
    %v5799 = vpack.c.b16 %v5695, %v5691
    %v5800 = vpack.c.b16 %v5696, %v5692
    %v5801 = vpack.c.b16 %v5697, %v5693
    %v5802 = vpack.c.b16 %v5702, %v5698
    %v5803 = vpack.c.b16 %v5703, %v5699
    %v5804 = vpack.c.b16 %v5704, %v5700
    %v5805 = vpack.c.b16 %v5705, %v5701
    %v5806 = vpack.c.b16 %v5710, %v5706
    %v5807 = vpack.c.b16 %v5711, %v5707
    %v5808 = vpack.c.b16 %v5712, %v5708
    %v5809 = vpack.c.b16 %v5713, %v5709
    %v5810 = vpack.c.b16 %v5718, %v5714
    %v5811 = vpack.c.b16 %v5719, %v5715
    %v5812 = vpack.c.b16 %v5720, %v5716
    %v5813 = vpack.c.b16 %v5721, %v5717
    %v5814 = vpack.c.b16 %v5726, %v5722
    %v5815 = vpack.c.b16 %v5727, %v5723
    %v5816 = vpack.c.b16 %v5728, %v5724
    %v5817 = vpack.c.b16 %v5729, %v5725
    %v5818 = vpack.c.b16 %v5734, %v5730
    %v5819 = vpack.c.b16 %v5735, %v5731
    %v5820 = vpack.c.b16 %v5736, %v5732
    %v5821 = vpack.c.b16 %v5737, %v5733
    %v5822 = vpack.c.b16 %v5742, %v5738
    %v5823 = vpack.c.b16 %v5743, %v5739
    %v5824 = vpack.c.b16 %v5744, %v5740
    %v5825 = vpack.c.b16 %v5745, %v5741
    %v5826 = vpack.c.b16 %v5750, %v5746
    %v5827 = vpack.c.b16 %v5751, %v5747
    %v5828 = vpack.c.b16 %v5752, %v5748
    %v5829 = vpack.c.b16 %v5753, %v5749
    %v5830 = vpack.c.b16 %v5758, %v5754
    %v5831 = vpack.c.b16 %v5759, %v5755
    %v5832 = vpack.c.b16 %v5760, %v5756
    %v5833 = vpack.c.b16 %v5761, %v5757
    %v5834 = vpack.c.b16 %v5766, %v5762
    %v5835 = vpack.c.b16 %v5767, %v5763
    %v5836 = vpack.c.b16 %v5768, %v5764
    %v5837 = vpack.c.b16 %v5769, %v5765
    %v5838 = vpack.c.b16 %v5774, %v5770
    %v5839 = vpack.c.b16 %v5775, %v5771
    %v5840 = vpack.c.b16 %v5776, %v5772
    %v5841 = vpack.c.b16 %v5777, %v5773
    %5906 = vmatprep.subr.bf16.mxu0 %v5807
    %5907 = vmatpush1.bf16.msra.mxu0 %v5806
    %5908 = vmatprep.subr.bf16.mxu0 %v5803
    %5909 = vmatpush1.bf16.msra.mxu0 %v5802
    %5910 = vmatprep.subr.bf16.mxu0 %v5799
    %5911 = vmatpush1.bf16.msra.mxu0 %v5798
    %5912 = vmatprep.subr.bf16.mxu0 %v5795
    %5913 = vmatpush1.bf16.msra.mxu0 %v5794
    %5914 = vmatprep.subr.bf16.mxu0 %v5791
    %5915 = vmatpush1.bf16.msra.mxu0 %v5790
    %5916 = vmatprep.subr.bf16.mxu0 %v5787
    %5917 = vmatpush1.bf16.msra.mxu0 %v5786
    %5918 = vmatprep.subr.bf16.mxu0 %v5783
    %5919 = vmatpush1.bf16.msra.mxu0 %v5782
    %5920 = vmatprep.subr.bf16.mxu0 %v5779
    %5921 = vmatpush1.bf16.msra.mxu0 %v5778
    %5922 = vmatprep.subr.bf16.mxu0 %v5839
    %5923 = vmatpush2.bf16.msra.mxu0 %v5838
    %5924 = vmatprep.subr.bf16.mxu0 %v5835
    %5925 = vmatpush2.bf16.msra.mxu0 %v5834
    %5926 = vmatprep.subr.bf16.mxu0 %v5831
    %5927 = vmatpush2.bf16.msra.mxu0 %v5830
    %5928 = vmatprep.subr.bf16.mxu0 %v5827
    %5929 = vmatpush2.bf16.msra.mxu0 %v5826
    %5930 = vmatprep.subr.bf16.mxu0 %v5823
    %5931 = vmatpush2.bf16.msra.mxu0 %v5822
    %5932 = vmatprep.subr.bf16.mxu0 %v5819
    %5933 = vmatpush2.bf16.msra.mxu0 %v5818
    %5934 = vmatprep.subr.bf16.mxu0 %v5815
    %5935 = vmatpush2.bf16.msra.mxu0 %v5814
    %5936 = vmatprep.subr.bf16.mxu0 %v5811
    %5937 = vmatpush2.bf16.msra.mxu0 %v5810
    %5938 = vmatprep.mubr.bf16.mxu0 %v2985
    %5939 = vmatmul.mubr.bf16.gmra.mxu0 %v2984
    %v5940 = vpop.f32.mrf.mxu0
    %v5941 = vadd.f32 0.0, %v5940
    %v5942 = vpop.f32.mrf.mxu0
    %v5943 = vadd.f32 0.0, %v5942
    %v5944 = vpop.f32.mrf.mxu0
    %v5945 = vadd.f32 0.0, %v5944
    %v5946 = vpop.f32.mrf.mxu0
    %v5947 = vadd.f32 0.0, %v5946
    %5948 = vmatprep.mubr.bf16.mxu0 %v2987
    %5949 = vmatmul.mubr.bf16.gmra.mxu0 %v2986
    %v5950 = vpop.f32.mrf.mxu0
    %v5951 = vadd.f32 0.0, %v5950
    %v5952 = vpop.f32.mrf.mxu0
    %v5953 = vadd.f32 0.0, %v5952
    %v5954 = vpop.f32.mrf.mxu0
    %v5955 = vadd.f32 0.0, %v5954
    %v5956 = vpop.f32.mrf.mxu0
    %v5957 = vadd.f32 0.0, %v5956
    %5958 = vmatprep.mubr.bf16.mxu0 %v2989
    %5959 = vmatmul.mubr.bf16.gmra.mxu0 %v2988
    %v5960 = vpop.f32.mrf.mxu0
    %v5961 = vadd.f32 0.0, %v5960
    %v5962 = vpop.f32.mrf.mxu0
    %v5963 = vadd.f32 0.0, %v5962
    %v5964 = vpop.f32.mrf.mxu0
    %v5965 = vadd.f32 0.0, %v5964
    %v5966 = vpop.f32.mrf.mxu0
    %v5967 = vadd.f32 0.0, %v5966
    %5968 = vmatprep.mubr.bf16.mxu0 %v2991
    %5969 = vmatmul.mubr.bf16.gmra.mxu0 %v2990
    %v5970 = vpop.f32.mrf.mxu0
    %v5971 = vadd.f32 0.0, %v5970
    %v5972 = vpop.f32.mrf.mxu0
    %v5973 = vadd.f32 0.0, %v5972
    %v5974 = vpop.f32.mrf.mxu0
    %v5975 = vadd.f32 0.0, %v5974
    %v5976 = vpop.f32.mrf.mxu0
    %v5977 = vadd.f32 0.0, %v5976
    %5978 = vmatprep.mubr.bf16.mxu0 %v2993
    %5979 = vmatmul.mubr.bf16.gmra.mxu0 %v2992
    %v5980 = vpop.f32.mrf.mxu0
    %v5981 = vadd.f32 0.0, %v5980
    %v5982 = vpop.f32.mrf.mxu0
    %v5983 = vadd.f32 0.0, %v5982
    %v5984 = vpop.f32.mrf.mxu0
    %v5985 = vadd.f32 0.0, %v5984
    %v5986 = vpop.f32.mrf.mxu0
    %v5987 = vadd.f32 0.0, %v5986
    %5988 = vmatprep.mubr.bf16.mxu0 %v2995
    %5989 = vmatmul.mubr.bf16.gmra.mxu0 %v2994
    %v5990 = vpop.f32.mrf.mxu0
    %v5991 = vadd.f32 0.0, %v5990
    %v5992 = vpop.f32.mrf.mxu0
    %v5993 = vadd.f32 0.0, %v5992
    %v5994 = vpop.f32.mrf.mxu0
    %v5995 = vadd.f32 0.0, %v5994
    %v5996 = vpop.f32.mrf.mxu0
    %v5997 = vadd.f32 0.0, %v5996
    %5998 = vmatprep.mubr.bf16.mxu0 %v2997
    %5999 = vmatmul.mubr.bf16.gmra.mxu0 %v2996
    %v6000 = vpop.f32.mrf.mxu0
    %v6001 = vadd.f32 0.0, %v6000
    %v6002 = vpop.f32.mrf.mxu0
    %v6003 = vadd.f32 0.0, %v6002
    %v6004 = vpop.f32.mrf.mxu0
    %v6005 = vadd.f32 0.0, %v6004
    %v6006 = vpop.f32.mrf.mxu0
    %v6007 = vadd.f32 0.0, %v6006
    %6008 = vmatprep.mubr.bf16.mxu0 %v2999
    %6009 = vmatmul.mubr.bf16.gmra.mxu0 %v2998
    %v6010 = vpop.f32.mrf.mxu0
    %v6011 = vadd.f32 0.0, %v6010
    %v6012 = vpop.f32.mrf.mxu0
    %v6013 = vadd.f32 0.0, %v6012
    %v6014 = vpop.f32.mrf.mxu0
    %v6015 = vadd.f32 0.0, %v6014
    %v6016 = vpop.f32.mrf.mxu0
    %v6017 = vadd.f32 0.0, %v6016
    %6018 = vmatprep.mubr.bf16.mxu0 %v3001
    %6019 = vmatmul.mubr.bf16.gmra.mxu0 %v3000
    %v6020 = vpop.f32.mrf.mxu0
    %v6021 = vadd.f32 0.0, %v6020
    %v6022 = vpop.f32.mrf.mxu0
    %v6023 = vadd.f32 0.0, %v6022
    %v6024 = vpop.f32.mrf.mxu0
    %v6025 = vadd.f32 0.0, %v6024
    %v6026 = vpop.f32.mrf.mxu0
    %v6027 = vadd.f32 0.0, %v6026
    %6028 = vmatprep.mubr.bf16.mxu0 %v3003
    %6029 = vmatmul.mubr.bf16.gmra.mxu0 %v3002
    %v6030 = vpop.f32.mrf.mxu0
    %v6031 = vadd.f32 0.0, %v6030
    %v6032 = vpop.f32.mrf.mxu0
    %v6033 = vadd.f32 0.0, %v6032
    %v6034 = vpop.f32.mrf.mxu0
    %v6035 = vadd.f32 0.0, %v6034
    %v6036 = vpop.f32.mrf.mxu0
    %v6037 = vadd.f32 0.0, %v6036
    %6038 = vmatprep.mubr.bf16.mxu0 %v3005
    %6039 = vmatmul.mubr.bf16.gmra.mxu0 %v3004
    %v6040 = vpop.f32.mrf.mxu0
    %v6041 = vadd.f32 0.0, %v6040
    %v6042 = vpop.f32.mrf.mxu0
    %v6043 = vadd.f32 0.0, %v6042
    %v6044 = vpop.f32.mrf.mxu0
    %v6045 = vadd.f32 0.0, %v6044
    %v6046 = vpop.f32.mrf.mxu0
    %v6047 = vadd.f32 0.0, %v6046
    %6048 = vmatprep.mubr.bf16.mxu0 %v3007
    %6049 = vmatmul.mubr.bf16.gmra.mxu0 %v3006
    %v6050 = vpop.f32.mrf.mxu0
    %v6051 = vadd.f32 0.0, %v6050
    %v6052 = vpop.f32.mrf.mxu0
    %v6053 = vadd.f32 0.0, %v6052
    %v6054 = vpop.f32.mrf.mxu0
    %v6055 = vadd.f32 0.0, %v6054
    %v6056 = vpop.f32.mrf.mxu0
    %v6057 = vadd.f32 0.0, %v6056
    %6058 = vmatprep.mubr.bf16.mxu0 %v3009
    %6059 = vmatmul.mubr.bf16.gmra.mxu0 %v3008
    %v6060 = vpop.f32.mrf.mxu0
    %v6061 = vadd.f32 0.0, %v6060
    %v6062 = vpop.f32.mrf.mxu0
    %v6063 = vadd.f32 0.0, %v6062
    %v6064 = vpop.f32.mrf.mxu0
    %v6065 = vadd.f32 0.0, %v6064
    %v6066 = vpop.f32.mrf.mxu0
    %v6067 = vadd.f32 0.0, %v6066
    %6068 = vmatprep.mubr.bf16.mxu0 %v3011
    %6069 = vmatmul.mubr.bf16.gmra.mxu0 %v3010
    %v6070 = vpop.f32.mrf.mxu0
    %v6071 = vadd.f32 0.0, %v6070
    %v6072 = vpop.f32.mrf.mxu0
    %v6073 = vadd.f32 0.0, %v6072
    %v6074 = vpop.f32.mrf.mxu0
    %v6075 = vadd.f32 0.0, %v6074
    %v6076 = vpop.f32.mrf.mxu0
    %v6077 = vadd.f32 0.0, %v6076
    %6078 = vmatprep.mubr.bf16.mxu0 %v3013
    %6079 = vmatmul.mubr.bf16.gmra.mxu0 %v3012
    %v6080 = vpop.f32.mrf.mxu0
    %v6081 = vadd.f32 0.0, %v6080
    %v6082 = vpop.f32.mrf.mxu0
    %v6083 = vadd.f32 0.0, %v6082
    %v6084 = vpop.f32.mrf.mxu0
    %v6085 = vadd.f32 0.0, %v6084
    %v6086 = vpop.f32.mrf.mxu0
    %v6087 = vadd.f32 0.0, %v6086
    %6088 = vmatprep.mubr.bf16.mxu0 %v3015
    %6089 = vmatmul.mubr.bf16.gmra.mxu0 %v3014
    %v6090 = vpop.f32.mrf.mxu0
    %v6091 = vadd.f32 0.0, %v6090
    %v6092 = vpop.f32.mrf.mxu0
    %v6093 = vadd.f32 0.0, %v6092
    %v6094 = vpop.f32.mrf.mxu0
    %v6095 = vadd.f32 0.0, %v6094
    %v6096 = vpop.f32.mrf.mxu0
    %v6097 = vadd.f32 0.0, %v6096
    %6098 = vdwg.mxu0
    %6099 = vmatprep.subr.bf16.mxu0 %v5809
    %6100 = vmatpush1.bf16.msra.mxu0 %v5808
    %6101 = vmatprep.subr.bf16.mxu0 %v5805
    %6102 = vmatpush1.bf16.msra.mxu0 %v5804
    %6103 = vmatprep.subr.bf16.mxu0 %v5801
    %6104 = vmatpush1.bf16.msra.mxu0 %v5800
    %6105 = vmatprep.subr.bf16.mxu0 %v5797
    %6106 = vmatpush1.bf16.msra.mxu0 %v5796
    %6107 = vmatprep.subr.bf16.mxu0 %v5793
    %6108 = vmatpush1.bf16.msra.mxu0 %v5792
    %6109 = vmatprep.subr.bf16.mxu0 %v5789
    %6110 = vmatpush1.bf16.msra.mxu0 %v5788
    %6111 = vmatprep.subr.bf16.mxu0 %v5785
    %6112 = vmatpush1.bf16.msra.mxu0 %v5784
    %6113 = vmatprep.subr.bf16.mxu0 %v5781
    %6114 = vmatpush1.bf16.msra.mxu0 %v5780
    %6115 = vmatprep.subr.bf16.mxu0 %v5841
    %6116 = vmatpush2.bf16.msra.mxu0 %v5840
    %6117 = vmatprep.subr.bf16.mxu0 %v5837
    %6118 = vmatpush2.bf16.msra.mxu0 %v5836
    %6119 = vmatprep.subr.bf16.mxu0 %v5833
    %6120 = vmatpush2.bf16.msra.mxu0 %v5832
    %6121 = vmatprep.subr.bf16.mxu0 %v5829
    %6122 = vmatpush2.bf16.msra.mxu0 %v5828
    %6123 = vmatprep.subr.bf16.mxu0 %v5825
    %6124 = vmatpush2.bf16.msra.mxu0 %v5824
    %6125 = vmatprep.subr.bf16.mxu0 %v5821
    %6126 = vmatpush2.bf16.msra.mxu0 %v5820
    %6127 = vmatprep.subr.bf16.mxu0 %v5817
    %6128 = vmatpush2.bf16.msra.mxu0 %v5816
    %6129 = vmatprep.subr.bf16.mxu0 %v5813
    %6130 = vmatpush2.bf16.msra.mxu0 %v5812
    %6131 = vmatprep.mubr.bf16.mxu0 %v2985
    %6132 = vmatmul.mubr.bf16.gmra.mxu0 %v2984
    %v6133 = vpop.f32.mrf.mxu0
    %v6134 = vadd.f32 0.0, %v6133
    %v6135 = vpop.f32.mrf.mxu0
    %v6136 = vadd.f32 0.0, %v6135
    %v6137 = vpop.f32.mrf.mxu0
    %v6138 = vadd.f32 0.0, %v6137
    %v6139 = vpop.f32.mrf.mxu0
    %v6140 = vadd.f32 0.0, %v6139
    %6141 = vmatprep.mubr.bf16.mxu0 %v2987
    %6142 = vmatmul.mubr.bf16.gmra.mxu0 %v2986
    %v6143 = vpop.f32.mrf.mxu0
    %v6144 = vadd.f32 0.0, %v6143
    %v6145 = vpop.f32.mrf.mxu0
    %v6146 = vadd.f32 0.0, %v6145
    %v6147 = vpop.f32.mrf.mxu0
    %v6148 = vadd.f32 0.0, %v6147
    %v6149 = vpop.f32.mrf.mxu0
    %v6150 = vadd.f32 0.0, %v6149
    %6151 = vmatprep.mubr.bf16.mxu0 %v2989
    %6152 = vmatmul.mubr.bf16.gmra.mxu0 %v2988
    %v6153 = vpop.f32.mrf.mxu0
    %v6154 = vadd.f32 0.0, %v6153
    %v6155 = vpop.f32.mrf.mxu0
    %v6156 = vadd.f32 0.0, %v6155
    %v6157 = vpop.f32.mrf.mxu0
    %v6158 = vadd.f32 0.0, %v6157
    %v6159 = vpop.f32.mrf.mxu0
    %v6160 = vadd.f32 0.0, %v6159
    %6161 = vmatprep.mubr.bf16.mxu0 %v2991
    %6162 = vmatmul.mubr.bf16.gmra.mxu0 %v2990
    %v6163 = vpop.f32.mrf.mxu0
    %v6164 = vadd.f32 0.0, %v6163
    %v6165 = vpop.f32.mrf.mxu0
    %v6166 = vadd.f32 0.0, %v6165
    %v6167 = vpop.f32.mrf.mxu0
    %v6168 = vadd.f32 0.0, %v6167
    %v6169 = vpop.f32.mrf.mxu0
    %v6170 = vadd.f32 0.0, %v6169
    %6171 = vmatprep.mubr.bf16.mxu0 %v2993
    %6172 = vmatmul.mubr.bf16.gmra.mxu0 %v2992
    %v6173 = vpop.f32.mrf.mxu0
    %v6174 = vadd.f32 0.0, %v6173
    %v6175 = vpop.f32.mrf.mxu0
    %v6176 = vadd.f32 0.0, %v6175
    %v6177 = vpop.f32.mrf.mxu0
    %v6178 = vadd.f32 0.0, %v6177
    %v6179 = vpop.f32.mrf.mxu0
    %v6180 = vadd.f32 0.0, %v6179
    %6181 = vmatprep.mubr.bf16.mxu0 %v2995
    %6182 = vmatmul.mubr.bf16.gmra.mxu0 %v2994
    %v6183 = vpop.f32.mrf.mxu0
    %v6184 = vadd.f32 0.0, %v6183
    %v6185 = vpop.f32.mrf.mxu0
    %v6186 = vadd.f32 0.0, %v6185
    %v6187 = vpop.f32.mrf.mxu0
    %v6188 = vadd.f32 0.0, %v6187
    %v6189 = vpop.f32.mrf.mxu0
    %v6190 = vadd.f32 0.0, %v6189
    %6191 = vmatprep.mubr.bf16.mxu0 %v2997
    %6192 = vmatmul.mubr.bf16.gmra.mxu0 %v2996
    %v6193 = vpop.f32.mrf.mxu0
    %v6194 = vadd.f32 0.0, %v6193
    %v6195 = vpop.f32.mrf.mxu0
    %v6196 = vadd.f32 0.0, %v6195
    %v6197 = vpop.f32.mrf.mxu0
    %v6198 = vadd.f32 0.0, %v6197
    %v6199 = vpop.f32.mrf.mxu0
    %v6200 = vadd.f32 0.0, %v6199
    %6201 = vmatprep.mubr.bf16.mxu0 %v2999
    %6202 = vmatmul.mubr.bf16.gmra.mxu0 %v2998
    %v6203 = vpop.f32.mrf.mxu0
    %v6204 = vadd.f32 0.0, %v6203
    %v6205 = vpop.f32.mrf.mxu0
    %v6206 = vadd.f32 0.0, %v6205
    %v6207 = vpop.f32.mrf.mxu0
    %v6208 = vadd.f32 0.0, %v6207
    %v6209 = vpop.f32.mrf.mxu0
    %v6210 = vadd.f32 0.0, %v6209
    %6211 = vmatprep.mubr.bf16.mxu0 %v3001
    %6212 = vmatmul.mubr.bf16.gmra.mxu0 %v3000
    %v6213 = vpop.f32.mrf.mxu0
    %v6214 = vadd.f32 0.0, %v6213
    %v6215 = vpop.f32.mrf.mxu0
    %v6216 = vadd.f32 0.0, %v6215
    %v6217 = vpop.f32.mrf.mxu0
    %v6218 = vadd.f32 0.0, %v6217
    %v6219 = vpop.f32.mrf.mxu0
    %v6220 = vadd.f32 0.0, %v6219
    %6221 = vmatprep.mubr.bf16.mxu0 %v3003
    %6222 = vmatmul.mubr.bf16.gmra.mxu0 %v3002
    %v6223 = vpop.f32.mrf.mxu0
    %v6224 = vadd.f32 0.0, %v6223
    %v6225 = vpop.f32.mrf.mxu0
    %v6226 = vadd.f32 0.0, %v6225
    %v6227 = vpop.f32.mrf.mxu0
    %v6228 = vadd.f32 0.0, %v6227
    %v6229 = vpop.f32.mrf.mxu0
    %v6230 = vadd.f32 0.0, %v6229
    %6231 = vmatprep.mubr.bf16.mxu0 %v3005
    %6232 = vmatmul.mubr.bf16.gmra.mxu0 %v3004
    %v6233 = vpop.f32.mrf.mxu0
    %v6234 = vadd.f32 0.0, %v6233
    %v6235 = vpop.f32.mrf.mxu0
    %v6236 = vadd.f32 0.0, %v6235
    %v6237 = vpop.f32.mrf.mxu0
    %v6238 = vadd.f32 0.0, %v6237
    %v6239 = vpop.f32.mrf.mxu0
    %v6240 = vadd.f32 0.0, %v6239
    %6241 = vmatprep.mubr.bf16.mxu0 %v3007
    %6242 = vmatmul.mubr.bf16.gmra.mxu0 %v3006
    %v6243 = vpop.f32.mrf.mxu0
    %v6244 = vadd.f32 0.0, %v6243
    %v6245 = vpop.f32.mrf.mxu0
    %v6246 = vadd.f32 0.0, %v6245
    %v6247 = vpop.f32.mrf.mxu0
    %v6248 = vadd.f32 0.0, %v6247
    %v6249 = vpop.f32.mrf.mxu0
    %v6250 = vadd.f32 0.0, %v6249
    %6251 = vmatprep.mubr.bf16.mxu0 %v3009
    %6252 = vmatmul.mubr.bf16.gmra.mxu0 %v3008
    %v6253 = vpop.f32.mrf.mxu0
    %v6254 = vadd.f32 0.0, %v6253
    %v6255 = vpop.f32.mrf.mxu0
    %v6256 = vadd.f32 0.0, %v6255
    %v6257 = vpop.f32.mrf.mxu0
    %v6258 = vadd.f32 0.0, %v6257
    %v6259 = vpop.f32.mrf.mxu0
    %v6260 = vadd.f32 0.0, %v6259
    %6261 = vmatprep.mubr.bf16.mxu0 %v3011
    %6262 = vmatmul.mubr.bf16.gmra.mxu0 %v3010
    %v6263 = vpop.f32.mrf.mxu0
    %v6264 = vadd.f32 0.0, %v6263
    %v6265 = vpop.f32.mrf.mxu0
    %v6266 = vadd.f32 0.0, %v6265
    %v6267 = vpop.f32.mrf.mxu0
    %v6268 = vadd.f32 0.0, %v6267
    %v6269 = vpop.f32.mrf.mxu0
    %v6270 = vadd.f32 0.0, %v6269
    %6271 = vmatprep.mubr.bf16.mxu0 %v3013
    %6272 = vmatmul.mubr.bf16.gmra.mxu0 %v3012
    %v6273 = vpop.f32.mrf.mxu0
    %v6274 = vadd.f32 0.0, %v6273
    %v6275 = vpop.f32.mrf.mxu0
    %v6276 = vadd.f32 0.0, %v6275
    %v6277 = vpop.f32.mrf.mxu0
    %v6278 = vadd.f32 0.0, %v6277
    %v6279 = vpop.f32.mrf.mxu0
    %v6280 = vadd.f32 0.0, %v6279
    %6281 = vmatprep.mubr.bf16.mxu0 %v3015
    %6282 = vmatmul.mubr.bf16.gmra.mxu0 %v3014
    %v6283 = vpop.f32.mrf.mxu0
    %v6284 = vadd.f32 0.0, %v6283
    %v6285 = vpop.f32.mrf.mxu0
    %v6286 = vadd.f32 0.0, %v6285
    %v6287 = vpop.f32.mrf.mxu0
    %v6288 = vadd.f32 0.0, %v6287
    %v6289 = vpop.f32.mrf.mxu0
    %v6290 = vadd.f32 0.0, %v6289
    %6291 = vdwg.mxu0
    %v6292 = vadd.f32 %v5458, %v5941
    %v6293 = vadd.f32 %v5459, %v5943
    %v6294 = vadd.f32 %v5460, %v6134
    %v6295 = vadd.f32 %v5461, %v6136
    %v6296 = vadd.f32 %v5462, %v5945
    %v6297 = vadd.f32 %v5463, %v5947
    %v6298 = vadd.f32 %v5464, %v6138
    %v6299 = vadd.f32 %v5465, %v6140
    %v6300 = vadd.f32 %v5466, %v5951
    %v6301 = vadd.f32 %v5467, %v5953
    %v6302 = vadd.f32 %v5468, %v6144
    %v6303 = vadd.f32 %v5469, %v6146
    %v6304 = vadd.f32 %v5470, %v5955
    %v6305 = vadd.f32 %v5471, %v5957
    %v6306 = vadd.f32 %v5472, %v6148
    %v6307 = vadd.f32 %v5473, %v6150
    %v6308 = vadd.f32 %v5474, %v5961
    %v6309 = vadd.f32 %v5475, %v5963
    %v6310 = vadd.f32 %v5476, %v6154
    %v6311 = vadd.f32 %v5477, %v6156
    %v6312 = vadd.f32 %v5478, %v5965
    %v6313 = vadd.f32 %v5479, %v5967
    %v6314 = vadd.f32 %v5480, %v6158
    %v6315 = vadd.f32 %v5481, %v6160
    %v6316 = vadd.f32 %v5482, %v5971
    %v6317 = vadd.f32 %v5483, %v5973
    %v6318 = vadd.f32 %v5484, %v6164
    %v6319 = vadd.f32 %v5485, %v6166
    %v6320 = vadd.f32 %v5486, %v5975
    %v6321 = vadd.f32 %v5487, %v5977
    %v6322 = vadd.f32 %v5488, %v6168
    %v6323 = vadd.f32 %v5489, %v6170
    %v6324 = vadd.f32 %v5490, %v5981
    %v6325 = vadd.f32 %v5491, %v5983
    %v6326 = vadd.f32 %v5492, %v6174
    %v6327 = vadd.f32 %v5493, %v6176
    %v6328 = vadd.f32 %v5494, %v5985
    %v6329 = vadd.f32 %v5495, %v5987
    %v6330 = vadd.f32 %v5496, %v6178
    %v6331 = vadd.f32 %v5497, %v6180
    %v6332 = vadd.f32 %v5498, %v5991
    %v6333 = vadd.f32 %v5499, %v5993
    %v6334 = vadd.f32 %v5500, %v6184
    %v6335 = vadd.f32 %v5501, %v6186
    %v6336 = vadd.f32 %v5502, %v5995
    %v6337 = vadd.f32 %v5503, %v5997
    %v6338 = vadd.f32 %v5504, %v6188
    %v6339 = vadd.f32 %v5505, %v6190
    %v6340 = vadd.f32 %v5506, %v6001
    %v6341 = vadd.f32 %v5507, %v6003
    %v6342 = vadd.f32 %v5508, %v6194
    %v6343 = vadd.f32 %v5509, %v6196
    %v6344 = vadd.f32 %v5510, %v6005
    %v6345 = vadd.f32 %v5511, %v6007
    %v6346 = vadd.f32 %v5512, %v6198
    %v6347 = vadd.f32 %v5513, %v6200
    %v6348 = vadd.f32 %v5514, %v6011
    %v6349 = vadd.f32 %v5515, %v6013
    %v6350 = vadd.f32 %v5516, %v6204
    %v6351 = vadd.f32 %v5517, %v6206
    %v6352 = vadd.f32 %v5518, %v6015
    %v6353 = vadd.f32 %v5519, %v6017
    %v6354 = vadd.f32 %v5520, %v6208
    %v6355 = vadd.f32 %v5521, %v6210
    %v6356 = vadd.f32 %v5522, %v6021
    %v6357 = vadd.f32 %v5523, %v6023
    %v6358 = vadd.f32 %v5524, %v6214
    %v6359 = vadd.f32 %v5525, %v6216
    %v6360 = vadd.f32 %v5526, %v6025
    %v6361 = vadd.f32 %v5527, %v6027
    %v6362 = vadd.f32 %v5528, %v6218
    %v6363 = vadd.f32 %v5529, %v6220
    %v6364 = vadd.f32 %v5530, %v6031
    %v6365 = vadd.f32 %v5531, %v6033
    %v6366 = vadd.f32 %v5532, %v6224
    %v6367 = vadd.f32 %v5533, %v6226
    %v6368 = vadd.f32 %v5534, %v6035
    %v6369 = vadd.f32 %v5535, %v6037
    %v6370 = vadd.f32 %v5536, %v6228
    %v6371 = vadd.f32 %v5537, %v6230
    %v6372 = vadd.f32 %v5538, %v6041
    %v6373 = vadd.f32 %v5539, %v6043
    %v6374 = vadd.f32 %v5540, %v6234
    %v6375 = vadd.f32 %v5541, %v6236
    %v6376 = vadd.f32 %v5542, %v6045
    %v6377 = vadd.f32 %v5543, %v6047
    %v6378 = vadd.f32 %v5544, %v6238
    %v6379 = vadd.f32 %v5545, %v6240
    %v6380 = vadd.f32 %v5546, %v6051
    %v6381 = vadd.f32 %v5547, %v6053
    %v6382 = vadd.f32 %v5548, %v6244
    %v6383 = vadd.f32 %v5549, %v6246
    %v6384 = vadd.f32 %v5550, %v6055
    %v6385 = vadd.f32 %v5551, %v6057
    %v6386 = vadd.f32 %v5552, %v6248
    %v6387 = vadd.f32 %v5553, %v6250
    %v6388 = vadd.f32 %v5554, %v6061
    %v6389 = vadd.f32 %v5555, %v6063
    %v6390 = vadd.f32 %v5556, %v6254
    %v6391 = vadd.f32 %v5557, %v6256
    %v6392 = vadd.f32 %v5558, %v6065
    %v6393 = vadd.f32 %v5559, %v6067
    %v6394 = vadd.f32 %v5560, %v6258
    %v6395 = vadd.f32 %v5561, %v6260
    %v6396 = vadd.f32 %v5562, %v6071
    %v6397 = vadd.f32 %v5563, %v6073
    %v6398 = vadd.f32 %v5564, %v6264
    %v6399 = vadd.f32 %v5565, %v6266
    %v6400 = vadd.f32 %v5566, %v6075
    %v6401 = vadd.f32 %v5567, %v6077
    %v6402 = vadd.f32 %v5568, %v6268
    %v6403 = vadd.f32 %v5569, %v6270
    %v6404 = vadd.f32 %v5570, %v6081
    %v6405 = vadd.f32 %v5571, %v6083
    %v6406 = vadd.f32 %v5572, %v6274
    %v6407 = vadd.f32 %v5573, %v6276
    %v6408 = vadd.f32 %v5574, %v6085
    %v6409 = vadd.f32 %v5575, %v6087
    %v6410 = vadd.f32 %v5576, %v6278
    %v6411 = vadd.f32 %v5577, %v6280
    %v6412 = vadd.f32 %v5578, %v6091
    %v6413 = vadd.f32 %v5579, %v6093
    %v6414 = vadd.f32 %v5580, %v6284
    %v6415 = vadd.f32 %v5581, %v6286
    %v6416 = vadd.f32 %v5582, %v6095
    %v6417 = vadd.f32 %v5583, %v6097
    %v6418 = vadd.f32 %v5584, %v6288
    %v6419 = vadd.f32 %v5585, %v6290
    %v6484 = vunpack.c.l.b16 %v3276
    %v6485 = vunpack.c.h.b16 %v3276
    %v6486 = vunpack.c.l.b16 %v3277
    %v6487 = vunpack.c.h.b16 %v3277
    %v6488 = vunpack.c.l.b16 %v3278
    %v6489 = vunpack.c.h.b16 %v3278
    %v6490 = vunpack.c.l.b16 %v3279
    %v6491 = vunpack.c.h.b16 %v3279
    %v6492 = vunpack.c.l.b16 %v3280
    %v6493 = vunpack.c.h.b16 %v3280
    %v6494 = vunpack.c.l.b16 %v3281
    %v6495 = vunpack.c.h.b16 %v3281
    %v6496 = vunpack.c.l.b16 %v3282
    %v6497 = vunpack.c.h.b16 %v3282
    %v6498 = vunpack.c.l.b16 %v3283
    %v6499 = vunpack.c.h.b16 %v3283
    %v6500 = vunpack.c.l.b16 %v3284
    %v6501 = vunpack.c.h.b16 %v3284
    %v6502 = vunpack.c.l.b16 %v3285
    %v6503 = vunpack.c.h.b16 %v3285
    %v6504 = vunpack.c.l.b16 %v3286
    %v6505 = vunpack.c.h.b16 %v3286
    %v6506 = vunpack.c.l.b16 %v3287
    %v6507 = vunpack.c.h.b16 %v3287
    %v6508 = vunpack.c.l.b16 %v3288
    %v6509 = vunpack.c.h.b16 %v3288
    %v6510 = vunpack.c.l.b16 %v3289
    %v6511 = vunpack.c.h.b16 %v3289
    %v6512 = vunpack.c.l.b16 %v3290
    %v6513 = vunpack.c.h.b16 %v3290
    %v6514 = vunpack.c.l.b16 %v3291
    %v6515 = vunpack.c.h.b16 %v3291
    %v6516 = vunpack.c.l.b16 %v3292
    %v6517 = vunpack.c.h.b16 %v3292
    %v6518 = vunpack.c.l.b16 %v3293
    %v6519 = vunpack.c.h.b16 %v3293
    %v6520 = vunpack.c.l.b16 %v3294
    %v6521 = vunpack.c.h.b16 %v3294
    %v6522 = vunpack.c.l.b16 %v3295
    %v6523 = vunpack.c.h.b16 %v3295
    %v6524 = vunpack.c.l.b16 %v3296
    %v6525 = vunpack.c.h.b16 %v3296
    %v6526 = vunpack.c.l.b16 %v3297
    %v6527 = vunpack.c.h.b16 %v3297
    %v6528 = vunpack.c.l.b16 %v3298
    %v6529 = vunpack.c.h.b16 %v3298
    %v6530 = vunpack.c.l.b16 %v3299
    %v6531 = vunpack.c.h.b16 %v3299
    %v6532 = vunpack.c.l.b16 %v3300
    %v6533 = vunpack.c.h.b16 %v3300
    %v6534 = vunpack.c.l.b16 %v3301
    %v6535 = vunpack.c.h.b16 %v3301
    %v6536 = vunpack.c.l.b16 %v3302
    %v6537 = vunpack.c.h.b16 %v3302
    %v6538 = vunpack.c.l.b16 %v3303
    %v6539 = vunpack.c.h.b16 %v3303
    %v6540 = vunpack.c.l.b16 %v3304
    %v6541 = vunpack.c.h.b16 %v3304
    %v6542 = vunpack.c.l.b16 %v3305
    %v6543 = vunpack.c.h.b16 %v3305
    %v6544 = vunpack.c.l.b16 %v3306
    %v6545 = vunpack.c.h.b16 %v3306
    %v6546 = vunpack.c.l.b16 %v3307
    %v6547 = vunpack.c.h.b16 %v3307
    %v6548 = vunpack.c.l.b16 %v3308
    %v6549 = vunpack.c.h.b16 %v3308
    %v6550 = vunpack.c.l.b16 %v3309
    %v6551 = vunpack.c.h.b16 %v3309
    %v6552 = vunpack.c.l.b16 %v3310
    %v6553 = vunpack.c.h.b16 %v3310
    %v6554 = vunpack.c.l.b16 %v3311
    %v6555 = vunpack.c.h.b16 %v3311
    %v6556 = vunpack.c.l.b16 %v3312
    %v6557 = vunpack.c.h.b16 %v3312
    %v6558 = vunpack.c.l.b16 %v3313
    %v6559 = vunpack.c.h.b16 %v3313
    %v6560 = vunpack.c.l.b16 %v3314
    %v6561 = vunpack.c.h.b16 %v3314
    %v6562 = vunpack.c.l.b16 %v3315
    %v6563 = vunpack.c.h.b16 %v3315
    %v6564 = vunpack.c.l.b16 %v3316
    %v6565 = vunpack.c.h.b16 %v3316
    %v6566 = vunpack.c.l.b16 %v3317
    %v6567 = vunpack.c.h.b16 %v3317
    %v6568 = vunpack.c.l.b16 %v3318
    %v6569 = vunpack.c.h.b16 %v3318
    %v6570 = vunpack.c.l.b16 %v3319
    %v6571 = vunpack.c.h.b16 %v3319
    %v6572 = vunpack.c.l.b16 %v3320
    %v6573 = vunpack.c.h.b16 %v3320
    %v6574 = vunpack.c.l.b16 %v3321
    %v6575 = vunpack.c.h.b16 %v3321
    %v6576 = vunpack.c.l.b16 %v3322
    %v6577 = vunpack.c.h.b16 %v3322
    %v6578 = vunpack.c.l.b16 %v3323
    %v6579 = vunpack.c.h.b16 %v3323
    %v6580 = vunpack.c.l.b16 %v3324
    %v6581 = vunpack.c.h.b16 %v3324
    %v6582 = vunpack.c.l.b16 %v3325
    %v6583 = vunpack.c.h.b16 %v3325
    %v6584 = vunpack.c.l.b16 %v3326
    %v6585 = vunpack.c.h.b16 %v3326
    %v6586 = vunpack.c.l.b16 %v3327
    %v6587 = vunpack.c.h.b16 %v3327
    %v6588 = vunpack.c.l.b16 %v3328
    %v6589 = vunpack.c.h.b16 %v3328
    %v6590 = vunpack.c.l.b16 %v3329
    %v6591 = vunpack.c.h.b16 %v3329
    %v6592 = vunpack.c.l.b16 %v3330
    %v6593 = vunpack.c.h.b16 %v3330
    %v6594 = vunpack.c.l.b16 %v3331
    %v6595 = vunpack.c.h.b16 %v3331
    %v6596 = vunpack.c.l.b16 %v3332
    %v6597 = vunpack.c.h.b16 %v3332
    %v6598 = vunpack.c.l.b16 %v3333
    %v6599 = vunpack.c.h.b16 %v3333
    %v6600 = vunpack.c.l.b16 %v3334
    %v6601 = vunpack.c.h.b16 %v3334
    %v6602 = vunpack.c.l.b16 %v3335
    %v6603 = vunpack.c.h.b16 %v3335
    %v6604 = vunpack.c.l.b16 %v3336
    %v6605 = vunpack.c.h.b16 %v3336
    %v6606 = vunpack.c.l.b16 %v3337
    %v6607 = vunpack.c.h.b16 %v3337
    %v6608 = vunpack.c.l.b16 %v3338
    %v6609 = vunpack.c.h.b16 %v3338
    %v6610 = vunpack.c.l.b16 %v3339
    %v6611 = vunpack.c.h.b16 %v3339
    %v6612 = vpack.c.b16 %v6488, %v6484
    %v6613 = vpack.c.b16 %v6489, %v6485
    %v6614 = vpack.c.b16 %v6490, %v6486
    %v6615 = vpack.c.b16 %v6491, %v6487
    %v6616 = vpack.c.b16 %v6496, %v6492
    %v6617 = vpack.c.b16 %v6497, %v6493
    %v6618 = vpack.c.b16 %v6498, %v6494
    %v6619 = vpack.c.b16 %v6499, %v6495
    %v6620 = vpack.c.b16 %v6504, %v6500
    %v6621 = vpack.c.b16 %v6505, %v6501
    %v6622 = vpack.c.b16 %v6506, %v6502
    %v6623 = vpack.c.b16 %v6507, %v6503
    %v6624 = vpack.c.b16 %v6512, %v6508
    %v6625 = vpack.c.b16 %v6513, %v6509
    %v6626 = vpack.c.b16 %v6514, %v6510
    %v6627 = vpack.c.b16 %v6515, %v6511
    %v6628 = vpack.c.b16 %v6520, %v6516
    %v6629 = vpack.c.b16 %v6521, %v6517
    %v6630 = vpack.c.b16 %v6522, %v6518
    %v6631 = vpack.c.b16 %v6523, %v6519
    %v6632 = vpack.c.b16 %v6528, %v6524
    %v6633 = vpack.c.b16 %v6529, %v6525
    %v6634 = vpack.c.b16 %v6530, %v6526
    %v6635 = vpack.c.b16 %v6531, %v6527
    %v6636 = vpack.c.b16 %v6536, %v6532
    %v6637 = vpack.c.b16 %v6537, %v6533
    %v6638 = vpack.c.b16 %v6538, %v6534
    %v6639 = vpack.c.b16 %v6539, %v6535
    %v6640 = vpack.c.b16 %v6544, %v6540
    %v6641 = vpack.c.b16 %v6545, %v6541
    %v6642 = vpack.c.b16 %v6546, %v6542
    %v6643 = vpack.c.b16 %v6547, %v6543
    %v6644 = vpack.c.b16 %v6552, %v6548
    %v6645 = vpack.c.b16 %v6553, %v6549
    %v6646 = vpack.c.b16 %v6554, %v6550
    %v6647 = vpack.c.b16 %v6555, %v6551
    %v6648 = vpack.c.b16 %v6560, %v6556
    %v6649 = vpack.c.b16 %v6561, %v6557
    %v6650 = vpack.c.b16 %v6562, %v6558
    %v6651 = vpack.c.b16 %v6563, %v6559
    %v6652 = vpack.c.b16 %v6568, %v6564
    %v6653 = vpack.c.b16 %v6569, %v6565
    %v6654 = vpack.c.b16 %v6570, %v6566
    %v6655 = vpack.c.b16 %v6571, %v6567
    %v6656 = vpack.c.b16 %v6576, %v6572
    %v6657 = vpack.c.b16 %v6577, %v6573
    %v6658 = vpack.c.b16 %v6578, %v6574
    %v6659 = vpack.c.b16 %v6579, %v6575
    %v6660 = vpack.c.b16 %v6584, %v6580
    %v6661 = vpack.c.b16 %v6585, %v6581
    %v6662 = vpack.c.b16 %v6586, %v6582
    %v6663 = vpack.c.b16 %v6587, %v6583
    %v6664 = vpack.c.b16 %v6592, %v6588
    %v6665 = vpack.c.b16 %v6593, %v6589
    %v6666 = vpack.c.b16 %v6594, %v6590
    %v6667 = vpack.c.b16 %v6595, %v6591
    %v6668 = vpack.c.b16 %v6600, %v6596
    %v6669 = vpack.c.b16 %v6601, %v6597
    %v6670 = vpack.c.b16 %v6602, %v6598
    %v6671 = vpack.c.b16 %v6603, %v6599
    %v6672 = vpack.c.b16 %v6608, %v6604
    %v6673 = vpack.c.b16 %v6609, %v6605
    %v6674 = vpack.c.b16 %v6610, %v6606
    %v6675 = vpack.c.b16 %v6611, %v6607
    %6740 = vmatprep.subr.bf16.mxu0 %v6641
    %6741 = vmatpush1.bf16.msra.mxu0 %v6640
    %6742 = vmatprep.subr.bf16.mxu0 %v6637
    %6743 = vmatpush1.bf16.msra.mxu0 %v6636
    %6744 = vmatprep.subr.bf16.mxu0 %v6633
    %6745 = vmatpush1.bf16.msra.mxu0 %v6632
    %6746 = vmatprep.subr.bf16.mxu0 %v6629
    %6747 = vmatpush1.bf16.msra.mxu0 %v6628
    %6748 = vmatprep.subr.bf16.mxu0 %v6625
    %6749 = vmatpush1.bf16.msra.mxu0 %v6624
    %6750 = vmatprep.subr.bf16.mxu0 %v6621
    %6751 = vmatpush1.bf16.msra.mxu0 %v6620
    %6752 = vmatprep.subr.bf16.mxu0 %v6617
    %6753 = vmatpush1.bf16.msra.mxu0 %v6616
    %6754 = vmatprep.subr.bf16.mxu0 %v6613
    %6755 = vmatpush1.bf16.msra.mxu0 %v6612
    %6756 = vmatprep.subr.bf16.mxu0 %v6673
    %6757 = vmatpush2.bf16.msra.mxu0 %v6672
    %6758 = vmatprep.subr.bf16.mxu0 %v6669
    %6759 = vmatpush2.bf16.msra.mxu0 %v6668
    %6760 = vmatprep.subr.bf16.mxu0 %v6665
    %6761 = vmatpush2.bf16.msra.mxu0 %v6664
    %6762 = vmatprep.subr.bf16.mxu0 %v6661
    %6763 = vmatpush2.bf16.msra.mxu0 %v6660
    %6764 = vmatprep.subr.bf16.mxu0 %v6657
    %6765 = vmatpush2.bf16.msra.mxu0 %v6656
    %6766 = vmatprep.subr.bf16.mxu0 %v6653
    %6767 = vmatpush2.bf16.msra.mxu0 %v6652
    %6768 = vmatprep.subr.bf16.mxu0 %v6649
    %6769 = vmatpush2.bf16.msra.mxu0 %v6648
    %6770 = vmatprep.subr.bf16.mxu0 %v6645
    %6771 = vmatpush2.bf16.msra.mxu0 %v6644
    %6772 = vmatprep.mubr.bf16.mxu0 %v2989
    %6773 = vmatmul.mubr.bf16.gmra.mxu0 %v2988
    %v6774 = vpop.f32.mrf.mxu0
    %v6775 = vadd.f32 0.0, %v6774
    %v6776 = vpop.f32.mrf.mxu0
    %v6777 = vadd.f32 0.0, %v6776
    %v6778 = vpop.f32.mrf.mxu0
    %v6779 = vadd.f32 0.0, %v6778
    %v6780 = vpop.f32.mrf.mxu0
    %v6781 = vadd.f32 0.0, %v6780
    %6782 = vmatprep.mubr.bf16.mxu0 %v2991
    %6783 = vmatmul.mubr.bf16.gmra.mxu0 %v2990
    %v6784 = vpop.f32.mrf.mxu0
    %v6785 = vadd.f32 0.0, %v6784
    %v6786 = vpop.f32.mrf.mxu0
    %v6787 = vadd.f32 0.0, %v6786
    %v6788 = vpop.f32.mrf.mxu0
    %v6789 = vadd.f32 0.0, %v6788
    %v6790 = vpop.f32.mrf.mxu0
    %v6791 = vadd.f32 0.0, %v6790
    %6792 = vmatprep.mubr.bf16.mxu0 %v2993
    %6793 = vmatmul.mubr.bf16.gmra.mxu0 %v2992
    %v6794 = vpop.f32.mrf.mxu0
    %v6795 = vadd.f32 0.0, %v6794
    %v6796 = vpop.f32.mrf.mxu0
    %v6797 = vadd.f32 0.0, %v6796
    %v6798 = vpop.f32.mrf.mxu0
    %v6799 = vadd.f32 0.0, %v6798
    %v6800 = vpop.f32.mrf.mxu0
    %v6801 = vadd.f32 0.0, %v6800
    %6802 = vmatprep.mubr.bf16.mxu0 %v2995
    %6803 = vmatmul.mubr.bf16.gmra.mxu0 %v2994
    %v6804 = vpop.f32.mrf.mxu0
    %v6805 = vadd.f32 0.0, %v6804
    %v6806 = vpop.f32.mrf.mxu0
    %v6807 = vadd.f32 0.0, %v6806
    %v6808 = vpop.f32.mrf.mxu0
    %v6809 = vadd.f32 0.0, %v6808
    %v6810 = vpop.f32.mrf.mxu0
    %v6811 = vadd.f32 0.0, %v6810
    %6812 = vmatprep.mubr.bf16.mxu0 %v2997
    %6813 = vmatmul.mubr.bf16.gmra.mxu0 %v2996
    %v6814 = vpop.f32.mrf.mxu0
    %v6815 = vadd.f32 0.0, %v6814
    %v6816 = vpop.f32.mrf.mxu0
    %v6817 = vadd.f32 0.0, %v6816
    %v6818 = vpop.f32.mrf.mxu0
    %v6819 = vadd.f32 0.0, %v6818
    %v6820 = vpop.f32.mrf.mxu0
    %v6821 = vadd.f32 0.0, %v6820
    %6822 = vmatprep.mubr.bf16.mxu0 %v2999
    %6823 = vmatmul.mubr.bf16.gmra.mxu0 %v2998
    %v6824 = vpop.f32.mrf.mxu0
    %v6825 = vadd.f32 0.0, %v6824
    %v6826 = vpop.f32.mrf.mxu0
    %v6827 = vadd.f32 0.0, %v6826
    %v6828 = vpop.f32.mrf.mxu0
    %v6829 = vadd.f32 0.0, %v6828
    %v6830 = vpop.f32.mrf.mxu0
    %v6831 = vadd.f32 0.0, %v6830
    %6832 = vmatprep.mubr.bf16.mxu0 %v3001
    %6833 = vmatmul.mubr.bf16.gmra.mxu0 %v3000
    %v6834 = vpop.f32.mrf.mxu0
    %v6835 = vadd.f32 0.0, %v6834
    %v6836 = vpop.f32.mrf.mxu0
    %v6837 = vadd.f32 0.0, %v6836
    %v6838 = vpop.f32.mrf.mxu0
    %v6839 = vadd.f32 0.0, %v6838
    %v6840 = vpop.f32.mrf.mxu0
    %v6841 = vadd.f32 0.0, %v6840
    %6842 = vmatprep.mubr.bf16.mxu0 %v3003
    %6843 = vmatmul.mubr.bf16.gmra.mxu0 %v3002
    %v6844 = vpop.f32.mrf.mxu0
    %v6845 = vadd.f32 0.0, %v6844
    %v6846 = vpop.f32.mrf.mxu0
    %v6847 = vadd.f32 0.0, %v6846
    %v6848 = vpop.f32.mrf.mxu0
    %v6849 = vadd.f32 0.0, %v6848
    %v6850 = vpop.f32.mrf.mxu0
    %v6851 = vadd.f32 0.0, %v6850
    %6852 = vmatprep.mubr.bf16.mxu0 %v3005
    %6853 = vmatmul.mubr.bf16.gmra.mxu0 %v3004
    %v6854 = vpop.f32.mrf.mxu0
    %v6855 = vadd.f32 0.0, %v6854
    %v6856 = vpop.f32.mrf.mxu0
    %v6857 = vadd.f32 0.0, %v6856
    %v6858 = vpop.f32.mrf.mxu0
    %v6859 = vadd.f32 0.0, %v6858
    %v6860 = vpop.f32.mrf.mxu0
    %v6861 = vadd.f32 0.0, %v6860
    %6862 = vmatprep.mubr.bf16.mxu0 %v3007
    %6863 = vmatmul.mubr.bf16.gmra.mxu0 %v3006
    %v6864 = vpop.f32.mrf.mxu0
    %v6865 = vadd.f32 0.0, %v6864
    %v6866 = vpop.f32.mrf.mxu0
    %v6867 = vadd.f32 0.0, %v6866
    %v6868 = vpop.f32.mrf.mxu0
    %v6869 = vadd.f32 0.0, %v6868
    %v6870 = vpop.f32.mrf.mxu0
    %v6871 = vadd.f32 0.0, %v6870
    %6872 = vmatprep.mubr.bf16.mxu0 %v3009
    %6873 = vmatmul.mubr.bf16.gmra.mxu0 %v3008
    %v6874 = vpop.f32.mrf.mxu0
    %v6875 = vadd.f32 0.0, %v6874
    %v6876 = vpop.f32.mrf.mxu0
    %v6877 = vadd.f32 0.0, %v6876
    %v6878 = vpop.f32.mrf.mxu0
    %v6879 = vadd.f32 0.0, %v6878
    %v6880 = vpop.f32.mrf.mxu0
    %v6881 = vadd.f32 0.0, %v6880
    %6882 = vmatprep.mubr.bf16.mxu0 %v3011
    %6883 = vmatmul.mubr.bf16.gmra.mxu0 %v3010
    %v6884 = vpop.f32.mrf.mxu0
    %v6885 = vadd.f32 0.0, %v6884
    %v6886 = vpop.f32.mrf.mxu0
    %v6887 = vadd.f32 0.0, %v6886
    %v6888 = vpop.f32.mrf.mxu0
    %v6889 = vadd.f32 0.0, %v6888
    %v6890 = vpop.f32.mrf.mxu0
    %v6891 = vadd.f32 0.0, %v6890
    %6892 = vmatprep.mubr.bf16.mxu0 %v3013
    %6893 = vmatmul.mubr.bf16.gmra.mxu0 %v3012
    %v6894 = vpop.f32.mrf.mxu0
    %v6895 = vadd.f32 0.0, %v6894
    %v6896 = vpop.f32.mrf.mxu0
    %v6897 = vadd.f32 0.0, %v6896
    %v6898 = vpop.f32.mrf.mxu0
    %v6899 = vadd.f32 0.0, %v6898
    %v6900 = vpop.f32.mrf.mxu0
    %v6901 = vadd.f32 0.0, %v6900
    %6902 = vmatprep.mubr.bf16.mxu0 %v3015
    %6903 = vmatmul.mubr.bf16.gmra.mxu0 %v3014
    %v6904 = vpop.f32.mrf.mxu0
    %v6905 = vadd.f32 0.0, %v6904
    %v6906 = vpop.f32.mrf.mxu0
    %v6907 = vadd.f32 0.0, %v6906
    %v6908 = vpop.f32.mrf.mxu0
    %v6909 = vadd.f32 0.0, %v6908
    %v6910 = vpop.f32.mrf.mxu0
    %v6911 = vadd.f32 0.0, %v6910
    %6912 = vmatprep.mubr.bf16.mxu0 %v3017
    %6913 = vmatmul.mubr.bf16.gmra.mxu0 %v3016
    %v6914 = vpop.f32.mrf.mxu0
    %v6915 = vadd.f32 0.0, %v6914
    %v6916 = vpop.f32.mrf.mxu0
    %v6917 = vadd.f32 0.0, %v6916
    %v6918 = vpop.f32.mrf.mxu0
    %v6919 = vadd.f32 0.0, %v6918
    %v6920 = vpop.f32.mrf.mxu0
    %v6921 = vadd.f32 0.0, %v6920
    %6922 = vmatprep.mubr.bf16.mxu0 %v3019
    %6923 = vmatmul.mubr.bf16.gmra.mxu0 %v3018
    %v6924 = vpop.f32.mrf.mxu0
    %v6925 = vadd.f32 0.0, %v6924
    %v6926 = vpop.f32.mrf.mxu0
    %v6927 = vadd.f32 0.0, %v6926
    %v6928 = vpop.f32.mrf.mxu0
    %v6929 = vadd.f32 0.0, %v6928
    %v6930 = vpop.f32.mrf.mxu0
    %v6931 = vadd.f32 0.0, %v6930
    %6932 = vdwg.mxu0
    %6933 = vmatprep.subr.bf16.mxu0 %v6643
    %6934 = vmatpush1.bf16.msra.mxu0 %v6642
    %6935 = vmatprep.subr.bf16.mxu0 %v6639
    %6936 = vmatpush1.bf16.msra.mxu0 %v6638
    %6937 = vmatprep.subr.bf16.mxu0 %v6635
    %6938 = vmatpush1.bf16.msra.mxu0 %v6634
    %6939 = vmatprep.subr.bf16.mxu0 %v6631
    %6940 = vmatpush1.bf16.msra.mxu0 %v6630
    %6941 = vmatprep.subr.bf16.mxu0 %v6627
    %6942 = vmatpush1.bf16.msra.mxu0 %v6626
    %6943 = vmatprep.subr.bf16.mxu0 %v6623
    %6944 = vmatpush1.bf16.msra.mxu0 %v6622
    %6945 = vmatprep.subr.bf16.mxu0 %v6619
    %6946 = vmatpush1.bf16.msra.mxu0 %v6618
    %6947 = vmatprep.subr.bf16.mxu0 %v6615
    %6948 = vmatpush1.bf16.msra.mxu0 %v6614
    %6949 = vmatprep.subr.bf16.mxu0 %v6675
    %6950 = vmatpush2.bf16.msra.mxu0 %v6674
    %6951 = vmatprep.subr.bf16.mxu0 %v6671
    %6952 = vmatpush2.bf16.msra.mxu0 %v6670
    %6953 = vmatprep.subr.bf16.mxu0 %v6667
    %6954 = vmatpush2.bf16.msra.mxu0 %v6666
    %6955 = vmatprep.subr.bf16.mxu0 %v6663
    %6956 = vmatpush2.bf16.msra.mxu0 %v6662
    %6957 = vmatprep.subr.bf16.mxu0 %v6659
    %6958 = vmatpush2.bf16.msra.mxu0 %v6658
    %6959 = vmatprep.subr.bf16.mxu0 %v6655
    %6960 = vmatpush2.bf16.msra.mxu0 %v6654
    %6961 = vmatprep.subr.bf16.mxu0 %v6651
    %6962 = vmatpush2.bf16.msra.mxu0 %v6650
    %6963 = vmatprep.subr.bf16.mxu0 %v6647
    %6964 = vmatpush2.bf16.msra.mxu0 %v6646
    %6965 = vmatprep.mubr.bf16.mxu0 %v2989
    %6966 = vmatmul.mubr.bf16.gmra.mxu0 %v2988
    %v6967 = vpop.f32.mrf.mxu0
    %v6968 = vadd.f32 0.0, %v6967
    %v6969 = vpop.f32.mrf.mxu0
    %v6970 = vadd.f32 0.0, %v6969
    %v6971 = vpop.f32.mrf.mxu0
    %v6972 = vadd.f32 0.0, %v6971
    %v6973 = vpop.f32.mrf.mxu0
    %v6974 = vadd.f32 0.0, %v6973
    %6975 = vmatprep.mubr.bf16.mxu0 %v2991
    %6976 = vmatmul.mubr.bf16.gmra.mxu0 %v2990
    %v6977 = vpop.f32.mrf.mxu0
    %v6978 = vadd.f32 0.0, %v6977
    %v6979 = vpop.f32.mrf.mxu0
    %v6980 = vadd.f32 0.0, %v6979
    %v6981 = vpop.f32.mrf.mxu0
    %v6982 = vadd.f32 0.0, %v6981
    %v6983 = vpop.f32.mrf.mxu0
    %v6984 = vadd.f32 0.0, %v6983
    %6985 = vmatprep.mubr.bf16.mxu0 %v2993
    %6986 = vmatmul.mubr.bf16.gmra.mxu0 %v2992
    %v6987 = vpop.f32.mrf.mxu0
    %v6988 = vadd.f32 0.0, %v6987
    %v6989 = vpop.f32.mrf.mxu0
    %v6990 = vadd.f32 0.0, %v6989
    %v6991 = vpop.f32.mrf.mxu0
    %v6992 = vadd.f32 0.0, %v6991
    %v6993 = vpop.f32.mrf.mxu0
    %v6994 = vadd.f32 0.0, %v6993
    %6995 = vmatprep.mubr.bf16.mxu0 %v2995
    %6996 = vmatmul.mubr.bf16.gmra.mxu0 %v2994
    %v6997 = vpop.f32.mrf.mxu0
    %v6998 = vadd.f32 0.0, %v6997
    %v6999 = vpop.f32.mrf.mxu0
    %v7000 = vadd.f32 0.0, %v6999
    %v7001 = vpop.f32.mrf.mxu0
    %v7002 = vadd.f32 0.0, %v7001
    %v7003 = vpop.f32.mrf.mxu0
    %v7004 = vadd.f32 0.0, %v7003
    %7005 = vmatprep.mubr.bf16.mxu0 %v2997
    %7006 = vmatmul.mubr.bf16.gmra.mxu0 %v2996
    %v7007 = vpop.f32.mrf.mxu0
    %v7008 = vadd.f32 0.0, %v7007
    %v7009 = vpop.f32.mrf.mxu0
    %v7010 = vadd.f32 0.0, %v7009
    %v7011 = vpop.f32.mrf.mxu0
    %v7012 = vadd.f32 0.0, %v7011
    %v7013 = vpop.f32.mrf.mxu0
    %v7014 = vadd.f32 0.0, %v7013
    %7015 = vmatprep.mubr.bf16.mxu0 %v2999
    %7016 = vmatmul.mubr.bf16.gmra.mxu0 %v2998
    %v7017 = vpop.f32.mrf.mxu0
    %v7018 = vadd.f32 0.0, %v7017
    %v7019 = vpop.f32.mrf.mxu0
    %v7020 = vadd.f32 0.0, %v7019
    %v7021 = vpop.f32.mrf.mxu0
    %v7022 = vadd.f32 0.0, %v7021
    %v7023 = vpop.f32.mrf.mxu0
    %v7024 = vadd.f32 0.0, %v7023
    %7025 = vmatprep.mubr.bf16.mxu0 %v3001
    %7026 = vmatmul.mubr.bf16.gmra.mxu0 %v3000
    %v7027 = vpop.f32.mrf.mxu0
    %v7028 = vadd.f32 0.0, %v7027
    %v7029 = vpop.f32.mrf.mxu0
    %v7030 = vadd.f32 0.0, %v7029
    %v7031 = vpop.f32.mrf.mxu0
    %v7032 = vadd.f32 0.0, %v7031
    %v7033 = vpop.f32.mrf.mxu0
    %v7034 = vadd.f32 0.0, %v7033
    %7035 = vmatprep.mubr.bf16.mxu0 %v3003
    %7036 = vmatmul.mubr.bf16.gmra.mxu0 %v3002
    %v7037 = vpop.f32.mrf.mxu0
    %v7038 = vadd.f32 0.0, %v7037
    %v7039 = vpop.f32.mrf.mxu0
    %v7040 = vadd.f32 0.0, %v7039
    %v7041 = vpop.f32.mrf.mxu0
    %v7042 = vadd.f32 0.0, %v7041
    %v7043 = vpop.f32.mrf.mxu0
    %v7044 = vadd.f32 0.0, %v7043
    %7045 = vmatprep.mubr.bf16.mxu0 %v3005
    %7046 = vmatmul.mubr.bf16.gmra.mxu0 %v3004
    %v7047 = vpop.f32.mrf.mxu0
    %v7048 = vadd.f32 0.0, %v7047
    %v7049 = vpop.f32.mrf.mxu0
    %v7050 = vadd.f32 0.0, %v7049
    %v7051 = vpop.f32.mrf.mxu0
    %v7052 = vadd.f32 0.0, %v7051
    %v7053 = vpop.f32.mrf.mxu0
    %v7054 = vadd.f32 0.0, %v7053
    %7055 = vmatprep.mubr.bf16.mxu0 %v3007
    %7056 = vmatmul.mubr.bf16.gmra.mxu0 %v3006
    %v7057 = vpop.f32.mrf.mxu0
    %v7058 = vadd.f32 0.0, %v7057
    %v7059 = vpop.f32.mrf.mxu0
    %v7060 = vadd.f32 0.0, %v7059
    %v7061 = vpop.f32.mrf.mxu0
    %v7062 = vadd.f32 0.0, %v7061
    %v7063 = vpop.f32.mrf.mxu0
    %v7064 = vadd.f32 0.0, %v7063
    %7065 = vmatprep.mubr.bf16.mxu0 %v3009
    %7066 = vmatmul.mubr.bf16.gmra.mxu0 %v3008
    %v7067 = vpop.f32.mrf.mxu0
    %v7068 = vadd.f32 0.0, %v7067
    %v7069 = vpop.f32.mrf.mxu0
    %v7070 = vadd.f32 0.0, %v7069
    %v7071 = vpop.f32.mrf.mxu0
    %v7072 = vadd.f32 0.0, %v7071
    %v7073 = vpop.f32.mrf.mxu0
    %v7074 = vadd.f32 0.0, %v7073
    %7075 = vmatprep.mubr.bf16.mxu0 %v3011
    %7076 = vmatmul.mubr.bf16.gmra.mxu0 %v3010
    %v7077 = vpop.f32.mrf.mxu0
    %v7078 = vadd.f32 0.0, %v7077
    %v7079 = vpop.f32.mrf.mxu0
    %v7080 = vadd.f32 0.0, %v7079
    %v7081 = vpop.f32.mrf.mxu0
    %v7082 = vadd.f32 0.0, %v7081
    %v7083 = vpop.f32.mrf.mxu0
    %v7084 = vadd.f32 0.0, %v7083
    %7085 = vmatprep.mubr.bf16.mxu0 %v3013
    %7086 = vmatmul.mubr.bf16.gmra.mxu0 %v3012
    %v7087 = vpop.f32.mrf.mxu0
    %v7088 = vadd.f32 0.0, %v7087
    %v7089 = vpop.f32.mrf.mxu0
    %v7090 = vadd.f32 0.0, %v7089
    %v7091 = vpop.f32.mrf.mxu0
    %v7092 = vadd.f32 0.0, %v7091
    %v7093 = vpop.f32.mrf.mxu0
    %v7094 = vadd.f32 0.0, %v7093
    %7095 = vmatprep.mubr.bf16.mxu0 %v3015
    %7096 = vmatmul.mubr.bf16.gmra.mxu0 %v3014
    %v7097 = vpop.f32.mrf.mxu0
    %v7098 = vadd.f32 0.0, %v7097
    %v7099 = vpop.f32.mrf.mxu0
    %v7100 = vadd.f32 0.0, %v7099
    %v7101 = vpop.f32.mrf.mxu0
    %v7102 = vadd.f32 0.0, %v7101
    %v7103 = vpop.f32.mrf.mxu0
    %v7104 = vadd.f32 0.0, %v7103
    %7105 = vmatprep.mubr.bf16.mxu0 %v3017
    %7106 = vmatmul.mubr.bf16.gmra.mxu0 %v3016
    %v7107 = vpop.f32.mrf.mxu0
    %v7108 = vadd.f32 0.0, %v7107
    %v7109 = vpop.f32.mrf.mxu0
    %v7110 = vadd.f32 0.0, %v7109
    %v7111 = vpop.f32.mrf.mxu0
    %v7112 = vadd.f32 0.0, %v7111
    %v7113 = vpop.f32.mrf.mxu0
    %v7114 = vadd.f32 0.0, %v7113
    %7115 = vmatprep.mubr.bf16.mxu0 %v3019
    %7116 = vmatmul.mubr.bf16.gmra.mxu0 %v3018
    %v7117 = vpop.f32.mrf.mxu0
    %v7118 = vadd.f32 0.0, %v7117
    %v7119 = vpop.f32.mrf.mxu0
    %v7120 = vadd.f32 0.0, %v7119
    %v7121 = vpop.f32.mrf.mxu0
    %v7122 = vadd.f32 0.0, %v7121
    %v7123 = vpop.f32.mrf.mxu0
    %v7124 = vadd.f32 0.0, %v7123
    %7125 = vdwg.mxu0
    %v7126 = vadd.f32 %v6292, %v6775
    %v7127 = vadd.f32 %v6293, %v6777
    %v7128 = vadd.f32 %v6294, %v6968
    %v7129 = vadd.f32 %v6295, %v6970
    %v7130 = vadd.f32 %v6296, %v6779
    %v7131 = vadd.f32 %v6297, %v6781
    %v7132 = vadd.f32 %v6298, %v6972
    %v7133 = vadd.f32 %v6299, %v6974
    %v7134 = vadd.f32 %v6300, %v6785
    %v7135 = vadd.f32 %v6301, %v6787
    %v7136 = vadd.f32 %v6302, %v6978
    %v7137 = vadd.f32 %v6303, %v6980
    %v7138 = vadd.f32 %v6304, %v6789
    %v7139 = vadd.f32 %v6305, %v6791
    %v7140 = vadd.f32 %v6306, %v6982
    %v7141 = vadd.f32 %v6307, %v6984
    %v7142 = vadd.f32 %v6308, %v6795
    %v7143 = vadd.f32 %v6309, %v6797
    %v7144 = vadd.f32 %v6310, %v6988
    %v7145 = vadd.f32 %v6311, %v6990
    %v7146 = vadd.f32 %v6312, %v6799
    %v7147 = vadd.f32 %v6313, %v6801
    %v7148 = vadd.f32 %v6314, %v6992
    %v7149 = vadd.f32 %v6315, %v6994
    %v7150 = vadd.f32 %v6316, %v6805
    %v7151 = vadd.f32 %v6317, %v6807
    %v7152 = vadd.f32 %v6318, %v6998
    %v7153 = vadd.f32 %v6319, %v7000
    %v7154 = vadd.f32 %v6320, %v6809
    %v7155 = vadd.f32 %v6321, %v6811
    %v7156 = vadd.f32 %v6322, %v7002
    %v7157 = vadd.f32 %v6323, %v7004
    %v7158 = vadd.f32 %v6324, %v6815
    %v7159 = vadd.f32 %v6325, %v6817
    %v7160 = vadd.f32 %v6326, %v7008
    %v7161 = vadd.f32 %v6327, %v7010
    %v7162 = vadd.f32 %v6328, %v6819
    %v7163 = vadd.f32 %v6329, %v6821
    %v7164 = vadd.f32 %v6330, %v7012
    %v7165 = vadd.f32 %v6331, %v7014
    %v7166 = vadd.f32 %v6332, %v6825
    %v7167 = vadd.f32 %v6333, %v6827
    %v7168 = vadd.f32 %v6334, %v7018
    %v7169 = vadd.f32 %v6335, %v7020
    %v7170 = vadd.f32 %v6336, %v6829
    %v7171 = vadd.f32 %v6337, %v6831
    %v7172 = vadd.f32 %v6338, %v7022
    %v7173 = vadd.f32 %v6339, %v7024
    %v7174 = vadd.f32 %v6340, %v6835
    %v7175 = vadd.f32 %v6341, %v6837
    %v7176 = vadd.f32 %v6342, %v7028
    %v7177 = vadd.f32 %v6343, %v7030
    %v7178 = vadd.f32 %v6344, %v6839
    %v7179 = vadd.f32 %v6345, %v6841
    %v7180 = vadd.f32 %v6346, %v7032
    %v7181 = vadd.f32 %v6347, %v7034
    %v7182 = vadd.f32 %v6348, %v6845
    %v7183 = vadd.f32 %v6349, %v6847
    %v7184 = vadd.f32 %v6350, %v7038
    %v7185 = vadd.f32 %v6351, %v7040
    %v7186 = vadd.f32 %v6352, %v6849
    %v7187 = vadd.f32 %v6353, %v6851
    %v7188 = vadd.f32 %v6354, %v7042
    %v7189 = vadd.f32 %v6355, %v7044
    %v7190 = vadd.f32 %v6356, %v6855
    %v7191 = vadd.f32 %v6357, %v6857
    %v7192 = vadd.f32 %v6358, %v7048
    %v7193 = vadd.f32 %v6359, %v7050
    %v7194 = vadd.f32 %v6360, %v6859
    %v7195 = vadd.f32 %v6361, %v6861
    %v7196 = vadd.f32 %v6362, %v7052
    %v7197 = vadd.f32 %v6363, %v7054
    %v7198 = vadd.f32 %v6364, %v6865
    %v7199 = vadd.f32 %v6365, %v6867
    %v7200 = vadd.f32 %v6366, %v7058
    %v7201 = vadd.f32 %v6367, %v7060
    %v7202 = vadd.f32 %v6368, %v6869
    %v7203 = vadd.f32 %v6369, %v6871
    %v7204 = vadd.f32 %v6370, %v7062
    %v7205 = vadd.f32 %v6371, %v7064
    %v7206 = vadd.f32 %v6372, %v6875
    %v7207 = vadd.f32 %v6373, %v6877
    %v7208 = vadd.f32 %v6374, %v7068
    %v7209 = vadd.f32 %v6375, %v7070
    %v7210 = vadd.f32 %v6376, %v6879
    %v7211 = vadd.f32 %v6377, %v6881
    %v7212 = vadd.f32 %v6378, %v7072
    %v7213 = vadd.f32 %v6379, %v7074
    %v7214 = vadd.f32 %v6380, %v6885
    %v7215 = vadd.f32 %v6381, %v6887
    %v7216 = vadd.f32 %v6382, %v7078
    %v7217 = vadd.f32 %v6383, %v7080
    %v7218 = vadd.f32 %v6384, %v6889
    %v7219 = vadd.f32 %v6385, %v6891
    %v7220 = vadd.f32 %v6386, %v7082
    %v7221 = vadd.f32 %v6387, %v7084
    %v7222 = vadd.f32 %v6388, %v6895
    %v7223 = vadd.f32 %v6389, %v6897
    %v7224 = vadd.f32 %v6390, %v7088
    %v7225 = vadd.f32 %v6391, %v7090
    %v7226 = vadd.f32 %v6392, %v6899
    %v7227 = vadd.f32 %v6393, %v6901
    %v7228 = vadd.f32 %v6394, %v7092
    %v7229 = vadd.f32 %v6395, %v7094
    %v7230 = vadd.f32 %v6396, %v6905
    %v7231 = vadd.f32 %v6397, %v6907
    %v7232 = vadd.f32 %v6398, %v7098
    %v7233 = vadd.f32 %v6399, %v7100
    %v7234 = vadd.f32 %v6400, %v6909
    %v7235 = vadd.f32 %v6401, %v6911
    %v7236 = vadd.f32 %v6402, %v7102
    %v7237 = vadd.f32 %v6403, %v7104
    %v7238 = vadd.f32 %v6404, %v6915
    %v7239 = vadd.f32 %v6405, %v6917
    %v7240 = vadd.f32 %v6406, %v7108
    %v7241 = vadd.f32 %v6407, %v7110
    %v7242 = vadd.f32 %v6408, %v6919
    %v7243 = vadd.f32 %v6409, %v6921
    %v7244 = vadd.f32 %v6410, %v7112
    %v7245 = vadd.f32 %v6411, %v7114
    %v7246 = vadd.f32 %v6412, %v6925
    %v7247 = vadd.f32 %v6413, %v6927
    %v7248 = vadd.f32 %v6414, %v7118
    %v7249 = vadd.f32 %v6415, %v7120
    %v7250 = vadd.f32 %v6416, %v6929
    %v7251 = vadd.f32 %v6417, %v6931
    %v7252 = vadd.f32 %v6418, %v7122
    %v7253 = vadd.f32 %v6419, %v7124
    %v7254 = vld [vmem:[#allocation10] sm:$0xf]
    %v7256 = vlaneseq
    %v7257 = vshrl.u32 %v7256, 7
    %v7258 = vsub.s32 0, %v7257
    %v7259 = vrot.slane %v7254, %v7258
    %v7260 = vlaneseq
    %v7261 = vshrl.u32 %v7260, 7
    %v7262 = vsub.s32 1, %v7261
    %v7263 = vrot.slane %v7254, %v7262
    %v7264 = vlaneseq
    %v7265 = vshrl.u32 %v7264, 7
    %v7266 = vsub.s32 2, %v7265
    %v7267 = vrot.slane %v7254, %v7266
    %v7268 = vlaneseq
    %v7269 = vshrl.u32 %v7268, 7
    %v7270 = vsub.s32 3, %v7269
    %v7271 = vrot.slane %v7254, %v7270
    %v7276 = vadd.f32 %v7126, %v7259
    %v7277 = vadd.f32 %v7127, %v7263
    %v7278 = vadd.f32 %v7128, %v7267
    %v7279 = vadd.f32 %v7129, %v7271
    %v7280 = vadd.f32 %v7130, %v7259
    %v7281 = vadd.f32 %v7131, %v7263
    %v7282 = vadd.f32 %v7132, %v7267
    %v7283 = vadd.f32 %v7133, %v7271
    %v7284 = vadd.f32 %v7134, %v7259
    %v7285 = vadd.f32 %v7135, %v7263
    %v7286 = vadd.f32 %v7136, %v7267
    %v7287 = vadd.f32 %v7137, %v7271
    %v7288 = vadd.f32 %v7138, %v7259
    %v7289 = vadd.f32 %v7139, %v7263
    %v7290 = vadd.f32 %v7140, %v7267
    %v7291 = vadd.f32 %v7141, %v7271
    %v7292 = vadd.f32 %v7142, %v7259
    %v7293 = vadd.f32 %v7143, %v7263
    %v7294 = vadd.f32 %v7144, %v7267
    %v7295 = vadd.f32 %v7145, %v7271
    %v7296 = vadd.f32 %v7146, %v7259
    %v7297 = vadd.f32 %v7147, %v7263
    %v7298 = vadd.f32 %v7148, %v7267
    %v7299 = vadd.f32 %v7149, %v7271
    %v7300 = vadd.f32 %v7150, %v7259
    %v7301 = vadd.f32 %v7151, %v7263
    %v7302 = vadd.f32 %v7152, %v7267
    %v7303 = vadd.f32 %v7153, %v7271
    %v7304 = vadd.f32 %v7154, %v7259
    %v7305 = vadd.f32 %v7155, %v7263
    %v7306 = vadd.f32 %v7156, %v7267
    %v7307 = vadd.f32 %v7157, %v7271
    %v7308 = vadd.f32 %v7158, %v7259
    %v7309 = vadd.f32 %v7159, %v7263
    %v7310 = vadd.f32 %v7160, %v7267
    %v7311 = vadd.f32 %v7161, %v7271
    %v7312 = vadd.f32 %v7162, %v7259
    %v7313 = vadd.f32 %v7163, %v7263
    %v7314 = vadd.f32 %v7164, %v7267
    %v7315 = vadd.f32 %v7165, %v7271
    %v7316 = vadd.f32 %v7166, %v7259
    %v7317 = vadd.f32 %v7167, %v7263
    %v7318 = vadd.f32 %v7168, %v7267
    %v7319 = vadd.f32 %v7169, %v7271
    %v7320 = vadd.f32 %v7170, %v7259
    %v7321 = vadd.f32 %v7171, %v7263
    %v7322 = vadd.f32 %v7172, %v7267
    %v7323 = vadd.f32 %v7173, %v7271
    %v7324 = vadd.f32 %v7174, %v7259
    %v7325 = vadd.f32 %v7175, %v7263
    %v7326 = vadd.f32 %v7176, %v7267
    %v7327 = vadd.f32 %v7177, %v7271
    %v7328 = vadd.f32 %v7178, %v7259
    %v7329 = vadd.f32 %v7179, %v7263
    %v7330 = vadd.f32 %v7180, %v7267
    %v7331 = vadd.f32 %v7181, %v7271
    %v7332 = vadd.f32 %v7182, %v7259
    %v7333 = vadd.f32 %v7183, %v7263
    %v7334 = vadd.f32 %v7184, %v7267
    %v7335 = vadd.f32 %v7185, %v7271
    %v7336 = vadd.f32 %v7186, %v7259
    %v7337 = vadd.f32 %v7187, %v7263
    %v7338 = vadd.f32 %v7188, %v7267
    %v7339 = vadd.f32 %v7189, %v7271
    %v7340 = vadd.f32 %v7190, %v7259
    %v7341 = vadd.f32 %v7191, %v7263
    %v7342 = vadd.f32 %v7192, %v7267
    %v7343 = vadd.f32 %v7193, %v7271
    %v7344 = vadd.f32 %v7194, %v7259
    %v7345 = vadd.f32 %v7195, %v7263
    %v7346 = vadd.f32 %v7196, %v7267
    %v7347 = vadd.f32 %v7197, %v7271
    %v7348 = vadd.f32 %v7198, %v7259
    %v7349 = vadd.f32 %v7199, %v7263
    %v7350 = vadd.f32 %v7200, %v7267
    %v7351 = vadd.f32 %v7201, %v7271
    %v7352 = vadd.f32 %v7202, %v7259
    %v7353 = vadd.f32 %v7203, %v7263
    %v7354 = vadd.f32 %v7204, %v7267
    %v7355 = vadd.f32 %v7205, %v7271
    %v7356 = vadd.f32 %v7206, %v7259
    %v7357 = vadd.f32 %v7207, %v7263
    %v7358 = vadd.f32 %v7208, %v7267
    %v7359 = vadd.f32 %v7209, %v7271
    %v7360 = vadd.f32 %v7210, %v7259
    %v7361 = vadd.f32 %v7211, %v7263
    %v7362 = vadd.f32 %v7212, %v7267
    %v7363 = vadd.f32 %v7213, %v7271
    %v7364 = vadd.f32 %v7214, %v7259
    %v7365 = vadd.f32 %v7215, %v7263
    %v7366 = vadd.f32 %v7216, %v7267
    %v7367 = vadd.f32 %v7217, %v7271
    %v7368 = vadd.f32 %v7218, %v7259
    %v7369 = vadd.f32 %v7219, %v7263
    %v7370 = vadd.f32 %v7220, %v7267
    %v7371 = vadd.f32 %v7221, %v7271
    %v7372 = vadd.f32 %v7222, %v7259
    %v7373 = vadd.f32 %v7223, %v7263
    %v7374 = vadd.f32 %v7224, %v7267
    %v7375 = vadd.f32 %v7225, %v7271
    %v7376 = vadd.f32 %v7226, %v7259
    %v7377 = vadd.f32 %v7227, %v7263
    %v7378 = vadd.f32 %v7228, %v7267
    %v7379 = vadd.f32 %v7229, %v7271
    %v7380 = vadd.f32 %v7230, %v7259
    %v7381 = vadd.f32 %v7231, %v7263
    %v7382 = vadd.f32 %v7232, %v7267
    %v7383 = vadd.f32 %v7233, %v7271
    %v7384 = vadd.f32 %v7234, %v7259
    %v7385 = vadd.f32 %v7235, %v7263
    %v7386 = vadd.f32 %v7236, %v7267
    %v7387 = vadd.f32 %v7237, %v7271
    %v7388 = vadd.f32 %v7238, %v7259
    %v7389 = vadd.f32 %v7239, %v7263
    %v7390 = vadd.f32 %v7240, %v7267
    %v7391 = vadd.f32 %v7241, %v7271
    %v7392 = vadd.f32 %v7242, %v7259
    %v7393 = vadd.f32 %v7243, %v7263
    %v7394 = vadd.f32 %v7244, %v7267
    %v7395 = vadd.f32 %v7245, %v7271
    %v7396 = vadd.f32 %v7246, %v7259
    %v7397 = vadd.f32 %v7247, %v7263
    %v7398 = vadd.f32 %v7248, %v7267
    %v7399 = vadd.f32 %v7249, %v7271
    %v7400 = vadd.f32 %v7250, %v7259
    %v7401 = vadd.f32 %v7251, %v7263
    %v7402 = vadd.f32 %v7252, %v7267
    %v7403 = vadd.f32 %v7253, %v7271
    %v7404 = vmax.f32 %v7276, 0.0
    %v7405 = vmax.f32 %v7277, 0.0
    %v7406 = vmax.f32 %v7278, 0.0
    %v7407 = vmax.f32 %v7279, 0.0
    %v7408 = vmax.f32 %v7280, 0.0
    %v7409 = vmax.f32 %v7281, 0.0
    %v7410 = vmax.f32 %v7282, 0.0
    %v7411 = vmax.f32 %v7283, 0.0
    %v7412 = vmax.f32 %v7284, 0.0
    %v7413 = vmax.f32 %v7285, 0.0
    %v7414 = vmax.f32 %v7286, 0.0
    %v7415 = vmax.f32 %v7287, 0.0
    %v7416 = vmax.f32 %v7288, 0.0
    %v7417 = vmax.f32 %v7289, 0.0
    %v7418 = vmax.f32 %v7290, 0.0
    %v7419 = vmax.f32 %v7291, 0.0
    %v7420 = vmax.f32 %v7292, 0.0
    %v7421 = vmax.f32 %v7293, 0.0
    %v7422 = vmax.f32 %v7294, 0.0
    %v7423 = vmax.f32 %v7295, 0.0
    %v7424 = vmax.f32 %v7296, 0.0
    %v7425 = vmax.f32 %v7297, 0.0
    %v7426 = vmax.f32 %v7298, 0.0
    %v7427 = vmax.f32 %v7299, 0.0
    %v7428 = vmax.f32 %v7300, 0.0
    %v7429 = vmax.f32 %v7301, 0.0
    %v7430 = vmax.f32 %v7302, 0.0
    %v7431 = vmax.f32 %v7303, 0.0
    %v7432 = vmax.f32 %v7304, 0.0
    %v7433 = vmax.f32 %v7305, 0.0
    %v7434 = vmax.f32 %v7306, 0.0
    %v7435 = vmax.f32 %v7307, 0.0
    %v7436 = vmax.f32 %v7308, 0.0
    %v7437 = vmax.f32 %v7309, 0.0
    %v7438 = vmax.f32 %v7310, 0.0
    %v7439 = vmax.f32 %v7311, 0.0
    %v7440 = vmax.f32 %v7312, 0.0
    %v7441 = vmax.f32 %v7313, 0.0
    %v7442 = vmax.f32 %v7314, 0.0
    %v7443 = vmax.f32 %v7315, 0.0
    %v7444 = vmax.f32 %v7316, 0.0
    %v7445 = vmax.f32 %v7317, 0.0
    %v7446 = vmax.f32 %v7318, 0.0
    %v7447 = vmax.f32 %v7319, 0.0
    %v7448 = vmax.f32 %v7320, 0.0
    %v7449 = vmax.f32 %v7321, 0.0
    %v7450 = vmax.f32 %v7322, 0.0
    %v7451 = vmax.f32 %v7323, 0.0
    %v7452 = vmax.f32 %v7324, 0.0
    %v7453 = vmax.f32 %v7325, 0.0
    %v7454 = vmax.f32 %v7326, 0.0
    %v7455 = vmax.f32 %v7327, 0.0
    %v7456 = vmax.f32 %v7328, 0.0
    %v7457 = vmax.f32 %v7329, 0.0
    %v7458 = vmax.f32 %v7330, 0.0
    %v7459 = vmax.f32 %v7331, 0.0
    %v7460 = vmax.f32 %v7332, 0.0
    %v7461 = vmax.f32 %v7333, 0.0
    %v7462 = vmax.f32 %v7334, 0.0
    %v7463 = vmax.f32 %v7335, 0.0
    %v7464 = vmax.f32 %v7336, 0.0
    %v7465 = vmax.f32 %v7337, 0.0
    %v7466 = vmax.f32 %v7338, 0.0
    %v7467 = vmax.f32 %v7339, 0.0
    %v7468 = vmax.f32 %v7340, 0.0
    %v7469 = vmax.f32 %v7341, 0.0
    %v7470 = vmax.f32 %v7342, 0.0
    %v7471 = vmax.f32 %v7343, 0.0
    %v7472 = vmax.f32 %v7344, 0.0
    %v7473 = vmax.f32 %v7345, 0.0
    %v7474 = vmax.f32 %v7346, 0.0
    %v7475 = vmax.f32 %v7347, 0.0
    %v7476 = vmax.f32 %v7348, 0.0
    %v7477 = vmax.f32 %v7349, 0.0
    %v7478 = vmax.f32 %v7350, 0.0
    %v7479 = vmax.f32 %v7351, 0.0
    %v7480 = vmax.f32 %v7352, 0.0
    %v7481 = vmax.f32 %v7353, 0.0
    %v7482 = vmax.f32 %v7354, 0.0
    %v7483 = vmax.f32 %v7355, 0.0
    %v7484 = vmax.f32 %v7356, 0.0
    %v7485 = vmax.f32 %v7357, 0.0
    %v7486 = vmax.f32 %v7358, 0.0
    %v7487 = vmax.f32 %v7359, 0.0
    %v7488 = vmax.f32 %v7360, 0.0
    %v7489 = vmax.f32 %v7361, 0.0
    %v7490 = vmax.f32 %v7362, 0.0
    %v7491 = vmax.f32 %v7363, 0.0
    %v7492 = vmax.f32 %v7364, 0.0
    %v7493 = vmax.f32 %v7365, 0.0
    %v7494 = vmax.f32 %v7366, 0.0
    %v7495 = vmax.f32 %v7367, 0.0
    %v7496 = vmax.f32 %v7368, 0.0
    %v7497 = vmax.f32 %v7369, 0.0
    %v7498 = vmax.f32 %v7370, 0.0
    %v7499 = vmax.f32 %v7371, 0.0
    %v7500 = vmax.f32 %v7372, 0.0
    %v7501 = vmax.f32 %v7373, 0.0
    %v7502 = vmax.f32 %v7374, 0.0
    %v7503 = vmax.f32 %v7375, 0.0
    %v7504 = vmax.f32 %v7376, 0.0
    %v7505 = vmax.f32 %v7377, 0.0
    %v7506 = vmax.f32 %v7378, 0.0
    %v7507 = vmax.f32 %v7379, 0.0
    %v7508 = vmax.f32 %v7380, 0.0
    %v7509 = vmax.f32 %v7381, 0.0
    %v7510 = vmax.f32 %v7382, 0.0
    %v7511 = vmax.f32 %v7383, 0.0
    %v7512 = vmax.f32 %v7384, 0.0
    %v7513 = vmax.f32 %v7385, 0.0
    %v7514 = vmax.f32 %v7386, 0.0
    %v7515 = vmax.f32 %v7387, 0.0
    %v7516 = vmax.f32 %v7388, 0.0
    %v7517 = vmax.f32 %v7389, 0.0
    %v7518 = vmax.f32 %v7390, 0.0
    %v7519 = vmax.f32 %v7391, 0.0
    %v7520 = vmax.f32 %v7392, 0.0
    %v7521 = vmax.f32 %v7393, 0.0
    %v7522 = vmax.f32 %v7394, 0.0
    %v7523 = vmax.f32 %v7395, 0.0
    %v7524 = vmax.f32 %v7396, 0.0
    %v7525 = vmax.f32 %v7397, 0.0
    %v7526 = vmax.f32 %v7398, 0.0
    %v7527 = vmax.f32 %v7399, 0.0
    %v7528 = vmax.f32 %v7400, 0.0
    %v7529 = vmax.f32 %v7401, 0.0
    %v7530 = vmax.f32 %v7402, 0.0
    %v7531 = vmax.f32 %v7403, 0.0
    %v7532 = vpack.c.bf16 %v7408, %v7404
    %v7533 = vpack.c.bf16 %v7409, %v7405
    %v7534 = vpack.c.bf16 %v7410, %v7406
    %v7535 = vpack.c.bf16 %v7411, %v7407
    %v7536 = vpack.c.bf16 %v7416, %v7412
    %v7537 = vpack.c.bf16 %v7417, %v7413
    %v7538 = vpack.c.bf16 %v7418, %v7414
    %v7539 = vpack.c.bf16 %v7419, %v7415
    %v7540 = vpack.c.bf16 %v7424, %v7420
    %v7541 = vpack.c.bf16 %v7425, %v7421
    %v7542 = vpack.c.bf16 %v7426, %v7422
    %v7543 = vpack.c.bf16 %v7427, %v7423
    %v7544 = vpack.c.bf16 %v7432, %v7428
    %v7545 = vpack.c.bf16 %v7433, %v7429
    %v7546 = vpack.c.bf16 %v7434, %v7430
    %v7547 = vpack.c.bf16 %v7435, %v7431
    %v7548 = vpack.c.bf16 %v7440, %v7436
    %v7549 = vpack.c.bf16 %v7441, %v7437
    %v7550 = vpack.c.bf16 %v7442, %v7438
    %v7551 = vpack.c.bf16 %v7443, %v7439
    %v7552 = vpack.c.bf16 %v7448, %v7444
    %v7553 = vpack.c.bf16 %v7449, %v7445
    %v7554 = vpack.c.bf16 %v7450, %v7446
    %v7555 = vpack.c.bf16 %v7451, %v7447
    %v7556 = vpack.c.bf16 %v7456, %v7452
    %v7557 = vpack.c.bf16 %v7457, %v7453
    %v7558 = vpack.c.bf16 %v7458, %v7454
    %v7559 = vpack.c.bf16 %v7459, %v7455
    %v7560 = vpack.c.bf16 %v7464, %v7460
    %v7561 = vpack.c.bf16 %v7465, %v7461
    %v7562 = vpack.c.bf16 %v7466, %v7462
    %v7563 = vpack.c.bf16 %v7467, %v7463
    %v7564 = vpack.c.bf16 %v7472, %v7468
    %v7565 = vpack.c.bf16 %v7473, %v7469
    %v7566 = vpack.c.bf16 %v7474, %v7470
    %v7567 = vpack.c.bf16 %v7475, %v7471
    %v7568 = vpack.c.bf16 %v7480, %v7476
    %v7569 = vpack.c.bf16 %v7481, %v7477
    %v7570 = vpack.c.bf16 %v7482, %v7478
    %v7571 = vpack.c.bf16 %v7483, %v7479
    %v7572 = vpack.c.bf16 %v7488, %v7484
    %v7573 = vpack.c.bf16 %v7489, %v7485
    %v7574 = vpack.c.bf16 %v7490, %v7486
    %v7575 = vpack.c.bf16 %v7491, %v7487
    %v7576 = vpack.c.bf16 %v7496, %v7492
    %v7577 = vpack.c.bf16 %v7497, %v7493
    %v7578 = vpack.c.bf16 %v7498, %v7494
    %v7579 = vpack.c.bf16 %v7499, %v7495
    %v7580 = vpack.c.bf16 %v7504, %v7500
    %v7581 = vpack.c.bf16 %v7505, %v7501
    %v7582 = vpack.c.bf16 %v7506, %v7502
    %v7583 = vpack.c.bf16 %v7507, %v7503
    %v7584 = vpack.c.bf16 %v7512, %v7508
    %v7585 = vpack.c.bf16 %v7513, %v7509
    %v7586 = vpack.c.bf16 %v7514, %v7510
    %v7587 = vpack.c.bf16 %v7515, %v7511
    %v7588 = vpack.c.bf16 %v7520, %v7516
    %v7589 = vpack.c.bf16 %v7521, %v7517
    %v7590 = vpack.c.bf16 %v7522, %v7518
    %v7591 = vpack.c.bf16 %v7523, %v7519
    %v7592 = vpack.c.bf16 %v7528, %v7524
    %v7593 = vpack.c.bf16 %v7529, %v7525
    %v7594 = vpack.c.bf16 %v7530, %v7526
    %v7595 = vpack.c.bf16 %v7531, %v7527
    %v7596 = vmax.bf16 %v7532, %v7534
    %v7597 = vmax.bf16 %v7533, %v7535
    %v7598 = vmax.bf16 %v7536, %v7538
    %v7599 = vmax.bf16 %v7537, %v7539
    %v7600 = vmax.bf16 %v7540, %v7542
    %v7601 = vmax.bf16 %v7541, %v7543
    %v7602 = vmax.bf16 %v7544, %v7546
    %v7603 = vmax.bf16 %v7545, %v7547
    %v7604 = vmax.bf16 %v7548, %v7550
    %v7605 = vmax.bf16 %v7549, %v7551
    %v7606 = vmax.bf16 %v7552, %v7554
    %v7607 = vmax.bf16 %v7553, %v7555
    %v7608 = vmax.bf16 %v7556, %v7558
    %v7609 = vmax.bf16 %v7557, %v7559
    %v7610 = vmax.bf16 %v7560, %v7562
    %v7611 = vmax.bf16 %v7561, %v7563
    %v7612 = vmax.bf16 %v7564, %v7566
    %v7613 = vmax.bf16 %v7565, %v7567
    %v7614 = vmax.bf16 %v7568, %v7570
    %v7615 = vmax.bf16 %v7569, %v7571
    %v7616 = vmax.bf16 %v7572, %v7574
    %v7617 = vmax.bf16 %v7573, %v7575
    %v7618 = vmax.bf16 %v7576, %v7578
    %v7619 = vmax.bf16 %v7577, %v7579
    %v7620 = vmax.bf16 %v7580, %v7582
    %v7621 = vmax.bf16 %v7581, %v7583
    %v7622 = vmax.bf16 %v7584, %v7586
    %v7623 = vmax.bf16 %v7585, %v7587
    %v7624 = vmax.bf16 %v7588, %v7590
    %v7625 = vmax.bf16 %v7589, %v7591
    %v7626 = vmax.bf16 %v7592, %v7594
    %v7627 = vmax.bf16 %v7593, %v7595
    %v7628 = vmax.bf16 %v7596, %v7600
    %v7629 = vmax.bf16 %v7597, %v7601
    %v7630 = vmax.bf16 %v7598, %v7602
    %v7631 = vmax.bf16 %v7599, %v7603
    %v7632 = vmax.bf16 %v7604, %v7608
    %v7633 = vmax.bf16 %v7605, %v7609
    %v7634 = vmax.bf16 %v7606, %v7610
    %v7635 = vmax.bf16 %v7607, %v7611
    %v7636 = vmax.bf16 %v7612, %v7616
    %v7637 = vmax.bf16 %v7613, %v7617
    %v7638 = vmax.bf16 %v7614, %v7618
    %v7639 = vmax.bf16 %v7615, %v7619
    %v7640 = vmax.bf16 %v7620, %v7624
    %v7641 = vmax.bf16 %v7621, %v7625
    %v7642 = vmax.bf16 %v7622, %v7626
    %v7643 = vmax.bf16 %v7623, %v7627
    %v7644 = vld [vmem:[#allocation11] sm:$0xff]
    %v7645 = vld [vmem:[#allocation11 + $0x8] sm:$0xff]
    %v7646 = vld [vmem:[#allocation11 + $0x10] sm:$0xff]
    %v7647 = vld [vmem:[#allocation11 + $0x18] sm:$0xff]
    %v7648 = vld [vmem:[#allocation11 + $0x20] sm:$0xff]
    %v7649 = vld [vmem:[#allocation11 + $0x28] sm:$0xff]
    %v7650 = vld [vmem:[#allocation11 + $0x30] sm:$0xff]
    %v7651 = vld [vmem:[#allocation11 + $0x38] sm:$0xff]
    %v7652 = vld [vmem:[#allocation11 + $0x40] sm:$0xff]
    %v7653 = vld [vmem:[#allocation11 + $0x48] sm:$0xff]
    %v7654 = vld [vmem:[#allocation11 + $0x50] sm:$0xff]
    %v7655 = vld [vmem:[#allocation11 + $0x58] sm:$0xff]
    %v7656 = vld [vmem:[#allocation11 + $0x60] sm:$0xff]
    %v7657 = vld [vmem:[#allocation11 + $0x68] sm:$0xff]
    %v7658 = vld [vmem:[#allocation11 + $0x70] sm:$0xff]
    %v7659 = vld [vmem:[#allocation11 + $0x78] sm:$0xff]
    %v7660 = vld [vmem:[#allocation11 + $0x80] sm:$0xff]
    %v7661 = vld [vmem:[#allocation11 + $0x88] sm:$0xff]
    %v7662 = vld [vmem:[#allocation11 + $0x90] sm:$0xff]
    %v7663 = vld [vmem:[#allocation11 + $0x98] sm:$0xff]
    %v7664 = vld [vmem:[#allocation11 + $0xa0] sm:$0xff]
    %v7665 = vld [vmem:[#allocation11 + $0xa8] sm:$0xff]
    %v7666 = vld [vmem:[#allocation11 + $0xb0] sm:$0xff]
    %v7667 = vld [vmem:[#allocation11 + $0xb8] sm:$0xff]
    %v7668 = vld [vmem:[#allocation11 + $0xc0] sm:$0xff]
    %v7669 = vld [vmem:[#allocation11 + $0xc8] sm:$0xff]
    %v7670 = vld [vmem:[#allocation11 + $0xd0] sm:$0xff]
    %v7671 = vld [vmem:[#allocation11 + $0xd8] sm:$0xff]
    %v7672 = vld [vmem:[#allocation11 + $0xe0] sm:$0xff]
    %v7673 = vld [vmem:[#allocation11 + $0xe8] sm:$0xff]
    %v7674 = vld [vmem:[#allocation11 + $0xf0] sm:$0xff]
    %v7675 = vld [vmem:[#allocation11 + $0xf8] sm:$0xff]
    %v7676 = vld [vmem:[#allocation11 + $0x100] sm:$0xff]
    %v7677 = vld [vmem:[#allocation11 + $0x108] sm:$0xff]
    %v7678 = vld [vmem:[#allocation11 + $0x110] sm:$0xff]
    %v7679 = vld [vmem:[#allocation11 + $0x118] sm:$0xff]
    %v7680 = vld [vmem:[#allocation11 + $0x120] sm:$0xff]
    %v7681 = vld [vmem:[#allocation11 + $0x128] sm:$0xff]
    %v7682 = vld [vmem:[#allocation11 + $0x130] sm:$0xff]
    %v7683 = vld [vmem:[#allocation11 + $0x138] sm:$0xff]
    %v7684 = vld [vmem:[#allocation11 + $0x140] sm:$0xff]
    %v7685 = vld [vmem:[#allocation11 + $0x148] sm:$0xff]
    %v7686 = vld [vmem:[#allocation11 + $0x150] sm:$0xff]
    %v7687 = vld [vmem:[#allocation11 + $0x158] sm:$0xff]
    %v7688 = vld [vmem:[#allocation11 + $0x160] sm:$0xff]
    %v7689 = vld [vmem:[#allocation11 + $0x168] sm:$0xff]
    %v7690 = vld [vmem:[#allocation11 + $0x170] sm:$0xff]
    %v7691 = vld [vmem:[#allocation11 + $0x178] sm:$0xff]
    %v7692 = vld [vmem:[#allocation11 + $0x180] sm:$0xff]
    %v7693 = vld [vmem:[#allocation11 + $0x188] sm:$0xff]
    %v7694 = vld [vmem:[#allocation11 + $0x190] sm:$0xff]
    %v7695 = vld [vmem:[#allocation11 + $0x198] sm:$0xff]
    %v7696 = vld [vmem:[#allocation11 + $0x1a0] sm:$0xff]
    %v7697 = vld [vmem:[#allocation11 + $0x1a8] sm:$0xff]
    %v7698 = vld [vmem:[#allocation11 + $0x1b0] sm:$0xff]
    %v7699 = vld [vmem:[#allocation11 + $0x1b8] sm:$0xff]
    %v7700 = vld [vmem:[#allocation11 + $0x1c0] sm:$0xff]
    %v7701 = vld [vmem:[#allocation11 + $0x1c8] sm:$0xff]
    %v7702 = vld [vmem:[#allocation11 + $0x1d0] sm:$0xff]
    %v7703 = vld [vmem:[#allocation11 + $0x1d8] sm:$0xff]
    %v7704 = vld [vmem:[#allocation11 + $0x1e0] sm:$0xff]
    %v7705 = vld [vmem:[#allocation11 + $0x1e8] sm:$0xff]
    %v7706 = vld [vmem:[#allocation11 + $0x1f0] sm:$0xff]
    %v7707 = vld [vmem:[#allocation11 + $0x1f8] sm:$0xff]
    %v7708 = vld [vmem:[#allocation11 + $0x200] sm:$0xff]
    %v7709 = vld [vmem:[#allocation11 + $0x208] sm:$0xff]
    %v7710 = vld [vmem:[#allocation11 + $0x210] sm:$0xff]
    %v7711 = vld [vmem:[#allocation11 + $0x218] sm:$0xff]
    %v7712 = vld [vmem:[#allocation11 + $0x220] sm:$0xff]
    %v7713 = vld [vmem:[#allocation11 + $0x228] sm:$0xff]
    %v7714 = vld [vmem:[#allocation11 + $0x230] sm:$0xff]
    %v7715 = vld [vmem:[#allocation11 + $0x238] sm:$0xff]
    %v7716 = vld [vmem:[#allocation11 + $0x240] sm:$0xff]
    %v7717 = vld [vmem:[#allocation11 + $0x248] sm:$0xff]
    %v7718 = vld [vmem:[#allocation11 + $0x250] sm:$0xff]
    %v7719 = vld [vmem:[#allocation11 + $0x258] sm:$0xff]
    %v7720 = vld [vmem:[#allocation11 + $0x260] sm:$0xff]
    %v7721 = vld [vmem:[#allocation11 + $0x268] sm:$0xff]
    %v7722 = vld [vmem:[#allocation11 + $0x270] sm:$0xff]
    %v7723 = vld [vmem:[#allocation11 + $0x278] sm:$0xff]
    %v7724 = vld [vmem:[#allocation11 + $0x280] sm:$0xff]
    %v7725 = vld [vmem:[#allocation11 + $0x288] sm:$0xff]
    %v7726 = vld [vmem:[#allocation11 + $0x290] sm:$0xff]
    %v7727 = vld [vmem:[#allocation11 + $0x298] sm:$0xff]
    %v7728 = vld [vmem:[#allocation11 + $0x2a0] sm:$0xff]
    %v7729 = vld [vmem:[#allocation11 + $0x2a8] sm:$0xff]
    %v7730 = vld [vmem:[#allocation11 + $0x2b0] sm:$0xff]
    %v7731 = vld [vmem:[#allocation11 + $0x2b8] sm:$0xff]
    %v7732 = vld [vmem:[#allocation11 + $0x2c0] sm:$0xff]
    %v7733 = vld [vmem:[#allocation11 + $0x2c8] sm:$0xff]
    %v7734 = vld [vmem:[#allocation11 + $0x2d0] sm:$0xff]
    %v7735 = vld [vmem:[#allocation11 + $0x2d8] sm:$0xff]
    %v7736 = vld [vmem:[#allocation11 + $0x2e0] sm:$0xff]
    %v7737 = vld [vmem:[#allocation11 + $0x2e8] sm:$0xff]
    %v7738 = vld [vmem:[#allocation11 + $0x2f0] sm:$0xff]
    %v7739 = vld [vmem:[#allocation11 + $0x2f8] sm:$0xff]
    %v7740 = vld [vmem:[#allocation11 + $0x300] sm:$0xff]
    %v7741 = vld [vmem:[#allocation11 + $0x308] sm:$0xff]
    %v7742 = vld [vmem:[#allocation11 + $0x310] sm:$0xff]
    %v7743 = vld [vmem:[#allocation11 + $0x318] sm:$0xff]
    %v7744 = vld [vmem:[#allocation11 + $0x320] sm:$0xff]
    %v7745 = vld [vmem:[#allocation11 + $0x328] sm:$0xff]
    %v7746 = vld [vmem:[#allocation11 + $0x330] sm:$0xff]
    %v7747 = vld [vmem:[#allocation11 + $0x338] sm:$0xff]
    %v7748 = vld [vmem:[#allocation11 + $0x340] sm:$0xff]
    %v7749 = vld [vmem:[#allocation11 + $0x348] sm:$0xff]
    %v7750 = vld [vmem:[#allocation11 + $0x350] sm:$0xff]
    %v7751 = vld [vmem:[#allocation11 + $0x358] sm:$0xff]
    %v7752 = vld [vmem:[#allocation11 + $0x360] sm:$0xff]
    %v7753 = vld [vmem:[#allocation11 + $0x368] sm:$0xff]
    %v7754 = vld [vmem:[#allocation11 + $0x370] sm:$0xff]
    %v7755 = vld [vmem:[#allocation11 + $0x378] sm:$0xff]
    %v7756 = vld [vmem:[#allocation11 + $0x380] sm:$0xff]
    %v7757 = vld [vmem:[#allocation11 + $0x388] sm:$0xff]
    %v7758 = vld [vmem:[#allocation11 + $0x390] sm:$0xff]
    %v7759 = vld [vmem:[#allocation11 + $0x398] sm:$0xff]
    %v7760 = vld [vmem:[#allocation11 + $0x3a0] sm:$0xff]
    %v7761 = vld [vmem:[#allocation11 + $0x3a8] sm:$0xff]
    %v7762 = vld [vmem:[#allocation11 + $0x3b0] sm:$0xff]
    %v7763 = vld [vmem:[#allocation11 + $0x3b8] sm:$0xff]
    %v7764 = vld [vmem:[#allocation11 + $0x3c0] sm:$0xff]
    %v7765 = vld [vmem:[#allocation11 + $0x3c8] sm:$0xff]
    %v7766 = vld [vmem:[#allocation11 + $0x3d0] sm:$0xff]
    %v7767 = vld [vmem:[#allocation11 + $0x3d8] sm:$0xff]
    %v7768 = vld [vmem:[#allocation11 + $0x3e0] sm:$0xff]
    %v7769 = vld [vmem:[#allocation11 + $0x3e8] sm:$0xff]
    %v7770 = vld [vmem:[#allocation11 + $0x3f0] sm:$0xff]
    %v7771 = vld [vmem:[#allocation11 + $0x3f8] sm:$0xff]
    %v7772 = vld [vmem:[#allocation11 + $0x400] sm:$0xff]
    %v7773 = vld [vmem:[#allocation11 + $0x408] sm:$0xff]
    %v7774 = vld [vmem:[#allocation11 + $0x410] sm:$0xff]
    %v7775 = vld [vmem:[#allocation11 + $0x418] sm:$0xff]
    %v7776 = vld [vmem:[#allocation11 + $0x420] sm:$0xff]
    %v7777 = vld [vmem:[#allocation11 + $0x428] sm:$0xff]
    %v7778 = vld [vmem:[#allocation11 + $0x430] sm:$0xff]
    %v7779 = vld [vmem:[#allocation11 + $0x438] sm:$0xff]
    %v7780 = vld [vmem:[#allocation11 + $0x440] sm:$0xff]
    %v7781 = vld [vmem:[#allocation11 + $0x448] sm:$0xff]
    %v7782 = vld [vmem:[#allocation11 + $0x450] sm:$0xff]
    %v7783 = vld [vmem:[#allocation11 + $0x458] sm:$0xff]
    %v7784 = vld [vmem:[#allocation11 + $0x460] sm:$0xff]
    %v7785 = vld [vmem:[#allocation11 + $0x468] sm:$0xff]
    %v7786 = vld [vmem:[#allocation11 + $0x470] sm:$0xff]
    %v7787 = vld [vmem:[#allocation11 + $0x478] sm:$0xff]
    %v7788 = vld [vmem:[#allocation11 + $0x480] sm:$0xff]
    %v7789 = vld [vmem:[#allocation11 + $0x488] sm:$0xff]
    %v7790 = vld [vmem:[#allocation11 + $0x490] sm:$0xff]
    %v7791 = vld [vmem:[#allocation11 + $0x498] sm:$0xff]
    %v7792 = vld [vmem:[#allocation11 + $0x4a0] sm:$0xff]
    %v7793 = vld [vmem:[#allocation11 + $0x4a8] sm:$0xff]
    %v7794 = vld [vmem:[#allocation11 + $0x4b0] sm:$0xff]
    %v7795 = vld [vmem:[#allocation11 + $0x4b8] sm:$0xff]
    %v7796 = vld [vmem:[#allocation11 + $0x4c0] sm:$0xff]
    %v7797 = vld [vmem:[#allocation11 + $0x4c8] sm:$0xff]
    %v7798 = vld [vmem:[#allocation11 + $0x4d0] sm:$0xff]
    %v7799 = vld [vmem:[#allocation11 + $0x4d8] sm:$0xff]
    %v7800 = vld [vmem:[#allocation11 + $0x4e0] sm:$0xff]
    %v7801 = vld [vmem:[#allocation11 + $0x4e8] sm:$0xff]
    %v7802 = vld [vmem:[#allocation11 + $0x4f0] sm:$0xff]
    %v7803 = vld [vmem:[#allocation11 + $0x4f8] sm:$0xff]
    %v7804 = vld [vmem:[#allocation11 + $0x500] sm:$0xff]
    %v7805 = vld [vmem:[#allocation11 + $0x508] sm:$0xff]
    %v7806 = vld [vmem:[#allocation11 + $0x510] sm:$0xff]
    %v7807 = vld [vmem:[#allocation11 + $0x518] sm:$0xff]
    %v7808 = vld [vmem:[#allocation11 + $0x520] sm:$0xff]
    %v7809 = vld [vmem:[#allocation11 + $0x528] sm:$0xff]
    %v7810 = vld [vmem:[#allocation11 + $0x530] sm:$0xff]
    %v7811 = vld [vmem:[#allocation11 + $0x538] sm:$0xff]
    %v7812 = vld [vmem:[#allocation11 + $0x540] sm:$0xff]
    %v7813 = vld [vmem:[#allocation11 + $0x548] sm:$0xff]
    %v7814 = vld [vmem:[#allocation11 + $0x550] sm:$0xff]
    %v7815 = vld [vmem:[#allocation11 + $0x558] sm:$0xff]
    %v7816 = vld [vmem:[#allocation11 + $0x560] sm:$0xff]
    %v7817 = vld [vmem:[#allocation11 + $0x568] sm:$0xff]
    %v7818 = vld [vmem:[#allocation11 + $0x570] sm:$0xff]
    %v7819 = vld [vmem:[#allocation11 + $0x578] sm:$0xff]
    %v7820 = vld [vmem:[#allocation11 + $0x580] sm:$0xff]
    %v7821 = vld [vmem:[#allocation11 + $0x588] sm:$0xff]
    %v7822 = vld [vmem:[#allocation11 + $0x590] sm:$0xff]
    %v7823 = vld [vmem:[#allocation11 + $0x598] sm:$0xff]
    %v7824 = vld [vmem:[#allocation11 + $0x5a0] sm:$0xff]
    %v7825 = vld [vmem:[#allocation11 + $0x5a8] sm:$0xff]
    %v7826 = vld [vmem:[#allocation11 + $0x5b0] sm:$0xff]
    %v7827 = vld [vmem:[#allocation11 + $0x5b8] sm:$0xff]
    %v7828 = vld [vmem:[#allocation11 + $0x5c0] sm:$0xff]
    %v7829 = vld [vmem:[#allocation11 + $0x5c8] sm:$0xff]
    %v7830 = vld [vmem:[#allocation11 + $0x5d0] sm:$0xff]
    %v7831 = vld [vmem:[#allocation11 + $0x5d8] sm:$0xff]
    %v7832 = vld [vmem:[#allocation11 + $0x5e0] sm:$0xff]
    %v7833 = vld [vmem:[#allocation11 + $0x5e8] sm:$0xff]
    %v7834 = vld [vmem:[#allocation11 + $0x5f0] sm:$0xff]
    %v7835 = vld [vmem:[#allocation11 + $0x5f8] sm:$0xff]
    %v7836 = vld [vmem:[#allocation11 + $0x600] sm:$0xff]
    %v7837 = vld [vmem:[#allocation11 + $0x608] sm:$0xff]
    %v7838 = vld [vmem:[#allocation11 + $0x610] sm:$0xff]
    %v7839 = vld [vmem:[#allocation11 + $0x618] sm:$0xff]
    %v7840 = vld [vmem:[#allocation11 + $0x620] sm:$0xff]
    %v7841 = vld [vmem:[#allocation11 + $0x628] sm:$0xff]
    %v7842 = vld [vmem:[#allocation11 + $0x630] sm:$0xff]
    %v7843 = vld [vmem:[#allocation11 + $0x638] sm:$0xff]
    %v7844 = vld [vmem:[#allocation11 + $0x640] sm:$0xff]
    %v7845 = vld [vmem:[#allocation11 + $0x648] sm:$0xff]
    %v7846 = vld [vmem:[#allocation11 + $0x650] sm:$0xff]
    %v7847 = vld [vmem:[#allocation11 + $0x658] sm:$0xff]
    %v7848 = vld [vmem:[#allocation11 + $0x660] sm:$0xff]
    %v7849 = vld [vmem:[#allocation11 + $0x668] sm:$0xff]
    %v7850 = vld [vmem:[#allocation11 + $0x670] sm:$0xff]
    %v7851 = vld [vmem:[#allocation11 + $0x678] sm:$0xff]
    %v7852 = vld [vmem:[#allocation11 + $0x680] sm:$0xff]
    %v7853 = vld [vmem:[#allocation11 + $0x688] sm:$0xff]
    %v7854 = vld [vmem:[#allocation11 + $0x690] sm:$0xff]
    %v7855 = vld [vmem:[#allocation11 + $0x698] sm:$0xff]
    %v7856 = vld [vmem:[#allocation11 + $0x6a0] sm:$0xff]
    %v7857 = vld [vmem:[#allocation11 + $0x6a8] sm:$0xff]
    %v7858 = vld [vmem:[#allocation11 + $0x6b0] sm:$0xff]
    %v7859 = vld [vmem:[#allocation11 + $0x6b8] sm:$0xff]
    %v7860 = vld [vmem:[#allocation11 + $0x6c0] sm:$0xff]
    %v7861 = vld [vmem:[#allocation11 + $0x6c8] sm:$0xff]
    %v7862 = vld [vmem:[#allocation11 + $0x6d0] sm:$0xff]
    %v7863 = vld [vmem:[#allocation11 + $0x6d8] sm:$0xff]
    %v7864 = vld [vmem:[#allocation11 + $0x6e0] sm:$0xff]
    %v7865 = vld [vmem:[#allocation11 + $0x6e8] sm:$0xff]
    %v7866 = vld [vmem:[#allocation11 + $0x6f0] sm:$0xff]
    %v7867 = vld [vmem:[#allocation11 + $0x6f8] sm:$0xff]
    %v7868 = vld [vmem:[#allocation11 + $0x700] sm:$0xff]
    %v7869 = vld [vmem:[#allocation11 + $0x708] sm:$0xff]
    %v7870 = vld [vmem:[#allocation11 + $0x710] sm:$0xff]
    %v7871 = vld [vmem:[#allocation11 + $0x718] sm:$0xff]
    %v7872 = vld [vmem:[#allocation11 + $0x720] sm:$0xff]
    %v7873 = vld [vmem:[#allocation11 + $0x728] sm:$0xff]
    %v7874 = vld [vmem:[#allocation11 + $0x730] sm:$0xff]
    %v7875 = vld [vmem:[#allocation11 + $0x738] sm:$0xff]
    %v7876 = vld [vmem:[#allocation11 + $0x740] sm:$0xff]
    %v7877 = vld [vmem:[#allocation11 + $0x748] sm:$0xff]
    %v7878 = vld [vmem:[#allocation11 + $0x750] sm:$0xff]
    %v7879 = vld [vmem:[#allocation11 + $0x758] sm:$0xff]
    %v7880 = vld [vmem:[#allocation11 + $0x760] sm:$0xff]
    %v7881 = vld [vmem:[#allocation11 + $0x768] sm:$0xff]
    %v7882 = vld [vmem:[#allocation11 + $0x770] sm:$0xff]
    %v7883 = vld [vmem:[#allocation11 + $0x778] sm:$0xff]
    %v7884 = vld [vmem:[#allocation11 + $0x780] sm:$0xff]
    %v7885 = vld [vmem:[#allocation11 + $0x788] sm:$0xff]
    %v7886 = vld [vmem:[#allocation11 + $0x790] sm:$0xff]
    %v7887 = vld [vmem:[#allocation11 + $0x798] sm:$0xff]
    %v7888 = vld [vmem:[#allocation11 + $0x7a0] sm:$0xff]
    %v7889 = vld [vmem:[#allocation11 + $0x7a8] sm:$0xff]
    %v7890 = vld [vmem:[#allocation11 + $0x7b0] sm:$0xff]
    %v7891 = vld [vmem:[#allocation11 + $0x7b8] sm:$0xff]
    %v7892 = vld [vmem:[#allocation11 + $0x7c0] sm:$0xff]
    %v7893 = vld [vmem:[#allocation11 + $0x7c8] sm:$0xff]
    %v7894 = vld [vmem:[#allocation11 + $0x7d0] sm:$0xff]
    %v7895 = vld [vmem:[#allocation11 + $0x7d8] sm:$0xff]
    %v7896 = vld [vmem:[#allocation11 + $0x7e0] sm:$0xff]
    %v7897 = vld [vmem:[#allocation11 + $0x7e8] sm:$0xff]
    %v7898 = vld [vmem:[#allocation11 + $0x7f0] sm:$0xff]
    %v7899 = vld [vmem:[#allocation11 + $0x7f8] sm:$0xff]
    %v7900 = vld [vmem:[#allocation13] sm:$0xf]
    %v7902 = vlaneseq
    %v7903 = vshrl.u32 %v7902, 7
    %v7904 = vsub.s32 0, %v7903
    %v7905 = vrot.slane %v7900, %v7904
    %v7906 = vlaneseq
    %v7907 = vshrl.u32 %v7906, 7
    %v7908 = vsub.s32 1, %v7907
    %v7909 = vrot.slane %v7900, %v7908
    %v7910 = vlaneseq
    %v7911 = vshrl.u32 %v7910, 7
    %v7912 = vsub.s32 2, %v7911
    %v7913 = vrot.slane %v7900, %v7912
    %v7914 = vlaneseq
    %v7915 = vshrl.u32 %v7914, 7
    %v7916 = vsub.s32 3, %v7915
    %v7917 = vrot.slane %v7900, %v7916
    %v8178 = vunpack.c.l.b16 %v7644
    %v8179 = vunpack.c.h.b16 %v7644
    %v8180 = vunpack.c.l.b16 %v7645
    %v8181 = vunpack.c.h.b16 %v7645
    %v8182 = vunpack.c.l.b16 %v7646
    %v8183 = vunpack.c.h.b16 %v7646
    %v8184 = vunpack.c.l.b16 %v7647
    %v8185 = vunpack.c.h.b16 %v7647
    %v8186 = vunpack.c.l.b16 %v7648
    %v8187 = vunpack.c.h.b16 %v7648
    %v8188 = vunpack.c.l.b16 %v7649
    %v8189 = vunpack.c.h.b16 %v7649
    %v8190 = vunpack.c.l.b16 %v7650
    %v8191 = vunpack.c.h.b16 %v7650
    %v8192 = vunpack.c.l.b16 %v7651
    %v8193 = vunpack.c.h.b16 %v7651
    %v8194 = vunpack.c.l.b16 %v7652
    %v8195 = vunpack.c.h.b16 %v7652
    %v8196 = vunpack.c.l.b16 %v7653
    %v8197 = vunpack.c.h.b16 %v7653
    %v8198 = vunpack.c.l.b16 %v7654
    %v8199 = vunpack.c.h.b16 %v7654
    %v8200 = vunpack.c.l.b16 %v7655
    %v8201 = vunpack.c.h.b16 %v7655
    %v8202 = vunpack.c.l.b16 %v7656
    %v8203 = vunpack.c.h.b16 %v7656
    %v8204 = vunpack.c.l.b16 %v7657
    %v8205 = vunpack.c.h.b16 %v7657
    %v8206 = vunpack.c.l.b16 %v7658
    %v8207 = vunpack.c.h.b16 %v7658
    %v8208 = vunpack.c.l.b16 %v7659
    %v8209 = vunpack.c.h.b16 %v7659
    %v8210 = vunpack.c.l.b16 %v7660
    %v8211 = vunpack.c.h.b16 %v7660
    %v8212 = vunpack.c.l.b16 %v7661
    %v8213 = vunpack.c.h.b16 %v7661
    %v8214 = vunpack.c.l.b16 %v7662
    %v8215 = vunpack.c.h.b16 %v7662
    %v8216 = vunpack.c.l.b16 %v7663
    %v8217 = vunpack.c.h.b16 %v7663
    %v8218 = vunpack.c.l.b16 %v7664
    %v8219 = vunpack.c.h.b16 %v7664
    %v8220 = vunpack.c.l.b16 %v7665
    %v8221 = vunpack.c.h.b16 %v7665
    %v8222 = vunpack.c.l.b16 %v7666
    %v8223 = vunpack.c.h.b16 %v7666
    %v8224 = vunpack.c.l.b16 %v7667
    %v8225 = vunpack.c.h.b16 %v7667
    %v8226 = vunpack.c.l.b16 %v7668
    %v8227 = vunpack.c.h.b16 %v7668
    %v8228 = vunpack.c.l.b16 %v7669
    %v8229 = vunpack.c.h.b16 %v7669
    %v8230 = vunpack.c.l.b16 %v7670
    %v8231 = vunpack.c.h.b16 %v7670
    %v8232 = vunpack.c.l.b16 %v7671
    %v8233 = vunpack.c.h.b16 %v7671
    %v8234 = vunpack.c.l.b16 %v7672
    %v8235 = vunpack.c.h.b16 %v7672
    %v8236 = vunpack.c.l.b16 %v7673
    %v8237 = vunpack.c.h.b16 %v7673
    %v8238 = vunpack.c.l.b16 %v7674
    %v8239 = vunpack.c.h.b16 %v7674
    %v8240 = vunpack.c.l.b16 %v7675
    %v8241 = vunpack.c.h.b16 %v7675
    %v8242 = vunpack.c.l.b16 %v7676
    %v8243 = vunpack.c.h.b16 %v7676
    %v8244 = vunpack.c.l.b16 %v7677
    %v8245 = vunpack.c.h.b16 %v7677
    %v8246 = vunpack.c.l.b16 %v7678
    %v8247 = vunpack.c.h.b16 %v7678
    %v8248 = vunpack.c.l.b16 %v7679
    %v8249 = vunpack.c.h.b16 %v7679
    %v8250 = vunpack.c.l.b16 %v7680
    %v8251 = vunpack.c.h.b16 %v7680
    %v8252 = vunpack.c.l.b16 %v7681
    %v8253 = vunpack.c.h.b16 %v7681
    %v8254 = vunpack.c.l.b16 %v7682
    %v8255 = vunpack.c.h.b16 %v7682
    %v8256 = vunpack.c.l.b16 %v7683
    %v8257 = vunpack.c.h.b16 %v7683
    %v8258 = vunpack.c.l.b16 %v7684
    %v8259 = vunpack.c.h.b16 %v7684
    %v8260 = vunpack.c.l.b16 %v7685
    %v8261 = vunpack.c.h.b16 %v7685
    %v8262 = vunpack.c.l.b16 %v7686
    %v8263 = vunpack.c.h.b16 %v7686
    %v8264 = vunpack.c.l.b16 %v7687
    %v8265 = vunpack.c.h.b16 %v7687
    %v8266 = vunpack.c.l.b16 %v7688
    %v8267 = vunpack.c.h.b16 %v7688
    %v8268 = vunpack.c.l.b16 %v7689
    %v8269 = vunpack.c.h.b16 %v7689
    %v8270 = vunpack.c.l.b16 %v7690
    %v8271 = vunpack.c.h.b16 %v7690
    %v8272 = vunpack.c.l.b16 %v7691
    %v8273 = vunpack.c.h.b16 %v7691
    %v8274 = vunpack.c.l.b16 %v7692
    %v8275 = vunpack.c.h.b16 %v7692
    %v8276 = vunpack.c.l.b16 %v7693
    %v8277 = vunpack.c.h.b16 %v7693
    %v8278 = vunpack.c.l.b16 %v7694
    %v8279 = vunpack.c.h.b16 %v7694
    %v8280 = vunpack.c.l.b16 %v7695
    %v8281 = vunpack.c.h.b16 %v7695
    %v8282 = vunpack.c.l.b16 %v7696
    %v8283 = vunpack.c.h.b16 %v7696
    %v8284 = vunpack.c.l.b16 %v7697
    %v8285 = vunpack.c.h.b16 %v7697
    %v8286 = vunpack.c.l.b16 %v7698
    %v8287 = vunpack.c.h.b16 %v7698
    %v8288 = vunpack.c.l.b16 %v7699
    %v8289 = vunpack.c.h.b16 %v7699
    %v8290 = vunpack.c.l.b16 %v7700
    %v8291 = vunpack.c.h.b16 %v7700
    %v8292 = vunpack.c.l.b16 %v7701
    %v8293 = vunpack.c.h.b16 %v7701
    %v8294 = vunpack.c.l.b16 %v7702
    %v8295 = vunpack.c.h.b16 %v7702
    %v8296 = vunpack.c.l.b16 %v7703
    %v8297 = vunpack.c.h.b16 %v7703
    %v8298 = vunpack.c.l.b16 %v7704
    %v8299 = vunpack.c.h.b16 %v7704
    %v8300 = vunpack.c.l.b16 %v7705
    %v8301 = vunpack.c.h.b16 %v7705
    %v8302 = vunpack.c.l.b16 %v7706
    %v8303 = vunpack.c.h.b16 %v7706
    %v8304 = vunpack.c.l.b16 %v7707
    %v8305 = vunpack.c.h.b16 %v7707
    %v8306 = vunpack.c.l.b16 %v7708
    %v8307 = vunpack.c.h.b16 %v7708
    %v8308 = vunpack.c.l.b16 %v7709
    %v8309 = vunpack.c.h.b16 %v7709
    %v8310 = vunpack.c.l.b16 %v7710
    %v8311 = vunpack.c.h.b16 %v7710
    %v8312 = vunpack.c.l.b16 %v7711
    %v8313 = vunpack.c.h.b16 %v7711
    %v8314 = vunpack.c.l.b16 %v7712
    %v8315 = vunpack.c.h.b16 %v7712
    %v8316 = vunpack.c.l.b16 %v7713
    %v8317 = vunpack.c.h.b16 %v7713
    %v8318 = vunpack.c.l.b16 %v7714
    %v8319 = vunpack.c.h.b16 %v7714
    %v8320 = vunpack.c.l.b16 %v7715
    %v8321 = vunpack.c.h.b16 %v7715
    %v8322 = vunpack.c.l.b16 %v7716
    %v8323 = vunpack.c.h.b16 %v7716
    %v8324 = vunpack.c.l.b16 %v7717
    %v8325 = vunpack.c.h.b16 %v7717
    %v8326 = vunpack.c.l.b16 %v7718
    %v8327 = vunpack.c.h.b16 %v7718
    %v8328 = vunpack.c.l.b16 %v7719
    %v8329 = vunpack.c.h.b16 %v7719
    %v8330 = vunpack.c.l.b16 %v7720
    %v8331 = vunpack.c.h.b16 %v7720
    %v8332 = vunpack.c.l.b16 %v7721
    %v8333 = vunpack.c.h.b16 %v7721
    %v8334 = vunpack.c.l.b16 %v7722
    %v8335 = vunpack.c.h.b16 %v7722
    %v8336 = vunpack.c.l.b16 %v7723
    %v8337 = vunpack.c.h.b16 %v7723
    %v8338 = vunpack.c.l.b16 %v7724
    %v8339 = vunpack.c.h.b16 %v7724
    %v8340 = vunpack.c.l.b16 %v7725
    %v8341 = vunpack.c.h.b16 %v7725
    %v8342 = vunpack.c.l.b16 %v7726
    %v8343 = vunpack.c.h.b16 %v7726
    %v8344 = vunpack.c.l.b16 %v7727
    %v8345 = vunpack.c.h.b16 %v7727
    %v8346 = vunpack.c.l.b16 %v7728
    %v8347 = vunpack.c.h.b16 %v7728
    %v8348 = vunpack.c.l.b16 %v7729
    %v8349 = vunpack.c.h.b16 %v7729
    %v8350 = vunpack.c.l.b16 %v7730
    %v8351 = vunpack.c.h.b16 %v7730
    %v8352 = vunpack.c.l.b16 %v7731
    %v8353 = vunpack.c.h.b16 %v7731
    %v8354 = vunpack.c.l.b16 %v7732
    %v8355 = vunpack.c.h.b16 %v7732
    %v8356 = vunpack.c.l.b16 %v7733
    %v8357 = vunpack.c.h.b16 %v7733
    %v8358 = vunpack.c.l.b16 %v7734
    %v8359 = vunpack.c.h.b16 %v7734
    %v8360 = vunpack.c.l.b16 %v7735
    %v8361 = vunpack.c.h.b16 %v7735
    %v8362 = vunpack.c.l.b16 %v7736
    %v8363 = vunpack.c.h.b16 %v7736
    %v8364 = vunpack.c.l.b16 %v7737
    %v8365 = vunpack.c.h.b16 %v7737
    %v8366 = vunpack.c.l.b16 %v7738
    %v8367 = vunpack.c.h.b16 %v7738
    %v8368 = vunpack.c.l.b16 %v7739
    %v8369 = vunpack.c.h.b16 %v7739
    %v8370 = vunpack.c.l.b16 %v7740
    %v8371 = vunpack.c.h.b16 %v7740
    %v8372 = vunpack.c.l.b16 %v7741
    %v8373 = vunpack.c.h.b16 %v7741
    %v8374 = vunpack.c.l.b16 %v7742
    %v8375 = vunpack.c.h.b16 %v7742
    %v8376 = vunpack.c.l.b16 %v7743
    %v8377 = vunpack.c.h.b16 %v7743
    %v8378 = vunpack.c.l.b16 %v7744
    %v8379 = vunpack.c.h.b16 %v7744
    %v8380 = vunpack.c.l.b16 %v7745
    %v8381 = vunpack.c.h.b16 %v7745
    %v8382 = vunpack.c.l.b16 %v7746
    %v8383 = vunpack.c.h.b16 %v7746
    %v8384 = vunpack.c.l.b16 %v7747
    %v8385 = vunpack.c.h.b16 %v7747
    %v8386 = vunpack.c.l.b16 %v7748
    %v8387 = vunpack.c.h.b16 %v7748
    %v8388 = vunpack.c.l.b16 %v7749
    %v8389 = vunpack.c.h.b16 %v7749
    %v8390 = vunpack.c.l.b16 %v7750
    %v8391 = vunpack.c.h.b16 %v7750
    %v8392 = vunpack.c.l.b16 %v7751
    %v8393 = vunpack.c.h.b16 %v7751
    %v8394 = vunpack.c.l.b16 %v7752
    %v8395 = vunpack.c.h.b16 %v7752
    %v8396 = vunpack.c.l.b16 %v7753
    %v8397 = vunpack.c.h.b16 %v7753
    %v8398 = vunpack.c.l.b16 %v7754
    %v8399 = vunpack.c.h.b16 %v7754
    %v8400 = vunpack.c.l.b16 %v7755
    %v8401 = vunpack.c.h.b16 %v7755
    %v8402 = vunpack.c.l.b16 %v7756
    %v8403 = vunpack.c.h.b16 %v7756
    %v8404 = vunpack.c.l.b16 %v7757
    %v8405 = vunpack.c.h.b16 %v7757
    %v8406 = vunpack.c.l.b16 %v7758
    %v8407 = vunpack.c.h.b16 %v7758
    %v8408 = vunpack.c.l.b16 %v7759
    %v8409 = vunpack.c.h.b16 %v7759
    %v8410 = vunpack.c.l.b16 %v7760
    %v8411 = vunpack.c.h.b16 %v7760
    %v8412 = vunpack.c.l.b16 %v7761
    %v8413 = vunpack.c.h.b16 %v7761
    %v8414 = vunpack.c.l.b16 %v7762
    %v8415 = vunpack.c.h.b16 %v7762
    %v8416 = vunpack.c.l.b16 %v7763
    %v8417 = vunpack.c.h.b16 %v7763
    %v8418 = vunpack.c.l.b16 %v7764
    %v8419 = vunpack.c.h.b16 %v7764
    %v8420 = vunpack.c.l.b16 %v7765
    %v8421 = vunpack.c.h.b16 %v7765
    %v8422 = vunpack.c.l.b16 %v7766
    %v8423 = vunpack.c.h.b16 %v7766
    %v8424 = vunpack.c.l.b16 %v7767
    %v8425 = vunpack.c.h.b16 %v7767
    %v8426 = vunpack.c.l.b16 %v7768
    %v8427 = vunpack.c.h.b16 %v7768
    %v8428 = vunpack.c.l.b16 %v7769
    %v8429 = vunpack.c.h.b16 %v7769
    %v8430 = vunpack.c.l.b16 %v7770
    %v8431 = vunpack.c.h.b16 %v7770
    %v8432 = vunpack.c.l.b16 %v7771
    %v8433 = vunpack.c.h.b16 %v7771
    %v8434 = vunpack.c.l.b16 %v7772
    %v8435 = vunpack.c.h.b16 %v7772
    %v8436 = vunpack.c.l.b16 %v7773
    %v8437 = vunpack.c.h.b16 %v7773
    %v8438 = vunpack.c.l.b16 %v7774
    %v8439 = vunpack.c.h.b16 %v7774
    %v8440 = vunpack.c.l.b16 %v7775
    %v8441 = vunpack.c.h.b16 %v7775
    %v8442 = vunpack.c.l.b16 %v7776
    %v8443 = vunpack.c.h.b16 %v7776
    %v8444 = vunpack.c.l.b16 %v7777
    %v8445 = vunpack.c.h.b16 %v7777
    %v8446 = vunpack.c.l.b16 %v7778
    %v8447 = vunpack.c.h.b16 %v7778
    %v8448 = vunpack.c.l.b16 %v7779
    %v8449 = vunpack.c.h.b16 %v7779
    %v8450 = vunpack.c.l.b16 %v7780
    %v8451 = vunpack.c.h.b16 %v7780
    %v8452 = vunpack.c.l.b16 %v7781
    %v8453 = vunpack.c.h.b16 %v7781
    %v8454 = vunpack.c.l.b16 %v7782
    %v8455 = vunpack.c.h.b16 %v7782
    %v8456 = vunpack.c.l.b16 %v7783
    %v8457 = vunpack.c.h.b16 %v7783
    %v8458 = vunpack.c.l.b16 %v7784
    %v8459 = vunpack.c.h.b16 %v7784
    %v8460 = vunpack.c.l.b16 %v7785
    %v8461 = vunpack.c.h.b16 %v7785
    %v8462 = vunpack.c.l.b16 %v7786
    %v8463 = vunpack.c.h.b16 %v7786
    %v8464 = vunpack.c.l.b16 %v7787
    %v8465 = vunpack.c.h.b16 %v7787
    %v8466 = vunpack.c.l.b16 %v7788
    %v8467 = vunpack.c.h.b16 %v7788
    %v8468 = vunpack.c.l.b16 %v7789
    %v8469 = vunpack.c.h.b16 %v7789
    %v8470 = vunpack.c.l.b16 %v7790
    %v8471 = vunpack.c.h.b16 %v7790
    %v8472 = vunpack.c.l.b16 %v7791
    %v8473 = vunpack.c.h.b16 %v7791
    %v8474 = vunpack.c.l.b16 %v7792
    %v8475 = vunpack.c.h.b16 %v7792
    %v8476 = vunpack.c.l.b16 %v7793
    %v8477 = vunpack.c.h.b16 %v7793
    %v8478 = vunpack.c.l.b16 %v7794
    %v8479 = vunpack.c.h.b16 %v7794
    %v8480 = vunpack.c.l.b16 %v7795
    %v8481 = vunpack.c.h.b16 %v7795
    %v8482 = vunpack.c.l.b16 %v7796
    %v8483 = vunpack.c.h.b16 %v7796
    %v8484 = vunpack.c.l.b16 %v7797
    %v8485 = vunpack.c.h.b16 %v7797
    %v8486 = vunpack.c.l.b16 %v7798
    %v8487 = vunpack.c.h.b16 %v7798
    %v8488 = vunpack.c.l.b16 %v7799
    %v8489 = vunpack.c.h.b16 %v7799
    %v8490 = vunpack.c.l.b16 %v7800
    %v8491 = vunpack.c.h.b16 %v7800
    %v8492 = vunpack.c.l.b16 %v7801
    %v8493 = vunpack.c.h.b16 %v7801
    %v8494 = vunpack.c.l.b16 %v7802
    %v8495 = vunpack.c.h.b16 %v7802
    %v8496 = vunpack.c.l.b16 %v7803
    %v8497 = vunpack.c.h.b16 %v7803
    %v8498 = vunpack.c.l.b16 %v7804
    %v8499 = vunpack.c.h.b16 %v7804
    %v8500 = vunpack.c.l.b16 %v7805
    %v8501 = vunpack.c.h.b16 %v7805
    %v8502 = vunpack.c.l.b16 %v7806
    %v8503 = vunpack.c.h.b16 %v7806
    %v8504 = vunpack.c.l.b16 %v7807
    %v8505 = vunpack.c.h.b16 %v7807
    %v8506 = vunpack.c.l.b16 %v7808
    %v8507 = vunpack.c.h.b16 %v7808
    %v8508 = vunpack.c.l.b16 %v7809
    %v8509 = vunpack.c.h.b16 %v7809
    %v8510 = vunpack.c.l.b16 %v7810
    %v8511 = vunpack.c.h.b16 %v7810
    %v8512 = vunpack.c.l.b16 %v7811
    %v8513 = vunpack.c.h.b16 %v7811
    %v8514 = vunpack.c.l.b16 %v7812
    %v8515 = vunpack.c.h.b16 %v7812
    %v8516 = vunpack.c.l.b16 %v7813
    %v8517 = vunpack.c.h.b16 %v7813
    %v8518 = vunpack.c.l.b16 %v7814
    %v8519 = vunpack.c.h.b16 %v7814
    %v8520 = vunpack.c.l.b16 %v7815
    %v8521 = vunpack.c.h.b16 %v7815
    %v8522 = vunpack.c.l.b16 %v7816
    %v8523 = vunpack.c.h.b16 %v7816
    %v8524 = vunpack.c.l.b16 %v7817
    %v8525 = vunpack.c.h.b16 %v7817
    %v8526 = vunpack.c.l.b16 %v7818
    %v8527 = vunpack.c.h.b16 %v7818
    %v8528 = vunpack.c.l.b16 %v7819
    %v8529 = vunpack.c.h.b16 %v7819
    %v8530 = vunpack.c.l.b16 %v7820
    %v8531 = vunpack.c.h.b16 %v7820
    %v8532 = vunpack.c.l.b16 %v7821
    %v8533 = vunpack.c.h.b16 %v7821
    %v8534 = vunpack.c.l.b16 %v7822
    %v8535 = vunpack.c.h.b16 %v7822
    %v8536 = vunpack.c.l.b16 %v7823
    %v8537 = vunpack.c.h.b16 %v7823
    %v8538 = vunpack.c.l.b16 %v7824
    %v8539 = vunpack.c.h.b16 %v7824
    %v8540 = vunpack.c.l.b16 %v7825
    %v8541 = vunpack.c.h.b16 %v7825
    %v8542 = vunpack.c.l.b16 %v7826
    %v8543 = vunpack.c.h.b16 %v7826
    %v8544 = vunpack.c.l.b16 %v7827
    %v8545 = vunpack.c.h.b16 %v7827
    %v8546 = vunpack.c.l.b16 %v7828
    %v8547 = vunpack.c.h.b16 %v7828
    %v8548 = vunpack.c.l.b16 %v7829
    %v8549 = vunpack.c.h.b16 %v7829
    %v8550 = vunpack.c.l.b16 %v7830
    %v8551 = vunpack.c.h.b16 %v7830
    %v8552 = vunpack.c.l.b16 %v7831
    %v8553 = vunpack.c.h.b16 %v7831
    %v8554 = vunpack.c.l.b16 %v7832
    %v8555 = vunpack.c.h.b16 %v7832
    %v8556 = vunpack.c.l.b16 %v7833
    %v8557 = vunpack.c.h.b16 %v7833
    %v8558 = vunpack.c.l.b16 %v7834
    %v8559 = vunpack.c.h.b16 %v7834
    %v8560 = vunpack.c.l.b16 %v7835
    %v8561 = vunpack.c.h.b16 %v7835
    %v8562 = vunpack.c.l.b16 %v7836
    %v8563 = vunpack.c.h.b16 %v7836
    %v8564 = vunpack.c.l.b16 %v7837
    %v8565 = vunpack.c.h.b16 %v7837
    %v8566 = vunpack.c.l.b16 %v7838
    %v8567 = vunpack.c.h.b16 %v7838
    %v8568 = vunpack.c.l.b16 %v7839
    %v8569 = vunpack.c.h.b16 %v7839
    %v8570 = vunpack.c.l.b16 %v7840
    %v8571 = vunpack.c.h.b16 %v7840
    %v8572 = vunpack.c.l.b16 %v7841
    %v8573 = vunpack.c.h.b16 %v7841
    %v8574 = vunpack.c.l.b16 %v7842
    %v8575 = vunpack.c.h.b16 %v7842
    %v8576 = vunpack.c.l.b16 %v7843
    %v8577 = vunpack.c.h.b16 %v7843
    %v8578 = vunpack.c.l.b16 %v7844
    %v8579 = vunpack.c.h.b16 %v7844
    %v8580 = vunpack.c.l.b16 %v7845
    %v8581 = vunpack.c.h.b16 %v7845
    %v8582 = vunpack.c.l.b16 %v7846
    %v8583 = vunpack.c.h.b16 %v7846
    %v8584 = vunpack.c.l.b16 %v7847
    %v8585 = vunpack.c.h.b16 %v7847
    %v8586 = vunpack.c.l.b16 %v7848
    %v8587 = vunpack.c.h.b16 %v7848
    %v8588 = vunpack.c.l.b16 %v7849
    %v8589 = vunpack.c.h.b16 %v7849
    %v8590 = vunpack.c.l.b16 %v7850
    %v8591 = vunpack.c.h.b16 %v7850
    %v8592 = vunpack.c.l.b16 %v7851
    %v8593 = vunpack.c.h.b16 %v7851
    %v8594 = vunpack.c.l.b16 %v7852
    %v8595 = vunpack.c.h.b16 %v7852
    %v8596 = vunpack.c.l.b16 %v7853
    %v8597 = vunpack.c.h.b16 %v7853
    %v8598 = vunpack.c.l.b16 %v7854
    %v8599 = vunpack.c.h.b16 %v7854
    %v8600 = vunpack.c.l.b16 %v7855
    %v8601 = vunpack.c.h.b16 %v7855
    %v8602 = vunpack.c.l.b16 %v7856
    %v8603 = vunpack.c.h.b16 %v7856
    %v8604 = vunpack.c.l.b16 %v7857
    %v8605 = vunpack.c.h.b16 %v7857
    %v8606 = vunpack.c.l.b16 %v7858
    %v8607 = vunpack.c.h.b16 %v7858
    %v8608 = vunpack.c.l.b16 %v7859
    %v8609 = vunpack.c.h.b16 %v7859
    %v8610 = vunpack.c.l.b16 %v7860
    %v8611 = vunpack.c.h.b16 %v7860
    %v8612 = vunpack.c.l.b16 %v7861
    %v8613 = vunpack.c.h.b16 %v7861
    %v8614 = vunpack.c.l.b16 %v7862
    %v8615 = vunpack.c.h.b16 %v7862
    %v8616 = vunpack.c.l.b16 %v7863
    %v8617 = vunpack.c.h.b16 %v7863
    %v8618 = vunpack.c.l.b16 %v7864
    %v8619 = vunpack.c.h.b16 %v7864
    %v8620 = vunpack.c.l.b16 %v7865
    %v8621 = vunpack.c.h.b16 %v7865
    %v8622 = vunpack.c.l.b16 %v7866
    %v8623 = vunpack.c.h.b16 %v7866
    %v8624 = vunpack.c.l.b16 %v7867
    %v8625 = vunpack.c.h.b16 %v7867
    %v8626 = vunpack.c.l.b16 %v7868
    %v8627 = vunpack.c.h.b16 %v7868
    %v8628 = vunpack.c.l.b16 %v7869
    %v8629 = vunpack.c.h.b16 %v7869
    %v8630 = vunpack.c.l.b16 %v7870
    %v8631 = vunpack.c.h.b16 %v7870
    %v8632 = vunpack.c.l.b16 %v7871
    %v8633 = vunpack.c.h.b16 %v7871
    %v8634 = vunpack.c.l.b16 %v7872
    %v8635 = vunpack.c.h.b16 %v7872
    %v8636 = vunpack.c.l.b16 %v7873
    %v8637 = vunpack.c.h.b16 %v7873
    %v8638 = vunpack.c.l.b16 %v7874
    %v8639 = vunpack.c.h.b16 %v7874
    %v8640 = vunpack.c.l.b16 %v7875
    %v8641 = vunpack.c.h.b16 %v7875
    %v8642 = vunpack.c.l.b16 %v7876
    %v8643 = vunpack.c.h.b16 %v7876
    %v8644 = vunpack.c.l.b16 %v7877
    %v8645 = vunpack.c.h.b16 %v7877
    %v8646 = vunpack.c.l.b16 %v7878
    %v8647 = vunpack.c.h.b16 %v7878
    %v8648 = vunpack.c.l.b16 %v7879
    %v8649 = vunpack.c.h.b16 %v7879
    %v8650 = vunpack.c.l.b16 %v7880
    %v8651 = vunpack.c.h.b16 %v7880
    %v8652 = vunpack.c.l.b16 %v7881
    %v8653 = vunpack.c.h.b16 %v7881
    %v8654 = vunpack.c.l.b16 %v7882
    %v8655 = vunpack.c.h.b16 %v7882
    %v8656 = vunpack.c.l.b16 %v7883
    %v8657 = vunpack.c.h.b16 %v7883
    %v8658 = vunpack.c.l.b16 %v7884
    %v8659 = vunpack.c.h.b16 %v7884
    %v8660 = vunpack.c.l.b16 %v7885
    %v8661 = vunpack.c.h.b16 %v7885
    %v8662 = vunpack.c.l.b16 %v7886
    %v8663 = vunpack.c.h.b16 %v7886
    %v8664 = vunpack.c.l.b16 %v7887
    %v8665 = vunpack.c.h.b16 %v7887
    %v8666 = vunpack.c.l.b16 %v7888
    %v8667 = vunpack.c.h.b16 %v7888
    %v8668 = vunpack.c.l.b16 %v7889
    %v8669 = vunpack.c.h.b16 %v7889
    %v8670 = vunpack.c.l.b16 %v7890
    %v8671 = vunpack.c.h.b16 %v7890
    %v8672 = vunpack.c.l.b16 %v7891
    %v8673 = vunpack.c.h.b16 %v7891
    %v8674 = vunpack.c.l.b16 %v7892
    %v8675 = vunpack.c.h.b16 %v7892
    %v8676 = vunpack.c.l.b16 %v7893
    %v8677 = vunpack.c.h.b16 %v7893
    %v8678 = vunpack.c.l.b16 %v7894
    %v8679 = vunpack.c.h.b16 %v7894
    %v8680 = vunpack.c.l.b16 %v7895
    %v8681 = vunpack.c.h.b16 %v7895
    %v8682 = vunpack.c.l.b16 %v7896
    %v8683 = vunpack.c.h.b16 %v7896
    %v8684 = vunpack.c.l.b16 %v7897
    %v8685 = vunpack.c.h.b16 %v7897
    %v8686 = vunpack.c.l.b16 %v7898
    %v8687 = vunpack.c.h.b16 %v7898
    %v8688 = vunpack.c.l.b16 %v7899
    %v8689 = vunpack.c.h.b16 %v7899
    %v8690 = vpack.c.b16 %v8182, %v8178
    %v8691 = vpack.c.b16 %v8183, %v8179
    %v8692 = vpack.c.b16 %v8184, %v8180
    %v8693 = vpack.c.b16 %v8185, %v8181
    %v8694 = vpack.c.b16 %v8190, %v8186
    %v8695 = vpack.c.b16 %v8191, %v8187
    %v8696 = vpack.c.b16 %v8192, %v8188
    %v8697 = vpack.c.b16 %v8193, %v8189
    %v8698 = vpack.c.b16 %v8198, %v8194
    %v8699 = vpack.c.b16 %v8199, %v8195
    %v8700 = vpack.c.b16 %v8200, %v8196
    %v8701 = vpack.c.b16 %v8201, %v8197
    %v8702 = vpack.c.b16 %v8206, %v8202
    %v8703 = vpack.c.b16 %v8207, %v8203
    %v8704 = vpack.c.b16 %v8208, %v8204
    %v8705 = vpack.c.b16 %v8209, %v8205
    %v8706 = vpack.c.b16 %v8214, %v8210
    %v8707 = vpack.c.b16 %v8215, %v8211
    %v8708 = vpack.c.b16 %v8216, %v8212
    %v8709 = vpack.c.b16 %v8217, %v8213
    %v8710 = vpack.c.b16 %v8222, %v8218
    %v8711 = vpack.c.b16 %v8223, %v8219
    %v8712 = vpack.c.b16 %v8224, %v8220
    %v8713 = vpack.c.b16 %v8225, %v8221
    %v8714 = vpack.c.b16 %v8230, %v8226
    %v8715 = vpack.c.b16 %v8231, %v8227
    %v8716 = vpack.c.b16 %v8232, %v8228
    %v8717 = vpack.c.b16 %v8233, %v8229
    %v8718 = vpack.c.b16 %v8238, %v8234
    %v8719 = vpack.c.b16 %v8239, %v8235
    %v8720 = vpack.c.b16 %v8240, %v8236
    %v8721 = vpack.c.b16 %v8241, %v8237
    %v8722 = vpack.c.b16 %v8246, %v8242
    %v8723 = vpack.c.b16 %v8247, %v8243
    %v8724 = vpack.c.b16 %v8248, %v8244
    %v8725 = vpack.c.b16 %v8249, %v8245
    %v8726 = vpack.c.b16 %v8254, %v8250
    %v8727 = vpack.c.b16 %v8255, %v8251
    %v8728 = vpack.c.b16 %v8256, %v8252
    %v8729 = vpack.c.b16 %v8257, %v8253
    %v8730 = vpack.c.b16 %v8262, %v8258
    %v8731 = vpack.c.b16 %v8263, %v8259
    %v8732 = vpack.c.b16 %v8264, %v8260
    %v8733 = vpack.c.b16 %v8265, %v8261
    %v8734 = vpack.c.b16 %v8270, %v8266
    %v8735 = vpack.c.b16 %v8271, %v8267
    %v8736 = vpack.c.b16 %v8272, %v8268
    %v8737 = vpack.c.b16 %v8273, %v8269
    %v8738 = vpack.c.b16 %v8278, %v8274
    %v8739 = vpack.c.b16 %v8279, %v8275
    %v8740 = vpack.c.b16 %v8280, %v8276
    %v8741 = vpack.c.b16 %v8281, %v8277
    %v8742 = vpack.c.b16 %v8286, %v8282
    %v8743 = vpack.c.b16 %v8287, %v8283
    %v8744 = vpack.c.b16 %v8288, %v8284
    %v8745 = vpack.c.b16 %v8289, %v8285
    %v8746 = vpack.c.b16 %v8294, %v8290
    %v8747 = vpack.c.b16 %v8295, %v8291
    %v8748 = vpack.c.b16 %v8296, %v8292
    %v8749 = vpack.c.b16 %v8297, %v8293
    %v8750 = vpack.c.b16 %v8302, %v8298
    %v8751 = vpack.c.b16 %v8303, %v8299
    %v8752 = vpack.c.b16 %v8304, %v8300
    %v8753 = vpack.c.b16 %v8305, %v8301
    %v8754 = vpack.c.b16 %v8310, %v8306
    %v8755 = vpack.c.b16 %v8311, %v8307
    %v8756 = vpack.c.b16 %v8312, %v8308
    %v8757 = vpack.c.b16 %v8313, %v8309
    %v8758 = vpack.c.b16 %v8318, %v8314
    %v8759 = vpack.c.b16 %v8319, %v8315
    %v8760 = vpack.c.b16 %v8320, %v8316
    %v8761 = vpack.c.b16 %v8321, %v8317
    %v8762 = vpack.c.b16 %v8326, %v8322
    %v8763 = vpack.c.b16 %v8327, %v8323
    %v8764 = vpack.c.b16 %v8328, %v8324
    %v8765 = vpack.c.b16 %v8329, %v8325
    %v8766 = vpack.c.b16 %v8334, %v8330
    %v8767 = vpack.c.b16 %v8335, %v8331
    %v8768 = vpack.c.b16 %v8336, %v8332
    %v8769 = vpack.c.b16 %v8337, %v8333
    %v8770 = vpack.c.b16 %v8342, %v8338
    %v8771 = vpack.c.b16 %v8343, %v8339
    %v8772 = vpack.c.b16 %v8344, %v8340
    %v8773 = vpack.c.b16 %v8345, %v8341
    %v8774 = vpack.c.b16 %v8350, %v8346
    %v8775 = vpack.c.b16 %v8351, %v8347
    %v8776 = vpack.c.b16 %v8352, %v8348
    %v8777 = vpack.c.b16 %v8353, %v8349
    %v8778 = vpack.c.b16 %v8358, %v8354
    %v8779 = vpack.c.b16 %v8359, %v8355
    %v8780 = vpack.c.b16 %v8360, %v8356
    %v8781 = vpack.c.b16 %v8361, %v8357
    %v8782 = vpack.c.b16 %v8366, %v8362
    %v8783 = vpack.c.b16 %v8367, %v8363
    %v8784 = vpack.c.b16 %v8368, %v8364
    %v8785 = vpack.c.b16 %v8369, %v8365
    %v8786 = vpack.c.b16 %v8374, %v8370
    %v8787 = vpack.c.b16 %v8375, %v8371
    %v8788 = vpack.c.b16 %v8376, %v8372
    %v8789 = vpack.c.b16 %v8377, %v8373
    %v8790 = vpack.c.b16 %v8382, %v8378
    %v8791 = vpack.c.b16 %v8383, %v8379
    %v8792 = vpack.c.b16 %v8384, %v8380
    %v8793 = vpack.c.b16 %v8385, %v8381
    %v8794 = vpack.c.b16 %v8390, %v8386
    %v8795 = vpack.c.b16 %v8391, %v8387
    %v8796 = vpack.c.b16 %v8392, %v8388
    %v8797 = vpack.c.b16 %v8393, %v8389
    %v8798 = vpack.c.b16 %v8398, %v8394
    %v8799 = vpack.c.b16 %v8399, %v8395
    %v8800 = vpack.c.b16 %v8400, %v8396
    %v8801 = vpack.c.b16 %v8401, %v8397
    %v8802 = vpack.c.b16 %v8406, %v8402
    %v8803 = vpack.c.b16 %v8407, %v8403
    %v8804 = vpack.c.b16 %v8408, %v8404
    %v8805 = vpack.c.b16 %v8409, %v8405
    %v8806 = vpack.c.b16 %v8414, %v8410
    %v8807 = vpack.c.b16 %v8415, %v8411
    %v8808 = vpack.c.b16 %v8416, %v8412
    %v8809 = vpack.c.b16 %v8417, %v8413
    %v8810 = vpack.c.b16 %v8422, %v8418
    %v8811 = vpack.c.b16 %v8423, %v8419
    %v8812 = vpack.c.b16 %v8424, %v8420
    %v8813 = vpack.c.b16 %v8425, %v8421
    %v8814 = vpack.c.b16 %v8430, %v8426
    %v8815 = vpack.c.b16 %v8431, %v8427
    %v8816 = vpack.c.b16 %v8432, %v8428
    %v8817 = vpack.c.b16 %v8433, %v8429
    %v8818 = vpack.c.b16 %v8438, %v8434
    %v8819 = vpack.c.b16 %v8439, %v8435
    %v8820 = vpack.c.b16 %v8440, %v8436
    %v8821 = vpack.c.b16 %v8441, %v8437
    %v8822 = vpack.c.b16 %v8446, %v8442
    %v8823 = vpack.c.b16 %v8447, %v8443
    %v8824 = vpack.c.b16 %v8448, %v8444
    %v8825 = vpack.c.b16 %v8449, %v8445
    %v8826 = vpack.c.b16 %v8454, %v8450
    %v8827 = vpack.c.b16 %v8455, %v8451
    %v8828 = vpack.c.b16 %v8456, %v8452
    %v8829 = vpack.c.b16 %v8457, %v8453
    %v8830 = vpack.c.b16 %v8462, %v8458
    %v8831 = vpack.c.b16 %v8463, %v8459
    %v8832 = vpack.c.b16 %v8464, %v8460
    %v8833 = vpack.c.b16 %v8465, %v8461
    %v8834 = vpack.c.b16 %v8470, %v8466
    %v8835 = vpack.c.b16 %v8471, %v8467
    %v8836 = vpack.c.b16 %v8472, %v8468
    %v8837 = vpack.c.b16 %v8473, %v8469
    %v8838 = vpack.c.b16 %v8478, %v8474
    %v8839 = vpack.c.b16 %v8479, %v8475
    %v8840 = vpack.c.b16 %v8480, %v8476
    %v8841 = vpack.c.b16 %v8481, %v8477
    %v8842 = vpack.c.b16 %v8486, %v8482
    %v8843 = vpack.c.b16 %v8487, %v8483
    %v8844 = vpack.c.b16 %v8488, %v8484
    %v8845 = vpack.c.b16 %v8489, %v8485
    %v8846 = vpack.c.b16 %v8494, %v8490
    %v8847 = vpack.c.b16 %v8495, %v8491
    %v8848 = vpack.c.b16 %v8496, %v8492
    %v8849 = vpack.c.b16 %v8497, %v8493
    %v8850 = vpack.c.b16 %v8502, %v8498
    %v8851 = vpack.c.b16 %v8503, %v8499
    %v8852 = vpack.c.b16 %v8504, %v8500
    %v8853 = vpack.c.b16 %v8505, %v8501
    %v8854 = vpack.c.b16 %v8510, %v8506
    %v8855 = vpack.c.b16 %v8511, %v8507
    %v8856 = vpack.c.b16 %v8512, %v8508
    %v8857 = vpack.c.b16 %v8513, %v8509
    %v8858 = vpack.c.b16 %v8518, %v8514
    %v8859 = vpack.c.b16 %v8519, %v8515
    %v8860 = vpack.c.b16 %v8520, %v8516
    %v8861 = vpack.c.b16 %v8521, %v8517
    %v8862 = vpack.c.b16 %v8526, %v8522
    %v8863 = vpack.c.b16 %v8527, %v8523
    %v8864 = vpack.c.b16 %v8528, %v8524
    %v8865 = vpack.c.b16 %v8529, %v8525
    %v8866 = vpack.c.b16 %v8534, %v8530
    %v8867 = vpack.c.b16 %v8535, %v8531
    %v8868 = vpack.c.b16 %v8536, %v8532
    %v8869 = vpack.c.b16 %v8537, %v8533
    %v8870 = vpack.c.b16 %v8542, %v8538
    %v8871 = vpack.c.b16 %v8543, %v8539
    %v8872 = vpack.c.b16 %v8544, %v8540
    %v8873 = vpack.c.b16 %v8545, %v8541
    %v8874 = vpack.c.b16 %v8550, %v8546
    %v8875 = vpack.c.b16 %v8551, %v8547
    %v8876 = vpack.c.b16 %v8552, %v8548
    %v8877 = vpack.c.b16 %v8553, %v8549
    %v8878 = vpack.c.b16 %v8558, %v8554
    %v8879 = vpack.c.b16 %v8559, %v8555
    %v8880 = vpack.c.b16 %v8560, %v8556
    %v8881 = vpack.c.b16 %v8561, %v8557
    %v8882 = vpack.c.b16 %v8566, %v8562
    %v8883 = vpack.c.b16 %v8567, %v8563
    %v8884 = vpack.c.b16 %v8568, %v8564
    %v8885 = vpack.c.b16 %v8569, %v8565
    %v8886 = vpack.c.b16 %v8574, %v8570
    %v8887 = vpack.c.b16 %v8575, %v8571
    %v8888 = vpack.c.b16 %v8576, %v8572
    %v8889 = vpack.c.b16 %v8577, %v8573
    %v8890 = vpack.c.b16 %v8582, %v8578
    %v8891 = vpack.c.b16 %v8583, %v8579
    %v8892 = vpack.c.b16 %v8584, %v8580
    %v8893 = vpack.c.b16 %v8585, %v8581
    %v8894 = vpack.c.b16 %v8590, %v8586
    %v8895 = vpack.c.b16 %v8591, %v8587
    %v8896 = vpack.c.b16 %v8592, %v8588
    %v8897 = vpack.c.b16 %v8593, %v8589
    %v8898 = vpack.c.b16 %v8598, %v8594
    %v8899 = vpack.c.b16 %v8599, %v8595
    %v8900 = vpack.c.b16 %v8600, %v8596
    %v8901 = vpack.c.b16 %v8601, %v8597
    %v8902 = vpack.c.b16 %v8606, %v8602
    %v8903 = vpack.c.b16 %v8607, %v8603
    %v8904 = vpack.c.b16 %v8608, %v8604
    %v8905 = vpack.c.b16 %v8609, %v8605
    %v8906 = vpack.c.b16 %v8614, %v8610
    %v8907 = vpack.c.b16 %v8615, %v8611
    %v8908 = vpack.c.b16 %v8616, %v8612
    %v8909 = vpack.c.b16 %v8617, %v8613
    %v8910 = vpack.c.b16 %v8622, %v8618
    %v8911 = vpack.c.b16 %v8623, %v8619
    %v8912 = vpack.c.b16 %v8624, %v8620
    %v8913 = vpack.c.b16 %v8625, %v8621
    %v8914 = vpack.c.b16 %v8630, %v8626
    %v8915 = vpack.c.b16 %v8631, %v8627
    %v8916 = vpack.c.b16 %v8632, %v8628
    %v8917 = vpack.c.b16 %v8633, %v8629
    %v8918 = vpack.c.b16 %v8638, %v8634
    %v8919 = vpack.c.b16 %v8639, %v8635
    %v8920 = vpack.c.b16 %v8640, %v8636
    %v8921 = vpack.c.b16 %v8641, %v8637
    %v8922 = vpack.c.b16 %v8646, %v8642
    %v8923 = vpack.c.b16 %v8647, %v8643
    %v8924 = vpack.c.b16 %v8648, %v8644
    %v8925 = vpack.c.b16 %v8649, %v8645
    %v8926 = vpack.c.b16 %v8654, %v8650
    %v8927 = vpack.c.b16 %v8655, %v8651
    %v8928 = vpack.c.b16 %v8656, %v8652
    %v8929 = vpack.c.b16 %v8657, %v8653
    %v8930 = vpack.c.b16 %v8662, %v8658
    %v8931 = vpack.c.b16 %v8663, %v8659
    %v8932 = vpack.c.b16 %v8664, %v8660
    %v8933 = vpack.c.b16 %v8665, %v8661
    %v8934 = vpack.c.b16 %v8670, %v8666
    %v8935 = vpack.c.b16 %v8671, %v8667
    %v8936 = vpack.c.b16 %v8672, %v8668
    %v8937 = vpack.c.b16 %v8673, %v8669
    %v8938 = vpack.c.b16 %v8678, %v8674
    %v8939 = vpack.c.b16 %v8679, %v8675
    %v8940 = vpack.c.b16 %v8680, %v8676
    %v8941 = vpack.c.b16 %v8681, %v8677
    %v8942 = vpack.c.b16 %v8686, %v8682
    %v8943 = vpack.c.b16 %v8687, %v8683
    %v8944 = vpack.c.b16 %v8688, %v8684
    %v8945 = vpack.c.b16 %v8689, %v8685
    %9202 = vmatprep.subr.bf16.mxu0 %v8719
    %9203 = vmatpush1.bf16.msra.mxu0 %v8718
    %9204 = vmatprep.subr.bf16.mxu0 %v8715
    %9205 = vmatpush1.bf16.msra.mxu0 %v8714
    %9206 = vmatprep.subr.bf16.mxu0 %v8711
    %9207 = vmatpush1.bf16.msra.mxu0 %v8710
    %9208 = vmatprep.subr.bf16.mxu0 %v8707
    %9209 = vmatpush1.bf16.msra.mxu0 %v8706
    %9210 = vmatprep.subr.bf16.mxu0 %v8703
    %9211 = vmatpush1.bf16.msra.mxu0 %v8702
    %9212 = vmatprep.subr.bf16.mxu0 %v8699
    %9213 = vmatpush1.bf16.msra.mxu0 %v8698
    %9214 = vmatprep.subr.bf16.mxu0 %v8695
    %9215 = vmatpush1.bf16.msra.mxu0 %v8694
    %9216 = vmatprep.subr.bf16.mxu0 %v8691
    %9217 = vmatpush1.bf16.msra.mxu0 %v8690
    %9218 = vmatprep.subr.bf16.mxu0 %v8751
    %9219 = vmatpush2.bf16.msra.mxu0 %v8750
    %9220 = vmatprep.subr.bf16.mxu0 %v8747
    %9221 = vmatpush2.bf16.msra.mxu0 %v8746
    %9222 = vmatprep.subr.bf16.mxu0 %v8743
    %9223 = vmatpush2.bf16.msra.mxu0 %v8742
    %9224 = vmatprep.subr.bf16.mxu0 %v8739
    %9225 = vmatpush2.bf16.msra.mxu0 %v8738
    %9226 = vmatprep.subr.bf16.mxu0 %v8735
    %9227 = vmatpush2.bf16.msra.mxu0 %v8734
    %9228 = vmatprep.subr.bf16.mxu0 %v8731
    %9229 = vmatpush2.bf16.msra.mxu0 %v8730
    %9230 = vmatprep.subr.bf16.mxu0 %v8727
    %9231 = vmatpush2.bf16.msra.mxu0 %v8726
    %9232 = vmatprep.subr.bf16.mxu0 %v8723
    %9233 = vmatpush2.bf16.msra.mxu0 %v8722
    %9234 = vmatprep.mubr.bf16.mxu0 %v7629
    %9235 = vmatmul.mubr.bf16.gmra.mxu0 %v7628
    %v9236 = vpop.f32.mrf.mxu0
    %v9237 = vadd.f32 %v7905, %v9236
    %v9238 = vpop.f32.mrf.mxu0
    %v9239 = vadd.f32 %v7909, %v9238
    %v9240 = vpop.f32.mrf.mxu0
    %v9241 = vadd.f32 %v7905, %v9240
    %v9242 = vpop.f32.mrf.mxu0
    %v9243 = vadd.f32 %v7909, %v9242
    %9244 = vmatprep.mubr.bf16.mxu0 %v7631
    %9245 = vmatmul.mubr.bf16.gmra.mxu0 %v7630
    %v9246 = vpop.f32.mrf.mxu0
    %v9247 = vadd.f32 %v7905, %v9246
    %v9248 = vpop.f32.mrf.mxu0
    %v9249 = vadd.f32 %v7909, %v9248
    %v9250 = vpop.f32.mrf.mxu0
    %v9251 = vadd.f32 %v7905, %v9250
    %v9252 = vpop.f32.mrf.mxu0
    %v9253 = vadd.f32 %v7909, %v9252
    %9254 = vdwg.mxu0
    %9255 = vmatprep.subr.bf16.mxu0 %v8783
    %9256 = vmatpush1.bf16.msra.mxu0 %v8782
    %9257 = vmatprep.subr.bf16.mxu0 %v8779
    %9258 = vmatpush1.bf16.msra.mxu0 %v8778
    %9259 = vmatprep.subr.bf16.mxu0 %v8775
    %9260 = vmatpush1.bf16.msra.mxu0 %v8774
    %9261 = vmatprep.subr.bf16.mxu0 %v8771
    %9262 = vmatpush1.bf16.msra.mxu0 %v8770
    %9263 = vmatprep.subr.bf16.mxu0 %v8767
    %9264 = vmatpush1.bf16.msra.mxu0 %v8766
    %9265 = vmatprep.subr.bf16.mxu0 %v8763
    %9266 = vmatpush1.bf16.msra.mxu0 %v8762
    %9267 = vmatprep.subr.bf16.mxu0 %v8759
    %9268 = vmatpush1.bf16.msra.mxu0 %v8758
    %9269 = vmatprep.subr.bf16.mxu0 %v8755
    %9270 = vmatpush1.bf16.msra.mxu0 %v8754
    %9271 = vmatprep.subr.bf16.mxu0 %v8815
    %9272 = vmatpush2.bf16.msra.mxu0 %v8814
    %9273 = vmatprep.subr.bf16.mxu0 %v8811
    %9274 = vmatpush2.bf16.msra.mxu0 %v8810
    %9275 = vmatprep.subr.bf16.mxu0 %v8807
    %9276 = vmatpush2.bf16.msra.mxu0 %v8806
    %9277 = vmatprep.subr.bf16.mxu0 %v8803
    %9278 = vmatpush2.bf16.msra.mxu0 %v8802
    %9279 = vmatprep.subr.bf16.mxu0 %v8799
    %9280 = vmatpush2.bf16.msra.mxu0 %v8798
    %9281 = vmatprep.subr.bf16.mxu0 %v8795
    %9282 = vmatpush2.bf16.msra.mxu0 %v8794
    %9283 = vmatprep.subr.bf16.mxu0 %v8791
    %9284 = vmatpush2.bf16.msra.mxu0 %v8790
    %9285 = vmatprep.subr.bf16.mxu0 %v8787
    %9286 = vmatpush2.bf16.msra.mxu0 %v8786
    %9287 = vmatprep.mubr.bf16.mxu0 %v7633
    %9288 = vmatmul.mubr.bf16.gmra.mxu0 %v7632
    %v9289 = vpop.f32.mrf.mxu0
    %v9290 = vadd.f32 %v9237, %v9289
    %v9291 = vpop.f32.mrf.mxu0
    %v9292 = vadd.f32 %v9239, %v9291
    %v9293 = vpop.f32.mrf.mxu0
    %v9294 = vadd.f32 %v9241, %v9293
    %v9295 = vpop.f32.mrf.mxu0
    %v9296 = vadd.f32 %v9243, %v9295
    %9297 = vmatprep.mubr.bf16.mxu0 %v7635
    %9298 = vmatmul.mubr.bf16.gmra.mxu0 %v7634
    %v9299 = vpop.f32.mrf.mxu0
    %v9300 = vadd.f32 %v9247, %v9299
    %v9301 = vpop.f32.mrf.mxu0
    %v9302 = vadd.f32 %v9249, %v9301
    %v9303 = vpop.f32.mrf.mxu0
    %v9304 = vadd.f32 %v9251, %v9303
    %v9305 = vpop.f32.mrf.mxu0
    %v9306 = vadd.f32 %v9253, %v9305
    %9307 = vdwg.mxu0
    %9308 = vmatprep.subr.bf16.mxu0 %v8847
    %9309 = vmatpush1.bf16.msra.mxu0 %v8846
    %9310 = vmatprep.subr.bf16.mxu0 %v8843
    %9311 = vmatpush1.bf16.msra.mxu0 %v8842
    %9312 = vmatprep.subr.bf16.mxu0 %v8839
    %9313 = vmatpush1.bf16.msra.mxu0 %v8838
    %9314 = vmatprep.subr.bf16.mxu0 %v8835
    %9315 = vmatpush1.bf16.msra.mxu0 %v8834
    %9316 = vmatprep.subr.bf16.mxu0 %v8831
    %9317 = vmatpush1.bf16.msra.mxu0 %v8830
    %9318 = vmatprep.subr.bf16.mxu0 %v8827
    %9319 = vmatpush1.bf16.msra.mxu0 %v8826
    %9320 = vmatprep.subr.bf16.mxu0 %v8823
    %9321 = vmatpush1.bf16.msra.mxu0 %v8822
    %9322 = vmatprep.subr.bf16.mxu0 %v8819
    %9323 = vmatpush1.bf16.msra.mxu0 %v8818
    %9324 = vmatprep.subr.bf16.mxu0 %v8879
    %9325 = vmatpush2.bf16.msra.mxu0 %v8878
    %9326 = vmatprep.subr.bf16.mxu0 %v8875
    %9327 = vmatpush2.bf16.msra.mxu0 %v8874
    %9328 = vmatprep.subr.bf16.mxu0 %v8871
    %9329 = vmatpush2.bf16.msra.mxu0 %v8870
    %9330 = vmatprep.subr.bf16.mxu0 %v8867
    %9331 = vmatpush2.bf16.msra.mxu0 %v8866
    %9332 = vmatprep.subr.bf16.mxu0 %v8863
    %9333 = vmatpush2.bf16.msra.mxu0 %v8862
    %9334 = vmatprep.subr.bf16.mxu0 %v8859
    %9335 = vmatpush2.bf16.msra.mxu0 %v8858
    %9336 = vmatprep.subr.bf16.mxu0 %v8855
    %9337 = vmatpush2.bf16.msra.mxu0 %v8854
    %9338 = vmatprep.subr.bf16.mxu0 %v8851
    %9339 = vmatpush2.bf16.msra.mxu0 %v8850
    %9340 = vmatprep.mubr.bf16.mxu0 %v7637
    %9341 = vmatmul.mubr.bf16.gmra.mxu0 %v7636
    %v9342 = vpop.f32.mrf.mxu0
    %v9343 = vadd.f32 %v9290, %v9342
    %v9344 = vpop.f32.mrf.mxu0
    %v9345 = vadd.f32 %v9292, %v9344
    %v9346 = vpop.f32.mrf.mxu0
    %v9347 = vadd.f32 %v9294, %v9346
    %v9348 = vpop.f32.mrf.mxu0
    %v9349 = vadd.f32 %v9296, %v9348
    %9350 = vmatprep.mubr.bf16.mxu0 %v7639
    %9351 = vmatmul.mubr.bf16.gmra.mxu0 %v7638
    %v9352 = vpop.f32.mrf.mxu0
    %v9353 = vadd.f32 %v9300, %v9352
    %v9354 = vpop.f32.mrf.mxu0
    %v9355 = vadd.f32 %v9302, %v9354
    %v9356 = vpop.f32.mrf.mxu0
    %v9357 = vadd.f32 %v9304, %v9356
    %v9358 = vpop.f32.mrf.mxu0
    %v9359 = vadd.f32 %v9306, %v9358
    %9360 = vdwg.mxu0
    %9361 = vmatprep.subr.bf16.mxu0 %v8911
    %9362 = vmatpush1.bf16.msra.mxu0 %v8910
    %9363 = vmatprep.subr.bf16.mxu0 %v8907
    %9364 = vmatpush1.bf16.msra.mxu0 %v8906
    %9365 = vmatprep.subr.bf16.mxu0 %v8903
    %9366 = vmatpush1.bf16.msra.mxu0 %v8902
    %9367 = vmatprep.subr.bf16.mxu0 %v8899
    %9368 = vmatpush1.bf16.msra.mxu0 %v8898
    %9369 = vmatprep.subr.bf16.mxu0 %v8895
    %9370 = vmatpush1.bf16.msra.mxu0 %v8894
    %9371 = vmatprep.subr.bf16.mxu0 %v8891
    %9372 = vmatpush1.bf16.msra.mxu0 %v8890
    %9373 = vmatprep.subr.bf16.mxu0 %v8887
    %9374 = vmatpush1.bf16.msra.mxu0 %v8886
    %9375 = vmatprep.subr.bf16.mxu0 %v8883
    %9376 = vmatpush1.bf16.msra.mxu0 %v8882
    %9377 = vmatprep.subr.bf16.mxu0 %v8943
    %9378 = vmatpush2.bf16.msra.mxu0 %v8942
    %9379 = vmatprep.subr.bf16.mxu0 %v8939
    %9380 = vmatpush2.bf16.msra.mxu0 %v8938
    %9381 = vmatprep.subr.bf16.mxu0 %v8935
    %9382 = vmatpush2.bf16.msra.mxu0 %v8934
    %9383 = vmatprep.subr.bf16.mxu0 %v8931
    %9384 = vmatpush2.bf16.msra.mxu0 %v8930
    %9385 = vmatprep.subr.bf16.mxu0 %v8927
    %9386 = vmatpush2.bf16.msra.mxu0 %v8926
    %9387 = vmatprep.subr.bf16.mxu0 %v8923
    %9388 = vmatpush2.bf16.msra.mxu0 %v8922
    %9389 = vmatprep.subr.bf16.mxu0 %v8919
    %9390 = vmatpush2.bf16.msra.mxu0 %v8918
    %9391 = vmatprep.subr.bf16.mxu0 %v8915
    %9392 = vmatpush2.bf16.msra.mxu0 %v8914
    %9393 = vmatprep.mubr.bf16.mxu0 %v7641
    %9394 = vmatmul.mubr.bf16.gmra.mxu0 %v7640
    %v9395 = vpop.f32.mrf.mxu0
    %v9396 = vadd.f32 %v9343, %v9395
    %v9397 = vpop.f32.mrf.mxu0
    %v9398 = vadd.f32 %v9345, %v9397
    %v9399 = vpop.f32.mrf.mxu0
    %v9400 = vadd.f32 %v9347, %v9399
    %v9401 = vpop.f32.mrf.mxu0
    %v9402 = vadd.f32 %v9349, %v9401
    %9403 = vmatprep.mubr.bf16.mxu0 %v7643
    %9404 = vmatmul.mubr.bf16.gmra.mxu0 %v7642
    %v9405 = vpop.f32.mrf.mxu0
    %v9406 = vadd.f32 %v9353, %v9405
    %v9407 = vpop.f32.mrf.mxu0
    %v9408 = vadd.f32 %v9355, %v9407
    %v9409 = vpop.f32.mrf.mxu0
    %v9410 = vadd.f32 %v9357, %v9409
    %v9411 = vpop.f32.mrf.mxu0
    %v9412 = vadd.f32 %v9359, %v9411
    %9413 = vdwg.mxu0
    %9414 = vmatprep.subr.bf16.mxu0 %v8721
    %9415 = vmatpush1.bf16.msra.mxu0 %v8720
    %9416 = vmatprep.subr.bf16.mxu0 %v8717
    %9417 = vmatpush1.bf16.msra.mxu0 %v8716
    %9418 = vmatprep.subr.bf16.mxu0 %v8713
    %9419 = vmatpush1.bf16.msra.mxu0 %v8712
    %9420 = vmatprep.subr.bf16.mxu0 %v8709
    %9421 = vmatpush1.bf16.msra.mxu0 %v8708
    %9422 = vmatprep.subr.bf16.mxu0 %v8705
    %9423 = vmatpush1.bf16.msra.mxu0 %v8704
    %9424 = vmatprep.subr.bf16.mxu0 %v8701
    %9425 = vmatpush1.bf16.msra.mxu0 %v8700
    %9426 = vmatprep.subr.bf16.mxu0 %v8697
    %9427 = vmatpush1.bf16.msra.mxu0 %v8696
    %9428 = vmatprep.subr.bf16.mxu0 %v8693
    %9429 = vmatpush1.bf16.msra.mxu0 %v8692
    %9430 = vmatprep.subr.bf16.mxu0 %v8753
    %9431 = vmatpush2.bf16.msra.mxu0 %v8752
    %9432 = vmatprep.subr.bf16.mxu0 %v8749
    %9433 = vmatpush2.bf16.msra.mxu0 %v8748
    %9434 = vmatprep.subr.bf16.mxu0 %v8745
    %9435 = vmatpush2.bf16.msra.mxu0 %v8744
    %9436 = vmatprep.subr.bf16.mxu0 %v8741
    %9437 = vmatpush2.bf16.msra.mxu0 %v8740
    %9438 = vmatprep.subr.bf16.mxu0 %v8737
    %9439 = vmatpush2.bf16.msra.mxu0 %v8736
    %9440 = vmatprep.subr.bf16.mxu0 %v8733
    %9441 = vmatpush2.bf16.msra.mxu0 %v8732
    %9442 = vmatprep.subr.bf16.mxu0 %v8729
    %9443 = vmatpush2.bf16.msra.mxu0 %v8728
    %9444 = vmatprep.subr.bf16.mxu0 %v8725
    %9445 = vmatpush2.bf16.msra.mxu0 %v8724
    %9446 = vmatprep.mubr.bf16.mxu0 %v7629
    %9447 = vmatmul.mubr.bf16.gmra.mxu0 %v7628
    %v9448 = vpop.f32.mrf.mxu0
    %v9449 = vadd.f32 %v7913, %v9448
    %v9450 = vpop.f32.mrf.mxu0
    %v9451 = vadd.f32 %v7917, %v9450
    %v9452 = vpop.f32.mrf.mxu0
    %v9453 = vadd.f32 %v7913, %v9452
    %v9454 = vpop.f32.mrf.mxu0
    %v9455 = vadd.f32 %v7917, %v9454
    %9456 = vmatprep.mubr.bf16.mxu0 %v7631
    %9457 = vmatmul.mubr.bf16.gmra.mxu0 %v7630
    %v9458 = vpop.f32.mrf.mxu0
    %v9459 = vadd.f32 %v7913, %v9458
    %v9460 = vpop.f32.mrf.mxu0
    %v9461 = vadd.f32 %v7917, %v9460
    %v9462 = vpop.f32.mrf.mxu0
    %v9463 = vadd.f32 %v7913, %v9462
    %v9464 = vpop.f32.mrf.mxu0
    %v9465 = vadd.f32 %v7917, %v9464
    %9466 = vdwg.mxu0
    %9467 = vmatprep.subr.bf16.mxu0 %v8785
    %9468 = vmatpush1.bf16.msra.mxu0 %v8784
    %9469 = vmatprep.subr.bf16.mxu0 %v8781
    %9470 = vmatpush1.bf16.msra.mxu0 %v8780
    %9471 = vmatprep.subr.bf16.mxu0 %v8777
    %9472 = vmatpush1.bf16.msra.mxu0 %v8776
    %9473 = vmatprep.subr.bf16.mxu0 %v8773
    %9474 = vmatpush1.bf16.msra.mxu0 %v8772
    %9475 = vmatprep.subr.bf16.mxu0 %v8769
    %9476 = vmatpush1.bf16.msra.mxu0 %v8768
    %9477 = vmatprep.subr.bf16.mxu0 %v8765
    %9478 = vmatpush1.bf16.msra.mxu0 %v8764
    %9479 = vmatprep.subr.bf16.mxu0 %v8761
    %9480 = vmatpush1.bf16.msra.mxu0 %v8760
    %9481 = vmatprep.subr.bf16.mxu0 %v8757
    %9482 = vmatpush1.bf16.msra.mxu0 %v8756
    %9483 = vmatprep.subr.bf16.mxu0 %v8817
    %9484 = vmatpush2.bf16.msra.mxu0 %v8816
    %9485 = vmatprep.subr.bf16.mxu0 %v8813
    %9486 = vmatpush2.bf16.msra.mxu0 %v8812
    %9487 = vmatprep.subr.bf16.mxu0 %v8809
    %9488 = vmatpush2.bf16.msra.mxu0 %v8808
    %9489 = vmatprep.subr.bf16.mxu0 %v8805
    %9490 = vmatpush2.bf16.msra.mxu0 %v8804
    %9491 = vmatprep.subr.bf16.mxu0 %v8801
    %9492 = vmatpush2.bf16.msra.mxu0 %v8800
    %9493 = vmatprep.subr.bf16.mxu0 %v8797
    %9494 = vmatpush2.bf16.msra.mxu0 %v8796
    %9495 = vmatprep.subr.bf16.mxu0 %v8793
    %9496 = vmatpush2.bf16.msra.mxu0 %v8792
    %9497 = vmatprep.subr.bf16.mxu0 %v8789
    %9498 = vmatpush2.bf16.msra.mxu0 %v8788
    %9499 = vmatprep.mubr.bf16.mxu0 %v7633
    %9500 = vmatmul.mubr.bf16.gmra.mxu0 %v7632
    %v9501 = vpop.f32.mrf.mxu0
    %v9502 = vadd.f32 %v9449, %v9501
    %v9503 = vpop.f32.mrf.mxu0
    %v9504 = vadd.f32 %v9451, %v9503
    %v9505 = vpop.f32.mrf.mxu0
    %v9506 = vadd.f32 %v9453, %v9505
    %v9507 = vpop.f32.mrf.mxu0
    %v9508 = vadd.f32 %v9455, %v9507
    %9509 = vmatprep.mubr.bf16.mxu0 %v7635
    %9510 = vmatmul.mubr.bf16.gmra.mxu0 %v7634
    %v9511 = vpop.f32.mrf.mxu0
    %v9512 = vadd.f32 %v9459, %v9511
    %v9513 = vpop.f32.mrf.mxu0
    %v9514 = vadd.f32 %v9461, %v9513
    %v9515 = vpop.f32.mrf.mxu0
    %v9516 = vadd.f32 %v9463, %v9515
    %v9517 = vpop.f32.mrf.mxu0
    %v9518 = vadd.f32 %v9465, %v9517
    %9519 = vdwg.mxu0
    %9520 = vmatprep.subr.bf16.mxu0 %v8849
    %9521 = vmatpush1.bf16.msra.mxu0 %v8848
    %9522 = vmatprep.subr.bf16.mxu0 %v8845
    %9523 = vmatpush1.bf16.msra.mxu0 %v8844
    %9524 = vmatprep.subr.bf16.mxu0 %v8841
    %9525 = vmatpush1.bf16.msra.mxu0 %v8840
    %9526 = vmatprep.subr.bf16.mxu0 %v8837
    %9527 = vmatpush1.bf16.msra.mxu0 %v8836
    %9528 = vmatprep.subr.bf16.mxu0 %v8833
    %9529 = vmatpush1.bf16.msra.mxu0 %v8832
    %9530 = vmatprep.subr.bf16.mxu0 %v8829
    %9531 = vmatpush1.bf16.msra.mxu0 %v8828
    %9532 = vmatprep.subr.bf16.mxu0 %v8825
    %9533 = vmatpush1.bf16.msra.mxu0 %v8824
    %9534 = vmatprep.subr.bf16.mxu0 %v8821
    %9535 = vmatpush1.bf16.msra.mxu0 %v8820
    %9536 = vmatprep.subr.bf16.mxu0 %v8881
    %9537 = vmatpush2.bf16.msra.mxu0 %v8880
    %9538 = vmatprep.subr.bf16.mxu0 %v8877
    %9539 = vmatpush2.bf16.msra.mxu0 %v8876
    %9540 = vmatprep.subr.bf16.mxu0 %v8873
    %9541 = vmatpush2.bf16.msra.mxu0 %v8872
    %9542 = vmatprep.subr.bf16.mxu0 %v8869
    %9543 = vmatpush2.bf16.msra.mxu0 %v8868
    %9544 = vmatprep.subr.bf16.mxu0 %v8865
    %9545 = vmatpush2.bf16.msra.mxu0 %v8864
    %9546 = vmatprep.subr.bf16.mxu0 %v8861
    %9547 = vmatpush2.bf16.msra.mxu0 %v8860
    %9548 = vmatprep.subr.bf16.mxu0 %v8857
    %9549 = vmatpush2.bf16.msra.mxu0 %v8856
    %9550 = vmatprep.subr.bf16.mxu0 %v8853
    %9551 = vmatpush2.bf16.msra.mxu0 %v8852
    %9552 = vmatprep.mubr.bf16.mxu0 %v7637
    %9553 = vmatmul.mubr.bf16.gmra.mxu0 %v7636
    %v9554 = vpop.f32.mrf.mxu0
    %v9555 = vadd.f32 %v9502, %v9554
    %v9556 = vpop.f32.mrf.mxu0
    %v9557 = vadd.f32 %v9504, %v9556
    %v9558 = vpop.f32.mrf.mxu0
    %v9559 = vadd.f32 %v9506, %v9558
    %v9560 = vpop.f32.mrf.mxu0
    %v9561 = vadd.f32 %v9508, %v9560
    %9562 = vmatprep.mubr.bf16.mxu0 %v7639
    %9563 = vmatmul.mubr.bf16.gmra.mxu0 %v7638
    %v9564 = vpop.f32.mrf.mxu0
    %v9565 = vadd.f32 %v9512, %v9564
    %v9566 = vpop.f32.mrf.mxu0
    %v9567 = vadd.f32 %v9514, %v9566
    %v9568 = vpop.f32.mrf.mxu0
    %v9569 = vadd.f32 %v9516, %v9568
    %v9570 = vpop.f32.mrf.mxu0
    %v9571 = vadd.f32 %v9518, %v9570
    %9572 = vdwg.mxu0
    %9573 = vmatprep.subr.bf16.mxu0 %v8913
    %9574 = vmatpush1.bf16.msra.mxu0 %v8912
    %9575 = vmatprep.subr.bf16.mxu0 %v8909
    %9576 = vmatpush1.bf16.msra.mxu0 %v8908
    %9577 = vmatprep.subr.bf16.mxu0 %v8905
    %9578 = vmatpush1.bf16.msra.mxu0 %v8904
    %9579 = vmatprep.subr.bf16.mxu0 %v8901
    %9580 = vmatpush1.bf16.msra.mxu0 %v8900
    %9581 = vmatprep.subr.bf16.mxu0 %v8897
    %9582 = vmatpush1.bf16.msra.mxu0 %v8896
    %9583 = vmatprep.subr.bf16.mxu0 %v8893
    %9584 = vmatpush1.bf16.msra.mxu0 %v8892
    %9585 = vmatprep.subr.bf16.mxu0 %v8889
    %9586 = vmatpush1.bf16.msra.mxu0 %v8888
    %9587 = vmatprep.subr.bf16.mxu0 %v8885
    %9588 = vmatpush1.bf16.msra.mxu0 %v8884
    %9589 = vmatprep.subr.bf16.mxu0 %v8945
    %9590 = vmatpush2.bf16.msra.mxu0 %v8944
    %9591 = vmatprep.subr.bf16.mxu0 %v8941
    %9592 = vmatpush2.bf16.msra.mxu0 %v8940
    %9593 = vmatprep.subr.bf16.mxu0 %v8937
    %9594 = vmatpush2.bf16.msra.mxu0 %v8936
    %9595 = vmatprep.subr.bf16.mxu0 %v8933
    %9596 = vmatpush2.bf16.msra.mxu0 %v8932
    %9597 = vmatprep.subr.bf16.mxu0 %v8929
    %9598 = vmatpush2.bf16.msra.mxu0 %v8928
    %9599 = vmatprep.subr.bf16.mxu0 %v8925
    %9600 = vmatpush2.bf16.msra.mxu0 %v8924
    %9601 = vmatprep.subr.bf16.mxu0 %v8921
    %9602 = vmatpush2.bf16.msra.mxu0 %v8920
    %9603 = vmatprep.subr.bf16.mxu0 %v8917
    %9604 = vmatpush2.bf16.msra.mxu0 %v8916
    %9605 = vmatprep.mubr.bf16.mxu0 %v7641
    %9606 = vmatmul.mubr.bf16.gmra.mxu0 %v7640
    %v9607 = vpop.f32.mrf.mxu0
    %v9608 = vadd.f32 %v9555, %v9607
    %v9609 = vpop.f32.mrf.mxu0
    %v9610 = vadd.f32 %v9557, %v9609
    %v9611 = vpop.f32.mrf.mxu0
    %v9612 = vadd.f32 %v9559, %v9611
    %v9613 = vpop.f32.mrf.mxu0
    %v9614 = vadd.f32 %v9561, %v9613
    %9615 = vmatprep.mubr.bf16.mxu0 %v7643
    %9616 = vmatmul.mubr.bf16.gmra.mxu0 %v7642
    %v9617 = vpop.f32.mrf.mxu0
    %v9618 = vadd.f32 %v9565, %v9617
    %v9619 = vpop.f32.mrf.mxu0
    %v9620 = vadd.f32 %v9567, %v9619
    %v9621 = vpop.f32.mrf.mxu0
    %v9622 = vadd.f32 %v9569, %v9621
    %v9623 = vpop.f32.mrf.mxu0
    %v9624 = vadd.f32 %v9571, %v9623
    %9625 = vdwg.mxu0
    %v9626 = vmax.f32 %v9396, 0.0
    %v9627 = vmax.f32 %v9398, 0.0
    %v9628 = vmax.f32 %v9608, 0.0
    %v9629 = vmax.f32 %v9610, 0.0
    %v9630 = vmax.f32 %v9400, 0.0
    %v9631 = vmax.f32 %v9402, 0.0
    %v9632 = vmax.f32 %v9612, 0.0
    %v9633 = vmax.f32 %v9614, 0.0
    %v9634 = vmax.f32 %v9406, 0.0
    %v9635 = vmax.f32 %v9408, 0.0
    %v9636 = vmax.f32 %v9618, 0.0
    %v9637 = vmax.f32 %v9620, 0.0
    %v9638 = vmax.f32 %v9410, 0.0
    %v9639 = vmax.f32 %v9412, 0.0
    %v9640 = vmax.f32 %v9622, 0.0
    %v9641 = vmax.f32 %v9624, 0.0
    %v9642 = vpack.c.bf16 %v9630, %v9626
    %v9643 = vpack.c.bf16 %v9631, %v9627
    %v9644 = vpack.c.bf16 %v9632, %v9628
    %v9645 = vpack.c.bf16 %v9633, %v9629
    %v9646 = vpack.c.bf16 %v9638, %v9634
    %v9647 = vpack.c.bf16 %v9639, %v9635
    %v9648 = vpack.c.bf16 %v9640, %v9636
    %v9649 = vpack.c.bf16 %v9641, %v9637
    %v9650 = vld [vmem:[#allocation14] sm:$0xf]
    %v9651 = vld [vmem:[#allocation14 + $0x4] sm:$0xf]
    %v9652 = vld [vmem:[#allocation14 + $0x8] sm:$0xf]
    %v9653 = vld [vmem:[#allocation14 + $0xc] sm:$0xf]
    %v9654 = vld [vmem:[#allocation14 + $0x10] sm:$0xf]
    %v9655 = vld [vmem:[#allocation14 + $0x14] sm:$0xf]
    %v9656 = vld [vmem:[#allocation14 + $0x18] sm:$0xf]
    %v9657 = vld [vmem:[#allocation14 + $0x1c] sm:$0xf]
    %v9658 = vld [vmem:[#allocation14 + $0x20] sm:$0xf]
    %v9659 = vld [vmem:[#allocation14 + $0x24] sm:$0xf]
    %v9660 = vld [vmem:[#allocation14 + $0x28] sm:$0xf]
    %v9661 = vld [vmem:[#allocation14 + $0x2c] sm:$0xf]
    %v9662 = vld [vmem:[#allocation14 + $0x30] sm:$0xf]
    %v9663 = vld [vmem:[#allocation14 + $0x34] sm:$0xf]
    %v9664 = vld [vmem:[#allocation14 + $0x38] sm:$0xf]
    %v9665 = vld [vmem:[#allocation14 + $0x3c] sm:$0xf]
    %v9666 = vld [vmem:[#allocation14 + $0x40] sm:$0xf]
    %v9667 = vld [vmem:[#allocation14 + $0x44] sm:$0xf]
    %v9668 = vld [vmem:[#allocation14 + $0x48] sm:$0xf]
    %v9669 = vld [vmem:[#allocation14 + $0x4c] sm:$0xf]
    %v9670 = vld [vmem:[#allocation14 + $0x50] sm:$0xf]
    %v9671 = vld [vmem:[#allocation14 + $0x54] sm:$0xf]
    %v9672 = vld [vmem:[#allocation14 + $0x58] sm:$0xf]
    %v9673 = vld [vmem:[#allocation14 + $0x5c] sm:$0xf]
    %v9674 = vld [vmem:[#allocation14 + $0x60] sm:$0xf]
    %v9675 = vld [vmem:[#allocation14 + $0x64] sm:$0xf]
    %v9676 = vld [vmem:[#allocation14 + $0x68] sm:$0xf]
    %v9677 = vld [vmem:[#allocation14 + $0x6c] sm:$0xf]
    %v9678 = vld [vmem:[#allocation14 + $0x70] sm:$0xf]
    %v9679 = vld [vmem:[#allocation14 + $0x74] sm:$0xf]
    %v9680 = vld [vmem:[#allocation14 + $0x78] sm:$0xf]
    %v9681 = vld [vmem:[#allocation14 + $0x7c] sm:$0xf]
    %v9682 = vld [vmem:[#allocation14 + $0x80] sm:$0xf]
    %v9683 = vld [vmem:[#allocation14 + $0x84] sm:$0xf]
    %v9684 = vld [vmem:[#allocation14 + $0x88] sm:$0xf]
    %v9685 = vld [vmem:[#allocation14 + $0x8c] sm:$0xf]
    %v9686 = vld [vmem:[#allocation14 + $0x90] sm:$0xf]
    %v9687 = vld [vmem:[#allocation14 + $0x94] sm:$0xf]
    %v9688 = vld [vmem:[#allocation14 + $0x98] sm:$0xf]
    %v9689 = vld [vmem:[#allocation14 + $0x9c] sm:$0xf]
    %v9690 = vld [vmem:[#allocation14 + $0xa0] sm:$0xf]
    %v9691 = vld [vmem:[#allocation14 + $0xa4] sm:$0xf]
    %v9692 = vld [vmem:[#allocation14 + $0xa8] sm:$0xf]
    %v9693 = vld [vmem:[#allocation14 + $0xac] sm:$0xf]
    %v9694 = vld [vmem:[#allocation14 + $0xb0] sm:$0xf]
    %v9695 = vld [vmem:[#allocation14 + $0xb4] sm:$0xf]
    %v9696 = vld [vmem:[#allocation14 + $0xb8] sm:$0xf]
    %v9697 = vld [vmem:[#allocation14 + $0xbc] sm:$0xf]
    %v9698 = vld [vmem:[#allocation14 + $0xc0] sm:$0xf]
    %v9699 = vld [vmem:[#allocation14 + $0xc4] sm:$0xf]
    %v9700 = vld [vmem:[#allocation14 + $0xc8] sm:$0xf]
    %v9701 = vld [vmem:[#allocation14 + $0xcc] sm:$0xf]
    %v9702 = vld [vmem:[#allocation14 + $0xd0] sm:$0xf]
    %v9703 = vld [vmem:[#allocation14 + $0xd4] sm:$0xf]
    %v9704 = vld [vmem:[#allocation14 + $0xd8] sm:$0xf]
    %v9705 = vld [vmem:[#allocation14 + $0xdc] sm:$0xf]
    %v9706 = vld [vmem:[#allocation14 + $0xe0] sm:$0xf]
    %v9707 = vld [vmem:[#allocation14 + $0xe4] sm:$0xf]
    %v9708 = vld [vmem:[#allocation14 + $0xe8] sm:$0xf]
    %v9709 = vld [vmem:[#allocation14 + $0xec] sm:$0xf]
    %v9710 = vld [vmem:[#allocation14 + $0xf0] sm:$0xf]
    %v9711 = vld [vmem:[#allocation14 + $0xf4] sm:$0xf]
    %v9712 = vld [vmem:[#allocation14 + $0xf8] sm:$0xf]
    %v9713 = vld [vmem:[#allocation14 + $0xfc] sm:$0xf]
    %v9714 = vld [vmem:[#allocation16] sm:$0x1]
    %v9716 = vlaneseq
    %v9717 = vshrl.u32 %v9716, 7
    %v9718 = vsub.s32 0, %v9717
    %v9719 = vrot.slane %v9714, %v9718
    %v9785 = vunpack.c.l.b16 %v9650
    %v9786 = vunpack.c.l.b16 %v9651
    %v9787 = vunpack.c.l.b16 %v9652
    %v9788 = vunpack.c.l.b16 %v9653
    %v9789 = vunpack.c.l.b16 %v9654
    %v9790 = vunpack.c.l.b16 %v9655
    %v9791 = vunpack.c.l.b16 %v9656
    %v9792 = vunpack.c.l.b16 %v9657
    %v9793 = vunpack.c.l.b16 %v9658
    %v9794 = vunpack.c.l.b16 %v9659
    %v9795 = vunpack.c.l.b16 %v9660
    %v9796 = vunpack.c.l.b16 %v9661
    %v9797 = vunpack.c.l.b16 %v9662
    %v9798 = vunpack.c.l.b16 %v9663
    %v9799 = vunpack.c.l.b16 %v9664
    %v9800 = vunpack.c.l.b16 %v9665
    %v9801 = vunpack.c.l.b16 %v9666
    %v9802 = vunpack.c.l.b16 %v9667
    %v9803 = vunpack.c.l.b16 %v9668
    %v9804 = vunpack.c.l.b16 %v9669
    %v9805 = vunpack.c.l.b16 %v9670
    %v9806 = vunpack.c.l.b16 %v9671
    %v9807 = vunpack.c.l.b16 %v9672
    %v9808 = vunpack.c.l.b16 %v9673
    %v9809 = vunpack.c.l.b16 %v9674
    %v9810 = vunpack.c.l.b16 %v9675
    %v9811 = vunpack.c.l.b16 %v9676
    %v9812 = vunpack.c.l.b16 %v9677
    %v9813 = vunpack.c.l.b16 %v9678
    %v9814 = vunpack.c.l.b16 %v9679
    %v9815 = vunpack.c.l.b16 %v9680
    %v9816 = vunpack.c.l.b16 %v9681
    %v9817 = vunpack.c.l.b16 %v9682
    %v9818 = vunpack.c.l.b16 %v9683
    %v9819 = vunpack.c.l.b16 %v9684
    %v9820 = vunpack.c.l.b16 %v9685
    %v9821 = vunpack.c.l.b16 %v9686
    %v9822 = vunpack.c.l.b16 %v9687
    %v9823 = vunpack.c.l.b16 %v9688
    %v9824 = vunpack.c.l.b16 %v9689
    %v9825 = vunpack.c.l.b16 %v9690
    %v9826 = vunpack.c.l.b16 %v9691
    %v9827 = vunpack.c.l.b16 %v9692
    %v9828 = vunpack.c.l.b16 %v9693
    %v9829 = vunpack.c.l.b16 %v9694
    %v9830 = vunpack.c.l.b16 %v9695
    %v9831 = vunpack.c.l.b16 %v9696
    %v9832 = vunpack.c.l.b16 %v9697
    %v9833 = vunpack.c.l.b16 %v9698
    %v9834 = vunpack.c.l.b16 %v9699
    %v9835 = vunpack.c.l.b16 %v9700
    %v9836 = vunpack.c.l.b16 %v9701
    %v9837 = vunpack.c.l.b16 %v9702
    %v9838 = vunpack.c.l.b16 %v9703
    %v9839 = vunpack.c.l.b16 %v9704
    %v9840 = vunpack.c.l.b16 %v9705
    %v9841 = vunpack.c.l.b16 %v9706
    %v9842 = vunpack.c.l.b16 %v9707
    %v9843 = vunpack.c.l.b16 %v9708
    %v9844 = vunpack.c.l.b16 %v9709
    %v9845 = vunpack.c.l.b16 %v9710
    %v9846 = vunpack.c.l.b16 %v9711
    %v9847 = vunpack.c.l.b16 %v9712
    %v9848 = vunpack.c.l.b16 %v9713
    %v9849 = vpack.c.b16 %v9786, %v9785
    %v9850 = vpack.c.b16 %v9788, %v9787
    %v9851 = vpack.c.b16 %v9790, %v9789
    %v9852 = vpack.c.b16 %v9792, %v9791
    %v9853 = vpack.c.b16 %v9794, %v9793
    %v9854 = vpack.c.b16 %v9796, %v9795
    %v9855 = vpack.c.b16 %v9798, %v9797
    %v9856 = vpack.c.b16 %v9800, %v9799
    %v9857 = vpack.c.b16 %v9802, %v9801
    %v9858 = vpack.c.b16 %v9804, %v9803
    %v9859 = vpack.c.b16 %v9806, %v9805
    %v9860 = vpack.c.b16 %v9808, %v9807
    %v9861 = vpack.c.b16 %v9810, %v9809
    %v9862 = vpack.c.b16 %v9812, %v9811
    %v9863 = vpack.c.b16 %v9814, %v9813
    %v9864 = vpack.c.b16 %v9816, %v9815
    %v9865 = vpack.c.b16 %v9818, %v9817
    %v9866 = vpack.c.b16 %v9820, %v9819
    %v9867 = vpack.c.b16 %v9822, %v9821
    %v9868 = vpack.c.b16 %v9824, %v9823
    %v9869 = vpack.c.b16 %v9826, %v9825
    %v9870 = vpack.c.b16 %v9828, %v9827
    %v9871 = vpack.c.b16 %v9830, %v9829
    %v9872 = vpack.c.b16 %v9832, %v9831
    %v9873 = vpack.c.b16 %v9834, %v9833
    %v9874 = vpack.c.b16 %v9836, %v9835
    %v9875 = vpack.c.b16 %v9838, %v9837
    %v9876 = vpack.c.b16 %v9840, %v9839
    %v9877 = vpack.c.b16 %v9842, %v9841
    %v9878 = vpack.c.b16 %v9844, %v9843
    %v9879 = vpack.c.b16 %v9846, %v9845
    %v9880 = vpack.c.b16 %v9848, %v9847
    %9913 = vmatprep.subr.bf16.mxu0 0
    %9914 = vmatpush1.bf16.msra.mxu0 %v9856
    %9915 = vmatprep.subr.bf16.mxu0 0
    %9916 = vmatpush1.bf16.msra.mxu0 %v9855
    %9917 = vmatprep.subr.bf16.mxu0 0
    %9918 = vmatpush1.bf16.msra.mxu0 %v9854
    %9919 = vmatprep.subr.bf16.mxu0 0
    %9920 = vmatpush1.bf16.msra.mxu0 %v9853
    %9921 = vmatprep.subr.bf16.mxu0 0
    %9922 = vmatpush1.bf16.msra.mxu0 %v9852
    %9923 = vmatprep.subr.bf16.mxu0 0
    %9924 = vmatpush1.bf16.msra.mxu0 %v9851
    %9925 = vmatprep.subr.bf16.mxu0 0
    %9926 = vmatpush1.bf16.msra.mxu0 %v9850
    %9927 = vmatprep.subr.bf16.mxu0 0
    %9928 = vmatpush1.bf16.msra.mxu0 %v9849
    %9929 = vmatprep.subr.bf16.mxu0 0
    %9930 = vmatpush2.bf16.msra.mxu0 %v9864
    %9931 = vmatprep.subr.bf16.mxu0 0
    %9932 = vmatpush2.bf16.msra.mxu0 %v9863
    %9933 = vmatprep.subr.bf16.mxu0 0
    %9934 = vmatpush2.bf16.msra.mxu0 %v9862
    %9935 = vmatprep.subr.bf16.mxu0 0
    %9936 = vmatpush2.bf16.msra.mxu0 %v9861
    %9937 = vmatprep.subr.bf16.mxu0 0
    %9938 = vmatpush2.bf16.msra.mxu0 %v9860
    %9939 = vmatprep.subr.bf16.mxu0 0
    %9940 = vmatpush2.bf16.msra.mxu0 %v9859
    %9941 = vmatprep.subr.bf16.mxu0 0
    %9942 = vmatpush2.bf16.msra.mxu0 %v9858
    %9943 = vmatprep.subr.bf16.mxu0 0
    %9944 = vmatpush2.bf16.msra.mxu0 %v9857
    %9945 = vmatprep.mubr.bf16.mxu0 %v9643
    %9946 = vmatmul.mubr.bf16.gmra.mxu0 %v9642
    %v9947 = vpop.f32.mrf.mxu0
    %v9948 = vadd.f32 %v9719, %v9947
    %v9949 = vpop.f32.mrf.mxu0
    %v9950 = vpop.f32.mrf.mxu0
    %v9951 = vadd.f32 %v9719, %v9950
    %v9952 = vpop.f32.mrf.mxu0
    %9953 = vmatprep.mubr.bf16.mxu0 %v9647
    %9954 = vmatmul.mubr.bf16.gmra.mxu0 %v9646
    %v9955 = vpop.f32.mrf.mxu0
    %v9956 = vadd.f32 %v9719, %v9955
    %v9957 = vpop.f32.mrf.mxu0
    %v9958 = vpop.f32.mrf.mxu0
    %v9959 = vadd.f32 %v9719, %v9958
    %v9960 = vpop.f32.mrf.mxu0
    %9961 = vdwg.mxu0
    %9962 = vmatprep.subr.bf16.mxu0 0
    %9963 = vmatpush1.bf16.msra.mxu0 %v9872
    %9964 = vmatprep.subr.bf16.mxu0 0
    %9965 = vmatpush1.bf16.msra.mxu0 %v9871
    %9966 = vmatprep.subr.bf16.mxu0 0
    %9967 = vmatpush1.bf16.msra.mxu0 %v9870
    %9968 = vmatprep.subr.bf16.mxu0 0
    %9969 = vmatpush1.bf16.msra.mxu0 %v9869
    %9970 = vmatprep.subr.bf16.mxu0 0
    %9971 = vmatpush1.bf16.msra.mxu0 %v9868
    %9972 = vmatprep.subr.bf16.mxu0 0
    %9973 = vmatpush1.bf16.msra.mxu0 %v9867
    %9974 = vmatprep.subr.bf16.mxu0 0
    %9975 = vmatpush1.bf16.msra.mxu0 %v9866
    %9976 = vmatprep.subr.bf16.mxu0 0
    %9977 = vmatpush1.bf16.msra.mxu0 %v9865
    %9978 = vmatprep.subr.bf16.mxu0 0
    %9979 = vmatpush2.bf16.msra.mxu0 %v9880
    %9980 = vmatprep.subr.bf16.mxu0 0
    %9981 = vmatpush2.bf16.msra.mxu0 %v9879
    %9982 = vmatprep.subr.bf16.mxu0 0
    %9983 = vmatpush2.bf16.msra.mxu0 %v9878
    %9984 = vmatprep.subr.bf16.mxu0 0
    %9985 = vmatpush2.bf16.msra.mxu0 %v9877
    %9986 = vmatprep.subr.bf16.mxu0 0
    %9987 = vmatpush2.bf16.msra.mxu0 %v9876
    %9988 = vmatprep.subr.bf16.mxu0 0
    %9989 = vmatpush2.bf16.msra.mxu0 %v9875
    %9990 = vmatprep.subr.bf16.mxu0 0
    %9991 = vmatpush2.bf16.msra.mxu0 %v9874
    %9992 = vmatprep.subr.bf16.mxu0 0
    %9993 = vmatpush2.bf16.msra.mxu0 %v9873
    %9994 = vmatprep.mubr.bf16.mxu0 %v9645
    %9995 = vmatmul.mubr.bf16.gmra.mxu0 %v9644
    %v9996 = vpop.f32.mrf.mxu0
    %v9997 = vadd.f32 %v9948, %v9996
    %v9998 = vpop.f32.mrf.mxu0
    %v9999 = vpop.f32.mrf.mxu0
    %v10000 = vadd.f32 %v9951, %v9999
    %v10001 = vpop.f32.mrf.mxu0
    %10002 = vmatprep.mubr.bf16.mxu0 %v9649
    %10003 = vmatmul.mubr.bf16.gmra.mxu0 %v9648
    %v10004 = vpop.f32.mrf.mxu0
    %v10005 = vadd.f32 %v9956, %v10004
    %v10006 = vpop.f32.mrf.mxu0
    %v10007 = vpop.f32.mrf.mxu0
    %v10008 = vadd.f32 %v9959, %v10007
    %v10009 = vpop.f32.mrf.mxu0
    %10010 = vdwg.mxu0
    %10011 = vst [vmem:[#allocation17] sm:$0xff] %v9997
    %10012 = vst [vmem:[#allocation17 + $0x8] sm:$0xff] %v10000
    %10013 = vst [vmem:[#allocation17 + $0x10] sm:$0xff] %v10005
    %10014 = vst [vmem:[#allocation17 + $0x18] sm:$0xff] %v10008
    // Predicated region
    $region74: #{tpu_custom_call.1} parent=1 // pred_check
      _
    $region75: #{tpu_custom_call.1} parent=1 // pred_check_branch
      %10016 = sbr.rel (0) target = $region77
    $region76: #{tpu_custom_call.1} parent=1 // pred_region
      %s10018 = ssub.s32 512, 512
      %10019 = vsyncadd [#allocation4], %s10018
      %s10020 = sshll.u32 [#allocation17], 4
      %s10021 = int_to_ptr.vmem [resolvable:$true] %s10020
      %10026 = dma.vmem_to_hbm [thread:$0]  %s10021, 512, %s9, [#allocation4], 128, 128, 8
    $region77: #{tpu_custom_call.1} parent=1 // pred_fallthru
      _
    // Predicated region
    $region78: #{tpu_custom_call.1} parent=1 // pred_check
      _
    $region79: #{tpu_custom_call.1} parent=1 // pred_check_branch
      %10028 = sbr.rel (0) target = $region81
    $region80: #{tpu_custom_call.1} parent=1 // pred_region
      %10029 = dma.done [#allocation4], 512
    $region81: #{tpu_custom_call.1} parent=1 // pred_fallthru
      _
    %10030 = vsyncpa [#allocation3], 1
    %10031 = vsyncpa [#allocation6], 1
    %10032 = vsyncpa [#allocation9], 1
    %10033 = vsyncpa [#allocation12], 1
    %10034 = vsyncpa [#allocation15], 1
    %10035 = vsyncpa [#allocation4], 1

</llo_original>
